<compile_context>
chip_gen: v6e
topology: v6e:2x2x1
jax: 0.10.0
libtpu: 0.0.40
codegen_flags: <defaults>
</compile_context>

<pallas_src>
import functools

import jax
import jax.numpy as jnp
import numpy as np
from jax import lax
from jax.experimental import pallas as pl
from jax.experimental.pallas import tpu as pltpu

MXU_PRECISION = lax.Precision.HIGHEST   # free at K=36/144; see header note.


# ---------------------------------------------------------------------------
# Weight regrouping (wrapper-side glue, traced once under jit):
# torch ConvTranspose2d weight (Cin, Cout, 4, 4) -> (4*Cout, 9*Cin) matrix
#   row    = (a*2 + b)*Cout + co          (output parity, output channel)
#   column = (oh*3 + ow)*Cin + c          (offset into the 1-padded input,
#                                          input channel)
# Output pixel (2i+a, 2j+b) = sum_{c,dh,dw} x_pad[c, i+a+dh, j+b+dw]
#                                          * W[c, co, 3-a-2dh, 3-b-2dw]
# so for parity (a,b) only offsets (a+dh, b+dw), dh,dw in {0,1} are non-zero
# and the whole transposed conv becomes a single matmul per image.
# ---------------------------------------------------------------------------
def _regroup_weight(w):
    cin, cout = w.shape[0], w.shape[1]
    wz = jnp.zeros((2, 2, cout, 3, 3, cin), w.dtype)
    for a in range(2):
        for b in range(2):
            for dh in range(2):
                for dw in range(2):
                    kh, kw = 3 - a - 2 * dh, 3 - b - 2 * dw
                    wz = wz.at[a, b, :, a + dh, b + dw, :].set(w[:, :, kh, kw].T)
    return wz.reshape(4 * cout, 9 * cin)


# ---------------------------------------------------------------------------
# Kernel 1: deconv1 as one matmul per image + BatchNorm partial statistics.
#   p_ref : (1, 9*Cin, H*W)   im2col patch of the padded input (wrapper-built)
#   w_ref : (4*Hid, 9*Cin)    zero-padded, parity/tap-fused weight
#   b_ref : (4*Hid, 1)        bias tiled over parities
#   h_ref : (1, 4*Hid, H*W)   parity-major hidden activations (spatial on lanes)
#   sum_ref / sq_ref : (1, 4*Hid, 1) per-image partial sums for BN stats
# ---------------------------------------------------------------------------
def _deconv1_kernel(p_ref, w_ref, b_ref, h_ref, sum_ref, sq_ref):
    g = jnp.dot(w_ref[...], p_ref[0],
                preferred_element_type=jnp.float32, precision=MXU_PRECISION)
    g = g + b_ref[...]
    h_ref[0] = g
    sum_ref[0] = jnp.sum(g, axis=1, keepdims=True)
    sq_ref[0] = jnp.sum(g * g, axis=1, keepdims=True)


# ---------------------------------------------------------------------------
# Kernel 2: BN affine + ReLU + deconv2 (one matmul per image) + tanh.
#   h_ref : (1, Hid, Hp*Wp)   zero-padded hidden map, channel-first, flat
#   sc_ref/sh_ref : (Hid, 1)  folded BN scale / shift
#   m_ref : (1, Hp*Wp)        interior mask (re-zeroes the padding ring
#                             after the affine+ReLU)
#   w_ref : (4*Cout, 9*Hid)   zero-padded, parity/tap-fused weight
#   b_ref : (4*Cout, 1)
#   y_ref : (1, 4*Cout, Lv)   parity-major output in padded-flat coordinates
# ---------------------------------------------------------------------------
def _deconv2_kernel(h_ref, sc_ref, sh_ref, m_ref, w_ref, b_ref, y_ref, *, wp, lv):
    hn = jnp.maximum(h_ref[0] * sc_ref[...] + sh_ref[...], 0.0) * m_ref[...]
    # 9-offset im2col: lane-offset windows of the padded-flat hidden map.
    patch = jnp.concatenate(
        [hn[:, oh * wp + ow: oh * wp + ow + lv]
         for oh in range(3) for ow in range(3)],
        axis=0)                                            # (9*Hid, lv)
    g = jnp.dot(w_ref[...], patch,
                preferred_element_type=jnp.float32, precision=MXU_PRECISION)
    y_ref[0] = jnp.tanh(g + b_ref[...])


# ---------------------------------------------------------------------------
# Wrapper
# ---------------------------------------------------------------------------
def decoder_forward(x_nchw, params, *, eps=1e-5):
    w1, b1 = params["w1"], params["b1"]
    gamma, beta = params["gamma"], params["beta"]
    w2, b2 = params["w2"], params["b2"]

    N, Cin, H, W = x_nchw.shape
    Hid = w1.shape[1]
    Cout = w2.shape[1]
    H2, W2 = 2 * H, 2 * W
    H4, W4 = 4 * H, 4 * W
    Hp, Wp = H2 + 2, W2 + 2            # padded hidden spatial dims
    Lp = Hp * Wp                        # flattened padded hidden spatial
    Lv = (H2 - 1) * Wp + W2             # columns reached by the 9-offset window

    x = x_nchw.astype(jnp.float32)

    # layer-1 im2col of the tiny padded input (pure layout plumbing in XLA)
    x_pad = jnp.pad(x, ((0, 0), (0, 0), (1, 1), (1, 1)))
    patch1 = jnp.stack(
        [x_pad[:, :, oh:oh + H, ow:ow + W] for oh in range(3) for ow in range(3)],
        axis=1).reshape(N, 9 * Cin, H * W)

    w1z = _regroup_weight(w1)                       # (4*Hid, 9*Cin)
    b1r = jnp.tile(b1, 4).reshape(4 * Hid, 1)
    w2z = _regroup_weight(w2)                       # (4*Cout, 9*Hid)
    b2r = jnp.tile(b2, 4).reshape(4 * Cout, 1)

    # ---- kernel 1: first transposed conv + BN partial sums -----------------
    h_sub, psum, psq = pl.pallas_call(
        _deconv1_kernel,
        out_shape=(
            jax.ShapeDtypeStruct((N, 4 * Hid, H * W), jnp.float32),
            jax.ShapeDtypeStruct((N, 4 * Hid, 1), jnp.float32),
            jax.ShapeDtypeStruct((N, 4 * Hid, 1), jnp.float32),
        ),
        grid=(N,),
        in_specs=[
            pl.BlockSpec((1, 9 * Cin, H * W), lambda n: (n, 0, 0)),
            pl.BlockSpec((4 * Hid, 9 * Cin), lambda n: (0, 0)),
            pl.BlockSpec((4 * Hid, 1), lambda n: (0, 0)),
        ],
        out_specs=(
            pl.BlockSpec((1, 4 * Hid, H * W), lambda n: (n, 0, 0)),
            pl.BlockSpec((1, 4 * Hid, 1), lambda n: (n, 0, 0)),
            pl.BlockSpec((1, 4 * Hid, 1), lambda n: (n, 0, 0)),
        ),
        compiler_params=pltpu.CompilerParams(dimension_semantics=("parallel",)),
    )(patch1, w1z, b1r)

    # training-mode BatchNorm2d (matches a torch module in its default train()
    # state): batch statistics folded into a per-channel affine, finalized in
    # XLA from the per-image partial sums (a (N, 64) reduction — negligible).
    count = N * H2 * W2
    s = jnp.sum(psum.reshape(N, 4, Hid), axis=(0, 1))
    q = jnp.sum(psq.reshape(N, 4, Hid), axis=(0, 1))
    mean = s / count
    var = q / count - mean * mean
    inv = lax.rsqrt(var + eps)
    scale = (gamma * inv).reshape(Hid, 1)
    shift = (beta - mean * gamma * inv).reshape(Hid, 1)

    # sub-pixel interleave + zero pad of the hidden map (layout plumbing)
    h = h_sub.reshape(N, 2, 2, Hid, H, W)                       # (n,a,b,k,h,w)
    h2 = jnp.transpose(h, (0, 3, 4, 1, 5, 2)).reshape(N, Hid, H2, W2)
    h2p = jnp.pad(h2, ((0, 0), (0, 0), (1, 1), (1, 1))).reshape(N, Hid, Lp)

    # interior mask: the padding ring must stay exactly zero after the
    # in-kernel BN affine + ReLU (ReLU(shift) can be > 0).
    ii = jnp.arange(Lp, dtype=jnp.int32)
    hh, ww = ii // Wp, ii % Wp
    mask = (((hh >= 1) & (hh <= H2) & (ww >= 1) & (ww <= W2))
            .astype(jnp.float32).reshape(1, Lp))

    # ---- kernel 2: BN affine + ReLU + second transposed conv + tanh --------
    k2 = functools.partial(_deconv2_kernel, wp=Wp, lv=Lv)
    y_raw = pl.pallas_call(
        k2,
        out_shape=jax.ShapeDtypeStruct((N, 4 * Cout, Lv), jnp.float32),
        grid=(N,),
        in_specs=[
            pl.BlockSpec((1, Hid, Lp), lambda n: (n, 0, 0)),
            pl.BlockSpec((Hid, 1), lambda n: (0, 0)),
            pl.BlockSpec((Hid, 1), lambda n: (0, 0)),
            pl.BlockSpec((1, Lp), lambda n: (0, 0)),
            pl.BlockSpec((4 * Cout, 9 * Hid), lambda n: (0, 0)),
            pl.BlockSpec((4 * Cout, 1), lambda n: (0, 0)),
        ],
        out_specs=pl.BlockSpec((1, 4 * Cout, Lv), lambda n: (n, 0, 0)),
        compiler_params=pltpu.CompilerParams(dimension_semantics=("parallel",)),
    )(h2p, scale, shift, mask, w2z, b2r)

    # un-flatten: (parity, co, padded-flat spatial) -> NCHW
    y = jnp.pad(y_raw, ((0, 0), (0, 0), (0, H2 * Wp - Lv)))
    y = y.reshape(N, 2, 2, Cout, H2, Wp)[..., :W2]              # (n,a,b,co,h,w)
    y = jnp.transpose(y, (0, 3, 4, 1, 5, 2)).reshape(N, Cout, H4, W4)
    return y


# ---------------------------------------------------------------------------
# Pure-JAX reference (matches the PyTorch module in training mode)
# ---------------------------------------------------------------------------
def _deconv_ref(x, w, b):
    wf = jnp.flip(jnp.transpose(w, (1, 0, 2, 3)), (2, 3))       # (Cout, Cin, 4, 4)
    y = lax.conv_general_dilated(
        x, wf, window_strides=(1, 1), padding=[(2, 2), (2, 2)],
        lhs_dilation=(2, 2), dimension_numbers=("NCHW", "OIHW", "NCHW"),
        precision=lax.Precision.HIGHEST)
    return y + b[None, :, None, None]


def decoder_reference(x, params, eps=1e-5):
    h = _deconv_ref(x, params["w1"], params["b1"])
    mean = jnp.mean(h, axis=(0, 2, 3), keepdims=True)
    var = jnp.var(h, axis=(0, 2, 3), keepdims=True)
    hn = (h - mean) * lax.rsqrt(var + eps)
    hn = hn * params["gamma"][None, :, None, None] + params["beta"][None, :, None, None]
    hn = jnp.maximum(hn, 0.0)
    return jnp.tanh(_deconv_ref(hn, params["w2"], params["b2"]))


if __name__ == "__main__":
    key = jax.random.PRNGKey(0)
    N, Cin, H, W = 2, 4, 16, 16      # in_size=4
    Hid, Cout = 16, 3                # hidden_size=16, out_size=3

    ks = jax.random.split(key, 5)
    params = {
        # ConvTranspose2d weight layout: (in_channels, out_channels, kH, kW)
        "w1": 0.1 * jax.random.normal(ks[0], (Cin, Hid, 4, 4), jnp.float32),
        "b1": 0.1 * jax.random.normal(ks[1], (Hid,), jnp.float32),
        "gamma": jnp.ones((Hid,), jnp.float32),    # BatchNorm2d default init
        "beta": jnp.zeros((Hid,), jnp.float32),
        "w2": 0.1 * jax.random.normal(ks[2], (Hid, Cout, 4, 4), jnp.float32),
        "b2": 0.1 * jax.random.normal(ks[3], (Cout,), jnp.float32),
    }
    x = jax.random.normal(ks[4], (N, Cin, H, W), jnp.float32)

    y = jax.jit(decoder_forward)(x, params)
    y = jax.block_until_ready(y)
    assert y.shape == (N, Cout, 4 * H, 4 * W)

    y_ref = decoder_reference(x, params)
    # Kernels and reference both run exact-f32 matmuls; remaining differences
    # are op-ordering / one-pass-variance / EUP-tanh level (~1e-6), so this
    # tolerance is purely a structural-bug detector.
    np.testing.assert_allclose(np.asarray(y), np.asarray(y_ref), atol=5e-3, rtol=5e-3)

    print("KERNEL_OK")
</pallas_src>

<mosaic_0001>
module attributes {stable_mosaic.version = 11 : i64} {
  func.func @_deconv1_kernel(%arg0: i32, %arg1: memref<1x36x256xf32, #tpu.memory_space<vmem>>, %arg2: memref<64x36xf32, #tpu.memory_space<vmem>>, %arg3: memref<64x1xf32, #tpu.memory_space<vmem>>, %arg4: memref<1x64x256xf32, #tpu.memory_space<vmem>>, %arg5: memref<1x64x1xf32, #tpu.memory_space<vmem>>, %arg6: memref<1x64x1xf32, #tpu.memory_space<vmem>>) attributes {dimension_semantics = [#tpu.dimension_semantics<parallel>], iteration_bounds = array<i64: 2>, scalar_prefetch = 0 : i64, scratch_operands = 0 : i64, tpu.core_type = #tpu.core_type<tc>, window_params = [{transform_indices = @transform_0, window_bounds = array<i64: 1, 36, 256>}, {pipeline_mode = #tpu.pipeline_mode<synchronous>, transform_indices = @transform_1, window_bounds = array<i64: 64, 36>}, {pipeline_mode = #tpu.pipeline_mode<synchronous>, transform_indices = @transform_2, window_bounds = array<i64: 64, 1>}, {transform_indices = @transform_3, window_bounds = array<i64: 1, 64, 256>}, {transform_indices = @transform_4, window_bounds = array<i64: 1, 64, 1>}, {transform_indices = @transform_5, window_bounds = array<i64: 1, 64, 1>}]} {
    %c0 = arith.constant 0 : index
    %c0_0 = arith.constant 0 : index
    %0 = vector.load %arg2[%c0, %c0_0] : memref<64x36xf32, #tpu.memory_space<vmem>>, vector<64x36xf32>
    %c0_1 = arith.constant 0 : index
    %c0_2 = arith.constant 0 : index
    %c0_3 = arith.constant 0 : index
    %1 = vector.load %arg1[%c0_1, %c0_2, %c0_3] : memref<1x36x256xf32, #tpu.memory_space<vmem>>, vector<1x36x256xf32>
    %2 = vector.shape_cast %1 : vector<1x36x256xf32> to vector<36x256xf32>
    %cst = arith.constant dense<0.000000e+00> : vector<64x256xf32>
    %3 = tpu.matmul %0, %2, %cst {dimension_numbers = #tpu.dot_dimension_numbers<[1], [0], [0], [1], [0, 0, 1, 1], [], []>, precision = #tpu.contract_precision<fp32>} : vector<64x36xf32>, vector<36x256xf32>, vector<64x256xf32> -> vector<64x256xf32>
    %c0_4 = arith.constant 0 : index
    %c0_5 = arith.constant 0 : index
    %4 = vector.load %arg3[%c0_4, %c0_5] : memref<64x1xf32, #tpu.memory_space<vmem>>, vector<64x1xf32>
    %5 = vector.broadcast %4 : vector<64x1xf32> to vector<64x256xf32>
    %6 = arith.addf %3, %5 : vector<64x256xf32>
    %c0_6 = arith.constant 0 : index
    %c0_7 = arith.constant 0 : index
    %c0_8 = arith.constant 0 : index
    %7 = vector.load %arg4[%c0_6, %c0_7, %c0_8] : memref<1x64x256xf32, #tpu.memory_space<vmem>>, vector<1x64x256xf32>
    %8 = vector.shape_cast %7 : vector<1x64x256xf32> to vector<64x256xf32>
    %9 = vector.shape_cast %6 : vector<64x256xf32> to vector<1x64x256xf32>
    tpu.vector_store %arg4[%c0_6, %c0_7, %c0_8], %9 {strides = array<i32>} : memref<1x64x256xf32, #tpu.memory_space<vmem>>, vector<1x64x256xf32>,
    %cst_9 = arith.constant dense<0.000000e+00> : vector<64xf32>
    %10 = vector.multi_reduction <add>, %6, %cst_9 [1] : vector<64x256xf32> to vector<64xf32>
    %11 = vector.shape_cast %10 : vector<64xf32> to vector<64x1xf32>
    %c0_10 = arith.constant 0 : index
    %c0_11 = arith.constant 0 : index
    %c0_12 = arith.constant 0 : index
    %12 = vector.load %arg5[%c0_10, %c0_11, %c0_12] : memref<1x64x1xf32, #tpu.memory_space<vmem>>, vector<1x64x1xf32>
    %13 = vector.shape_cast %12 : vector<1x64x1xf32> to vector<64x1xf32>
    %14 = vector.shape_cast %11 : vector<64x1xf32> to vector<1x64x1xf32>
    tpu.vector_store %arg5[%c0_10, %c0_11, %c0_12], %14 {strides = array<i32>} : memref<1x64x1xf32, #tpu.memory_space<vmem>>, vector<1x64x1xf32>,
    %15 = arith.mulf %6, %6 : vector<64x256xf32>
    %cst_13 = arith.constant dense<0.000000e+00> : vector<64xf32>
    %16 = vector.multi_reduction <add>, %15, %cst_13 [1] : vector<64x256xf32> to vector<64xf32>
    %17 = vector.shape_cast %16 : vector<64xf32> to vector<64x1xf32>
    %c0_14 = arith.constant 0 : index
    %c0_15 = arith.constant 0 : index
    %c0_16 = arith.constant 0 : index
    %18 = vector.load %arg6[%c0_14, %c0_15, %c0_16] : memref<1x64x1xf32, #tpu.memory_space<vmem>>, vector<1x64x1xf32>
    %19 = vector.shape_cast %18 : vector<1x64x1xf32> to vector<64x1xf32>
    %20 = vector.shape_cast %17 : vector<64x1xf32> to vector<1x64x1xf32>
    tpu.vector_store %arg6[%c0_14, %c0_15, %c0_16], %20 {strides = array<i32>} : memref<1x64x1xf32, #tpu.memory_space<vmem>>, vector<1x64x1xf32>,
    return
  }
  func.func @transform_0(%arg0: i32) -> (i32, i32, i32) {
    %c0_i32 = arith.constant 0 : i32
    %c0_i32_0 = arith.constant 0 : i32
    %c0_i32_1 = arith.constant 0 : i32
    return %arg0, %c0_i32, %c0_i32_0 : i32, i32, i32
  }
  func.func @transform_1(%arg0: i32) -> (i32, i32) {
    %c0_i32 = arith.constant 0 : i32
    %c0_i32_0 = arith.constant 0 : i32
    %c0_i32_1 = arith.constant 0 : i32
    return %c0_i32, %c0_i32_0 : i32, i32
  }
  func.func @transform_2(%arg0: i32) -> (i32, i32) {
    %c0_i32 = arith.constant 0 : i32
    %c0_i32_0 = arith.constant 0 : i32
    %c0_i32_1 = arith.constant 0 : i32
    return %c0_i32, %c0_i32_0 : i32, i32
  }
  func.func @transform_3(%arg0: i32) -> (i32, i32, i32) {
    %c0_i32 = arith.constant 0 : i32
    %c0_i32_0 = arith.constant 0 : i32
    %c0_i32_1 = arith.constant 0 : i32
    return %arg0, %c0_i32, %c0_i32_0 : i32, i32, i32
  }
  func.func @transform_4(%arg0: i32) -> (i32, i32, i32) {
    %c0_i32 = arith.constant 0 : i32
    %c0_i32_0 = arith.constant 0 : i32
    %c0_i32_1 = arith.constant 0 : i32
    return %arg0, %c0_i32, %c0_i32_0 : i32, i32, i32
  }
  func.func @transform_5(%arg0: i32) -> (i32, i32, i32) {
    %c0_i32 = arith.constant 0 : i32
    %c0_i32_0 = arith.constant 0 : i32
    %c0_i32_1 = arith.constant 0 : i32
    return %arg0, %c0_i32, %c0_i32_0 : i32, i32, i32
  }
}

module attributes {stable_mosaic.version = 11 : i64} {
  func.func @_deconv2_kernel(%arg0: i32, %arg1: memref<1x16x1156xf32, #tpu.memory_space<vmem>>, %arg2: memref<16x1xf32, #tpu.memory_space<vmem>>, %arg3: memref<16x1xf32, #tpu.memory_space<vmem>>, %arg4: memref<1x1156xf32, #tpu.memory_space<vmem>>, %arg5: memref<12x144xf32, #tpu.memory_space<vmem>>, %arg6: memref<12x1xf32, #tpu.memory_space<vmem>>, %arg7: memref<1x12x1086xf32, #tpu.memory_space<vmem>>) attributes {dimension_semantics = [#tpu.dimension_semantics<parallel>], iteration_bounds = array<i64: 2>, scalar_prefetch = 0 : i64, scratch_operands = 0 : i64, tpu.core_type = #tpu.core_type<tc>, window_params = [{transform_indices = @transform_0, window_bounds = array<i64: 1, 16, 1156>}, {pipeline_mode = #tpu.pipeline_mode<synchronous>, transform_indices = @transform_1, window_bounds = array<i64: 16, 1>}, {pipeline_mode = #tpu.pipeline_mode<synchronous>, transform_indices = @transform_2, window_bounds = array<i64: 16, 1>}, {pipeline_mode = #tpu.pipeline_mode<synchronous>, transform_indices = @transform_3, window_bounds = array<i64: 1, 1156>}, {pipeline_mode = #tpu.pipeline_mode<synchronous>, transform_indices = @transform_4, window_bounds = array<i64: 12, 144>}, {pipeline_mode = #tpu.pipeline_mode<synchronous>, transform_indices = @transform_5, window_bounds = array<i64: 12, 1>}, {transform_indices = @transform_6, window_bounds = array<i64: 1, 12, 1086>}]} {
    %c0 = arith.constant 0 : index
    %c0_0 = arith.constant 0 : index
    %c0_1 = arith.constant 0 : index
    %0 = vector.load %arg1[%c0, %c0_0, %c0_1] : memref<1x16x1156xf32, #tpu.memory_space<vmem>>, vector<1x16x1156xf32>
    %1 = vector.shape_cast %0 : vector<1x16x1156xf32> to vector<16x1156xf32>
    %c0_2 = arith.constant 0 : index
    %c0_3 = arith.constant 0 : index
    %2 = vector.load %arg2[%c0_2, %c0_3] : memref<16x1xf32, #tpu.memory_space<vmem>>, vector<16x1xf32>
    %3 = vector.broadcast %2 : vector<16x1xf32> to vector<16x1156xf32>
    %4 = arith.mulf %1, %3 : vector<16x1156xf32>
    %c0_4 = arith.constant 0 : index
    %c0_5 = arith.constant 0 : index
    %5 = vector.load %arg3[%c0_4, %c0_5] : memref<16x1xf32, #tpu.memory_space<vmem>>, vector<16x1xf32>
    %6 = vector.broadcast %5 : vector<16x1xf32> to vector<16x1156xf32>
    %7 = arith.addf %4, %6 : vector<16x1156xf32>
    %cst = arith.constant 0.000000e+00 : f32
    %8 = vector.broadcast %cst : f32 to vector<16x1156xf32>
    %9 = arith.maximumf %7, %8 : vector<16x1156xf32>
    %c0_6 = arith.constant 0 : index
    %c0_7 = arith.constant 0 : index
    %10 = vector.load %arg4[%c0_6, %c0_7] : memref<1x1156xf32, #tpu.memory_space<vmem>>, vector<1x1156xf32>
    %11 = vector.broadcast %10 : vector<1x1156xf32> to vector<16x1156xf32>
    %12 = arith.mulf %9, %11 : vector<16x1156xf32>
    %13 = vector.extract_strided_slice %12 {offsets = [0, 0], sizes = [16, 1086], strides = [1, 1]} : vector<16x1156xf32> to vector<16x1086xf32>
    %14 = vector.extract_strided_slice %12 {offsets = [0, 1], sizes = [16, 1086], strides = [1, 1]} : vector<16x1156xf32> to vector<16x1086xf32>
    %15 = vector.extract_strided_slice %12 {offsets = [0, 2], sizes = [16, 1086], strides = [1, 1]} : vector<16x1156xf32> to vector<16x1086xf32>
    %16 = vector.extract_strided_slice %12 {offsets = [0, 34], sizes = [16, 1086], strides = [1, 1]} : vector<16x1156xf32> to vector<16x1086xf32>
    %17 = vector.extract_strided_slice %12 {offsets = [0, 35], sizes = [16, 1086], strides = [1, 1]} : vector<16x1156xf32> to vector<16x1086xf32>
    %18 = vector.extract_strided_slice %12 {offsets = [0, 36], sizes = [16, 1086], strides = [1, 1]} : vector<16x1156xf32> to vector<16x1086xf32>
    %19 = vector.extract_strided_slice %12 {offsets = [0, 68], sizes = [16, 1086], strides = [1, 1]} : vector<16x1156xf32> to vector<16x1086xf32>
    %20 = vector.extract_strided_slice %12 {offsets = [0, 69], sizes = [16, 1086], strides = [1, 1]} : vector<16x1156xf32> to vector<16x1086xf32>
    %21 = vector.extract_strided_slice %12 {offsets = [0, 70], sizes = [16, 1086], strides = [1, 1]} : vector<16x1156xf32> to vector<16x1086xf32>
    %22 = tpu.concatenate %13, %14, %15, %16, %17, %18, %19, %20, %21 in 0 : vector<16x1086xf32>, vector<16x1086xf32>, vector<16x1086xf32>, vector<16x1086xf32>, vector<16x1086xf32>, vector<16x1086xf32>, vector<16x1086xf32>, vector<16x1086xf32>, vector<16x1086xf32> -> vector<144x1086xf32>
    %c0_8 = arith.constant 0 : index
    %c0_9 = arith.constant 0 : index
    %23 = vector.load %arg5[%c0_8, %c0_9] : memref<12x144xf32, #tpu.memory_space<vmem>>, vector<12x144xf32>
    %cst_10 = arith.constant dense<0.000000e+00> : vector<12x1086xf32>
    %24 = tpu.matmul %23, %22, %cst_10 {dimension_numbers = #tpu.dot_dimension_numbers<[1], [0], [0], [1], [0, 0, 1, 1], [], []>, precision = #tpu.contract_precision<fp32>} : vector<12x144xf32>, vector<144x1086xf32>, vector<12x1086xf32> -> vector<12x1086xf32>
    %c0_11 = arith.constant 0 : index
    %c0_12 = arith.constant 0 : index
    %25 = vector.load %arg6[%c0_11, %c0_12] : memref<12x1xf32, #tpu.memory_space<vmem>>, vector<12x1xf32>
    %26 = vector.broadcast %25 : vector<12x1xf32> to vector<12x1086xf32>
    %27 = arith.addf %24, %26 : vector<12x1086xf32>
    %28 = math.tanh %27 : vector<12x1086xf32>
    %c0_13 = arith.constant 0 : index
    %c0_14 = arith.constant 0 : index
    %c0_15 = arith.constant 0 : index
    %29 = vector.load %arg7[%c0_13, %c0_14, %c0_15] : memref<1x12x1086xf32, #tpu.memory_space<vmem>>, vector<1x12x1086xf32>
    %30 = vector.shape_cast %29 : vector<1x12x1086xf32> to vector<12x1086xf32>
    %31 = vector.shape_cast %28 : vector<12x1086xf32> to vector<1x12x1086xf32>
    tpu.vector_store %arg7[%c0_13, %c0_14, %c0_15], %31 {strides = array<i32>} : memref<1x12x1086xf32, #tpu.memory_space<vmem>>, vector<1x12x1086xf32>,
    return
  }
  func.func @transform_0(%arg0: i32) -> (i32, i32, i32) {
    %c0_i32 = arith.constant 0 : i32
    %c0_i32_0 = arith.constant 0 : i32
    %c0_i32_1 = arith.constant 0 : i32
    return %arg0, %c0_i32, %c0_i32_0 : i32, i32, i32
  }
  func.func @transform_1(%arg0: i32) -> (i32, i32) {
    %c0_i32 = arith.constant 0 : i32
    %c0_i32_0 = arith.constant 0 : i32
    %c0_i32_1 = arith.constant 0 : i32
    return %c0_i32, %c0_i32_0 : i32, i32
  }
  func.func @transform_2(%arg0: i32) -> (i32, i32) {
    %c0_i32 = arith.constant 0 : i32
    %c0_i32_0 = arith.constant 0 : i32
    %c0_i32_1 = arith.constant 0 : i32
    return %c0_i32, %c0_i32_0 : i32, i32
  }
  func.func @transform_3(%arg0: i32) -> (i32, i32) {
    %c0_i32 = arith.constant 0 : i32
    %c0_i32_0 = arith.constant 0 : i32
    %c0_i32_1 = arith.constant 0 : i32
    return %c0_i32, %c0_i32_0 : i32, i32
  }
  func.func @transform_4(%arg0: i32) -> (i32, i32) {
    %c0_i32 = arith.constant 0 : i32
    %c0_i32_0 = arith.constant 0 : i32
    %c0_i32_1 = arith.constant 0 : i32
    return %c0_i32, %c0_i32_0 : i32, i32
  }
  func.func @transform_5(%arg0: i32) -> (i32, i32) {
    %c0_i32 = arith.constant 0 : i32
    %c0_i32_0 = arith.constant 0 : i32
    %c0_i32_1 = arith.constant 0 : i32
    return %c0_i32, %c0_i32_0 : i32, i32
  }
  func.func @transform_6(%arg0: i32) -> (i32, i32, i32) {
    %c0_i32 = arith.constant 0 : i32
    %c0_i32_0 = arith.constant 0 : i32
    %c0_i32_1 = arith.constant 0 : i32
    return %arg0, %c0_i32, %c0_i32_0 : i32, i32, i32
  }
}

</mosaic_0001>

<llo_original>
// kernel: tile.18
$region0: #{tile.18}
  #allocation2 [shape = 's32[1]{0}', space=sflag, size = 0x4, scoped, tag = 'scoped memory for tile.18']
  %s0 = inlined_call_operand.hbm [shape: f32[3], index: 0, kind: input, shape index: {}]
  %s1 = inlined_call_operand.vmem [shape: f32[4,3], index: 1, kind: output, shape index: {}]
  $region1: #{tile.18} parent=0
    #allocation0 [shape = 'u8[512]{0}', space=vmem, size = 0x400, scoped, tag = 'operand span for operand 0']
    #allocation1 [shape = 's32[1]{0}', space=sflag, size = 0x4, scoped, tag = 'scoped memory for tile.18']
    %2 = vsyncpa [#allocation1], 0
    // Predicated region
    $region2: #{tile.18} parent=1 // pred_check
      _
    $region3: #{tile.18} parent=1 // pred_check_branch
      %4 = sbr.rel (0) target = $region5
    $region4: #{tile.18} parent=1 // pred_region
      %s6 = ssub.s32 16, 16
      %7 = vsyncadd [#allocation1], %s6
      %s9 = sshll.u32 [#allocation0], 4
      %s10 = int_to_ptr.vmem [resolvable:$true] %s9
      %12 = dma.hbm_to_vmem [thread:$0]  %s0, 16, %s10, [#allocation1]
    $region5: #{tile.18} parent=1 // pred_fallthru
      _
    // Predicated region
    $region6: #{tile.18} parent=1 // pred_check
      _
    $region7: #{tile.18} parent=1 // pred_check_branch
      %14 = sbr.rel (0) target = $region9
    $region8: #{tile.18} parent=1 // pred_region
      %15 = dma.done [#allocation1], 16
    $region9: #{tile.18} parent=1 // pred_fallthru
      _
    %v16 = vld [vmem:[#allocation0] ss:$0 sm:$0xff]
    %17 = vst [vmem:[%s1] sm:$0xf] %v16
    %18 = vsyncpa [#allocation1], 1

// kernel: tile.13
$region0: #{tile.13}
  #allocation2 [shape = 's32[1]{0}', space=sflag, size = 0x4, scoped, tag = 'scoped memory for tile.13']
  %s0 = inlined_call_operand.hbm [shape: f32[16], index: 0, kind: input, shape index: {}]
  %s1 = inlined_call_operand.vmem [shape: f32[4,16], index: 1, kind: output, shape index: {}]
  $region1: #{tile.13} parent=0
    #allocation0 [shape = 'u8[512]{0}', space=vmem, size = 0x400, scoped, tag = 'operand span for operand 0']
    #allocation1 [shape = 's32[1]{0}', space=sflag, size = 0x4, scoped, tag = 'scoped memory for tile.13']
    %2 = vsyncpa [#allocation1], 0
    // Predicated region
    $region2: #{tile.13} parent=1 // pred_check
      _
    $region3: #{tile.13} parent=1 // pred_check_branch
      %4 = sbr.rel (0) target = $region5
    $region4: #{tile.13} parent=1 // pred_region
      %s6 = ssub.s32 16, 16
      %7 = vsyncadd [#allocation1], %s6
      %s9 = sshll.u32 [#allocation0], 4
      %s10 = int_to_ptr.vmem [resolvable:$true] %s9
      %12 = dma.hbm_to_vmem [thread:$0]  %s0, 16, %s10, [#allocation1]
    $region5: #{tile.13} parent=1 // pred_fallthru
      _
    // Predicated region
    $region6: #{tile.13} parent=1 // pred_check
      _
    $region7: #{tile.13} parent=1 // pred_check_branch
      %14 = sbr.rel (0) target = $region9
    $region8: #{tile.13} parent=1 // pred_region
      %15 = dma.done [#allocation1], 16
    $region9: #{tile.13} parent=1 // pred_fallthru
      _
    %v16 = vld [vmem:[#allocation0] ss:$0 sm:$0xff]
    %17 = vst [vmem:[%s1] sm:$0xf] %v16
    %18 = vsyncpa [#allocation1], 1

// kernel: tile.1
$region0: #{tile.1}
  %s0 = inlined_call_operand.vmem [shape: f32[4,3], index: 0, kind: input, shape index: {}]
  %s1 = inlined_call_operand.vmem [shape: f32[12,1], index: 1, kind: output, shape index: {}]
  $region1: #{tile.1} parent=0
    #allocation0 [shape = 'u8[4096]{0}', space=vmem, size = 0x1000, scoped, tag = 'scoped mem for input reshape']
    %s3 = sshll.u32 1, 4
    %s4 = ssub.s32 %s3, 1
    %v5 = vld [vmem:[%s0] sm:%s4]
    %6 = vst [vmem:[#allocation0] sm:%s4] %v5
    %v7 = vld [vmem:[#allocation0] sm:$0xf]
    %vm8 = vcmask 7168
    %9 = vst.msk [vmem:[%s1] ss:$3 sm:$0xf] %vm8, %v7
    %v10 = vld [vmem:[#allocation0] sm:$0xf]
    %11 = vrot.lane.b32.xlu0 %v10, 127
    %v12 = vpop.permute.xlu0 %11
    %vm13 = vcmask 7168
    %s14 = scalar_lea.vmem %s1, 1
    %15 = vst.msk [vmem:[%s14] ss:$3 sm:$0xf] %vm13, %v12
    %v16 = vld [vmem:[#allocation0] sm:$0xf]
    %17 = vrot.lane.b32.xlu0 %v16, 126
    %v18 = vpop.permute.xlu0 %17
    %vm19 = vcmask 7168
    %s20 = scalar_lea.vmem %s1, 2
    %21 = vst.msk [vmem:[%s20] ss:$3 sm:$0xf] %vm19, %v18

// kernel: tile.0
$region0: #{tile.0}
  %s0 = inlined_call_operand.vmem [shape: f32[4,16], index: 0, kind: input, shape index: {}]
  %s1 = inlined_call_operand.vmem [shape: f32[64,1], index: 1, kind: output, shape index: {}]
  $region1: #{tile.0} parent=0
    #allocation0 [shape = 'u8[4096]{0}', space=vmem, size = 0x1000, scoped, tag = 'scoped mem for input reshape']
    %s3 = sshll.u32 1, 4
    %s4 = ssub.s32 %s3, 1
    %v5 = vld [vmem:[%s0] sm:%s4]
    %6 = vst [vmem:[#allocation0] sm:%s4] %v5
    %v7 = vld [vmem:[#allocation0] sm:$0xf]
    %vm8 = vcmask 7168
    %9 = vst.msk [vmem:[%s1] ss:$16 sm:$0x3] %vm8, %v7
    %10 = vst.msk [vmem:[%s1] ss:$16 sm:$0xc] %vm8, %v7
    %v11 = vld [vmem:[#allocation0] sm:$0xf]
    %12 = vrot.lane.b32.xlu0 %v11, 127
    %v13 = vpop.permute.xlu0 %12
    %vm14 = vcmask 7168
    %s15 = scalar_lea.vmem %s1, 1
    %16 = vst.msk [vmem:[%s15] ss:$16 sm:$0x3] %vm14, %v13
    %s17 = scalar_lea.vmem %s1, 1
    %18 = vst.msk [vmem:[%s17] ss:$16 sm:$0xc] %vm14, %v13
    %v19 = vld [vmem:[#allocation0] sm:$0xf]
    %20 = vrot.lane.b32.xlu0 %v19, 126
    %v21 = vpop.permute.xlu0 %20
    %vm22 = vcmask 7168
    %s23 = scalar_lea.vmem %s1, 2
    %24 = vst.msk [vmem:[%s23] ss:$16 sm:$0x3] %vm22, %v21
    %s25 = scalar_lea.vmem %s1, 2
    %26 = vst.msk [vmem:[%s25] ss:$16 sm:$0xc] %vm22, %v21
    %v27 = vld [vmem:[#allocation0] sm:$0xf]
    %28 = vrot.lane.b32.xlu0 %v27, 125
    %v29 = vpop.permute.xlu0 %28
    %vm30 = vcmask 7168
    %s31 = scalar_lea.vmem %s1, 3
    %32 = vst.msk [vmem:[%s31] ss:$16 sm:$0x3] %vm30, %v29
    %s33 = scalar_lea.vmem %s1, 3
    %34 = vst.msk [vmem:[%s33] ss:$16 sm:$0xc] %vm30, %v29
    %v35 = vld [vmem:[#allocation0] sm:$0xf]
    %36 = vrot.lane.b32.xlu0 %v35, 124
    %v37 = vpop.permute.xlu0 %36
    %vm38 = vcmask 7168
    %s39 = scalar_lea.vmem %s1, 4
    %40 = vst.msk [vmem:[%s39] ss:$16 sm:$0x3] %vm38, %v37
    %s41 = scalar_lea.vmem %s1, 4
    %42 = vst.msk [vmem:[%s41] ss:$16 sm:$0xc] %vm38, %v37
    %v43 = vld [vmem:[#allocation0] sm:$0xf]
    %44 = vrot.lane.b32.xlu0 %v43, 123
    %v45 = vpop.permute.xlu0 %44
    %vm46 = vcmask 7168
    %s47 = scalar_lea.vmem %s1, 5
    %48 = vst.msk [vmem:[%s47] ss:$16 sm:$0x3] %vm46, %v45
    %s49 = scalar_lea.vmem %s1, 5
    %50 = vst.msk [vmem:[%s49] ss:$16 sm:$0xc] %vm46, %v45
    %v51 = vld [vmem:[#allocation0] sm:$0xf]
    %52 = vrot.lane.b32.xlu0 %v51, 122
    %v53 = vpop.permute.xlu0 %52
    %vm54 = vcmask 7168
    %s55 = scalar_lea.vmem %s1, 6
    %56 = vst.msk [vmem:[%s55] ss:$16 sm:$0x3] %vm54, %v53
    %s57 = scalar_lea.vmem %s1, 6
    %58 = vst.msk [vmem:[%s57] ss:$16 sm:$0xc] %vm54, %v53
    %v59 = vld [vmem:[#allocation0] sm:$0xf]
    %60 = vrot.lane.b32.xlu0 %v59, 121
    %v61 = vpop.permute.xlu0 %60
    %vm62 = vcmask 7168
    %s63 = scalar_lea.vmem %s1, 7
    %64 = vst.msk [vmem:[%s63] ss:$16 sm:$0x3] %vm62, %v61
    %s65 = scalar_lea.vmem %s1, 7
    %66 = vst.msk [vmem:[%s65] ss:$16 sm:$0xc] %vm62, %v61
    %v67 = vld [vmem:[#allocation0] sm:$0xf]
    %68 = vrot.lane.b32.xlu0 %v67, 120
    %v69 = vpop.permute.xlu0 %68
    %vm70 = vcmask 7168
    %s71 = scalar_lea.vmem %s1, 8
    %72 = vst.msk [vmem:[%s71] ss:$16 sm:$0x3] %vm70, %v69
    %s73 = scalar_lea.vmem %s1, 8
    %74 = vst.msk [vmem:[%s73] ss:$16 sm:$0xc] %vm70, %v69
    %v75 = vld [vmem:[#allocation0] sm:$0xf]
    %76 = vrot.lane.b32.xlu0 %v75, 119
    %v77 = vpop.permute.xlu0 %76
    %vm78 = vcmask 7168
    %s79 = scalar_lea.vmem %s1, 9
    %80 = vst.msk [vmem:[%s79] ss:$16 sm:$0x3] %vm78, %v77
    %s81 = scalar_lea.vmem %s1, 9
    %82 = vst.msk [vmem:[%s81] ss:$16 sm:$0xc] %vm78, %v77
    %v83 = vld [vmem:[#allocation0] sm:$0xf]
    %84 = vrot.lane.b32.xlu0 %v83, 118
    %v85 = vpop.permute.xlu0 %84
    %vm86 = vcmask 7168
    %s87 = scalar_lea.vmem %s1, 10
    %88 = vst.msk [vmem:[%s87] ss:$16 sm:$0x3] %vm86, %v85
    %s89 = scalar_lea.vmem %s1, 10
    %90 = vst.msk [vmem:[%s89] ss:$16 sm:$0xc] %vm86, %v85
    %v91 = vld [vmem:[#allocation0] sm:$0xf]
    %92 = vrot.lane.b32.xlu0 %v91, 117
    %v93 = vpop.permute.xlu0 %92
    %vm94 = vcmask 7168
    %s95 = scalar_lea.vmem %s1, 11
    %96 = vst.msk [vmem:[%s95] ss:$16 sm:$0x3] %vm94, %v93
    %s97 = scalar_lea.vmem %s1, 11
    %98 = vst.msk [vmem:[%s97] ss:$16 sm:$0xc] %vm94, %v93
    %v99 = vld [vmem:[#allocation0] sm:$0xf]
    %100 = vrot.lane.b32.xlu0 %v99, 116
    %v101 = vpop.permute.xlu0 %100
    %vm102 = vcmask 7168
    %s103 = scalar_lea.vmem %s1, 12
    %104 = vst.msk [vmem:[%s103] ss:$16 sm:$0x3] %vm102, %v101
    %s105 = scalar_lea.vmem %s1, 12
    %106 = vst.msk [vmem:[%s105] ss:$16 sm:$0xc] %vm102, %v101
    %v107 = vld [vmem:[#allocation0] sm:$0xf]
    %108 = vrot.lane.b32.xlu0 %v107, 115
    %v109 = vpop.permute.xlu0 %108
    %vm110 = vcmask 7168
    %s111 = scalar_lea.vmem %s1, 13
    %112 = vst.msk [vmem:[%s111] ss:$16 sm:$0x3] %vm110, %v109
    %s113 = scalar_lea.vmem %s1, 13
    %114 = vst.msk [vmem:[%s113] ss:$16 sm:$0xc] %vm110, %v109
    %v115 = vld [vmem:[#allocation0] sm:$0xf]
    %116 = vrot.lane.b32.xlu0 %v115, 114
    %v117 = vpop.permute.xlu0 %116
    %vm118 = vcmask 7168
    %s119 = scalar_lea.vmem %s1, 14
    %120 = vst.msk [vmem:[%s119] ss:$16 sm:$0x3] %vm118, %v117
    %s121 = scalar_lea.vmem %s1, 14
    %122 = vst.msk [vmem:[%s121] ss:$16 sm:$0xc] %vm118, %v117
    %v123 = vld [vmem:[#allocation0] sm:$0xf]
    %124 = vrot.lane.b32.xlu0 %v123, 113
    %v125 = vpop.permute.xlu0 %124
    %vm126 = vcmask 7168
    %s127 = scalar_lea.vmem %s1, 15
    %128 = vst.msk [vmem:[%s127] ss:$16 sm:$0x3] %vm126, %v125
    %s129 = scalar_lea.vmem %s1, 15
    %130 = vst.msk [vmem:[%s129] ss:$16 sm:$0xc] %vm126, %v125

// kernel: decoder_forward.2
$region0: #{decoder_forward.2}
  #allocation0 [shape = 'u32[]', space=smem, size = 0x4, offset = 0x4, fixed_abs, tag = 'smem constant byte address 0x4 - core index']
  #allocation1 [shape = 'u32[144,128]{1,0:T(1,128)}', space=vmem, size = 0x12000, scoped, tag = 'internal scratch']
  %s0 = inlined_call_operand.vmem [shape: f32[2,36,256], index: 0, kind: input, shape index: {}]
  %s1 = inlined_call_operand.vmem [shape: f32[64,36], index: 1, kind: input, shape index: {}]
  %s2 = inlined_call_operand.vmem [shape: f32[64,1], index: 2, kind: input, shape index: {}]
  %s3 = inlined_call_operand.vmem [shape: f32[2,64,256], index: 3, kind: output, shape index: {0}]
  %s4 = inlined_call_operand.vmem [shape: f32[2,64,1], index: 4, kind: output, shape index: {1}]
  %s5 = inlined_call_operand.vmem [shape: f32[2,64,1], index: 5, kind: output, shape index: {2}]
  %6 = xla_tuple %s3, %s4, %s5
  %s7 = sld [smem:[#allocation0]]
  $region61: #{decoder_forward.2} parent=0
    _
  %s9 = ssub.s32 1, %s7
  %s10 = scalar_select 0, %s9, %s7
  loop: start=0, step=1, limit=4
  $region2: #{decoder_forward.2} parent=0 // loop_pre_header
    _
  $region3: #{decoder_forward.2} parent=0 // loop_header
    %s12 = sphi 0, %s16
    %p13 = scmp.ge.s32.totalorder %s12, 4
    %s22 = sphi 0, %s24
    %s25 = sphi 0, %s22
    %s26 = sphi 0, %s25
    %s42 = sphi 0, %s26
    %s46 = sphi 0, %s46
    %s48 = sphi 0, %s46
    %s49 = sphi 0, %s48
    %s63 = sphi 0, %s49
    %s67 = sphi 0, %s67
    %s69 = sphi 0, %s67
    %s70 = sphi 0, %s69
    %s84 = sphi 0, %s70
    %s90 = sphi 0, %s92
    %s93 = sphi 0, %s90
    %s94 = sphi 0, %s93
    %s110 = sphi 0, %s94
    %s116 = sphi 0, %s118
    %s119 = sphi 0, %s116
    %s120 = sphi 0, %s119
    %s136 = sphi 0, %s120
    %s142 = sphi 0, %s144
    %s145 = sphi 0, %s142
    %s146 = sphi 0, %s145
    %s162 = sphi 0, %s146
  $region4: #{decoder_forward.2} parent=0 // loop_header_branch
    %15 = sbr.rel (%p13) target = $region8
  $region5: #{decoder_forward.2} parent=0 // loop_body
    %s17 = ssub.s32 %s12, 1
    %s18 = ssub.s32 %s12, 2
    %s19 = sadd.s32 %s12, 1
    %s20 = ssub.s32 %s12, %s19
    %p21 = scmp.eq.s32.totalorder %s20, 0
    %s23 = sadd.s32 %s22, 1
    %s24 = scalar_select %p21, %s22, %s23
    %p27 = pneg %p21
    %p28 = scmp.eq.s32.totalorder %s12, 1
    %p29 = por %p27, %p28
    %p30 = scmp.ne.s32.totalorder %s22, %s25
    %p31 = scmp.eq.s32.totalorder %s12, 0
    %p32 = por %p30, %p31
    %p33 = scmp.ne.s32.totalorder %s22, %s25
    %p34 = scmp.eq.s32.totalorder %s17, 1
    %p35 = por %p33, %p34
    %p36 = scmp.ne.s32.totalorder %s25, %s26
    %p37 = scmp.eq.s32.totalorder %s17, 0
    %p38 = por %p36, %p37
    %p39 = scmp.ne.s32.totalorder %s25, %s26
    %p40 = scmp.eq.s32.totalorder %s18, 1
    %p41 = por %p39, %p40
    %p43 = scmp.ne.s32.totalorder %s26, %s42
    %p44 = scmp.eq.s32.totalorder %s18, 0
    %p45 = por %p43, %p44
    %s47 = sadd.s32 %s46, 1
    %p50 = scmp.eq.s32.totalorder %s12, 1
    %p51 = scmp.ne.s32.totalorder %s46, %s48
    %p52 = scmp.eq.s32.totalorder %s12, 0
    %p53 = por %p51, %p52
    %p54 = scmp.ne.s32.totalorder %s46, %s48
    %p55 = scmp.eq.s32.totalorder %s17, 1
    %p56 = por %p54, %p55
    %p57 = scmp.ne.s32.totalorder %s48, %s49
    %p58 = scmp.eq.s32.totalorder %s17, 0
    %p59 = por %p57, %p58
    %p60 = scmp.ne.s32.totalorder %s48, %s49
    %p61 = scmp.eq.s32.totalorder %s18, 1
    %p62 = por %p60, %p61
    %p64 = scmp.ne.s32.totalorder %s49, %s63
    %p65 = scmp.eq.s32.totalorder %s18, 0
    %p66 = por %p64, %p65
    %s68 = sadd.s32 %s67, 1
    %p71 = scmp.eq.s32.totalorder %s12, 1
    %p72 = scmp.ne.s32.totalorder %s67, %s69
    %p73 = scmp.eq.s32.totalorder %s12, 0
    %p74 = por %p72, %p73
    %p75 = scmp.ne.s32.totalorder %s67, %s69
    %p76 = scmp.eq.s32.totalorder %s17, 1
    %p77 = por %p75, %p76
    %p78 = scmp.ne.s32.totalorder %s69, %s70
    %p79 = scmp.eq.s32.totalorder %s17, 0
    %p80 = por %p78, %p79
    %p81 = scmp.ne.s32.totalorder %s69, %s70
    %p82 = scmp.eq.s32.totalorder %s18, 1
    %p83 = por %p81, %p82
    %p85 = scmp.ne.s32.totalorder %s70, %s84
    %p86 = scmp.eq.s32.totalorder %s18, 0
    %p87 = por %p85, %p86
    %s88 = ssub.s32 %s12, %s19
    %p89 = scmp.eq.s32.totalorder %s88, 0
    %s91 = sadd.s32 %s90, 1
    %s92 = scalar_select %p89, %s90, %s91
    %p95 = pneg %p89
    %p96 = scmp.eq.s32.totalorder %s12, 1
    %p97 = por %p95, %p96
    %p98 = scmp.ne.s32.totalorder %s90, %s93
    %p99 = scmp.eq.s32.totalorder %s12, 0
    %p100 = por %p98, %p99
    %p101 = scmp.ne.s32.totalorder %s90, %s93
    %p102 = scmp.eq.s32.totalorder %s17, 1
    %p103 = por %p101, %p102
    %p104 = scmp.ne.s32.totalorder %s93, %s94
    %p105 = scmp.eq.s32.totalorder %s17, 0
    %p106 = por %p104, %p105
    %p107 = scmp.ne.s32.totalorder %s93, %s94
    %p108 = scmp.eq.s32.totalorder %s18, 1
    %p109 = por %p107, %p108
    %p111 = scmp.ne.s32.totalorder %s94, %s110
    %p112 = scmp.eq.s32.totalorder %s18, 0
    %p113 = por %p111, %p112
    %s114 = ssub.s32 %s12, %s19
    %p115 = scmp.eq.s32.totalorder %s114, 0
    %s117 = sadd.s32 %s116, 1
    %s118 = scalar_select %p115, %s116, %s117
    %p121 = pneg %p115
    %p122 = scmp.eq.s32.totalorder %s12, 1
    %p123 = por %p121, %p122
    %p124 = scmp.ne.s32.totalorder %s116, %s119
    %p125 = scmp.eq.s32.totalorder %s12, 0
    %p126 = por %p124, %p125
    %p127 = scmp.ne.s32.totalorder %s116, %s119
    %p128 = scmp.eq.s32.totalorder %s17, 1
    %p129 = por %p127, %p128
    %p130 = scmp.ne.s32.totalorder %s119, %s120
    %p131 = scmp.eq.s32.totalorder %s17, 0
    %p132 = por %p130, %p131
    %p133 = scmp.ne.s32.totalorder %s119, %s120
    %p134 = scmp.eq.s32.totalorder %s18, 1
    %p135 = por %p133, %p134
    %p137 = scmp.ne.s32.totalorder %s120, %s136
    %p138 = scmp.eq.s32.totalorder %s18, 0
    %p139 = por %p137, %p138
    %s140 = ssub.s32 %s12, %s19
    %p141 = scmp.eq.s32.totalorder %s140, 0
    %s143 = sadd.s32 %s142, 1
    %s144 = scalar_select %p141, %s142, %s143
    %p147 = pneg %p141
    %p148 = scmp.eq.s32.totalorder %s12, 1
    %p149 = por %p147, %p148
    %p150 = scmp.ne.s32.totalorder %s142, %s145
    %p151 = scmp.eq.s32.totalorder %s12, 0
    %p152 = por %p150, %p151
    %p153 = scmp.ne.s32.totalorder %s142, %s145
    %p154 = scmp.eq.s32.totalorder %s17, 1
    %p155 = por %p153, %p154
    %p156 = scmp.ne.s32.totalorder %s145, %s146
    %p157 = scmp.eq.s32.totalorder %s17, 0
    %p158 = por %p156, %p157
    %p159 = scmp.ne.s32.totalorder %s145, %s146
    %p160 = scmp.eq.s32.totalorder %s18, 1
    %p161 = por %p159, %p160
    %p163 = scmp.ne.s32.totalorder %s146, %s162
    %p164 = scmp.eq.s32.totalorder %s18, 0
    %p165 = por %p163, %p164
    %p166 = scmp.le.s32.totalorder 1, %s12
    %p167 = scmp.lt.s32.totalorder %s12, 3
    %p168 = pnand %p166, %p167
    %p169 = pneg %p168
    // Predicated region
    $region9: #{decoder_forward.2} parent=5 // pred_check
      _
    $region10: #{decoder_forward.2} parent=5 // pred_check_branch
      %171 = sbr.rel (%p168) target = $region12
    $region11: #{decoder_forward.2} parent=5 // pred_region
      %s172 = ssub.s32 %s12, 1
      // Predicated region
      $region13: #{decoder_forward.2} parent=11 // pred_check
        %p173 = pneg %p59
      $region14: #{decoder_forward.2} parent=11 // pred_check_branch
        %175 = sbr.rel (%p173) target = $region16
      $region15: #{decoder_forward.2} parent=11 // pred_region
        _
      $region16: #{decoder_forward.2} parent=11 // pred_fallthru
        _
      // Predicated region
      $region17: #{decoder_forward.2} parent=11 // pred_check
        %p176 = pneg %p80
      $region18: #{decoder_forward.2} parent=11 // pred_check_branch
        %178 = sbr.rel (%p176) target = $region20
      $region19: #{decoder_forward.2} parent=11 // pred_region
        _
      $region20: #{decoder_forward.2} parent=11 // pred_fallthru
        _
    $region12: #{decoder_forward.2} parent=5 // pred_fallthru
      _
    %p179 = scmp.lt.s32.totalorder %s12, 2
    // Predicated region
    $region21: #{decoder_forward.2} parent=5 // pred_check
      %p180 = pneg %p179
    $region22: #{decoder_forward.2} parent=5 // pred_check_branch
      %182 = sbr.rel (%p180) target = $region24
    $region23: #{decoder_forward.2} parent=5 // pred_region
      // Predicated region
      $region25: #{decoder_forward.2} parent=23 // pred_check
        %p183 = pneg %p32
      $region26: #{decoder_forward.2} parent=23 // pred_check_branch
        %185 = sbr.rel (%p183) target = $region28
      $region27: #{decoder_forward.2} parent=23 // pred_region
        %p186 = scmp.lt.s32.totalorder %s12, 1
        %s187 = scalar_select %p186, %s12, 1
        %s188 = smul.addr %s187, 10
        %s189 = smul.addr %s188, 8
        %s190 = scalar_lea.vmem %s0, %s189
      $region28: #{decoder_forward.2} parent=23 // pred_fallthru
        _
    $region24: #{decoder_forward.2} parent=5 // pred_fallthru
      _
    %p191 = scmp.le.s32.totalorder 1, %s12
    %p192 = scmp.lt.s32.totalorder %s12, 3
    %p193 = pnand %p191, %p192
    %p194 = pneg %p193
    // Predicated region
    $region29: #{decoder_forward.2} parent=5 // pred_check
      _
    $region30: #{decoder_forward.2} parent=5 // pred_check_branch
      %196 = sbr.rel (%p193) target = $region32
    $region31: #{decoder_forward.2} parent=5 // pred_region
      %s197 = ssub.s32 %s12, 1
      %p198 = scmp.lt.s32.totalorder %s17, 1
      %s199 = scalar_select %p198, %s17, 1
      %s200 = smul.addr %s199, 10
      %s201 = smul.addr %s200, 8
      %s202 = scalar_lea.vmem %s0, %s201
      %p203 = pneg %p38
      %p204 = pneg %p35
      %p205 = pneg %p59
      %p206 = pneg %p56
      %p207 = pneg %p80
      %p208 = pneg %p77
      %p209 = pneg %p106
      %p210 = pneg %p103
      %p211 = scmp.lt.s32.totalorder %s17, 1
      %s212 = scalar_select %p211, %s17, 1
      %s213 = smul.addr %s212, 16
      %s214 = smul.addr %s213, 8
      %s215 = scalar_lea.vmem %s3, %s214
      %p216 = pneg %p132
      %p217 = pneg %p129
      %p218 = scmp.lt.s32.totalorder %s17, 1
      %s219 = scalar_select %p218, %s17, 1
      %s220 = smul.addr %s219, 8
      %s221 = smul.addr %s220, 8
      %s222 = scalar_lea.vmem %s4, %s221
      %p223 = pneg %p158
      %p224 = pneg %p155
      %p225 = scmp.lt.s32.totalorder %s17, 1
      %s226 = scalar_select %p225, %s17, 1
      %s227 = smul.addr %s226, 8
      %s228 = smul.addr %s227, 8
      %s229 = scalar_lea.vmem %s5, %s228
      %p230 = scmp.lt.s32.totalorder %s17, 1
      %s231 = scalar_select %p230, %s17, 1
      %s232 = smul.addr %s231, 10
      %s233 = smul.addr %s232, 8
      %s234 = scalar_lea.vmem %s0, %s233
      %p235 = scmp.lt.s32.totalorder %s17, 1
      %s236 = scalar_select %p235, %s17, 1
      %s237 = smul.addr %s236, 16
      %s238 = smul.addr %s237, 8
      %s239 = scalar_lea.vmem %s3, %s238
      %p240 = scmp.lt.s32.totalorder %s17, 1
      %s241 = scalar_select %p240, %s17, 1
      %s242 = smul.addr %s241, 8
      %s243 = smul.addr %s242, 8
      %s244 = scalar_lea.vmem %s4, %s243
      %p245 = scmp.lt.s32.totalorder %s17, 1
      %s246 = scalar_select %p245, %s17, 1
      %s247 = smul.addr %s246, 8
      %s248 = smul.addr %s247, 8
      %s249 = scalar_lea.vmem %s5, %s248
      %v250 = vld [vmem:[%s1] sm:$0xff]
      %v251 = vld [vmem:[%s1 + $0x8] sm:$0xff]
      %v252 = vld [vmem:[%s1 + $0x10] sm:$0xff]
      %v253 = vld [vmem:[%s1 + $0x18] sm:$0xff]
      %v254 = vld [vmem:[%s1 + $0x20] sm:$0xff]
      %v255 = vld [vmem:[%s1 + $0x28] sm:$0xff]
      %v256 = vld [vmem:[%s1 + $0x30] sm:$0xff]
      %v257 = vld [vmem:[%s1 + $0x38] sm:$0xff]
      %v258 = vld [vmem:[%s234] sm:$0xff]
      %v259 = vld [vmem:[%s234 + $0x8] sm:$0xff]
      %v260 = vld [vmem:[%s234 + $0x10] sm:$0xff]
      %v261 = vld [vmem:[%s234 + $0x18] sm:$0xff]
      %v262 = vld [vmem:[%s234 + $0x20] sm:$0xff]
      %v263 = vld [vmem:[%s234 + $0x28] sm:$0xff]
      %v264 = vld [vmem:[%s234 + $0x30] sm:$0xff]
      %v265 = vld [vmem:[%s234 + $0x38] sm:$0xff]
      %v266 = vld [vmem:[%s234 + $0x40] sm:$0xf]
      %v267 = vld [vmem:[%s234 + $0x48] sm:$0xf]
      %v268 = vld [vmem:[%s2] sm:$0xff]
      %v269 = vld [vmem:[%s2 + $0x8] sm:$0xff]
      %v270 = vld [vmem:[%s2 + $0x10] sm:$0xff]
      %v271 = vld [vmem:[%s2 + $0x18] sm:$0xff]
      %v272 = vld [vmem:[%s2 + $0x20] sm:$0xff]
      %v273 = vld [vmem:[%s2 + $0x28] sm:$0xff]
      %v274 = vld [vmem:[%s2 + $0x30] sm:$0xff]
      %v275 = vld [vmem:[%s2 + $0x38] sm:$0xff]
      %277 = vset.pattern.permute.xlu0 0
      %278 = vperm.xlu0 %277, %v268
      %v279 = vpop.permute.xlu0 %278
      %282 = vset.pattern.permute.xlu0 0
      %283 = vperm.xlu0 %282, %v269
      %v284 = vpop.permute.xlu0 %283
      %287 = vset.pattern.permute.xlu0 0
      %288 = vperm.xlu0 %287, %v270
      %v289 = vpop.permute.xlu0 %288
      %292 = vset.pattern.permute.xlu0 0
      %293 = vperm.xlu0 %292, %v271
      %v294 = vpop.permute.xlu0 %293
      %297 = vset.pattern.permute.xlu0 0
      %298 = vperm.xlu0 %297, %v272
      %v299 = vpop.permute.xlu0 %298
      %302 = vset.pattern.permute.xlu0 0
      %303 = vperm.xlu0 %302, %v273
      %v304 = vpop.permute.xlu0 %303
      %307 = vset.pattern.permute.xlu0 0
      %308 = vperm.xlu0 %307, %v274
      %v309 = vpop.permute.xlu0 %308
      %312 = vset.pattern.permute.xlu0 0
      %313 = vperm.xlu0 %312, %v275
      %v314 = vpop.permute.xlu0 %313
      %vm316 = vcmask 293888
      %v318 = vsel %vm316, %v250, 0
      %v321 = vsel %vm316, %v251, 0
      %v324 = vsel %vm316, %v252, 0
      %v327 = vsel %vm316, %v253, 0
      %v330 = vsel %vm316, %v254, 0
      %v333 = vsel %vm316, %v255, 0
      %v336 = vsel %vm316, %v256, 0
      %v339 = vsel %vm316, %v257, 0
      %vm341 = vcmask 1043456
      %v343 = vsel %vm341, %v266, 0
      %v346 = vsel %vm341, %v267, 0
      %348 = vmatprep.subr.mxu0 0.0
      %349 = vmatpush1.msra.mxu0 0.0
      %350 = vmatprep.subr.mxu0 0.0
      %351 = vmatpush1.msra.mxu0 0.0
      %352 = vmatprep.subr.mxu0 0.0
      %353 = vmatpush1.msra.mxu0 0.0
      %354 = vmatprep.subr.mxu0 0.0
      %355 = vmatpush1.msra.mxu0 0.0
      %356 = vmatprep.subr.mxu0 0.0
      %357 = vmatpush1.msra.mxu0 0.0
      %358 = vmatprep.subr.mxu0 0.0
      %359 = vmatpush1.msra.mxu0 0.0
      %360 = vmatprep.subr.mxu0 0.0
      %361 = vmatpush1.msra.mxu0 0.0
      %362 = vmatprep.subr.mxu0 0.0
      %363 = vmatpush1.msra.mxu0 0.0
      %364 = vmatprep.subr.mxu0 0.0
      %365 = vmatpush1.msra.mxu0 0.0
      %366 = vmatprep.subr.mxu0 0.0
      %367 = vmatpush1.msra.mxu0 0.0
      %368 = vmatprep.subr.mxu0 0.0
      %369 = vmatpush1.msra.mxu0 0.0
      %v370 = vand.u32 %v346, 4294901760
      %371 = vmatprep.subr.mxu0 %v370
      %v372 = vand.u32 %v343, 4294901760
      %373 = vmatpush1.msra.mxu0 %v372
      %v374 = vand.u32 %v265, 4294901760
      %375 = vmatprep.subr.mxu0 %v374
      %v376 = vand.u32 %v264, 4294901760
      %377 = vmatpush1.msra.mxu0 %v376
      %v378 = vand.u32 %v263, 4294901760
      %379 = vmatprep.subr.mxu0 %v378
      %v380 = vand.u32 %v262, 4294901760
      %381 = vmatpush1.msra.mxu0 %v380
      %v382 = vand.u32 %v261, 4294901760
      %383 = vmatprep.subr.mxu0 %v382
      %v384 = vand.u32 %v260, 4294901760
      %385 = vmatpush1.msra.mxu0 %v384
      %v386 = vand.u32 %v259, 4294901760
      %387 = vmatprep.subr.mxu0 %v386
      %v388 = vand.u32 %v258, 4294901760
      %389 = vmatpush1.msra.mxu0 %v388
      %390 = vmatprep.subr.mxu0 0.0
      %391 = vmatpush2.msra.mxu0 0.0
      %392 = vmatprep.subr.mxu0 0.0
      %393 = vmatpush2.msra.mxu0 0.0
      %394 = vmatprep.subr.mxu0 0.0
      %395 = vmatpush2.msra.mxu0 0.0
      %396 = vmatprep.subr.mxu0 0.0
      %397 = vmatpush2.msra.mxu0 0.0
      %398 = vmatprep.subr.mxu0 0.0
      %399 = vmatpush2.msra.mxu0 0.0
      %400 = vmatprep.subr.mxu0 0.0
      %401 = vmatpush2.msra.mxu0 0.0
      %402 = vmatprep.subr.mxu0 0.0
      %403 = vmatpush2.msra.mxu0 0.0
      %404 = vmatprep.subr.mxu0 0.0
      %405 = vmatpush2.msra.mxu0 0.0
      %406 = vmatprep.subr.mxu0 0.0
      %407 = vmatpush2.msra.mxu0 0.0
      %408 = vmatprep.subr.mxu0 0.0
      %409 = vmatpush2.msra.mxu0 0.0
      %410 = vmatprep.subr.mxu0 0.0
      %411 = vmatpush2.msra.mxu0 0.0
      %412 = vmatprep.subr.mxu0 0.0
      %413 = vmatpush2.msra.mxu0 0.0
      %414 = vmatprep.subr.mxu0 0.0
      %415 = vmatpush2.msra.mxu0 0.0
      %416 = vmatprep.subr.mxu0 0.0
      %417 = vmatpush2.msra.mxu0 0.0
      %418 = vmatprep.subr.mxu0 0.0
      %419 = vmatpush2.msra.mxu0 0.0
      %420 = vmatprep.subr.mxu0 0.0
      %421 = vmatpush2.msra.mxu0 0.0
      %422 = vmatprep.mubr.f32.mxu0 0.0
      %v423 = vand.u32 %v318, 4294901760
      %v424 = vsub.f32 %v318, %v423
      %v425 = vand.u32 %v424, 4294901760
      %v426 = vsub.f32 %v424, %v425
      %v427 = vand.u32 %v426, 4294901760
      %428 = vmatmul.mubr.f32.gmra.mxu0 %v427
      %v429 = vpop.f32.mrf.mxu0
      %v430 = vadd.f32 %v279, %v429
      %v431 = vpop.f32.mrf.mxu0
      %v432 = vadd.f32 %v279, %v431
      %433 = vmatprep.mubr.f32.mxu0 0.0
      %v434 = vand.u32 %v321, 4294901760
      %v435 = vsub.f32 %v321, %v434
      %v436 = vand.u32 %v435, 4294901760
      %v437 = vsub.f32 %v435, %v436
      %v438 = vand.u32 %v437, 4294901760
      %439 = vmatmul.mubr.f32.gmra.mxu0 %v438
      %v440 = vpop.f32.mrf.mxu0
      %v441 = vadd.f32 %v284, %v440
      %v442 = vpop.f32.mrf.mxu0
      %v443 = vadd.f32 %v284, %v442
      %444 = vmatprep.mubr.f32.mxu0 0.0
      %v445 = vand.u32 %v324, 4294901760
      %v446 = vsub.f32 %v324, %v445
      %v447 = vand.u32 %v446, 4294901760
      %v448 = vsub.f32 %v446, %v447
      %v449 = vand.u32 %v448, 4294901760
      %450 = vmatmul.mubr.f32.gmra.mxu0 %v449
      %v451 = vpop.f32.mrf.mxu0
      %v452 = vadd.f32 %v289, %v451
      %v453 = vpop.f32.mrf.mxu0
      %v454 = vadd.f32 %v289, %v453
      %455 = vmatprep.mubr.f32.mxu0 0.0
      %v456 = vand.u32 %v327, 4294901760
      %v457 = vsub.f32 %v327, %v456
      %v458 = vand.u32 %v457, 4294901760
      %v459 = vsub.f32 %v457, %v458
      %v460 = vand.u32 %v459, 4294901760
      %461 = vmatmul.mubr.f32.gmra.mxu0 %v460
      %v462 = vpop.f32.mrf.mxu0
      %v463 = vadd.f32 %v294, %v462
      %v464 = vpop.f32.mrf.mxu0
      %v465 = vadd.f32 %v294, %v464
      %466 = vmatprep.mubr.f32.mxu0 0.0
      %v467 = vand.u32 %v330, 4294901760
      %v468 = vsub.f32 %v330, %v467
      %v469 = vand.u32 %v468, 4294901760
      %v470 = vsub.f32 %v468, %v469
      %v471 = vand.u32 %v470, 4294901760
      %472 = vmatmul.mubr.f32.gmra.mxu0 %v471
      %v473 = vpop.f32.mrf.mxu0
      %v474 = vadd.f32 %v299, %v473
      %v475 = vpop.f32.mrf.mxu0
      %v476 = vadd.f32 %v299, %v475
      %477 = vmatprep.mubr.f32.mxu0 0.0
      %v478 = vand.u32 %v333, 4294901760
      %v479 = vsub.f32 %v333, %v478
      %v480 = vand.u32 %v479, 4294901760
      %v481 = vsub.f32 %v479, %v480
      %v482 = vand.u32 %v481, 4294901760
      %483 = vmatmul.mubr.f32.gmra.mxu0 %v482
      %v484 = vpop.f32.mrf.mxu0
      %v485 = vadd.f32 %v304, %v484
      %v486 = vpop.f32.mrf.mxu0
      %v487 = vadd.f32 %v304, %v486
      %488 = vmatprep.mubr.f32.mxu0 0.0
      %v489 = vand.u32 %v336, 4294901760
      %v490 = vsub.f32 %v336, %v489
      %v491 = vand.u32 %v490, 4294901760
      %v492 = vsub.f32 %v490, %v491
      %v493 = vand.u32 %v492, 4294901760
      %494 = vmatmul.mubr.f32.gmra.mxu0 %v493
      %v495 = vpop.f32.mrf.mxu0
      %v496 = vadd.f32 %v309, %v495
      %v497 = vpop.f32.mrf.mxu0
      %v498 = vadd.f32 %v309, %v497
      %499 = vmatprep.mubr.f32.mxu0 0.0
      %v500 = vand.u32 %v339, 4294901760
      %v501 = vsub.f32 %v339, %v500
      %v502 = vand.u32 %v501, 4294901760
      %v503 = vsub.f32 %v501, %v502
      %v504 = vand.u32 %v503, 4294901760
      %505 = vmatmul.mubr.f32.gmra.mxu0 %v504
      %v506 = vpop.f32.mrf.mxu0
      %v507 = vadd.f32 %v314, %v506
      %v508 = vpop.f32.mrf.mxu0
      %v509 = vadd.f32 %v314, %v508
      %510 = vdwg.mxu0
      %511 = vmatprep.subr.mxu0 0.0
      %512 = vmatpush1.msra.mxu0 0.0
      %513 = vmatprep.subr.mxu0 0.0
      %514 = vmatpush1.msra.mxu0 0.0
      %515 = vmatprep.subr.mxu0 0.0
      %516 = vmatpush1.msra.mxu0 0.0
      %517 = vmatprep.subr.mxu0 0.0
      %518 = vmatpush1.msra.mxu0 0.0
      %519 = vmatprep.subr.mxu0 0.0
      %520 = vmatpush1.msra.mxu0 0.0
      %521 = vmatprep.subr.mxu0 0.0
      %522 = vmatpush1.msra.mxu0 0.0
      %523 = vmatprep.subr.mxu0 0.0
      %524 = vmatpush1.msra.mxu0 0.0
      %525 = vmatprep.subr.mxu0 0.0
      %526 = vmatpush1.msra.mxu0 0.0
      %527 = vmatprep.subr.mxu0 0.0
      %528 = vmatpush1.msra.mxu0 0.0
      %529 = vmatprep.subr.mxu0 0.0
      %530 = vmatpush1.msra.mxu0 0.0
      %531 = vmatprep.subr.mxu0 0.0
      %532 = vmatpush1.msra.mxu0 0.0
      %v533 = vand.u32 %v346, 4294901760
      %v534 = vsub.f32 %v346, %v533
      %v535 = vand.u32 %v534, 4294901760
      %v536 = vsub.f32 %v534, %v535
      %v537 = vand.u32 %v536, 4294901760
      %538 = vmatprep.subr.mxu0 %v537
      %v539 = vand.u32 %v343, 4294901760
      %v540 = vsub.f32 %v343, %v539
      %v541 = vand.u32 %v540, 4294901760
      %v542 = vsub.f32 %v540, %v541
      %v543 = vand.u32 %v542, 4294901760
      %544 = vmatpush1.msra.mxu0 %v543
      %v545 = vand.u32 %v265, 4294901760
      %v546 = vsub.f32 %v265, %v545
      %v547 = vand.u32 %v546, 4294901760
      %v548 = vsub.f32 %v546, %v547
      %v549 = vand.u32 %v548, 4294901760
      %550 = vmatprep.subr.mxu0 %v549
      %v551 = vand.u32 %v264, 4294901760
      %v552 = vsub.f32 %v264, %v551
      %v553 = vand.u32 %v552, 4294901760
      %v554 = vsub.f32 %v552, %v553
      %v555 = vand.u32 %v554, 4294901760
      %556 = vmatpush1.msra.mxu0 %v555
      %v557 = vand.u32 %v263, 4294901760
      %v558 = vsub.f32 %v263, %v557
      %v559 = vand.u32 %v558, 4294901760
      %v560 = vsub.f32 %v558, %v559
      %v561 = vand.u32 %v560, 4294901760
      %562 = vmatprep.subr.mxu0 %v561
      %v563 = vand.u32 %v262, 4294901760
      %v564 = vsub.f32 %v262, %v563
      %v565 = vand.u32 %v564, 4294901760
      %v566 = vsub.f32 %v564, %v565
      %v567 = vand.u32 %v566, 4294901760
      %568 = vmatpush1.msra.mxu0 %v567
      %v569 = vand.u32 %v261, 4294901760
      %v570 = vsub.f32 %v261, %v569
      %v571 = vand.u32 %v570, 4294901760
      %v572 = vsub.f32 %v570, %v571
      %v573 = vand.u32 %v572, 4294901760
      %574 = vmatprep.subr.mxu0 %v573
      %v575 = vand.u32 %v260, 4294901760
      %v576 = vsub.f32 %v260, %v575
      %v577 = vand.u32 %v576, 4294901760
      %v578 = vsub.f32 %v576, %v577
      %v579 = vand.u32 %v578, 4294901760
      %580 = vmatpush1.msra.mxu0 %v579
      %v581 = vand.u32 %v259, 4294901760
      %v582 = vsub.f32 %v259, %v581
      %v583 = vand.u32 %v582, 4294901760
      %v584 = vsub.f32 %v582, %v583
      %v585 = vand.u32 %v584, 4294901760
      %586 = vmatprep.subr.mxu0 %v585
      %v587 = vand.u32 %v258, 4294901760
      %v588 = vsub.f32 %v258, %v587
      %v589 = vand.u32 %v588, 4294901760
      %v590 = vsub.f32 %v588, %v589
      %v591 = vand.u32 %v590, 4294901760
      %592 = vmatpush1.msra.mxu0 %v591
      %593 = vmatprep.subr.mxu0 0.0
      %594 = vmatpush2.msra.mxu0 0.0
      %595 = vmatprep.subr.mxu0 0.0
      %596 = vmatpush2.msra.mxu0 0.0
      %597 = vmatprep.subr.mxu0 0.0
      %598 = vmatpush2.msra.mxu0 0.0
      %599 = vmatprep.subr.mxu0 0.0
      %600 = vmatpush2.msra.mxu0 0.0
      %601 = vmatprep.subr.mxu0 0.0
      %602 = vmatpush2.msra.mxu0 0.0
      %603 = vmatprep.subr.mxu0 0.0
      %604 = vmatpush2.msra.mxu0 0.0
      %605 = vmatprep.subr.mxu0 0.0
      %606 = vmatpush2.msra.mxu0 0.0
      %607 = vmatprep.subr.mxu0 0.0
      %608 = vmatpush2.msra.mxu0 0.0
      %609 = vmatprep.subr.mxu0 0.0
      %610 = vmatpush2.msra.mxu0 0.0
      %611 = vmatprep.subr.mxu0 0.0
      %612 = vmatpush2.msra.mxu0 0.0
      %613 = vmatprep.subr.mxu0 0.0
      %614 = vmatpush2.msra.mxu0 0.0
      %615 = vmatprep.subr.mxu0 0.0
      %616 = vmatpush2.msra.mxu0 0.0
      %617 = vmatprep.subr.mxu0 0.0
      %618 = vmatpush2.msra.mxu0 0.0
      %619 = vmatprep.subr.mxu0 0.0
      %620 = vmatpush2.msra.mxu0 0.0
      %621 = vmatprep.subr.mxu0 0.0
      %622 = vmatpush2.msra.mxu0 0.0
      %623 = vmatprep.subr.mxu0 0.0
      %624 = vmatpush2.msra.mxu0 0.0
      %625 = vmatprep.mubr.f32.mxu0 0.0
      %v626 = vand.u32 %v318, 4294901760
      %627 = vmatmul.mubr.f32.gmra.mxu0 %v626
      %v628 = vpop.f32.mrf.mxu0
      %v629 = vadd.f32 %v430, %v628
      %v630 = vpop.f32.mrf.mxu0
      %v631 = vadd.f32 %v432, %v630
      %632 = vmatprep.mubr.f32.mxu0 0.0
      %v633 = vand.u32 %v321, 4294901760
      %634 = vmatmul.mubr.f32.gmra.mxu0 %v633
      %v635 = vpop.f32.mrf.mxu0
      %v636 = vadd.f32 %v441, %v635
      %v637 = vpop.f32.mrf.mxu0
      %v638 = vadd.f32 %v443, %v637
      %639 = vmatprep.mubr.f32.mxu0 0.0
      %v640 = vand.u32 %v324, 4294901760
      %641 = vmatmul.mubr.f32.gmra.mxu0 %v640
      %v642 = vpop.f32.mrf.mxu0
      %v643 = vadd.f32 %v452, %v642
      %v644 = vpop.f32.mrf.mxu0
      %v645 = vadd.f32 %v454, %v644
      %646 = vmatprep.mubr.f32.mxu0 0.0
      %v647 = vand.u32 %v327, 4294901760
      %648 = vmatmul.mubr.f32.gmra.mxu0 %v647
      %v649 = vpop.f32.mrf.mxu0
      %v650 = vadd.f32 %v463, %v649
      %v651 = vpop.f32.mrf.mxu0
      %v652 = vadd.f32 %v465, %v651
      %653 = vmatprep.mubr.f32.mxu0 0.0
      %v654 = vand.u32 %v330, 4294901760
      %655 = vmatmul.mubr.f32.gmra.mxu0 %v654
      %v656 = vpop.f32.mrf.mxu0
      %v657 = vadd.f32 %v474, %v656
      %v658 = vpop.f32.mrf.mxu0
      %v659 = vadd.f32 %v476, %v658
      %660 = vmatprep.mubr.f32.mxu0 0.0
      %v661 = vand.u32 %v333, 4294901760
      %662 = vmatmul.mubr.f32.gmra.mxu0 %v661
      %v663 = vpop.f32.mrf.mxu0
      %v664 = vadd.f32 %v485, %v663
      %v665 = vpop.f32.mrf.mxu0
      %v666 = vadd.f32 %v487, %v665
      %667 = vmatprep.mubr.f32.mxu0 0.0
      %v668 = vand.u32 %v336, 4294901760
      %669 = vmatmul.mubr.f32.gmra.mxu0 %v668
      %v670 = vpop.f32.mrf.mxu0
      %v671 = vadd.f32 %v496, %v670
      %v672 = vpop.f32.mrf.mxu0
      %v673 = vadd.f32 %v498, %v672
      %674 = vmatprep.mubr.f32.mxu0 0.0
      %v675 = vand.u32 %v339, 4294901760
      %676 = vmatmul.mubr.f32.gmra.mxu0 %v675
      %v677 = vpop.f32.mrf.mxu0
      %v678 = vadd.f32 %v507, %v677
      %v679 = vpop.f32.mrf.mxu0
      %v680 = vadd.f32 %v509, %v679
      %681 = vdwg.mxu0
      %682 = vmatprep.subr.mxu0 0.0
      %683 = vmatpush1.msra.mxu0 0.0
      %684 = vmatprep.subr.mxu0 0.0
      %685 = vmatpush1.msra.mxu0 0.0
      %686 = vmatprep.subr.mxu0 0.0
      %687 = vmatpush1.msra.mxu0 0.0
      %688 = vmatprep.subr.mxu0 0.0
      %689 = vmatpush1.msra.mxu0 0.0
      %690 = vmatprep.subr.mxu0 0.0
      %691 = vmatpush1.msra.mxu0 0.0
      %692 = vmatprep.subr.mxu0 0.0
      %693 = vmatpush1.msra.mxu0 0.0
      %694 = vmatprep.subr.mxu0 0.0
      %695 = vmatpush1.msra.mxu0 0.0
      %696 = vmatprep.subr.mxu0 0.0
      %697 = vmatpush1.msra.mxu0 0.0
      %698 = vmatprep.subr.mxu0 0.0
      %699 = vmatpush1.msra.mxu0 0.0
      %700 = vmatprep.subr.mxu0 0.0
      %701 = vmatpush1.msra.mxu0 0.0
      %702 = vmatprep.subr.mxu0 0.0
      %703 = vmatpush1.msra.mxu0 0.0
      %v704 = vand.u32 %v346, 4294901760
      %v705 = vsub.f32 %v346, %v704
      %706 = vmatprep.subr.mxu0 %v705
      %v707 = vand.u32 %v343, 4294901760
      %v708 = vsub.f32 %v343, %v707
      %709 = vmatpush1.msra.mxu0 %v708
      %v710 = vand.u32 %v265, 4294901760
      %v711 = vsub.f32 %v265, %v710
      %712 = vmatprep.subr.mxu0 %v711
      %v713 = vand.u32 %v264, 4294901760
      %v714 = vsub.f32 %v264, %v713
      %715 = vmatpush1.msra.mxu0 %v714
      %v716 = vand.u32 %v263, 4294901760
      %v717 = vsub.f32 %v263, %v716
      %718 = vmatprep.subr.mxu0 %v717
      %v719 = vand.u32 %v262, 4294901760
      %v720 = vsub.f32 %v262, %v719
      %721 = vmatpush1.msra.mxu0 %v720
      %v722 = vand.u32 %v261, 4294901760
      %v723 = vsub.f32 %v261, %v722
      %724 = vmatprep.subr.mxu0 %v723
      %v725 = vand.u32 %v260, 4294901760
      %v726 = vsub.f32 %v260, %v725
      %727 = vmatpush1.msra.mxu0 %v726
      %v728 = vand.u32 %v259, 4294901760
      %v729 = vsub.f32 %v259, %v728
      %730 = vmatprep.subr.mxu0 %v729
      %v731 = vand.u32 %v258, 4294901760
      %v732 = vsub.f32 %v258, %v731
      %733 = vmatpush1.msra.mxu0 %v732
      %734 = vmatprep.subr.mxu0 0.0
      %735 = vmatpush2.msra.mxu0 0.0
      %736 = vmatprep.subr.mxu0 0.0
      %737 = vmatpush2.msra.mxu0 0.0
      %738 = vmatprep.subr.mxu0 0.0
      %739 = vmatpush2.msra.mxu0 0.0
      %740 = vmatprep.subr.mxu0 0.0
      %741 = vmatpush2.msra.mxu0 0.0
      %742 = vmatprep.subr.mxu0 0.0
      %743 = vmatpush2.msra.mxu0 0.0
      %744 = vmatprep.subr.mxu0 0.0
      %745 = vmatpush2.msra.mxu0 0.0
      %746 = vmatprep.subr.mxu0 0.0
      %747 = vmatpush2.msra.mxu0 0.0
      %748 = vmatprep.subr.mxu0 0.0
      %749 = vmatpush2.msra.mxu0 0.0
      %750 = vmatprep.subr.mxu0 0.0
      %751 = vmatpush2.msra.mxu0 0.0
      %752 = vmatprep.subr.mxu0 0.0
      %753 = vmatpush2.msra.mxu0 0.0
      %754 = vmatprep.subr.mxu0 0.0
      %755 = vmatpush2.msra.mxu0 0.0
      %756 = vmatprep.subr.mxu0 0.0
      %757 = vmatpush2.msra.mxu0 0.0
      %758 = vmatprep.subr.mxu0 0.0
      %759 = vmatpush2.msra.mxu0 0.0
      %760 = vmatprep.subr.mxu0 0.0
      %761 = vmatpush2.msra.mxu0 0.0
      %762 = vmatprep.subr.mxu0 0.0
      %763 = vmatpush2.msra.mxu0 0.0
      %764 = vmatprep.subr.mxu0 0.0
      %765 = vmatpush2.msra.mxu0 0.0
      %766 = vmatprep.mubr.f32.mxu0 0.0
      %v767 = vand.u32 %v318, 4294901760
      %v768 = vsub.f32 %v318, %v767
      %769 = vmatmul.mubr.f32.gmra.mxu0 %v768
      %v770 = vpop.f32.mrf.mxu0
      %v771 = vadd.f32 %v629, %v770
      %v772 = vpop.f32.mrf.mxu0
      %v773 = vadd.f32 %v631, %v772
      %774 = vmatprep.mubr.f32.mxu0 0.0
      %v775 = vand.u32 %v321, 4294901760
      %v776 = vsub.f32 %v321, %v775
      %777 = vmatmul.mubr.f32.gmra.mxu0 %v776
      %v778 = vpop.f32.mrf.mxu0
      %v779 = vadd.f32 %v636, %v778
      %v780 = vpop.f32.mrf.mxu0
      %v781 = vadd.f32 %v638, %v780
      %782 = vmatprep.mubr.f32.mxu0 0.0
      %v783 = vand.u32 %v324, 4294901760
      %v784 = vsub.f32 %v324, %v783
      %785 = vmatmul.mubr.f32.gmra.mxu0 %v784
      %v786 = vpop.f32.mrf.mxu0
      %v787 = vadd.f32 %v643, %v786
      %v788 = vpop.f32.mrf.mxu0
      %v789 = vadd.f32 %v645, %v788
      %790 = vmatprep.mubr.f32.mxu0 0.0
      %v791 = vand.u32 %v327, 4294901760
      %v792 = vsub.f32 %v327, %v791
      %793 = vmatmul.mubr.f32.gmra.mxu0 %v792
      %v794 = vpop.f32.mrf.mxu0
      %v795 = vadd.f32 %v650, %v794
      %v796 = vpop.f32.mrf.mxu0
      %v797 = vadd.f32 %v652, %v796
      %798 = vmatprep.mubr.f32.mxu0 0.0
      %v799 = vand.u32 %v330, 4294901760
      %v800 = vsub.f32 %v330, %v799
      %801 = vmatmul.mubr.f32.gmra.mxu0 %v800
      %v802 = vpop.f32.mrf.mxu0
      %v803 = vadd.f32 %v657, %v802
      %v804 = vpop.f32.mrf.mxu0
      %v805 = vadd.f32 %v659, %v804
      %806 = vmatprep.mubr.f32.mxu0 0.0
      %v807 = vand.u32 %v333, 4294901760
      %v808 = vsub.f32 %v333, %v807
      %809 = vmatmul.mubr.f32.gmra.mxu0 %v808
      %v810 = vpop.f32.mrf.mxu0
      %v811 = vadd.f32 %v664, %v810
      %v812 = vpop.f32.mrf.mxu0
      %v813 = vadd.f32 %v666, %v812
      %814 = vmatprep.mubr.f32.mxu0 0.0
      %v815 = vand.u32 %v336, 4294901760
      %v816 = vsub.f32 %v336, %v815
      %817 = vmatmul.mubr.f32.gmra.mxu0 %v816
      %v818 = vpop.f32.mrf.mxu0
      %v819 = vadd.f32 %v671, %v818
      %v820 = vpop.f32.mrf.mxu0
      %v821 = vadd.f32 %v673, %v820
      %822 = vmatprep.mubr.f32.mxu0 0.0
      %v823 = vand.u32 %v339, 4294901760
      %v824 = vsub.f32 %v339, %v823
      %825 = vmatmul.mubr.f32.gmra.mxu0 %v824
      %v826 = vpop.f32.mrf.mxu0
      %v827 = vadd.f32 %v678, %v826
      %v828 = vpop.f32.mrf.mxu0
      %v829 = vadd.f32 %v680, %v828
      %830 = vdwg.mxu0
      %831 = vmatprep.subr.mxu0 0.0
      %832 = vmatpush1.msra.mxu0 0.0
      %833 = vmatprep.subr.mxu0 0.0
      %834 = vmatpush1.msra.mxu0 0.0
      %835 = vmatprep.subr.mxu0 0.0
      %836 = vmatpush1.msra.mxu0 0.0
      %837 = vmatprep.subr.mxu0 0.0
      %838 = vmatpush1.msra.mxu0 0.0
      %839 = vmatprep.subr.mxu0 0.0
      %840 = vmatpush1.msra.mxu0 0.0
      %841 = vmatprep.subr.mxu0 0.0
      %842 = vmatpush1.msra.mxu0 0.0
      %843 = vmatprep.subr.mxu0 0.0
      %844 = vmatpush1.msra.mxu0 0.0
      %845 = vmatprep.subr.mxu0 0.0
      %846 = vmatpush1.msra.mxu0 0.0
      %847 = vmatprep.subr.mxu0 0.0
      %848 = vmatpush1.msra.mxu0 0.0
      %849 = vmatprep.subr.mxu0 0.0
      %850 = vmatpush1.msra.mxu0 0.0
      %851 = vmatprep.subr.mxu0 0.0
      %852 = vmatpush1.msra.mxu0 0.0
      %v853 = vand.u32 %v346, 4294901760
      %854 = vmatprep.subr.mxu0 %v853
      %v855 = vand.u32 %v343, 4294901760
      %856 = vmatpush1.msra.mxu0 %v855
      %v857 = vand.u32 %v265, 4294901760
      %858 = vmatprep.subr.mxu0 %v857
      %v859 = vand.u32 %v264, 4294901760
      %860 = vmatpush1.msra.mxu0 %v859
      %v861 = vand.u32 %v263, 4294901760
      %862 = vmatprep.subr.mxu0 %v861
      %v863 = vand.u32 %v262, 4294901760
      %864 = vmatpush1.msra.mxu0 %v863
      %v865 = vand.u32 %v261, 4294901760
      %866 = vmatprep.subr.mxu0 %v865
      %v867 = vand.u32 %v260, 4294901760
      %868 = vmatpush1.msra.mxu0 %v867
      %v869 = vand.u32 %v259, 4294901760
      %870 = vmatprep.subr.mxu0 %v869
      %v871 = vand.u32 %v258, 4294901760
      %872 = vmatpush1.msra.mxu0 %v871
      %873 = vmatprep.subr.mxu0 0.0
      %874 = vmatpush2.msra.mxu0 0.0
      %875 = vmatprep.subr.mxu0 0.0
      %876 = vmatpush2.msra.mxu0 0.0
      %877 = vmatprep.subr.mxu0 0.0
      %878 = vmatpush2.msra.mxu0 0.0
      %879 = vmatprep.subr.mxu0 0.0
      %880 = vmatpush2.msra.mxu0 0.0
      %881 = vmatprep.subr.mxu0 0.0
      %882 = vmatpush2.msra.mxu0 0.0
      %883 = vmatprep.subr.mxu0 0.0
      %884 = vmatpush2.msra.mxu0 0.0
      %885 = vmatprep.subr.mxu0 0.0
      %886 = vmatpush2.msra.mxu0 0.0
      %887 = vmatprep.subr.mxu0 0.0
      %888 = vmatpush2.msra.mxu0 0.0
      %889 = vmatprep.subr.mxu0 0.0
      %890 = vmatpush2.msra.mxu0 0.0
      %891 = vmatprep.subr.mxu0 0.0
      %892 = vmatpush2.msra.mxu0 0.0
      %893 = vmatprep.subr.mxu0 0.0
      %894 = vmatpush2.msra.mxu0 0.0
      %895 = vmatprep.subr.mxu0 0.0
      %896 = vmatpush2.msra.mxu0 0.0
      %897 = vmatprep.subr.mxu0 0.0
      %898 = vmatpush2.msra.mxu0 0.0
      %899 = vmatprep.subr.mxu0 0.0
      %900 = vmatpush2.msra.mxu0 0.0
      %901 = vmatprep.subr.mxu0 0.0
      %902 = vmatpush2.msra.mxu0 0.0
      %903 = vmatprep.subr.mxu0 0.0
      %904 = vmatpush2.msra.mxu0 0.0
      %905 = vmatprep.mubr.f32.mxu0 0.0
      %v906 = vand.u32 %v318, 4294901760
      %v907 = vsub.f32 %v318, %v906
      %v908 = vand.u32 %v907, 4294901760
      %909 = vmatmul.mubr.f32.gmra.mxu0 %v908
      %v910 = vpop.f32.mrf.mxu0
      %v911 = vadd.f32 %v771, %v910
      %v912 = vpop.f32.mrf.mxu0
      %v913 = vadd.f32 %v773, %v912
      %914 = vmatprep.mubr.f32.mxu0 0.0
      %v915 = vand.u32 %v321, 4294901760
      %v916 = vsub.f32 %v321, %v915
      %v917 = vand.u32 %v916, 4294901760
      %918 = vmatmul.mubr.f32.gmra.mxu0 %v917
      %v919 = vpop.f32.mrf.mxu0
      %v920 = vadd.f32 %v779, %v919
      %v921 = vpop.f32.mrf.mxu0
      %v922 = vadd.f32 %v781, %v921
      %923 = vmatprep.mubr.f32.mxu0 0.0
      %v924 = vand.u32 %v324, 4294901760
      %v925 = vsub.f32 %v324, %v924
      %v926 = vand.u32 %v925, 4294901760
      %927 = vmatmul.mubr.f32.gmra.mxu0 %v926
      %v928 = vpop.f32.mrf.mxu0
      %v929 = vadd.f32 %v787, %v928
      %v930 = vpop.f32.mrf.mxu0
      %v931 = vadd.f32 %v789, %v930
      %932 = vmatprep.mubr.f32.mxu0 0.0
      %v933 = vand.u32 %v327, 4294901760
      %v934 = vsub.f32 %v327, %v933
      %v935 = vand.u32 %v934, 4294901760
      %936 = vmatmul.mubr.f32.gmra.mxu0 %v935
      %v937 = vpop.f32.mrf.mxu0
      %v938 = vadd.f32 %v795, %v937
      %v939 = vpop.f32.mrf.mxu0
      %v940 = vadd.f32 %v797, %v939
      %941 = vmatprep.mubr.f32.mxu0 0.0
      %v942 = vand.u32 %v330, 4294901760
      %v943 = vsub.f32 %v330, %v942
      %v944 = vand.u32 %v943, 4294901760
      %945 = vmatmul.mubr.f32.gmra.mxu0 %v944
      %v946 = vpop.f32.mrf.mxu0
      %v947 = vadd.f32 %v803, %v946
      %v948 = vpop.f32.mrf.mxu0
      %v949 = vadd.f32 %v805, %v948
      %950 = vmatprep.mubr.f32.mxu0 0.0
      %v951 = vand.u32 %v333, 4294901760
      %v952 = vsub.f32 %v333, %v951
      %v953 = vand.u32 %v952, 4294901760
      %954 = vmatmul.mubr.f32.gmra.mxu0 %v953
      %v955 = vpop.f32.mrf.mxu0
      %v956 = vadd.f32 %v811, %v955
      %v957 = vpop.f32.mrf.mxu0
      %v958 = vadd.f32 %v813, %v957
      %959 = vmatprep.mubr.f32.mxu0 0.0
      %v960 = vand.u32 %v336, 4294901760
      %v961 = vsub.f32 %v336, %v960
      %v962 = vand.u32 %v961, 4294901760
      %963 = vmatmul.mubr.f32.gmra.mxu0 %v962
      %v964 = vpop.f32.mrf.mxu0
      %v965 = vadd.f32 %v819, %v964
      %v966 = vpop.f32.mrf.mxu0
      %v967 = vadd.f32 %v821, %v966
      %968 = vmatprep.mubr.f32.mxu0 0.0
      %v969 = vand.u32 %v339, 4294901760
      %v970 = vsub.f32 %v339, %v969
      %v971 = vand.u32 %v970, 4294901760
      %972 = vmatmul.mubr.f32.gmra.mxu0 %v971
      %v973 = vpop.f32.mrf.mxu0
      %v974 = vadd.f32 %v827, %v973
      %v975 = vpop.f32.mrf.mxu0
      %v976 = vadd.f32 %v829, %v975
      %977 = vdwg.mxu0
      %978 = vmatprep.subr.mxu0 0.0
      %979 = vmatpush1.msra.mxu0 0.0
      %980 = vmatprep.subr.mxu0 0.0
      %981 = vmatpush1.msra.mxu0 0.0
      %982 = vmatprep.subr.mxu0 0.0
      %983 = vmatpush1.msra.mxu0 0.0
      %984 = vmatprep.subr.mxu0 0.0
      %985 = vmatpush1.msra.mxu0 0.0
      %986 = vmatprep.subr.mxu0 0.0
      %987 = vmatpush1.msra.mxu0 0.0
      %988 = vmatprep.subr.mxu0 0.0
      %989 = vmatpush1.msra.mxu0 0.0
      %990 = vmatprep.subr.mxu0 0.0
      %991 = vmatpush1.msra.mxu0 0.0
      %992 = vmatprep.subr.mxu0 0.0
      %993 = vmatpush1.msra.mxu0 0.0
      %994 = vmatprep.subr.mxu0 0.0
      %995 = vmatpush1.msra.mxu0 0.0
      %996 = vmatprep.subr.mxu0 0.0
      %997 = vmatpush1.msra.mxu0 0.0
      %998 = vmatprep.subr.mxu0 0.0
      %999 = vmatpush1.msra.mxu0 0.0
      %v1000 = vand.u32 %v346, 4294901760
      %v1001 = vsub.f32 %v346, %v1000
      %v1002 = vand.u32 %v1001, 4294901760
      %1003 = vmatprep.subr.mxu0 %v1002
      %v1004 = vand.u32 %v343, 4294901760
      %v1005 = vsub.f32 %v343, %v1004
      %v1006 = vand.u32 %v1005, 4294901760
      %1007 = vmatpush1.msra.mxu0 %v1006
      %v1008 = vand.u32 %v265, 4294901760
      %v1009 = vsub.f32 %v265, %v1008
      %v1010 = vand.u32 %v1009, 4294901760
      %1011 = vmatprep.subr.mxu0 %v1010
      %v1012 = vand.u32 %v264, 4294901760
      %v1013 = vsub.f32 %v264, %v1012
      %v1014 = vand.u32 %v1013, 4294901760
      %1015 = vmatpush1.msra.mxu0 %v1014
      %v1016 = vand.u32 %v263, 4294901760
      %v1017 = vsub.f32 %v263, %v1016
      %v1018 = vand.u32 %v1017, 4294901760
      %1019 = vmatprep.subr.mxu0 %v1018
      %v1020 = vand.u32 %v262, 4294901760
      %v1021 = vsub.f32 %v262, %v1020
      %v1022 = vand.u32 %v1021, 4294901760
      %1023 = vmatpush1.msra.mxu0 %v1022
      %v1024 = vand.u32 %v261, 4294901760
      %v1025 = vsub.f32 %v261, %v1024
      %v1026 = vand.u32 %v1025, 4294901760
      %1027 = vmatprep.subr.mxu0 %v1026
      %v1028 = vand.u32 %v260, 4294901760
      %v1029 = vsub.f32 %v260, %v1028
      %v1030 = vand.u32 %v1029, 4294901760
      %1031 = vmatpush1.msra.mxu0 %v1030
      %v1032 = vand.u32 %v259, 4294901760
      %v1033 = vsub.f32 %v259, %v1032
      %v1034 = vand.u32 %v1033, 4294901760
      %1035 = vmatprep.subr.mxu0 %v1034
      %v1036 = vand.u32 %v258, 4294901760
      %v1037 = vsub.f32 %v258, %v1036
      %v1038 = vand.u32 %v1037, 4294901760
      %1039 = vmatpush1.msra.mxu0 %v1038
      %1040 = vmatprep.subr.mxu0 0.0
      %1041 = vmatpush2.msra.mxu0 0.0
      %1042 = vmatprep.subr.mxu0 0.0
      %1043 = vmatpush2.msra.mxu0 0.0
      %1044 = vmatprep.subr.mxu0 0.0
      %1045 = vmatpush2.msra.mxu0 0.0
      %1046 = vmatprep.subr.mxu0 0.0
      %1047 = vmatpush2.msra.mxu0 0.0
      %1048 = vmatprep.subr.mxu0 0.0
      %1049 = vmatpush2.msra.mxu0 0.0
      %1050 = vmatprep.subr.mxu0 0.0
      %1051 = vmatpush2.msra.mxu0 0.0
      %1052 = vmatprep.subr.mxu0 0.0
      %1053 = vmatpush2.msra.mxu0 0.0
      %1054 = vmatprep.subr.mxu0 0.0
      %1055 = vmatpush2.msra.mxu0 0.0
      %1056 = vmatprep.subr.mxu0 0.0
      %1057 = vmatpush2.msra.mxu0 0.0
      %1058 = vmatprep.subr.mxu0 0.0
      %1059 = vmatpush2.msra.mxu0 0.0
      %1060 = vmatprep.subr.mxu0 0.0
      %1061 = vmatpush2.msra.mxu0 0.0
      %1062 = vmatprep.subr.mxu0 0.0
      %1063 = vmatpush2.msra.mxu0 0.0
      %1064 = vmatprep.subr.mxu0 0.0
      %1065 = vmatpush2.msra.mxu0 0.0
      %1066 = vmatprep.subr.mxu0 0.0
      %1067 = vmatpush2.msra.mxu0 0.0
      %1068 = vmatprep.subr.mxu0 0.0
      %1069 = vmatpush2.msra.mxu0 0.0
      %1070 = vmatprep.subr.mxu0 0.0
      %1071 = vmatpush2.msra.mxu0 0.0
      %1072 = vmatprep.mubr.f32.mxu0 0.0
      %v1073 = vand.u32 %v318, 4294901760
      %1074 = vmatmul.mubr.f32.gmra.mxu0 %v1073
      %v1075 = vpop.f32.mrf.mxu0
      %v1076 = vadd.f32 %v911, %v1075
      %v1077 = vpop.f32.mrf.mxu0
      %v1078 = vadd.f32 %v913, %v1077
      %1079 = vmatprep.mubr.f32.mxu0 0.0
      %v1080 = vand.u32 %v321, 4294901760
      %1081 = vmatmul.mubr.f32.gmra.mxu0 %v1080
      %v1082 = vpop.f32.mrf.mxu0
      %v1083 = vadd.f32 %v920, %v1082
      %v1084 = vpop.f32.mrf.mxu0
      %v1085 = vadd.f32 %v922, %v1084
      %1086 = vmatprep.mubr.f32.mxu0 0.0
      %v1087 = vand.u32 %v324, 4294901760
      %1088 = vmatmul.mubr.f32.gmra.mxu0 %v1087
      %v1089 = vpop.f32.mrf.mxu0
      %v1090 = vadd.f32 %v929, %v1089
      %v1091 = vpop.f32.mrf.mxu0
      %v1092 = vadd.f32 %v931, %v1091
      %1093 = vmatprep.mubr.f32.mxu0 0.0
      %v1094 = vand.u32 %v327, 4294901760
      %1095 = vmatmul.mubr.f32.gmra.mxu0 %v1094
      %v1096 = vpop.f32.mrf.mxu0
      %v1097 = vadd.f32 %v938, %v1096
      %v1098 = vpop.f32.mrf.mxu0
      %v1099 = vadd.f32 %v940, %v1098
      %1100 = vmatprep.mubr.f32.mxu0 0.0
      %v1101 = vand.u32 %v330, 4294901760
      %1102 = vmatmul.mubr.f32.gmra.mxu0 %v1101
      %v1103 = vpop.f32.mrf.mxu0
      %v1104 = vadd.f32 %v947, %v1103
      %v1105 = vpop.f32.mrf.mxu0
      %v1106 = vadd.f32 %v949, %v1105
      %1107 = vmatprep.mubr.f32.mxu0 0.0
      %v1108 = vand.u32 %v333, 4294901760
      %1109 = vmatmul.mubr.f32.gmra.mxu0 %v1108
      %v1110 = vpop.f32.mrf.mxu0
      %v1111 = vadd.f32 %v956, %v1110
      %v1112 = vpop.f32.mrf.mxu0
      %v1113 = vadd.f32 %v958, %v1112
      %1114 = vmatprep.mubr.f32.mxu0 0.0
      %v1115 = vand.u32 %v336, 4294901760
      %1116 = vmatmul.mubr.f32.gmra.mxu0 %v1115
      %v1117 = vpop.f32.mrf.mxu0
      %v1118 = vadd.f32 %v965, %v1117
      %v1119 = vpop.f32.mrf.mxu0
      %v1120 = vadd.f32 %v967, %v1119
      %1121 = vmatprep.mubr.f32.mxu0 0.0
      %v1122 = vand.u32 %v339, 4294901760
      %1123 = vmatmul.mubr.f32.gmra.mxu0 %v1122
      %v1124 = vpop.f32.mrf.mxu0
      %v1125 = vadd.f32 %v974, %v1124
      %v1126 = vpop.f32.mrf.mxu0
      %v1127 = vadd.f32 %v976, %v1126
      %1128 = vdwg.mxu0
      %1129 = vmatprep.subr.mxu0 0.0
      %1130 = vmatpush1.msra.mxu0 0.0
      %1131 = vmatprep.subr.mxu0 0.0
      %1132 = vmatpush1.msra.mxu0 0.0
      %1133 = vmatprep.subr.mxu0 0.0
      %1134 = vmatpush1.msra.mxu0 0.0
      %1135 = vmatprep.subr.mxu0 0.0
      %1136 = vmatpush1.msra.mxu0 0.0
      %1137 = vmatprep.subr.mxu0 0.0
      %1138 = vmatpush1.msra.mxu0 0.0
      %1139 = vmatprep.subr.mxu0 0.0
      %1140 = vmatpush1.msra.mxu0 0.0
      %1141 = vmatprep.subr.mxu0 0.0
      %1142 = vmatpush1.msra.mxu0 0.0
      %1143 = vmatprep.subr.mxu0 0.0
      %1144 = vmatpush1.msra.mxu0 0.0
      %1145 = vmatprep.subr.mxu0 0.0
      %1146 = vmatpush1.msra.mxu0 0.0
      %1147 = vmatprep.subr.mxu0 0.0
      %1148 = vmatpush1.msra.mxu0 0.0
      %1149 = vmatprep.subr.mxu0 0.0
      %1150 = vmatpush1.msra.mxu0 0.0
      %v1151 = vand.u32 %v346, 4294901760
      %1152 = vmatprep.subr.mxu0 %v1151
      %v1153 = vand.u32 %v343, 4294901760
      %1154 = vmatpush1.msra.mxu0 %v1153
      %v1155 = vand.u32 %v265, 4294901760
      %1156 = vmatprep.subr.mxu0 %v1155
      %v1157 = vand.u32 %v264, 4294901760
      %1158 = vmatpush1.msra.mxu0 %v1157
      %v1159 = vand.u32 %v263, 4294901760
      %1160 = vmatprep.subr.mxu0 %v1159
      %v1161 = vand.u32 %v262, 4294901760
      %1162 = vmatpush1.msra.mxu0 %v1161
      %v1163 = vand.u32 %v261, 4294901760
      %1164 = vmatprep.subr.mxu0 %v1163
      %v1165 = vand.u32 %v260, 4294901760
      %1166 = vmatpush1.msra.mxu0 %v1165
      %v1167 = vand.u32 %v259, 4294901760
      %1168 = vmatprep.subr.mxu0 %v1167
      %v1169 = vand.u32 %v258, 4294901760
      %1170 = vmatpush1.msra.mxu0 %v1169
      %1171 = vmatprep.subr.mxu0 0.0
      %1172 = vmatpush2.msra.mxu0 0.0
      %1173 = vmatprep.subr.mxu0 0.0
      %1174 = vmatpush2.msra.mxu0 0.0
      %1175 = vmatprep.subr.mxu0 0.0
      %1176 = vmatpush2.msra.mxu0 0.0
      %1177 = vmatprep.subr.mxu0 0.0
      %1178 = vmatpush2.msra.mxu0 0.0
      %1179 = vmatprep.subr.mxu0 0.0
      %1180 = vmatpush2.msra.mxu0 0.0
      %1181 = vmatprep.subr.mxu0 0.0
      %1182 = vmatpush2.msra.mxu0 0.0
      %1183 = vmatprep.subr.mxu0 0.0
      %1184 = vmatpush2.msra.mxu0 0.0
      %1185 = vmatprep.subr.mxu0 0.0
      %1186 = vmatpush2.msra.mxu0 0.0
      %1187 = vmatprep.subr.mxu0 0.0
      %1188 = vmatpush2.msra.mxu0 0.0
      %1189 = vmatprep.subr.mxu0 0.0
      %1190 = vmatpush2.msra.mxu0 0.0
      %1191 = vmatprep.subr.mxu0 0.0
      %1192 = vmatpush2.msra.mxu0 0.0
      %1193 = vmatprep.subr.mxu0 0.0
      %1194 = vmatpush2.msra.mxu0 0.0
      %1195 = vmatprep.subr.mxu0 0.0
      %1196 = vmatpush2.msra.mxu0 0.0
      %1197 = vmatprep.subr.mxu0 0.0
      %1198 = vmatpush2.msra.mxu0 0.0
      %1199 = vmatprep.subr.mxu0 0.0
      %1200 = vmatpush2.msra.mxu0 0.0
      %1201 = vmatprep.subr.mxu0 0.0
      %1202 = vmatpush2.msra.mxu0 0.0
      %1203 = vmatprep.mubr.f32.mxu0 0.0
      %v1204 = vand.u32 %v318, 4294901760
      %1205 = vmatmul.mubr.f32.gmra.mxu0 %v1204
      %v1206 = vpop.f32.mrf.mxu0
      %v1207 = vadd.f32 %v1076, %v1206
      %v1208 = vpop.f32.mrf.mxu0
      %v1209 = vadd.f32 %v1078, %v1208
      %1210 = vmatprep.mubr.f32.mxu0 0.0
      %v1211 = vand.u32 %v321, 4294901760
      %1212 = vmatmul.mubr.f32.gmra.mxu0 %v1211
      %v1213 = vpop.f32.mrf.mxu0
      %v1214 = vadd.f32 %v1083, %v1213
      %v1215 = vpop.f32.mrf.mxu0
      %v1216 = vadd.f32 %v1085, %v1215
      %1217 = vmatprep.mubr.f32.mxu0 0.0
      %v1218 = vand.u32 %v324, 4294901760
      %1219 = vmatmul.mubr.f32.gmra.mxu0 %v1218
      %v1220 = vpop.f32.mrf.mxu0
      %v1221 = vadd.f32 %v1090, %v1220
      %v1222 = vpop.f32.mrf.mxu0
      %v1223 = vadd.f32 %v1092, %v1222
      %1224 = vmatprep.mubr.f32.mxu0 0.0
      %v1225 = vand.u32 %v327, 4294901760
      %1226 = vmatmul.mubr.f32.gmra.mxu0 %v1225
      %v1227 = vpop.f32.mrf.mxu0
      %v1228 = vadd.f32 %v1097, %v1227
      %v1229 = vpop.f32.mrf.mxu0
      %v1230 = vadd.f32 %v1099, %v1229
      %1231 = vmatprep.mubr.f32.mxu0 0.0
      %v1232 = vand.u32 %v330, 4294901760
      %1233 = vmatmul.mubr.f32.gmra.mxu0 %v1232
      %v1234 = vpop.f32.mrf.mxu0
      %v1235 = vadd.f32 %v1104, %v1234
      %v1236 = vpop.f32.mrf.mxu0
      %v1237 = vadd.f32 %v1106, %v1236
      %1238 = vmatprep.mubr.f32.mxu0 0.0
      %v1239 = vand.u32 %v333, 4294901760
      %1240 = vmatmul.mubr.f32.gmra.mxu0 %v1239
      %v1241 = vpop.f32.mrf.mxu0
      %v1242 = vadd.f32 %v1111, %v1241
      %v1243 = vpop.f32.mrf.mxu0
      %v1244 = vadd.f32 %v1113, %v1243
      %1245 = vmatprep.mubr.f32.mxu0 0.0
      %v1246 = vand.u32 %v336, 4294901760
      %1247 = vmatmul.mubr.f32.gmra.mxu0 %v1246
      %v1248 = vpop.f32.mrf.mxu0
      %v1249 = vadd.f32 %v1118, %v1248
      %v1250 = vpop.f32.mrf.mxu0
      %v1251 = vadd.f32 %v1120, %v1250
      %1252 = vmatprep.mubr.f32.mxu0 0.0
      %v1253 = vand.u32 %v339, 4294901760
      %1254 = vmatmul.mubr.f32.gmra.mxu0 %v1253
      %v1255 = vpop.f32.mrf.mxu0
      %v1256 = vadd.f32 %v1125, %v1255
      %v1257 = vpop.f32.mrf.mxu0
      %v1258 = vadd.f32 %v1127, %v1257
      %1259 = vdwg.mxu0
      %1260 = vst [vmem:[%s239] sm:$0xff] %v1207
      %1261 = vst [vmem:[%s239 + $0x8] sm:$0xff] %v1209
      %1262 = vst [vmem:[%s239 + $0x10] sm:$0xff] %v1214
      %1263 = vst [vmem:[%s239 + $0x18] sm:$0xff] %v1216
      %1264 = vst [vmem:[%s239 + $0x20] sm:$0xff] %v1221
      %1265 = vst [vmem:[%s239 + $0x28] sm:$0xff] %v1223
      %1266 = vst [vmem:[%s239 + $0x30] sm:$0xff] %v1228
      %1267 = vst [vmem:[%s239 + $0x38] sm:$0xff] %v1230
      %1268 = vst [vmem:[%s239 + $0x40] sm:$0xff] %v1235
      %1269 = vst [vmem:[%s239 + $0x48] sm:$0xff] %v1237
      %1270 = vst [vmem:[%s239 + $0x50] sm:$0xff] %v1242
      %1271 = vst [vmem:[%s239 + $0x58] sm:$0xff] %v1244
      %1272 = vst [vmem:[%s239 + $0x60] sm:$0xff] %v1249
      %1273 = vst [vmem:[%s239 + $0x68] sm:$0xff] %v1251
      %1274 = vst [vmem:[%s239 + $0x70] sm:$0xff] %v1256
      %1275 = vst [vmem:[%s239 + $0x78] sm:$0xff] %v1258
      %v1276 = vadd.f32 %v1207, %v1209
      %1277 = vadd.xlane.f32.xlu0 %v1276
      %v1278 = vpop.xlane.xlu0 %1277
      %v1279 = vadd.f32 %v1214, %v1216
      %1280 = vadd.xlane.f32.xlu0 %v1279
      %v1281 = vpop.xlane.xlu0 %1280
      %v1282 = vadd.f32 %v1221, %v1223
      %1283 = vadd.xlane.f32.xlu0 %v1282
      %v1284 = vpop.xlane.xlu0 %1283
      %v1285 = vadd.f32 %v1228, %v1230
      %1286 = vadd.xlane.f32.xlu0 %v1285
      %v1287 = vpop.xlane.xlu0 %1286
      %v1288 = vadd.f32 %v1235, %v1237
      %1289 = vadd.xlane.f32.xlu0 %v1288
      %v1290 = vpop.xlane.xlu0 %1289
      %v1291 = vadd.f32 %v1242, %v1244
      %1292 = vadd.xlane.f32.xlu0 %v1291
      %v1293 = vpop.xlane.xlu0 %1292
      %v1294 = vadd.f32 %v1249, %v1251
      %1295 = vadd.xlane.f32.xlu0 %v1294
      %v1296 = vpop.xlane.xlu0 %1295
      %v1297 = vadd.f32 %v1256, %v1258
      %1298 = vadd.xlane.f32.xlu0 %v1297
      %v1299 = vpop.xlane.xlu0 %1298
      %vm1300 = vcmask 7168
      %1301 = vst.msk [vmem:[%s244] sm:$0xff] %vm1300, %v1278
      %1302 = vst.msk [vmem:[%s244 + $0x8] sm:$0xff] %vm1300, %v1281
      %1303 = vst.msk [vmem:[%s244 + $0x10] sm:$0xff] %vm1300, %v1284
      %1304 = vst.msk [vmem:[%s244 + $0x18] sm:$0xff] %vm1300, %v1287
      %1305 = vst.msk [vmem:[%s244 + $0x20] sm:$0xff] %vm1300, %v1290
      %1306 = vst.msk [vmem:[%s244 + $0x28] sm:$0xff] %vm1300, %v1293
      %1307 = vst.msk [vmem:[%s244 + $0x30] sm:$0xff] %vm1300, %v1296
      %1308 = vst.msk [vmem:[%s244 + $0x38] sm:$0xff] %vm1300, %v1299
      %v1309 = vmul.f32 %v1207, %v1207
      %v1310 = vmul.f32 %v1209, %v1209
      %v1311 = vmul.f32 %v1214, %v1214
      %v1312 = vmul.f32 %v1216, %v1216
      %v1313 = vmul.f32 %v1221, %v1221
      %v1314 = vmul.f32 %v1223, %v1223
      %v1315 = vmul.f32 %v1228, %v1228
      %v1316 = vmul.f32 %v1230, %v1230
      %v1317 = vmul.f32 %v1235, %v1235
      %v1318 = vmul.f32 %v1237, %v1237
      %v1319 = vmul.f32 %v1242, %v1242
      %v1320 = vmul.f32 %v1244, %v1244
      %v1321 = vmul.f32 %v1249, %v1249
      %v1322 = vmul.f32 %v1251, %v1251
      %v1323 = vmul.f32 %v1256, %v1256
      %v1324 = vmul.f32 %v1258, %v1258
      %v1325 = vadd.f32 %v1309, %v1310
      %1326 = vadd.xlane.f32.xlu0 %v1325
      %v1327 = vpop.xlane.xlu0 %1326
      %v1328 = vadd.f32 %v1311, %v1312
      %1329 = vadd.xlane.f32.xlu0 %v1328
      %v1330 = vpop.xlane.xlu0 %1329
      %v1331 = vadd.f32 %v1313, %v1314
      %1332 = vadd.xlane.f32.xlu0 %v1331
      %v1333 = vpop.xlane.xlu0 %1332
      %v1334 = vadd.f32 %v1315, %v1316
      %1335 = vadd.xlane.f32.xlu0 %v1334
      %v1336 = vpop.xlane.xlu0 %1335
      %v1337 = vadd.f32 %v1317, %v1318
      %1338 = vadd.xlane.f32.xlu0 %v1337
      %v1339 = vpop.xlane.xlu0 %1338
      %v1340 = vadd.f32 %v1319, %v1320
      %1341 = vadd.xlane.f32.xlu0 %v1340
      %v1342 = vpop.xlane.xlu0 %1341
      %v1343 = vadd.f32 %v1321, %v1322
      %1344 = vadd.xlane.f32.xlu0 %v1343
      %v1345 = vpop.xlane.xlu0 %1344
      %v1346 = vadd.f32 %v1323, %v1324
      %1347 = vadd.xlane.f32.xlu0 %v1346
      %v1348 = vpop.xlane.xlu0 %1347
      %1349 = vst.msk [vmem:[%s249] sm:$0xff] %vm1300, %v1327
      %1350 = vst.msk [vmem:[%s249 + $0x8] sm:$0xff] %vm1300, %v1330
      %1351 = vst.msk [vmem:[%s249 + $0x10] sm:$0xff] %vm1300, %v1333
      %1352 = vst.msk [vmem:[%s249 + $0x18] sm:$0xff] %vm1300, %v1336
      %1353 = vst.msk [vmem:[%s249 + $0x20] sm:$0xff] %vm1300, %v1339
      %1354 = vst.msk [vmem:[%s249 + $0x28] sm:$0xff] %vm1300, %v1342
      %1355 = vst.msk [vmem:[%s249 + $0x30] sm:$0xff] %vm1300, %v1345
      %1356 = vst.msk [vmem:[%s249 + $0x38] sm:$0xff] %vm1300, %v1348
      %p1357 = scmp.lt.s32.totalorder %s17, 1
      %s1358 = scalar_select %p1357, %s17, 1
      %s1359 = smul.addr %s1358, 16
      %s1360 = smul.addr %s1359, 8
      %s1361 = scalar_lea.vmem %s3, %s1360
      %p1362 = scmp.lt.s32.totalorder %s17, 1
      %s1363 = scalar_select %p1362, %s17, 1
      %s1364 = smul.addr %s1363, 8
      %s1365 = smul.addr %s1364, 8
      %s1366 = scalar_lea.vmem %s4, %s1365
      %p1367 = scmp.lt.s32.totalorder %s17, 1
      %s1368 = scalar_select %p1367, %s17, 1
      %s1369 = smul.addr %s1368, 8
      %s1370 = smul.addr %s1369, 8
      %s1371 = scalar_lea.vmem %s5, %s1370
      // Predicated region
      $region33: #{decoder_forward.2} parent=31 // pred_check
        %p1372 = pneg %p103
      $region34: #{decoder_forward.2} parent=31 // pred_check_branch
        %1374 = sbr.rel (%p1372) target = $region36
      $region35: #{decoder_forward.2} parent=31 // pred_region
        _
      $region36: #{decoder_forward.2} parent=31 // pred_fallthru
        _
      // Predicated region
      $region37: #{decoder_forward.2} parent=31 // pred_check
        %p1375 = pneg %p129
      $region38: #{decoder_forward.2} parent=31 // pred_check_branch
        %1377 = sbr.rel (%p1375) target = $region40
      $region39: #{decoder_forward.2} parent=31 // pred_region
        _
      $region40: #{decoder_forward.2} parent=31 // pred_fallthru
        _
      // Predicated region
      $region41: #{decoder_forward.2} parent=31 // pred_check
        %p1378 = pneg %p155
      $region42: #{decoder_forward.2} parent=31 // pred_check_branch
        %1380 = sbr.rel (%p1378) target = $region44
      $region43: #{decoder_forward.2} parent=31 // pred_region
        _
      $region44: #{decoder_forward.2} parent=31 // pred_fallthru
        _
    $region32: #{decoder_forward.2} parent=5 // pred_fallthru
      _
    %p1381 = scmp.le.s32.totalorder 2, %s12
    // Predicated region
    $region45: #{decoder_forward.2} parent=5 // pred_check
      %p1382 = pneg %p1381
    $region46: #{decoder_forward.2} parent=5 // pred_check_branch
      %1384 = sbr.rel (%p1382) target = $region48
    $region47: #{decoder_forward.2} parent=5 // pred_region
      %s1385 = ssub.s32 %s12, 2
      // Predicated region
      $region49: #{decoder_forward.2} parent=47 // pred_check
        %p1386 = pneg %p109
      $region50: #{decoder_forward.2} parent=47 // pred_check_branch
        %1388 = sbr.rel (%p1386) target = $region52
      $region51: #{decoder_forward.2} parent=47 // pred_region
        %p1389 = scmp.lt.s32.totalorder %s18, 1
        %s1390 = scalar_select %p1389, %s18, 1
        %s1391 = smul.addr %s1390, 16
        %s1392 = smul.addr %s1391, 8
        %s1393 = scalar_lea.vmem %s3, %s1392
      $region52: #{decoder_forward.2} parent=47 // pred_fallthru
        _
      // Predicated region
      $region53: #{decoder_forward.2} parent=47 // pred_check
        %p1394 = pneg %p135
      $region54: #{decoder_forward.2} parent=47 // pred_check_branch
        %1396 = sbr.rel (%p1394) target = $region56
      $region55: #{decoder_forward.2} parent=47 // pred_region
        %p1397 = scmp.lt.s32.totalorder %s18, 1
        %s1398 = scalar_select %p1397, %s18, 1
        %s1399 = smul.addr %s1398, 8
        %s1400 = smul.addr %s1399, 8
        %s1401 = scalar_lea.vmem %s4, %s1400
      $region56: #{decoder_forward.2} parent=47 // pred_fallthru
        _
      // Predicated region
      $region57: #{decoder_forward.2} parent=47 // pred_check
        %p1402 = pneg %p161
      $region58: #{decoder_forward.2} parent=47 // pred_check_branch
        %1404 = sbr.rel (%p1402) target = $region60
      $region59: #{decoder_forward.2} parent=47 // pred_region
        %p1405 = scmp.lt.s32.totalorder %s18, 1
        %s1406 = scalar_select %p1405, %s18, 1
        %s1407 = smul.addr %s1406, 8
        %s1408 = smul.addr %s1407, 8
        %s1409 = scalar_lea.vmem %s5, %s1408
      $region60: #{decoder_forward.2} parent=47 // pred_fallthru
        _
    $region48: #{decoder_forward.2} parent=5 // pred_fallthru
      _
  $region6: #{decoder_forward.2} parent=0 // loop_footer
    %s16 = sadd.s32 1, %s12
  $region7: #{decoder_forward.2} parent=0 // loop_footer_branch
    %11 = sbr.rel target = $region3
  $region8: #{decoder_forward.2} parent=0 // loop_exit
    _

// kernel: decoder_forward.3
$region0: #{decoder_forward.3}
  #allocation0 [shape = 'u32[]', space=smem, size = 0x4, offset = 0x4, fixed_abs, tag = 'smem constant byte address 0x4 - core index']
  #allocation1 [shape = 'u32[144,128]{1,0:T(1,128)}', space=vmem, size = 0x12000, scoped, tag = 'internal scratch']
  %s0 = inlined_call_operand.vmem [shape: f32[2,16,1156], index: 0, kind: input, shape index: {}]
  %s1 = inlined_call_operand.vmem [shape: f32[16,1], index: 1, kind: input, shape index: {}]
  %s2 = inlined_call_operand.vmem [shape: f32[16,1], index: 2, kind: input, shape index: {}]
  %s3 = inlined_call_operand.vmem [shape: f32[1,1156], index: 3, kind: input, shape index: {}]
  %s4 = inlined_call_operand.vmem [shape: f32[12,144], index: 4, kind: input, shape index: {}]
  %s5 = inlined_call_operand.vmem [shape: f32[12,1], index: 5, kind: input, shape index: {}]
  %s6 = inlined_call_operand.vmem [shape: f32[2,12,1086], index: 6, kind: output, shape index: {}]
  %s7 = sld [smem:[#allocation0]]
  $region57: #{decoder_forward.3} parent=0
    _
  %s9 = ssub.s32 1, %s7
  %s10 = scalar_select 0, %s9, %s7
  loop: start=0, step=1, limit=4
  $region2: #{decoder_forward.3} parent=0 // loop_pre_header
    _
  $region3: #{decoder_forward.3} parent=0 // loop_header
    %s12 = sphi 0, %s16
    %p13 = scmp.ge.s32.totalorder %s12, 4
    %s22 = sphi 0, %s24
    %s25 = sphi 0, %s22
    %s26 = sphi 0, %s25
    %s42 = sphi 0, %s26
    %s46 = sphi 0, %s46
    %s48 = sphi 0, %s46
    %s49 = sphi 0, %s48
    %s63 = sphi 0, %s49
    %s67 = sphi 0, %s67
    %s69 = sphi 0, %s67
    %s70 = sphi 0, %s69
    %s84 = sphi 0, %s70
    %s88 = sphi 0, %s88
    %s90 = sphi 0, %s88
    %s91 = sphi 0, %s90
    %s105 = sphi 0, %s91
    %s109 = sphi 0, %s109
    %s111 = sphi 0, %s109
    %s112 = sphi 0, %s111
    %s126 = sphi 0, %s112
    %s130 = sphi 0, %s130
    %s132 = sphi 0, %s130
    %s133 = sphi 0, %s132
    %s147 = sphi 0, %s133
    %s153 = sphi 0, %s155
    %s156 = sphi 0, %s153
    %s157 = sphi 0, %s156
    %s173 = sphi 0, %s157
  $region4: #{decoder_forward.3} parent=0 // loop_header_branch
    %15 = sbr.rel (%p13) target = $region8
  $region5: #{decoder_forward.3} parent=0 // loop_body
    %s17 = ssub.s32 %s12, 1
    %s18 = ssub.s32 %s12, 2
    %s19 = sadd.s32 %s12, 1
    %s20 = ssub.s32 %s12, %s19
    %p21 = scmp.eq.s32.totalorder %s20, 0
    %s23 = sadd.s32 %s22, 1
    %s24 = scalar_select %p21, %s22, %s23
    %p27 = pneg %p21
    %p28 = scmp.eq.s32.totalorder %s12, 1
    %p29 = por %p27, %p28
    %p30 = scmp.ne.s32.totalorder %s22, %s25
    %p31 = scmp.eq.s32.totalorder %s12, 0
    %p32 = por %p30, %p31
    %p33 = scmp.ne.s32.totalorder %s22, %s25
    %p34 = scmp.eq.s32.totalorder %s17, 1
    %p35 = por %p33, %p34
    %p36 = scmp.ne.s32.totalorder %s25, %s26
    %p37 = scmp.eq.s32.totalorder %s17, 0
    %p38 = por %p36, %p37
    %p39 = scmp.ne.s32.totalorder %s25, %s26
    %p40 = scmp.eq.s32.totalorder %s18, 1
    %p41 = por %p39, %p40
    %p43 = scmp.ne.s32.totalorder %s26, %s42
    %p44 = scmp.eq.s32.totalorder %s18, 0
    %p45 = por %p43, %p44
    %s47 = sadd.s32 %s46, 1
    %p50 = scmp.eq.s32.totalorder %s12, 1
    %p51 = scmp.ne.s32.totalorder %s46, %s48
    %p52 = scmp.eq.s32.totalorder %s12, 0
    %p53 = por %p51, %p52
    %p54 = scmp.ne.s32.totalorder %s46, %s48
    %p55 = scmp.eq.s32.totalorder %s17, 1
    %p56 = por %p54, %p55
    %p57 = scmp.ne.s32.totalorder %s48, %s49
    %p58 = scmp.eq.s32.totalorder %s17, 0
    %p59 = por %p57, %p58
    %p60 = scmp.ne.s32.totalorder %s48, %s49
    %p61 = scmp.eq.s32.totalorder %s18, 1
    %p62 = por %p60, %p61
    %p64 = scmp.ne.s32.totalorder %s49, %s63
    %p65 = scmp.eq.s32.totalorder %s18, 0
    %p66 = por %p64, %p65
    %s68 = sadd.s32 %s67, 1
    %p71 = scmp.eq.s32.totalorder %s12, 1
    %p72 = scmp.ne.s32.totalorder %s67, %s69
    %p73 = scmp.eq.s32.totalorder %s12, 0
    %p74 = por %p72, %p73
    %p75 = scmp.ne.s32.totalorder %s67, %s69
    %p76 = scmp.eq.s32.totalorder %s17, 1
    %p77 = por %p75, %p76
    %p78 = scmp.ne.s32.totalorder %s69, %s70
    %p79 = scmp.eq.s32.totalorder %s17, 0
    %p80 = por %p78, %p79
    %p81 = scmp.ne.s32.totalorder %s69, %s70
    %p82 = scmp.eq.s32.totalorder %s18, 1
    %p83 = por %p81, %p82
    %p85 = scmp.ne.s32.totalorder %s70, %s84
    %p86 = scmp.eq.s32.totalorder %s18, 0
    %p87 = por %p85, %p86
    %s89 = sadd.s32 %s88, 1
    %p92 = scmp.eq.s32.totalorder %s12, 1
    %p93 = scmp.ne.s32.totalorder %s88, %s90
    %p94 = scmp.eq.s32.totalorder %s12, 0
    %p95 = por %p93, %p94
    %p96 = scmp.ne.s32.totalorder %s88, %s90
    %p97 = scmp.eq.s32.totalorder %s17, 1
    %p98 = por %p96, %p97
    %p99 = scmp.ne.s32.totalorder %s90, %s91
    %p100 = scmp.eq.s32.totalorder %s17, 0
    %p101 = por %p99, %p100
    %p102 = scmp.ne.s32.totalorder %s90, %s91
    %p103 = scmp.eq.s32.totalorder %s18, 1
    %p104 = por %p102, %p103
    %p106 = scmp.ne.s32.totalorder %s91, %s105
    %p107 = scmp.eq.s32.totalorder %s18, 0
    %p108 = por %p106, %p107
    %s110 = sadd.s32 %s109, 1
    %p113 = scmp.eq.s32.totalorder %s12, 1
    %p114 = scmp.ne.s32.totalorder %s109, %s111
    %p115 = scmp.eq.s32.totalorder %s12, 0
    %p116 = por %p114, %p115
    %p117 = scmp.ne.s32.totalorder %s109, %s111
    %p118 = scmp.eq.s32.totalorder %s17, 1
    %p119 = por %p117, %p118
    %p120 = scmp.ne.s32.totalorder %s111, %s112
    %p121 = scmp.eq.s32.totalorder %s17, 0
    %p122 = por %p120, %p121
    %p123 = scmp.ne.s32.totalorder %s111, %s112
    %p124 = scmp.eq.s32.totalorder %s18, 1
    %p125 = por %p123, %p124
    %p127 = scmp.ne.s32.totalorder %s112, %s126
    %p128 = scmp.eq.s32.totalorder %s18, 0
    %p129 = por %p127, %p128
    %s131 = sadd.s32 %s130, 1
    %p134 = scmp.eq.s32.totalorder %s12, 1
    %p135 = scmp.ne.s32.totalorder %s130, %s132
    %p136 = scmp.eq.s32.totalorder %s12, 0
    %p137 = por %p135, %p136
    %p138 = scmp.ne.s32.totalorder %s130, %s132
    %p139 = scmp.eq.s32.totalorder %s17, 1
    %p140 = por %p138, %p139
    %p141 = scmp.ne.s32.totalorder %s132, %s133
    %p142 = scmp.eq.s32.totalorder %s17, 0
    %p143 = por %p141, %p142
    %p144 = scmp.ne.s32.totalorder %s132, %s133
    %p145 = scmp.eq.s32.totalorder %s18, 1
    %p146 = por %p144, %p145
    %p148 = scmp.ne.s32.totalorder %s133, %s147
    %p149 = scmp.eq.s32.totalorder %s18, 0
    %p150 = por %p148, %p149
    %s151 = ssub.s32 %s12, %s19
    %p152 = scmp.eq.s32.totalorder %s151, 0
    %s154 = sadd.s32 %s153, 1
    %s155 = scalar_select %p152, %s153, %s154
    %p158 = pneg %p152
    %p159 = scmp.eq.s32.totalorder %s12, 1
    %p160 = por %p158, %p159
    %p161 = scmp.ne.s32.totalorder %s153, %s156
    %p162 = scmp.eq.s32.totalorder %s12, 0
    %p163 = por %p161, %p162
    %p164 = scmp.ne.s32.totalorder %s153, %s156
    %p165 = scmp.eq.s32.totalorder %s17, 1
    %p166 = por %p164, %p165
    %p167 = scmp.ne.s32.totalorder %s156, %s157
    %p168 = scmp.eq.s32.totalorder %s17, 0
    %p169 = por %p167, %p168
    %p170 = scmp.ne.s32.totalorder %s156, %s157
    %p171 = scmp.eq.s32.totalorder %s18, 1
    %p172 = por %p170, %p171
    %p174 = scmp.ne.s32.totalorder %s157, %s173
    %p175 = scmp.eq.s32.totalorder %s18, 0
    %p176 = por %p174, %p175
    %p177 = scmp.le.s32.totalorder 1, %s12
    %p178 = scmp.lt.s32.totalorder %s12, 3
    %p179 = pnand %p177, %p178
    %p180 = pneg %p179
    // Predicated region
    $region9: #{decoder_forward.3} parent=5 // pred_check
      _
    $region10: #{decoder_forward.3} parent=5 // pred_check_branch
      %182 = sbr.rel (%p179) target = $region12
    $region11: #{decoder_forward.3} parent=5 // pred_region
      %s183 = ssub.s32 %s12, 1
      // Predicated region
      $region13: #{decoder_forward.3} parent=11 // pred_check
        %p184 = pneg %p59
      $region14: #{decoder_forward.3} parent=11 // pred_check_branch
        %186 = sbr.rel (%p184) target = $region16
      $region15: #{decoder_forward.3} parent=11 // pred_region
        _
      $region16: #{decoder_forward.3} parent=11 // pred_fallthru
        _
      // Predicated region
      $region17: #{decoder_forward.3} parent=11 // pred_check
        %p187 = pneg %p80
      $region18: #{decoder_forward.3} parent=11 // pred_check_branch
        %189 = sbr.rel (%p187) target = $region20
      $region19: #{decoder_forward.3} parent=11 // pred_region
        _
      $region20: #{decoder_forward.3} parent=11 // pred_fallthru
        _
      // Predicated region
      $region21: #{decoder_forward.3} parent=11 // pred_check
        %p190 = pneg %p101
      $region22: #{decoder_forward.3} parent=11 // pred_check_branch
        %192 = sbr.rel (%p190) target = $region24
      $region23: #{decoder_forward.3} parent=11 // pred_region
        _
      $region24: #{decoder_forward.3} parent=11 // pred_fallthru
        _
      // Predicated region
      $region25: #{decoder_forward.3} parent=11 // pred_check
        %p193 = pneg %p122
      $region26: #{decoder_forward.3} parent=11 // pred_check_branch
        %195 = sbr.rel (%p193) target = $region28
      $region27: #{decoder_forward.3} parent=11 // pred_region
        _
      $region28: #{decoder_forward.3} parent=11 // pred_fallthru
        _
      // Predicated region
      $region29: #{decoder_forward.3} parent=11 // pred_check
        %p196 = pneg %p143
      $region30: #{decoder_forward.3} parent=11 // pred_check_branch
        %198 = sbr.rel (%p196) target = $region32
      $region31: #{decoder_forward.3} parent=11 // pred_region
        _
      $region32: #{decoder_forward.3} parent=11 // pred_fallthru
        _
    $region12: #{decoder_forward.3} parent=5 // pred_fallthru
      _
    %p199 = scmp.lt.s32.totalorder %s12, 2
    // Predicated region
    $region33: #{decoder_forward.3} parent=5 // pred_check
      %p200 = pneg %p199
    $region34: #{decoder_forward.3} parent=5 // pred_check_branch
      %202 = sbr.rel (%p200) target = $region36
    $region35: #{decoder_forward.3} parent=5 // pred_region
      // Predicated region
      $region37: #{decoder_forward.3} parent=35 // pred_check
        %p203 = pneg %p32
      $region38: #{decoder_forward.3} parent=35 // pred_check_branch
        %205 = sbr.rel (%p203) target = $region40
      $region39: #{decoder_forward.3} parent=35 // pred_region
        %p206 = scmp.lt.s32.totalorder %s12, 1
        %s207 = scalar_select %p206, %s12, 1
        %s208 = smul.addr %s207, 20
        %s209 = smul.addr %s208, 8
        %s210 = scalar_lea.vmem %s0, %s209
      $region40: #{decoder_forward.3} parent=35 // pred_fallthru
        _
    $region36: #{decoder_forward.3} parent=5 // pred_fallthru
      _
    %p211 = scmp.le.s32.totalorder 1, %s12
    %p212 = scmp.lt.s32.totalorder %s12, 3
    %p213 = pnand %p211, %p212
    %p214 = pneg %p213
    // Predicated region
    $region41: #{decoder_forward.3} parent=5 // pred_check
      _
    $region42: #{decoder_forward.3} parent=5 // pred_check_branch
      %216 = sbr.rel (%p213) target = $region44
    $region43: #{decoder_forward.3} parent=5 // pred_region
      %s217 = ssub.s32 %s12, 1
      %p218 = scmp.lt.s32.totalorder %s17, 1
      %s219 = scalar_select %p218, %s17, 1
      %s220 = smul.addr %s219, 20
      %s221 = smul.addr %s220, 8
      %s222 = scalar_lea.vmem %s0, %s221
      %p223 = pneg %p38
      %p224 = pneg %p35
      %p225 = pneg %p59
      %p226 = pneg %p56
      %p227 = pneg %p80
      %p228 = pneg %p77
      %p229 = pneg %p101
      %p230 = pneg %p98
      %p231 = pneg %p122
      %p232 = pneg %p119
      %p233 = pneg %p143
      %p234 = pneg %p140
      %p235 = pneg %p169
      %p236 = pneg %p166
      %p237 = scmp.lt.s32.totalorder %s17, 1
      %s238 = scalar_select %p237, %s17, 1
      %s239 = smul.addr %s238, 18
      %s240 = smul.addr %s239, 8
      %s241 = scalar_lea.vmem %s6, %s240
      %p242 = scmp.lt.s32.totalorder %s17, 1
      %s243 = scalar_select %p242, %s17, 1
      %s244 = smul.addr %s243, 20
      %s245 = smul.addr %s244, 8
      %s246 = scalar_lea.vmem %s0, %s245
      %p247 = scmp.lt.s32.totalorder %s17, 1
      %s248 = scalar_select %p247, %s17, 1
      %s249 = smul.addr %s248, 18
      %s250 = smul.addr %s249, 8
      %s251 = scalar_lea.vmem %s6, %s250
      %v252 = vld [vmem:[%s246] sm:$0xff]
      %v253 = vld [vmem:[%s246 + $0x8] sm:$0xff]
      %v254 = vld [vmem:[%s246 + $0x10] sm:$0xff]
      %v255 = vld [vmem:[%s246 + $0x18] sm:$0xff]
      %v256 = vld [vmem:[%s246 + $0x20] sm:$0xff]
      %v257 = vld [vmem:[%s246 + $0x28] sm:$0xff]
      %v258 = vld [vmem:[%s246 + $0x30] sm:$0xff]
      %v259 = vld [vmem:[%s246 + $0x38] sm:$0xff]
      %v260 = vld [vmem:[%s246 + $0x40] sm:$0xff]
      %v261 = vld [vmem:[%s246 + $0x48] sm:$0xff]
      %v262 = vld [vmem:[%s246 + $0x50] sm:$0xff]
      %v263 = vld [vmem:[%s246 + $0x58] sm:$0xff]
      %v264 = vld [vmem:[%s246 + $0x60] sm:$0xff]
      %v265 = vld [vmem:[%s246 + $0x68] sm:$0xff]
      %v266 = vld [vmem:[%s246 + $0x70] sm:$0xff]
      %v267 = vld [vmem:[%s246 + $0x78] sm:$0xff]
      %v268 = vld [vmem:[%s246 + $0x80] sm:$0xff]
      %v269 = vld [vmem:[%s246 + $0x88] sm:$0xff]
      %v270 = vld [vmem:[%s246 + $0x90] sm:$0xff]
      %v271 = vld [vmem:[%s246 + $0x98] sm:$0xff]
      %v272 = vld [vmem:[%s1] sm:$0xff]
      %v273 = vld [vmem:[%s1 + $0x8] sm:$0xff]
      %275 = vset.pattern.permute.xlu0 0
      %276 = vperm.xlu0 %275, %v272
      %v277 = vpop.permute.xlu0 %276
      %280 = vset.pattern.permute.xlu0 0
      %281 = vperm.xlu0 %280, %v273
      %v282 = vpop.permute.xlu0 %281
      %v284 = vmul.f32 %v252, %v277
      %v285 = vmul.f32 %v253, %v277
      %v286 = vmul.f32 %v254, %v277
      %v287 = vmul.f32 %v255, %v277
      %v288 = vmul.f32 %v256, %v277
      %v289 = vmul.f32 %v257, %v277
      %v290 = vmul.f32 %v258, %v277
      %v291 = vmul.f32 %v259, %v277
      %v292 = vmul.f32 %v260, %v277
      %v293 = vmul.f32 %v261, %v277
      %v294 = vmul.f32 %v262, %v282
      %v295 = vmul.f32 %v263, %v282
      %v296 = vmul.f32 %v264, %v282
      %v297 = vmul.f32 %v265, %v282
      %v298 = vmul.f32 %v266, %v282
      %v299 = vmul.f32 %v267, %v282
      %v300 = vmul.f32 %v268, %v282
      %v301 = vmul.f32 %v269, %v282
      %v302 = vmul.f32 %v270, %v282
      %v303 = vmul.f32 %v271, %v282
      %v304 = vld [vmem:[%s2] sm:$0xff]
      %v305 = vld [vmem:[%s2 + $0x8] sm:$0xff]
      %307 = vset.pattern.permute.xlu0 0
      %308 = vperm.xlu0 %307, %v304
      %v309 = vpop.permute.xlu0 %308
      %312 = vset.pattern.permute.xlu0 0
      %313 = vperm.xlu0 %312, %v305
      %v314 = vpop.permute.xlu0 %313
      %v316 = vadd.f32 %v284, %v309
      %v317 = vadd.f32 %v285, %v309
      %v318 = vadd.f32 %v286, %v309
      %v319 = vadd.f32 %v287, %v309
      %v320 = vadd.f32 %v288, %v309
      %v321 = vadd.f32 %v289, %v309
      %v322 = vadd.f32 %v290, %v309
      %v323 = vadd.f32 %v291, %v309
      %v324 = vadd.f32 %v292, %v309
      %v325 = vadd.f32 %v293, %v309
      %v326 = vadd.f32 %v294, %v314
      %v327 = vadd.f32 %v295, %v314
      %v328 = vadd.f32 %v296, %v314
      %v329 = vadd.f32 %v297, %v314
      %v330 = vadd.f32 %v298, %v314
      %v331 = vadd.f32 %v299, %v314
      %v332 = vadd.f32 %v300, %v314
      %v333 = vadd.f32 %v301, %v314
      %v334 = vadd.f32 %v302, %v314
      %v335 = vadd.f32 %v303, %v314
      %v336 = vmax.f32 %v316, 0.0
      %v337 = vmax.f32 %v317, 0.0
      %v338 = vmax.f32 %v318, 0.0
      %v339 = vmax.f32 %v319, 0.0
      %v340 = vmax.f32 %v320, 0.0
      %v341 = vmax.f32 %v321, 0.0
      %v342 = vmax.f32 %v322, 0.0
      %v343 = vmax.f32 %v323, 0.0
      %v344 = vmax.f32 %v324, 0.0
      %v345 = vmax.f32 %v325, 0.0
      %v346 = vmax.f32 %v326, 0.0
      %v347 = vmax.f32 %v327, 0.0
      %v348 = vmax.f32 %v328, 0.0
      %v349 = vmax.f32 %v329, 0.0
      %v350 = vmax.f32 %v330, 0.0
      %v351 = vmax.f32 %v331, 0.0
      %v352 = vmax.f32 %v332, 0.0
      %v353 = vmax.f32 %v333, 0.0
      %v354 = vmax.f32 %v334, 0.0
      %v355 = vmax.f32 %v335, 0.0
      %v356 = vld [vmem:[%s3] sm:$0xff]
      %v357 = vld [vmem:[%s3 + $0x8] sm:$0x3]
      %v360 = vlaneseq
      %v361 = vshrl.u32 %v360, 7
      %v362 = vsub.s32 0, %v361
      %v363 = vrot.slane %v356, %v362
      %v364 = vlaneseq
      %v365 = vshrl.u32 %v364, 7
      %v366 = vsub.s32 1, %v365
      %v367 = vrot.slane %v356, %v366
      %v368 = vlaneseq
      %v369 = vshrl.u32 %v368, 7
      %v370 = vsub.s32 2, %v369
      %v371 = vrot.slane %v356, %v370
      %v372 = vlaneseq
      %v373 = vshrl.u32 %v372, 7
      %v374 = vsub.s32 3, %v373
      %v375 = vrot.slane %v356, %v374
      %v376 = vlaneseq
      %v377 = vshrl.u32 %v376, 7
      %v378 = vsub.s32 4, %v377
      %v379 = vrot.slane %v356, %v378
      %v380 = vlaneseq
      %v381 = vshrl.u32 %v380, 7
      %v382 = vsub.s32 5, %v381
      %v383 = vrot.slane %v356, %v382
      %v384 = vlaneseq
      %v385 = vshrl.u32 %v384, 7
      %v386 = vsub.s32 6, %v385
      %v387 = vrot.slane %v356, %v386
      %v388 = vlaneseq
      %v389 = vshrl.u32 %v388, 7
      %v390 = vsub.s32 7, %v389
      %v391 = vrot.slane %v356, %v390
      %v392 = vlaneseq
      %v393 = vshrl.u32 %v392, 7
      %v394 = vsub.s32 0, %v393
      %v395 = vrot.slane %v357, %v394
      %v396 = vlaneseq
      %v397 = vshrl.u32 %v396, 7
      %v398 = vsub.s32 1, %v397
      %v399 = vrot.slane %v357, %v398
      %v410 = vmul.f32 %v336, %v363
      %v411 = vmul.f32 %v337, %v367
      %v412 = vmul.f32 %v338, %v371
      %v413 = vmul.f32 %v339, %v375
      %v414 = vmul.f32 %v340, %v379
      %v415 = vmul.f32 %v341, %v383
      %v416 = vmul.f32 %v342, %v387
      %v417 = vmul.f32 %v343, %v391
      %v418 = vmul.f32 %v344, %v395
      %v419 = vmul.f32 %v345, %v399
      %v420 = vmul.f32 %v346, %v363
      %v421 = vmul.f32 %v347, %v367
      %v422 = vmul.f32 %v348, %v371
      %v423 = vmul.f32 %v349, %v375
      %v424 = vmul.f32 %v350, %v379
      %v425 = vmul.f32 %v351, %v383
      %v426 = vmul.f32 %v352, %v387
      %v427 = vmul.f32 %v353, %v391
      %v428 = vmul.f32 %v354, %v395
      %v429 = vmul.f32 %v355, %v399
      %448 = vrot.lane.b32.xlu0 %v410, 127
      %v449 = vpop.permute.xlu0 %448
      %450 = vrot.lane.b32.xlu0 %v411, 127
      %v451 = vpop.permute.xlu0 %450
      %452 = vrot.lane.b32.xlu0 %v412, 127
      %v453 = vpop.permute.xlu0 %452
      %454 = vrot.lane.b32.xlu0 %v413, 127
      %v455 = vpop.permute.xlu0 %454
      %456 = vrot.lane.b32.xlu0 %v414, 127
      %v457 = vpop.permute.xlu0 %456
      %458 = vrot.lane.b32.xlu0 %v415, 127
      %v459 = vpop.permute.xlu0 %458
      %460 = vrot.lane.b32.xlu0 %v416, 127
      %v461 = vpop.permute.xlu0 %460
      %462 = vrot.lane.b32.xlu0 %v417, 127
      %v463 = vpop.permute.xlu0 %462
      %464 = vrot.lane.b32.xlu0 %v418, 127
      %v465 = vpop.permute.xlu0 %464
      %466 = vrot.lane.b32.xlu0 %v420, 127
      %v467 = vpop.permute.xlu0 %466
      %468 = vrot.lane.b32.xlu0 %v421, 127
      %v469 = vpop.permute.xlu0 %468
      %470 = vrot.lane.b32.xlu0 %v422, 127
      %v471 = vpop.permute.xlu0 %470
      %472 = vrot.lane.b32.xlu0 %v423, 127
      %v473 = vpop.permute.xlu0 %472
      %474 = vrot.lane.b32.xlu0 %v424, 127
      %v475 = vpop.permute.xlu0 %474
      %476 = vrot.lane.b32.xlu0 %v425, 127
      %v477 = vpop.permute.xlu0 %476
      %478 = vrot.lane.b32.xlu0 %v426, 127
      %v479 = vpop.permute.xlu0 %478
      %480 = vrot.lane.b32.xlu0 %v427, 127
      %v481 = vpop.permute.xlu0 %480
      %482 = vrot.lane.b32.xlu0 %v428, 127
      %v483 = vpop.permute.xlu0 %482
      %vm484 = vcmask 1039360
      %v485 = vsel %vm484, %v449, %v451
      %v486 = vsel %vm484, %v451, %v453
      %v487 = vsel %vm484, %v453, %v455
      %v488 = vsel %vm484, %v455, %v457
      %v489 = vsel %vm484, %v457, %v459
      %v490 = vsel %vm484, %v459, %v461
      %v491 = vsel %vm484, %v461, %v463
      %v492 = vsel %vm484, %v463, %v465
      %v493 = vsel %vm484, %v467, %v469
      %v494 = vsel %vm484, %v469, %v471
      %v495 = vsel %vm484, %v471, %v473
      %v496 = vsel %vm484, %v473, %v475
      %v497 = vsel %vm484, %v475, %v477
      %v498 = vsel %vm484, %v477, %v479
      %v499 = vsel %vm484, %v479, %v481
      %v500 = vsel %vm484, %v481, %v483
      %519 = vrot.lane.b32.xlu0 %v410, 126
      %v520 = vpop.permute.xlu0 %519
      %521 = vrot.lane.b32.xlu0 %v411, 126
      %v522 = vpop.permute.xlu0 %521
      %523 = vrot.lane.b32.xlu0 %v412, 126
      %v524 = vpop.permute.xlu0 %523
      %525 = vrot.lane.b32.xlu0 %v413, 126
      %v526 = vpop.permute.xlu0 %525
      %527 = vrot.lane.b32.xlu0 %v414, 126
      %v528 = vpop.permute.xlu0 %527
      %529 = vrot.lane.b32.xlu0 %v415, 126
      %v530 = vpop.permute.xlu0 %529
      %531 = vrot.lane.b32.xlu0 %v416, 126
      %v532 = vpop.permute.xlu0 %531
      %533 = vrot.lane.b32.xlu0 %v417, 126
      %v534 = vpop.permute.xlu0 %533
      %535 = vrot.lane.b32.xlu0 %v418, 126
      %v536 = vpop.permute.xlu0 %535
      %537 = vrot.lane.b32.xlu0 %v420, 126
      %v538 = vpop.permute.xlu0 %537
      %539 = vrot.lane.b32.xlu0 %v421, 126
      %v540 = vpop.permute.xlu0 %539
      %541 = vrot.lane.b32.xlu0 %v422, 126
      %v542 = vpop.permute.xlu0 %541
      %543 = vrot.lane.b32.xlu0 %v423, 126
      %v544 = vpop.permute.xlu0 %543
      %545 = vrot.lane.b32.xlu0 %v424, 126
      %v546 = vpop.permute.xlu0 %545
      %547 = vrot.lane.b32.xlu0 %v425, 126
      %v548 = vpop.permute.xlu0 %547
      %549 = vrot.lane.b32.xlu0 %v426, 126
      %v550 = vpop.permute.xlu0 %549
      %551 = vrot.lane.b32.xlu0 %v427, 126
      %v552 = vpop.permute.xlu0 %551
      %553 = vrot.lane.b32.xlu0 %v428, 126
      %v554 = vpop.permute.xlu0 %553
      %vm555 = vcmask 1031168
      %v556 = vsel %vm555, %v520, %v522
      %v557 = vsel %vm555, %v522, %v524
      %v558 = vsel %vm555, %v524, %v526
      %v559 = vsel %vm555, %v526, %v528
      %v560 = vsel %vm555, %v528, %v530
      %v561 = vsel %vm555, %v530, %v532
      %v562 = vsel %vm555, %v532, %v534
      %v563 = vsel %vm555, %v534, %v536
      %v564 = vsel %vm555, %v538, %v540
      %v565 = vsel %vm555, %v540, %v542
      %v566 = vsel %vm555, %v542, %v544
      %v567 = vsel %vm555, %v544, %v546
      %v568 = vsel %vm555, %v546, %v548
      %v569 = vsel %vm555, %v548, %v550
      %v570 = vsel %vm555, %v550, %v552
      %v571 = vsel %vm555, %v552, %v554
      %590 = vrot.lane.b32.xlu0 %v410, 94
      %v591 = vpop.permute.xlu0 %590
      %592 = vrot.lane.b32.xlu0 %v411, 94
      %v593 = vpop.permute.xlu0 %592
      %594 = vrot.lane.b32.xlu0 %v412, 94
      %v595 = vpop.permute.xlu0 %594
      %596 = vrot.lane.b32.xlu0 %v413, 94
      %v597 = vpop.permute.xlu0 %596
      %598 = vrot.lane.b32.xlu0 %v414, 94
      %v599 = vpop.permute.xlu0 %598
      %600 = vrot.lane.b32.xlu0 %v415, 94
      %v601 = vpop.permute.xlu0 %600
      %602 = vrot.lane.b32.xlu0 %v416, 94
      %v603 = vpop.permute.xlu0 %602
      %604 = vrot.lane.b32.xlu0 %v417, 94
      %v605 = vpop.permute.xlu0 %604
      %606 = vrot.lane.b32.xlu0 %v418, 94
      %v607 = vpop.permute.xlu0 %606
      %608 = vrot.lane.b32.xlu0 %v420, 94
      %v609 = vpop.permute.xlu0 %608
      %610 = vrot.lane.b32.xlu0 %v421, 94
      %v611 = vpop.permute.xlu0 %610
      %612 = vrot.lane.b32.xlu0 %v422, 94
      %v613 = vpop.permute.xlu0 %612
      %614 = vrot.lane.b32.xlu0 %v423, 94
      %v615 = vpop.permute.xlu0 %614
      %616 = vrot.lane.b32.xlu0 %v424, 94
      %v617 = vpop.permute.xlu0 %616
      %618 = vrot.lane.b32.xlu0 %v425, 94
      %v619 = vpop.permute.xlu0 %618
      %620 = vrot.lane.b32.xlu0 %v426, 94
      %v621 = vpop.permute.xlu0 %620
      %622 = vrot.lane.b32.xlu0 %v427, 94
      %v623 = vpop.permute.xlu0 %622
      %624 = vrot.lane.b32.xlu0 %v428, 94
      %v625 = vpop.permute.xlu0 %624
      %vm626 = vcmask 769024
      %v627 = vsel %vm626, %v591, %v593
      %v628 = vsel %vm626, %v593, %v595
      %v629 = vsel %vm626, %v595, %v597
      %v630 = vsel %vm626, %v597, %v599
      %v631 = vsel %vm626, %v599, %v601
      %v632 = vsel %vm626, %v601, %v603
      %v633 = vsel %vm626, %v603, %v605
      %v634 = vsel %vm626, %v605, %v607
      %v635 = vsel %vm626, %v609, %v611
      %v636 = vsel %vm626, %v611, %v613
      %v637 = vsel %vm626, %v613, %v615
      %v638 = vsel %vm626, %v615, %v617
      %v639 = vsel %vm626, %v617, %v619
      %v640 = vsel %vm626, %v619, %v621
      %v641 = vsel %vm626, %v621, %v623
      %v642 = vsel %vm626, %v623, %v625
      %661 = vrot.lane.b32.xlu0 %v410, 93
      %v662 = vpop.permute.xlu0 %661
      %663 = vrot.lane.b32.xlu0 %v411, 93
      %v664 = vpop.permute.xlu0 %663
      %665 = vrot.lane.b32.xlu0 %v412, 93
      %v666 = vpop.permute.xlu0 %665
      %667 = vrot.lane.b32.xlu0 %v413, 93
      %v668 = vpop.permute.xlu0 %667
      %669 = vrot.lane.b32.xlu0 %v414, 93
      %v670 = vpop.permute.xlu0 %669
      %671 = vrot.lane.b32.xlu0 %v415, 93
      %v672 = vpop.permute.xlu0 %671
      %673 = vrot.lane.b32.xlu0 %v416, 93
      %v674 = vpop.permute.xlu0 %673
      %675 = vrot.lane.b32.xlu0 %v417, 93
      %v676 = vpop.permute.xlu0 %675
      %677 = vrot.lane.b32.xlu0 %v418, 93
      %v678 = vpop.permute.xlu0 %677
      %679 = vrot.lane.b32.xlu0 %v420, 93
      %v680 = vpop.permute.xlu0 %679
      %681 = vrot.lane.b32.xlu0 %v421, 93
      %v682 = vpop.permute.xlu0 %681
      %683 = vrot.lane.b32.xlu0 %v422, 93
      %v684 = vpop.permute.xlu0 %683
      %685 = vrot.lane.b32.xlu0 %v423, 93
      %v686 = vpop.permute.xlu0 %685
      %687 = vrot.lane.b32.xlu0 %v424, 93
      %v688 = vpop.permute.xlu0 %687
      %689 = vrot.lane.b32.xlu0 %v425, 93
      %v690 = vpop.permute.xlu0 %689
      %691 = vrot.lane.b32.xlu0 %v426, 93
      %v692 = vpop.permute.xlu0 %691
      %693 = vrot.lane.b32.xlu0 %v427, 93
      %v694 = vpop.permute.xlu0 %693
      %695 = vrot.lane.b32.xlu0 %v428, 93
      %v696 = vpop.permute.xlu0 %695
      %vm697 = vcmask 760832
      %v698 = vsel %vm697, %v662, %v664
      %v699 = vsel %vm697, %v664, %v666
      %v700 = vsel %vm697, %v666, %v668
      %v701 = vsel %vm697, %v668, %v670
      %v702 = vsel %vm697, %v670, %v672
      %v703 = vsel %vm697, %v672, %v674
      %v704 = vsel %vm697, %v674, %v676
      %v705 = vsel %vm697, %v676, %v678
      %v706 = vsel %vm697, %v680, %v682
      %v707 = vsel %vm697, %v682, %v684
      %v708 = vsel %vm697, %v684, %v686
      %v709 = vsel %vm697, %v686, %v688
      %v710 = vsel %vm697, %v688, %v690
      %v711 = vsel %vm697, %v690, %v692
      %v712 = vsel %vm697, %v692, %v694
      %v713 = vsel %vm697, %v694, %v696
      %732 = vrot.lane.b32.xlu0 %v410, 92
      %v733 = vpop.permute.xlu0 %732
      %734 = vrot.lane.b32.xlu0 %v411, 92
      %v735 = vpop.permute.xlu0 %734
      %736 = vrot.lane.b32.xlu0 %v412, 92
      %v737 = vpop.permute.xlu0 %736
      %738 = vrot.lane.b32.xlu0 %v413, 92
      %v739 = vpop.permute.xlu0 %738
      %740 = vrot.lane.b32.xlu0 %v414, 92
      %v741 = vpop.permute.xlu0 %740
      %742 = vrot.lane.b32.xlu0 %v415, 92
      %v743 = vpop.permute.xlu0 %742
      %744 = vrot.lane.b32.xlu0 %v416, 92
      %v745 = vpop.permute.xlu0 %744
      %746 = vrot.lane.b32.xlu0 %v417, 92
      %v747 = vpop.permute.xlu0 %746
      %748 = vrot.lane.b32.xlu0 %v418, 92
      %v749 = vpop.permute.xlu0 %748
      %750 = vrot.lane.b32.xlu0 %v420, 92
      %v751 = vpop.permute.xlu0 %750
      %752 = vrot.lane.b32.xlu0 %v421, 92
      %v753 = vpop.permute.xlu0 %752
      %754 = vrot.lane.b32.xlu0 %v422, 92
      %v755 = vpop.permute.xlu0 %754
      %756 = vrot.lane.b32.xlu0 %v423, 92
      %v757 = vpop.permute.xlu0 %756
      %758 = vrot.lane.b32.xlu0 %v424, 92
      %v759 = vpop.permute.xlu0 %758
      %760 = vrot.lane.b32.xlu0 %v425, 92
      %v761 = vpop.permute.xlu0 %760
      %762 = vrot.lane.b32.xlu0 %v426, 92
      %v763 = vpop.permute.xlu0 %762
      %764 = vrot.lane.b32.xlu0 %v427, 92
      %v765 = vpop.permute.xlu0 %764
      %766 = vrot.lane.b32.xlu0 %v428, 92
      %v767 = vpop.permute.xlu0 %766
      %vm768 = vcmask 752640
      %v769 = vsel %vm768, %v733, %v735
      %v770 = vsel %vm768, %v735, %v737
      %v771 = vsel %vm768, %v737, %v739
      %v772 = vsel %vm768, %v739, %v741
      %v773 = vsel %vm768, %v741, %v743
      %v774 = vsel %vm768, %v743, %v745
      %v775 = vsel %vm768, %v745, %v747
      %v776 = vsel %vm768, %v747, %v749
      %v777 = vsel %vm768, %v751, %v753
      %v778 = vsel %vm768, %v753, %v755
      %v779 = vsel %vm768, %v755, %v757
      %v780 = vsel %vm768, %v757, %v759
      %v781 = vsel %vm768, %v759, %v761
      %v782 = vsel %vm768, %v761, %v763
      %v783 = vsel %vm768, %v763, %v765
      %v784 = vsel %vm768, %v765, %v767
      %805 = vrot.lane.b32.xlu0 %v410, 60
      %v806 = vpop.permute.xlu0 %805
      %807 = vrot.lane.b32.xlu0 %v411, 60
      %v808 = vpop.permute.xlu0 %807
      %809 = vrot.lane.b32.xlu0 %v412, 60
      %v810 = vpop.permute.xlu0 %809
      %811 = vrot.lane.b32.xlu0 %v413, 60
      %v812 = vpop.permute.xlu0 %811
      %813 = vrot.lane.b32.xlu0 %v414, 60
      %v814 = vpop.permute.xlu0 %813
      %815 = vrot.lane.b32.xlu0 %v415, 60
      %v816 = vpop.permute.xlu0 %815
      %817 = vrot.lane.b32.xlu0 %v416, 60
      %v818 = vpop.permute.xlu0 %817
      %819 = vrot.lane.b32.xlu0 %v417, 60
      %v820 = vpop.permute.xlu0 %819
      %821 = vrot.lane.b32.xlu0 %v418, 60
      %v822 = vpop.permute.xlu0 %821
      %823 = vrot.lane.b32.xlu0 %v419, 60
      %v824 = vpop.permute.xlu0 %823
      %825 = vrot.lane.b32.xlu0 %v420, 60
      %v826 = vpop.permute.xlu0 %825
      %827 = vrot.lane.b32.xlu0 %v421, 60
      %v828 = vpop.permute.xlu0 %827
      %829 = vrot.lane.b32.xlu0 %v422, 60
      %v830 = vpop.permute.xlu0 %829
      %831 = vrot.lane.b32.xlu0 %v423, 60
      %v832 = vpop.permute.xlu0 %831
      %833 = vrot.lane.b32.xlu0 %v424, 60
      %v834 = vpop.permute.xlu0 %833
      %835 = vrot.lane.b32.xlu0 %v425, 60
      %v836 = vpop.permute.xlu0 %835
      %837 = vrot.lane.b32.xlu0 %v426, 60
      %v838 = vpop.permute.xlu0 %837
      %839 = vrot.lane.b32.xlu0 %v427, 60
      %v840 = vpop.permute.xlu0 %839
      %841 = vrot.lane.b32.xlu0 %v428, 60
      %v842 = vpop.permute.xlu0 %841
      %843 = vrot.lane.b32.xlu0 %v429, 60
      %v844 = vpop.permute.xlu0 %843
      %vm845 = vcmask 490496
      %v846 = vsel %vm845, %v806, %v808
      %v847 = vsel %vm845, %v808, %v810
      %v848 = vsel %vm845, %v810, %v812
      %v849 = vsel %vm845, %v812, %v814
      %v850 = vsel %vm845, %v814, %v816
      %v851 = vsel %vm845, %v816, %v818
      %v852 = vsel %vm845, %v818, %v820
      %v853 = vsel %vm845, %v820, %v822
      %v854 = vsel %vm845, %v822, %v824
      %v855 = vsel %vm845, %v826, %v828
      %v856 = vsel %vm845, %v828, %v830
      %v857 = vsel %vm845, %v830, %v832
      %v858 = vsel %vm845, %v832, %v834
      %v859 = vsel %vm845, %v834, %v836
      %v860 = vsel %vm845, %v836, %v838
      %v861 = vsel %vm845, %v838, %v840
      %v862 = vsel %vm845, %v840, %v842
      %v863 = vsel %vm845, %v842, %v844
      %882 = vrot.lane.b32.xlu0 %v410, 59
      %v883 = vpop.permute.xlu0 %882
      %884 = vrot.lane.b32.xlu0 %v411, 59
      %v885 = vpop.permute.xlu0 %884
      %886 = vrot.lane.b32.xlu0 %v412, 59
      %v887 = vpop.permute.xlu0 %886
      %888 = vrot.lane.b32.xlu0 %v413, 59
      %v889 = vpop.permute.xlu0 %888
      %890 = vrot.lane.b32.xlu0 %v414, 59
      %v891 = vpop.permute.xlu0 %890
      %892 = vrot.lane.b32.xlu0 %v415, 59
      %v893 = vpop.permute.xlu0 %892
      %894 = vrot.lane.b32.xlu0 %v416, 59
      %v895 = vpop.permute.xlu0 %894
      %896 = vrot.lane.b32.xlu0 %v417, 59
      %v897 = vpop.permute.xlu0 %896
      %898 = vrot.lane.b32.xlu0 %v418, 59
      %v899 = vpop.permute.xlu0 %898
      %900 = vrot.lane.b32.xlu0 %v419, 59
      %v901 = vpop.permute.xlu0 %900
      %902 = vrot.lane.b32.xlu0 %v420, 59
      %v903 = vpop.permute.xlu0 %902
      %904 = vrot.lane.b32.xlu0 %v421, 59
      %v905 = vpop.permute.xlu0 %904
      %906 = vrot.lane.b32.xlu0 %v422, 59
      %v907 = vpop.permute.xlu0 %906
      %908 = vrot.lane.b32.xlu0 %v423, 59
      %v909 = vpop.permute.xlu0 %908
      %910 = vrot.lane.b32.xlu0 %v424, 59
      %v911 = vpop.permute.xlu0 %910
      %912 = vrot.lane.b32.xlu0 %v425, 59
      %v913 = vpop.permute.xlu0 %912
      %914 = vrot.lane.b32.xlu0 %v426, 59
      %v915 = vpop.permute.xlu0 %914
      %916 = vrot.lane.b32.xlu0 %v427, 59
      %v917 = vpop.permute.xlu0 %916
      %918 = vrot.lane.b32.xlu0 %v428, 59
      %v919 = vpop.permute.xlu0 %918
      %920 = vrot.lane.b32.xlu0 %v429, 59
      %v921 = vpop.permute.xlu0 %920
      %vm922 = vcmask 482304
      %v923 = vsel %vm922, %v883, %v885
      %v924 = vsel %vm922, %v885, %v887
      %v925 = vsel %vm922, %v887, %v889
      %v926 = vsel %vm922, %v889, %v891
      %v927 = vsel %vm922, %v891, %v893
      %v928 = vsel %vm922, %v893, %v895
      %v929 = vsel %vm922, %v895, %v897
      %v930 = vsel %vm922, %v897, %v899
      %v931 = vsel %vm922, %v899, %v901
      %v932 = vsel %vm922, %v903, %v905
      %v933 = vsel %vm922, %v905, %v907
      %v934 = vsel %vm922, %v907, %v909
      %v935 = vsel %vm922, %v909, %v911
      %v936 = vsel %vm922, %v911, %v913
      %v937 = vsel %vm922, %v913, %v915
      %v938 = vsel %vm922, %v915, %v917
      %v939 = vsel %vm922, %v917, %v919
      %v940 = vsel %vm922, %v919, %v921
      %959 = vrot.lane.b32.xlu0 %v410, 58
      %v960 = vpop.permute.xlu0 %959
      %961 = vrot.lane.b32.xlu0 %v411, 58
      %v962 = vpop.permute.xlu0 %961
      %963 = vrot.lane.b32.xlu0 %v412, 58
      %v964 = vpop.permute.xlu0 %963
      %965 = vrot.lane.b32.xlu0 %v413, 58
      %v966 = vpop.permute.xlu0 %965
      %967 = vrot.lane.b32.xlu0 %v414, 58
      %v968 = vpop.permute.xlu0 %967
      %969 = vrot.lane.b32.xlu0 %v415, 58
      %v970 = vpop.permute.xlu0 %969
      %971 = vrot.lane.b32.xlu0 %v416, 58
      %v972 = vpop.permute.xlu0 %971
      %973 = vrot.lane.b32.xlu0 %v417, 58
      %v974 = vpop.permute.xlu0 %973
      %975 = vrot.lane.b32.xlu0 %v418, 58
      %v976 = vpop.permute.xlu0 %975
      %977 = vrot.lane.b32.xlu0 %v419, 58
      %v978 = vpop.permute.xlu0 %977
      %979 = vrot.lane.b32.xlu0 %v420, 58
      %v980 = vpop.permute.xlu0 %979
      %981 = vrot.lane.b32.xlu0 %v421, 58
      %v982 = vpop.permute.xlu0 %981
      %983 = vrot.lane.b32.xlu0 %v422, 58
      %v984 = vpop.permute.xlu0 %983
      %985 = vrot.lane.b32.xlu0 %v423, 58
      %v986 = vpop.permute.xlu0 %985
      %987 = vrot.lane.b32.xlu0 %v424, 58
      %v988 = vpop.permute.xlu0 %987
      %989 = vrot.lane.b32.xlu0 %v425, 58
      %v990 = vpop.permute.xlu0 %989
      %991 = vrot.lane.b32.xlu0 %v426, 58
      %v992 = vpop.permute.xlu0 %991
      %993 = vrot.lane.b32.xlu0 %v427, 58
      %v994 = vpop.permute.xlu0 %993
      %995 = vrot.lane.b32.xlu0 %v428, 58
      %v996 = vpop.permute.xlu0 %995
      %997 = vrot.lane.b32.xlu0 %v429, 58
      %v998 = vpop.permute.xlu0 %997
      %vm999 = vcmask 474112
      %v1000 = vsel %vm999, %v960, %v962
      %v1001 = vsel %vm999, %v962, %v964
      %v1002 = vsel %vm999, %v964, %v966
      %v1003 = vsel %vm999, %v966, %v968
      %v1004 = vsel %vm999, %v968, %v970
      %v1005 = vsel %vm999, %v970, %v972
      %v1006 = vsel %vm999, %v972, %v974
      %v1007 = vsel %vm999, %v974, %v976
      %v1008 = vsel %vm999, %v976, %v978
      %v1009 = vsel %vm999, %v980, %v982
      %v1010 = vsel %vm999, %v982, %v984
      %v1011 = vsel %vm999, %v984, %v986
      %v1012 = vsel %vm999, %v986, %v988
      %v1013 = vsel %vm999, %v988, %v990
      %v1014 = vsel %vm999, %v990, %v992
      %v1015 = vsel %vm999, %v992, %v994
      %v1016 = vsel %vm999, %v994, %v996
      %v1017 = vsel %vm999, %v996, %v998
      %v1036 = vld [vmem:[%s4] sm:$0xff]
      %v1037 = vld [vmem:[%s4 + $0x8] sm:$0xff]
      %v1038 = vld [vmem:[%s4 + $0x10] sm:$0xf]
      %v1039 = vld [vmem:[%s4 + $0x18] sm:$0xf]
      %v1040 = vld [vmem:[%s5] sm:$0xff]
      %v1041 = vld [vmem:[%s5 + $0x8] sm:$0xf]
      %1043 = vset.pattern.permute.xlu0 0
      %1044 = vperm.xlu0 %1043, %v1040
      %v1045 = vpop.permute.xlu0 %1044
      %1048 = vset.pattern.permute.xlu0 0
      %1049 = vperm.xlu0 %1048, %v1041
      %v1050 = vpop.permute.xlu0 %1049
      %vm1052 = vcmask 130048
      %v1054 = vsel %vm1052, %v1037, 0
      %v1057 = vsel %vm1052, %v1039, 0
      %v1059 = vand.u32 %v933, 4294901760
      %1060 = vmatprep.subr.mxu0 %v1059
      %v1061 = vand.u32 %v932, 4294901760
      %1062 = vmatpush1.msra.mxu0 %v1061
      %v1063 = vand.u32 %v924, 4294901760
      %1064 = vmatprep.subr.mxu0 %v1063
      %v1065 = vand.u32 %v923, 4294901760
      %1066 = vmatpush1.msra.mxu0 %v1065
      %v1067 = vand.u32 %v856, 4294901760
      %1068 = vmatprep.subr.mxu0 %v1067
      %v1069 = vand.u32 %v855, 4294901760
      %1070 = vmatpush1.msra.mxu0 %v1069
      %v1071 = vand.u32 %v847, 4294901760
      %1072 = vmatprep.subr.mxu0 %v1071
      %v1073 = vand.u32 %v846, 4294901760
      %1074 = vmatpush1.msra.mxu0 %v1073
      %v1075 = vand.u32 %v778, 4294901760
      %1076 = vmatprep.subr.mxu0 %v1075
      %v1077 = vand.u32 %v777, 4294901760
      %1078 = vmatpush1.msra.mxu0 %v1077
      %v1079 = vand.u32 %v770, 4294901760
      %1080 = vmatprep.subr.mxu0 %v1079
      %v1081 = vand.u32 %v769, 4294901760
      %1082 = vmatpush1.msra.mxu0 %v1081
      %v1083 = vand.u32 %v707, 4294901760
      %1084 = vmatprep.subr.mxu0 %v1083
      %v1085 = vand.u32 %v706, 4294901760
      %1086 = vmatpush1.msra.mxu0 %v1085
      %v1087 = vand.u32 %v699, 4294901760
      %1088 = vmatprep.subr.mxu0 %v1087
      %v1089 = vand.u32 %v698, 4294901760
      %1090 = vmatpush1.msra.mxu0 %v1089
      %v1091 = vand.u32 %v636, 4294901760
      %1092 = vmatprep.subr.mxu0 %v1091
      %v1093 = vand.u32 %v635, 4294901760
      %1094 = vmatpush1.msra.mxu0 %v1093
      %v1095 = vand.u32 %v628, 4294901760
      %1096 = vmatprep.subr.mxu0 %v1095
      %v1097 = vand.u32 %v627, 4294901760
      %1098 = vmatpush1.msra.mxu0 %v1097
      %v1099 = vand.u32 %v565, 4294901760
      %1100 = vmatprep.subr.mxu0 %v1099
      %v1101 = vand.u32 %v564, 4294901760
      %1102 = vmatpush1.msra.mxu0 %v1101
      %v1103 = vand.u32 %v557, 4294901760
      %1104 = vmatprep.subr.mxu0 %v1103
      %v1105 = vand.u32 %v556, 4294901760
      %1106 = vmatpush1.msra.mxu0 %v1105
      %v1107 = vand.u32 %v494, 4294901760
      %1108 = vmatprep.subr.mxu0 %v1107
      %v1109 = vand.u32 %v493, 4294901760
      %1110 = vmatpush1.msra.mxu0 %v1109
      %v1111 = vand.u32 %v486, 4294901760
      %1112 = vmatprep.subr.mxu0 %v1111
      %v1113 = vand.u32 %v485, 4294901760
      %1114 = vmatpush1.msra.mxu0 %v1113
      %v1115 = vand.u32 %v421, 4294901760
      %1116 = vmatprep.subr.mxu0 %v1115
      %v1117 = vand.u32 %v420, 4294901760
      %1118 = vmatpush1.msra.mxu0 %v1117
      %v1119 = vand.u32 %v411, 4294901760
      %1120 = vmatprep.subr.mxu0 %v1119
      %v1121 = vand.u32 %v410, 4294901760
      %1122 = vmatpush1.msra.mxu0 %v1121
      %1123 = vmatprep.subr.mxu0 0.0
      %1124 = vmatpush2.msra.mxu0 0.0
      %1125 = vmatprep.subr.mxu0 0.0
      %1126 = vmatpush2.msra.mxu0 0.0
      %1127 = vmatprep.subr.mxu0 0.0
      %1128 = vmatpush2.msra.mxu0 0.0
      %1129 = vmatprep.subr.mxu0 0.0
      %1130 = vmatpush2.msra.mxu0 0.0
      %1131 = vmatprep.subr.mxu0 0.0
      %1132 = vmatpush2.msra.mxu0 0.0
      %1133 = vmatprep.subr.mxu0 0.0
      %1134 = vmatpush2.msra.mxu0 0.0
      %1135 = vmatprep.subr.mxu0 0.0
      %1136 = vmatpush2.msra.mxu0 0.0
      %1137 = vmatprep.subr.mxu0 0.0
      %1138 = vmatpush2.msra.mxu0 0.0
      %1139 = vmatprep.subr.mxu0 0.0
      %1140 = vmatpush2.msra.mxu0 0.0
      %1141 = vmatprep.subr.mxu0 0.0
      %1142 = vmatpush2.msra.mxu0 0.0
      %1143 = vmatprep.subr.mxu0 0.0
      %1144 = vmatpush2.msra.mxu0 0.0
      %1145 = vmatprep.subr.mxu0 0.0
      %1146 = vmatpush2.msra.mxu0 0.0
      %1147 = vmatprep.subr.mxu0 0.0
      %1148 = vmatpush2.msra.mxu0 0.0
      %1149 = vmatprep.subr.mxu0 0.0
      %1150 = vmatpush2.msra.mxu0 0.0
      %v1151 = vand.u32 %v1010, 4294901760
      %1152 = vmatprep.subr.mxu0 %v1151
      %v1153 = vand.u32 %v1009, 4294901760
      %1154 = vmatpush2.msra.mxu0 %v1153
      %v1155 = vand.u32 %v1001, 4294901760
      %1156 = vmatprep.subr.mxu0 %v1155
      %v1157 = vand.u32 %v1000, 4294901760
      %1158 = vmatpush2.msra.mxu0 %v1157
      %v1159 = vand.u32 %v1054, 4294901760
      %v1160 = vsub.f32 %v1054, %v1159
      %v1161 = vand.u32 %v1160, 4294901760
      %v1162 = vsub.f32 %v1160, %v1161
      %v1163 = vand.u32 %v1162, 4294901760
      %1164 = vmatprep.mubr.f32.mxu0 %v1163
      %v1165 = vand.u32 %v1036, 4294901760
      %v1166 = vsub.f32 %v1036, %v1165
      %v1167 = vand.u32 %v1166, 4294901760
      %v1168 = vsub.f32 %v1166, %v1167
      %v1169 = vand.u32 %v1168, 4294901760
      %1170 = vmatmul.mubr.f32.gmra.mxu0 %v1169
      %v1171 = vpop.f32.mrf.mxu0
      %v1172 = vadd.f32 %v1045, %v1171
      %v1173 = vpop.f32.mrf.mxu0
      %v1174 = vadd.f32 %v1045, %v1173
      %v1175 = vand.u32 %v1057, 4294901760
      %v1176 = vsub.f32 %v1057, %v1175
      %v1177 = vand.u32 %v1176, 4294901760
      %v1178 = vsub.f32 %v1176, %v1177
      %v1179 = vand.u32 %v1178, 4294901760
      %1180 = vmatprep.mubr.f32.mxu0 %v1179
      %v1181 = vand.u32 %v1038, 4294901760
      %v1182 = vsub.f32 %v1038, %v1181
      %v1183 = vand.u32 %v1182, 4294901760
      %v1184 = vsub.f32 %v1182, %v1183
      %v1185 = vand.u32 %v1184, 4294901760
      %1186 = vmatmul.mubr.f32.gmra.mxu0 %v1185
      %v1187 = vpop.f32.mrf.mxu0
      %v1188 = vadd.f32 %v1050, %v1187
      %v1189 = vpop.f32.mrf.mxu0
      %v1190 = vadd.f32 %v1050, %v1189
      %1191 = vdwg.mxu0
      %v1192 = vand.u32 %v933, 4294901760
      %v1193 = vsub.f32 %v933, %v1192
      %v1194 = vand.u32 %v1193, 4294901760
      %v1195 = vsub.f32 %v1193, %v1194
      %v1196 = vand.u32 %v1195, 4294901760
      %1197 = vmatprep.subr.mxu0 %v1196
      %v1198 = vand.u32 %v932, 4294901760
      %v1199 = vsub.f32 %v932, %v1198
      %v1200 = vand.u32 %v1199, 4294901760
      %v1201 = vsub.f32 %v1199, %v1200
      %v1202 = vand.u32 %v1201, 4294901760
      %1203 = vmatpush1.msra.mxu0 %v1202
      %v1204 = vand.u32 %v924, 4294901760
      %v1205 = vsub.f32 %v924, %v1204
      %v1206 = vand.u32 %v1205, 4294901760
      %v1207 = vsub.f32 %v1205, %v1206
      %v1208 = vand.u32 %v1207, 4294901760
      %1209 = vmatprep.subr.mxu0 %v1208
      %v1210 = vand.u32 %v923, 4294901760
      %v1211 = vsub.f32 %v923, %v1210
      %v1212 = vand.u32 %v1211, 4294901760
      %v1213 = vsub.f32 %v1211, %v1212
      %v1214 = vand.u32 %v1213, 4294901760
      %1215 = vmatpush1.msra.mxu0 %v1214
      %v1216 = vand.u32 %v856, 4294901760
      %v1217 = vsub.f32 %v856, %v1216
      %v1218 = vand.u32 %v1217, 4294901760
      %v1219 = vsub.f32 %v1217, %v1218
      %v1220 = vand.u32 %v1219, 4294901760
      %1221 = vmatprep.subr.mxu0 %v1220
      %v1222 = vand.u32 %v855, 4294901760
      %v1223 = vsub.f32 %v855, %v1222
      %v1224 = vand.u32 %v1223, 4294901760
      %v1225 = vsub.f32 %v1223, %v1224
      %v1226 = vand.u32 %v1225, 4294901760
      %1227 = vmatpush1.msra.mxu0 %v1226
      %v1228 = vand.u32 %v847, 4294901760
      %v1229 = vsub.f32 %v847, %v1228
      %v1230 = vand.u32 %v1229, 4294901760
      %v1231 = vsub.f32 %v1229, %v1230
      %v1232 = vand.u32 %v1231, 4294901760
      %1233 = vmatprep.subr.mxu0 %v1232
      %v1234 = vand.u32 %v846, 4294901760
      %v1235 = vsub.f32 %v846, %v1234
      %v1236 = vand.u32 %v1235, 4294901760
      %v1237 = vsub.f32 %v1235, %v1236
      %v1238 = vand.u32 %v1237, 4294901760
      %1239 = vmatpush1.msra.mxu0 %v1238
      %v1240 = vand.u32 %v778, 4294901760
      %v1241 = vsub.f32 %v778, %v1240
      %v1242 = vand.u32 %v1241, 4294901760
      %v1243 = vsub.f32 %v1241, %v1242
      %v1244 = vand.u32 %v1243, 4294901760
      %1245 = vmatprep.subr.mxu0 %v1244
      %v1246 = vand.u32 %v777, 4294901760
      %v1247 = vsub.f32 %v777, %v1246
      %v1248 = vand.u32 %v1247, 4294901760
      %v1249 = vsub.f32 %v1247, %v1248
      %v1250 = vand.u32 %v1249, 4294901760
      %1251 = vmatpush1.msra.mxu0 %v1250
      %v1252 = vand.u32 %v770, 4294901760
      %v1253 = vsub.f32 %v770, %v1252
      %v1254 = vand.u32 %v1253, 4294901760
      %v1255 = vsub.f32 %v1253, %v1254
      %v1256 = vand.u32 %v1255, 4294901760
      %1257 = vmatprep.subr.mxu0 %v1256
      %v1258 = vand.u32 %v769, 4294901760
      %v1259 = vsub.f32 %v769, %v1258
      %v1260 = vand.u32 %v1259, 4294901760
      %v1261 = vsub.f32 %v1259, %v1260
      %v1262 = vand.u32 %v1261, 4294901760
      %1263 = vmatpush1.msra.mxu0 %v1262
      %v1264 = vand.u32 %v707, 4294901760
      %v1265 = vsub.f32 %v707, %v1264
      %v1266 = vand.u32 %v1265, 4294901760
      %v1267 = vsub.f32 %v1265, %v1266
      %v1268 = vand.u32 %v1267, 4294901760
      %1269 = vmatprep.subr.mxu0 %v1268
      %v1270 = vand.u32 %v706, 4294901760
      %v1271 = vsub.f32 %v706, %v1270
      %v1272 = vand.u32 %v1271, 4294901760
      %v1273 = vsub.f32 %v1271, %v1272
      %v1274 = vand.u32 %v1273, 4294901760
      %1275 = vmatpush1.msra.mxu0 %v1274
      %v1276 = vand.u32 %v699, 4294901760
      %v1277 = vsub.f32 %v699, %v1276
      %v1278 = vand.u32 %v1277, 4294901760
      %v1279 = vsub.f32 %v1277, %v1278
      %v1280 = vand.u32 %v1279, 4294901760
      %1281 = vmatprep.subr.mxu0 %v1280
      %v1282 = vand.u32 %v698, 4294901760
      %v1283 = vsub.f32 %v698, %v1282
      %v1284 = vand.u32 %v1283, 4294901760
      %v1285 = vsub.f32 %v1283, %v1284
      %v1286 = vand.u32 %v1285, 4294901760
      %1287 = vmatpush1.msra.mxu0 %v1286
      %v1288 = vand.u32 %v636, 4294901760
      %v1289 = vsub.f32 %v636, %v1288
      %v1290 = vand.u32 %v1289, 4294901760
      %v1291 = vsub.f32 %v1289, %v1290
      %v1292 = vand.u32 %v1291, 4294901760
      %1293 = vmatprep.subr.mxu0 %v1292
      %v1294 = vand.u32 %v635, 4294901760
      %v1295 = vsub.f32 %v635, %v1294
      %v1296 = vand.u32 %v1295, 4294901760
      %v1297 = vsub.f32 %v1295, %v1296
      %v1298 = vand.u32 %v1297, 4294901760
      %1299 = vmatpush1.msra.mxu0 %v1298
      %v1300 = vand.u32 %v628, 4294901760
      %v1301 = vsub.f32 %v628, %v1300
      %v1302 = vand.u32 %v1301, 4294901760
      %v1303 = vsub.f32 %v1301, %v1302
      %v1304 = vand.u32 %v1303, 4294901760
      %1305 = vmatprep.subr.mxu0 %v1304
      %v1306 = vand.u32 %v627, 4294901760
      %v1307 = vsub.f32 %v627, %v1306
      %v1308 = vand.u32 %v1307, 4294901760
      %v1309 = vsub.f32 %v1307, %v1308
      %v1310 = vand.u32 %v1309, 4294901760
      %1311 = vmatpush1.msra.mxu0 %v1310
      %v1312 = vand.u32 %v565, 4294901760
      %v1313 = vsub.f32 %v565, %v1312
      %v1314 = vand.u32 %v1313, 4294901760
      %v1315 = vsub.f32 %v1313, %v1314
      %v1316 = vand.u32 %v1315, 4294901760
      %1317 = vmatprep.subr.mxu0 %v1316
      %v1318 = vand.u32 %v564, 4294901760
      %v1319 = vsub.f32 %v564, %v1318
      %v1320 = vand.u32 %v1319, 4294901760
      %v1321 = vsub.f32 %v1319, %v1320
      %v1322 = vand.u32 %v1321, 4294901760
      %1323 = vmatpush1.msra.mxu0 %v1322
      %v1324 = vand.u32 %v557, 4294901760
      %v1325 = vsub.f32 %v557, %v1324
      %v1326 = vand.u32 %v1325, 4294901760
      %v1327 = vsub.f32 %v1325, %v1326
      %v1328 = vand.u32 %v1327, 4294901760
      %1329 = vmatprep.subr.mxu0 %v1328
      %v1330 = vand.u32 %v556, 4294901760
      %v1331 = vsub.f32 %v556, %v1330
      %v1332 = vand.u32 %v1331, 4294901760
      %v1333 = vsub.f32 %v1331, %v1332
      %v1334 = vand.u32 %v1333, 4294901760
      %1335 = vmatpush1.msra.mxu0 %v1334
      %v1336 = vand.u32 %v494, 4294901760
      %v1337 = vsub.f32 %v494, %v1336
      %v1338 = vand.u32 %v1337, 4294901760
      %v1339 = vsub.f32 %v1337, %v1338
      %v1340 = vand.u32 %v1339, 4294901760
      %1341 = vmatprep.subr.mxu0 %v1340
      %v1342 = vand.u32 %v493, 4294901760
      %v1343 = vsub.f32 %v493, %v1342
      %v1344 = vand.u32 %v1343, 4294901760
      %v1345 = vsub.f32 %v1343, %v1344
      %v1346 = vand.u32 %v1345, 4294901760
      %1347 = vmatpush1.msra.mxu0 %v1346
      %v1348 = vand.u32 %v486, 4294901760
      %v1349 = vsub.f32 %v486, %v1348
      %v1350 = vand.u32 %v1349, 4294901760
      %v1351 = vsub.f32 %v1349, %v1350
      %v1352 = vand.u32 %v1351, 4294901760
      %1353 = vmatprep.subr.mxu0 %v1352
      %v1354 = vand.u32 %v485, 4294901760
      %v1355 = vsub.f32 %v485, %v1354
      %v1356 = vand.u32 %v1355, 4294901760
      %v1357 = vsub.f32 %v1355, %v1356
      %v1358 = vand.u32 %v1357, 4294901760
      %1359 = vmatpush1.msra.mxu0 %v1358
      %v1360 = vand.u32 %v421, 4294901760
      %v1361 = vsub.f32 %v421, %v1360
      %v1362 = vand.u32 %v1361, 4294901760
      %v1363 = vsub.f32 %v1361, %v1362
      %v1364 = vand.u32 %v1363, 4294901760
      %1365 = vmatprep.subr.mxu0 %v1364
      %v1366 = vand.u32 %v420, 4294901760
      %v1367 = vsub.f32 %v420, %v1366
      %v1368 = vand.u32 %v1367, 4294901760
      %v1369 = vsub.f32 %v1367, %v1368
      %v1370 = vand.u32 %v1369, 4294901760
      %1371 = vmatpush1.msra.mxu0 %v1370
      %v1372 = vand.u32 %v411, 4294901760
      %v1373 = vsub.f32 %v411, %v1372
      %v1374 = vand.u32 %v1373, 4294901760
      %v1375 = vsub.f32 %v1373, %v1374
      %v1376 = vand.u32 %v1375, 4294901760
      %1377 = vmatprep.subr.mxu0 %v1376
      %v1378 = vand.u32 %v410, 4294901760
      %v1379 = vsub.f32 %v410, %v1378
      %v1380 = vand.u32 %v1379, 4294901760
      %v1381 = vsub.f32 %v1379, %v1380
      %v1382 = vand.u32 %v1381, 4294901760
      %1383 = vmatpush1.msra.mxu0 %v1382
      %1384 = vmatprep.subr.mxu0 0.0
      %1385 = vmatpush2.msra.mxu0 0.0
      %1386 = vmatprep.subr.mxu0 0.0
      %1387 = vmatpush2.msra.mxu0 0.0
      %1388 = vmatprep.subr.mxu0 0.0
      %1389 = vmatpush2.msra.mxu0 0.0
      %1390 = vmatprep.subr.mxu0 0.0
      %1391 = vmatpush2.msra.mxu0 0.0
      %1392 = vmatprep.subr.mxu0 0.0
      %1393 = vmatpush2.msra.mxu0 0.0
      %1394 = vmatprep.subr.mxu0 0.0
      %1395 = vmatpush2.msra.mxu0 0.0
      %1396 = vmatprep.subr.mxu0 0.0
      %1397 = vmatpush2.msra.mxu0 0.0
      %1398 = vmatprep.subr.mxu0 0.0
      %1399 = vmatpush2.msra.mxu0 0.0
      %1400 = vmatprep.subr.mxu0 0.0
      %1401 = vmatpush2.msra.mxu0 0.0
      %1402 = vmatprep.subr.mxu0 0.0
      %1403 = vmatpush2.msra.mxu0 0.0
      %1404 = vmatprep.subr.mxu0 0.0
      %1405 = vmatpush2.msra.mxu0 0.0
      %1406 = vmatprep.subr.mxu0 0.0
      %1407 = vmatpush2.msra.mxu0 0.0
      %1408 = vmatprep.subr.mxu0 0.0
      %1409 = vmatpush2.msra.mxu0 0.0
      %1410 = vmatprep.subr.mxu0 0.0
      %1411 = vmatpush2.msra.mxu0 0.0
      %v1412 = vand.u32 %v1010, 4294901760
      %v1413 = vsub.f32 %v1010, %v1412
      %v1414 = vand.u32 %v1413, 4294901760
      %v1415 = vsub.f32 %v1413, %v1414
      %v1416 = vand.u32 %v1415, 4294901760
      %1417 = vmatprep.subr.mxu0 %v1416
      %v1418 = vand.u32 %v1009, 4294901760
      %v1419 = vsub.f32 %v1009, %v1418
      %v1420 = vand.u32 %v1419, 4294901760
      %v1421 = vsub.f32 %v1419, %v1420
      %v1422 = vand.u32 %v1421, 4294901760
      %1423 = vmatpush2.msra.mxu0 %v1422
      %v1424 = vand.u32 %v1001, 4294901760
      %v1425 = vsub.f32 %v1001, %v1424
      %v1426 = vand.u32 %v1425, 4294901760
      %v1427 = vsub.f32 %v1425, %v1426
      %v1428 = vand.u32 %v1427, 4294901760
      %1429 = vmatprep.subr.mxu0 %v1428
      %v1430 = vand.u32 %v1000, 4294901760
      %v1431 = vsub.f32 %v1000, %v1430
      %v1432 = vand.u32 %v1431, 4294901760
      %v1433 = vsub.f32 %v1431, %v1432
      %v1434 = vand.u32 %v1433, 4294901760
      %1435 = vmatpush2.msra.mxu0 %v1434
      %v1436 = vand.u32 %v1054, 4294901760
      %1437 = vmatprep.mubr.f32.mxu0 %v1436
      %v1438 = vand.u32 %v1036, 4294901760
      %1439 = vmatmul.mubr.f32.gmra.mxu0 %v1438
      %v1440 = vpop.f32.mrf.mxu0
      %v1441 = vadd.f32 %v1172, %v1440
      %v1442 = vpop.f32.mrf.mxu0
      %v1443 = vadd.f32 %v1174, %v1442
      %v1444 = vand.u32 %v1057, 4294901760
      %1445 = vmatprep.mubr.f32.mxu0 %v1444
      %v1446 = vand.u32 %v1038, 4294901760
      %1447 = vmatmul.mubr.f32.gmra.mxu0 %v1446
      %v1448 = vpop.f32.mrf.mxu0
      %v1449 = vadd.f32 %v1188, %v1448
      %v1450 = vpop.f32.mrf.mxu0
      %v1451 = vadd.f32 %v1190, %v1450
      %1452 = vdwg.mxu0
      %v1453 = vand.u32 %v933, 4294901760
      %v1454 = vsub.f32 %v933, %v1453
      %1455 = vmatprep.subr.mxu0 %v1454
      %v1456 = vand.u32 %v932, 4294901760
      %v1457 = vsub.f32 %v932, %v1456
      %1458 = vmatpush1.msra.mxu0 %v1457
      %v1459 = vand.u32 %v924, 4294901760
      %v1460 = vsub.f32 %v924, %v1459
      %1461 = vmatprep.subr.mxu0 %v1460
      %v1462 = vand.u32 %v923, 4294901760
      %v1463 = vsub.f32 %v923, %v1462
      %1464 = vmatpush1.msra.mxu0 %v1463
      %v1465 = vand.u32 %v856, 4294901760
      %v1466 = vsub.f32 %v856, %v1465
      %1467 = vmatprep.subr.mxu0 %v1466
      %v1468 = vand.u32 %v855, 4294901760
      %v1469 = vsub.f32 %v855, %v1468
      %1470 = vmatpush1.msra.mxu0 %v1469
      %v1471 = vand.u32 %v847, 4294901760
      %v1472 = vsub.f32 %v847, %v1471
      %1473 = vmatprep.subr.mxu0 %v1472
      %v1474 = vand.u32 %v846, 4294901760
      %v1475 = vsub.f32 %v846, %v1474
      %1476 = vmatpush1.msra.mxu0 %v1475
      %v1477 = vand.u32 %v778, 4294901760
      %v1478 = vsub.f32 %v778, %v1477
      %1479 = vmatprep.subr.mxu0 %v1478
      %v1480 = vand.u32 %v777, 4294901760
      %v1481 = vsub.f32 %v777, %v1480
      %1482 = vmatpush1.msra.mxu0 %v1481
      %v1483 = vand.u32 %v770, 4294901760
      %v1484 = vsub.f32 %v770, %v1483
      %1485 = vmatprep.subr.mxu0 %v1484
      %v1486 = vand.u32 %v769, 4294901760
      %v1487 = vsub.f32 %v769, %v1486
      %1488 = vmatpush1.msra.mxu0 %v1487
      %v1489 = vand.u32 %v707, 4294901760
      %v1490 = vsub.f32 %v707, %v1489
      %1491 = vmatprep.subr.mxu0 %v1490
      %v1492 = vand.u32 %v706, 4294901760
      %v1493 = vsub.f32 %v706, %v1492
      %1494 = vmatpush1.msra.mxu0 %v1493
      %v1495 = vand.u32 %v699, 4294901760
      %v1496 = vsub.f32 %v699, %v1495
      %1497 = vmatprep.subr.mxu0 %v1496
      %v1498 = vand.u32 %v698, 4294901760
      %v1499 = vsub.f32 %v698, %v1498
      %1500 = vmatpush1.msra.mxu0 %v1499
      %v1501 = vand.u32 %v636, 4294901760
      %v1502 = vsub.f32 %v636, %v1501
      %1503 = vmatprep.subr.mxu0 %v1502
      %v1504 = vand.u32 %v635, 4294901760
      %v1505 = vsub.f32 %v635, %v1504
      %1506 = vmatpush1.msra.mxu0 %v1505
      %v1507 = vand.u32 %v628, 4294901760
      %v1508 = vsub.f32 %v628, %v1507
      %1509 = vmatprep.subr.mxu0 %v1508
      %v1510 = vand.u32 %v627, 4294901760
      %v1511 = vsub.f32 %v627, %v1510
      %1512 = vmatpush1.msra.mxu0 %v1511
      %v1513 = vand.u32 %v565, 4294901760
      %v1514 = vsub.f32 %v565, %v1513
      %1515 = vmatprep.subr.mxu0 %v1514
      %v1516 = vand.u32 %v564, 4294901760
      %v1517 = vsub.f32 %v564, %v1516
      %1518 = vmatpush1.msra.mxu0 %v1517
      %v1519 = vand.u32 %v557, 4294901760
      %v1520 = vsub.f32 %v557, %v1519
      %1521 = vmatprep.subr.mxu0 %v1520
      %v1522 = vand.u32 %v556, 4294901760
      %v1523 = vsub.f32 %v556, %v1522
      %1524 = vmatpush1.msra.mxu0 %v1523
      %v1525 = vand.u32 %v494, 4294901760
      %v1526 = vsub.f32 %v494, %v1525
      %1527 = vmatprep.subr.mxu0 %v1526
      %v1528 = vand.u32 %v493, 4294901760
      %v1529 = vsub.f32 %v493, %v1528
      %1530 = vmatpush1.msra.mxu0 %v1529
      %v1531 = vand.u32 %v486, 4294901760
      %v1532 = vsub.f32 %v486, %v1531
      %1533 = vmatprep.subr.mxu0 %v1532
      %v1534 = vand.u32 %v485, 4294901760
      %v1535 = vsub.f32 %v485, %v1534
      %1536 = vmatpush1.msra.mxu0 %v1535
      %v1537 = vand.u32 %v421, 4294901760
      %v1538 = vsub.f32 %v421, %v1537
      %1539 = vmatprep.subr.mxu0 %v1538
      %v1540 = vand.u32 %v420, 4294901760
      %v1541 = vsub.f32 %v420, %v1540
      %1542 = vmatpush1.msra.mxu0 %v1541
      %v1543 = vand.u32 %v411, 4294901760
      %v1544 = vsub.f32 %v411, %v1543
      %1545 = vmatprep.subr.mxu0 %v1544
      %v1546 = vand.u32 %v410, 4294901760
      %v1547 = vsub.f32 %v410, %v1546
      %1548 = vmatpush1.msra.mxu0 %v1547
      %1549 = vmatprep.subr.mxu0 0.0
      %1550 = vmatpush2.msra.mxu0 0.0
      %1551 = vmatprep.subr.mxu0 0.0
      %1552 = vmatpush2.msra.mxu0 0.0
      %1553 = vmatprep.subr.mxu0 0.0
      %1554 = vmatpush2.msra.mxu0 0.0
      %1555 = vmatprep.subr.mxu0 0.0
      %1556 = vmatpush2.msra.mxu0 0.0
      %1557 = vmatprep.subr.mxu0 0.0
      %1558 = vmatpush2.msra.mxu0 0.0
      %1559 = vmatprep.subr.mxu0 0.0
      %1560 = vmatpush2.msra.mxu0 0.0
      %1561 = vmatprep.subr.mxu0 0.0
      %1562 = vmatpush2.msra.mxu0 0.0
      %1563 = vmatprep.subr.mxu0 0.0
      %1564 = vmatpush2.msra.mxu0 0.0
      %1565 = vmatprep.subr.mxu0 0.0
      %1566 = vmatpush2.msra.mxu0 0.0
      %1567 = vmatprep.subr.mxu0 0.0
      %1568 = vmatpush2.msra.mxu0 0.0
      %1569 = vmatprep.subr.mxu0 0.0
      %1570 = vmatpush2.msra.mxu0 0.0
      %1571 = vmatprep.subr.mxu0 0.0
      %1572 = vmatpush2.msra.mxu0 0.0
      %1573 = vmatprep.subr.mxu0 0.0
      %1574 = vmatpush2.msra.mxu0 0.0
      %1575 = vmatprep.subr.mxu0 0.0
      %1576 = vmatpush2.msra.mxu0 0.0
      %v1577 = vand.u32 %v1010, 4294901760
      %v1578 = vsub.f32 %v1010, %v1577
      %1579 = vmatprep.subr.mxu0 %v1578
      %v1580 = vand.u32 %v1009, 4294901760
      %v1581 = vsub.f32 %v1009, %v1580
      %1582 = vmatpush2.msra.mxu0 %v1581
      %v1583 = vand.u32 %v1001, 4294901760
      %v1584 = vsub.f32 %v1001, %v1583
      %1585 = vmatprep.subr.mxu0 %v1584
      %v1586 = vand.u32 %v1000, 4294901760
      %v1587 = vsub.f32 %v1000, %v1586
      %1588 = vmatpush2.msra.mxu0 %v1587
      %v1589 = vand.u32 %v1054, 4294901760
      %v1590 = vsub.f32 %v1054, %v1589
      %1591 = vmatprep.mubr.f32.mxu0 %v1590
      %v1592 = vand.u32 %v1036, 4294901760
      %v1593 = vsub.f32 %v1036, %v1592
      %1594 = vmatmul.mubr.f32.gmra.mxu0 %v1593
      %v1595 = vpop.f32.mrf.mxu0
      %v1596 = vadd.f32 %v1441, %v1595
      %v1597 = vpop.f32.mrf.mxu0
      %v1598 = vadd.f32 %v1443, %v1597
      %v1599 = vand.u32 %v1057, 4294901760
      %v1600 = vsub.f32 %v1057, %v1599
      %1601 = vmatprep.mubr.f32.mxu0 %v1600
      %v1602 = vand.u32 %v1038, 4294901760
      %v1603 = vsub.f32 %v1038, %v1602
      %1604 = vmatmul.mubr.f32.gmra.mxu0 %v1603
      %v1605 = vpop.f32.mrf.mxu0
      %v1606 = vadd.f32 %v1449, %v1605
      %v1607 = vpop.f32.mrf.mxu0
      %v1608 = vadd.f32 %v1451, %v1607
      %1609 = vdwg.mxu0
      %v1610 = vand.u32 %v933, 4294901760
      %1611 = vmatprep.subr.mxu0 %v1610
      %v1612 = vand.u32 %v932, 4294901760
      %1613 = vmatpush1.msra.mxu0 %v1612
      %v1614 = vand.u32 %v924, 4294901760
      %1615 = vmatprep.subr.mxu0 %v1614
      %v1616 = vand.u32 %v923, 4294901760
      %1617 = vmatpush1.msra.mxu0 %v1616
      %v1618 = vand.u32 %v856, 4294901760
      %1619 = vmatprep.subr.mxu0 %v1618
      %v1620 = vand.u32 %v855, 4294901760
      %1621 = vmatpush1.msra.mxu0 %v1620
      %v1622 = vand.u32 %v847, 4294901760
      %1623 = vmatprep.subr.mxu0 %v1622
      %v1624 = vand.u32 %v846, 4294901760
      %1625 = vmatpush1.msra.mxu0 %v1624
      %v1626 = vand.u32 %v778, 4294901760
      %1627 = vmatprep.subr.mxu0 %v1626
      %v1628 = vand.u32 %v777, 4294901760
      %1629 = vmatpush1.msra.mxu0 %v1628
      %v1630 = vand.u32 %v770, 4294901760
      %1631 = vmatprep.subr.mxu0 %v1630
      %v1632 = vand.u32 %v769, 4294901760
      %1633 = vmatpush1.msra.mxu0 %v1632
      %v1634 = vand.u32 %v707, 4294901760
      %1635 = vmatprep.subr.mxu0 %v1634
      %v1636 = vand.u32 %v706, 4294901760
      %1637 = vmatpush1.msra.mxu0 %v1636
      %v1638 = vand.u32 %v699, 4294901760
      %1639 = vmatprep.subr.mxu0 %v1638
      %v1640 = vand.u32 %v698, 4294901760
      %1641 = vmatpush1.msra.mxu0 %v1640
      %v1642 = vand.u32 %v636, 4294901760
      %1643 = vmatprep.subr.mxu0 %v1642
      %v1644 = vand.u32 %v635, 4294901760
      %1645 = vmatpush1.msra.mxu0 %v1644
      %v1646 = vand.u32 %v628, 4294901760
      %1647 = vmatprep.subr.mxu0 %v1646
      %v1648 = vand.u32 %v627, 4294901760
      %1649 = vmatpush1.msra.mxu0 %v1648
      %v1650 = vand.u32 %v565, 4294901760
      %1651 = vmatprep.subr.mxu0 %v1650
      %v1652 = vand.u32 %v564, 4294901760
      %1653 = vmatpush1.msra.mxu0 %v1652
      %v1654 = vand.u32 %v557, 4294901760
      %1655 = vmatprep.subr.mxu0 %v1654
      %v1656 = vand.u32 %v556, 4294901760
      %1657 = vmatpush1.msra.mxu0 %v1656
      %v1658 = vand.u32 %v494, 4294901760
      %1659 = vmatprep.subr.mxu0 %v1658
      %v1660 = vand.u32 %v493, 4294901760
      %1661 = vmatpush1.msra.mxu0 %v1660
      %v1662 = vand.u32 %v486, 4294901760
      %1663 = vmatprep.subr.mxu0 %v1662
      %v1664 = vand.u32 %v485, 4294901760
      %1665 = vmatpush1.msra.mxu0 %v1664
      %v1666 = vand.u32 %v421, 4294901760
      %1667 = vmatprep.subr.mxu0 %v1666
      %v1668 = vand.u32 %v420, 4294901760
      %1669 = vmatpush1.msra.mxu0 %v1668
      %v1670 = vand.u32 %v411, 4294901760
      %1671 = vmatprep.subr.mxu0 %v1670
      %v1672 = vand.u32 %v410, 4294901760
      %1673 = vmatpush1.msra.mxu0 %v1672
      %1674 = vmatprep.subr.mxu0 0.0
      %1675 = vmatpush2.msra.mxu0 0.0
      %1676 = vmatprep.subr.mxu0 0.0
      %1677 = vmatpush2.msra.mxu0 0.0
      %1678 = vmatprep.subr.mxu0 0.0
      %1679 = vmatpush2.msra.mxu0 0.0
      %1680 = vmatprep.subr.mxu0 0.0
      %1681 = vmatpush2.msra.mxu0 0.0
      %1682 = vmatprep.subr.mxu0 0.0
      %1683 = vmatpush2.msra.mxu0 0.0
      %1684 = vmatprep.subr.mxu0 0.0
      %1685 = vmatpush2.msra.mxu0 0.0
      %1686 = vmatprep.subr.mxu0 0.0
      %1687 = vmatpush2.msra.mxu0 0.0
      %1688 = vmatprep.subr.mxu0 0.0
      %1689 = vmatpush2.msra.mxu0 0.0
      %1690 = vmatprep.subr.mxu0 0.0
      %1691 = vmatpush2.msra.mxu0 0.0
      %1692 = vmatprep.subr.mxu0 0.0
      %1693 = vmatpush2.msra.mxu0 0.0
      %1694 = vmatprep.subr.mxu0 0.0
      %1695 = vmatpush2.msra.mxu0 0.0
      %1696 = vmatprep.subr.mxu0 0.0
      %1697 = vmatpush2.msra.mxu0 0.0
      %1698 = vmatprep.subr.mxu0 0.0
      %1699 = vmatpush2.msra.mxu0 0.0
      %1700 = vmatprep.subr.mxu0 0.0
      %1701 = vmatpush2.msra.mxu0 0.0
      %v1702 = vand.u32 %v1010, 4294901760
      %1703 = vmatprep.subr.mxu0 %v1702
      %v1704 = vand.u32 %v1009, 4294901760
      %1705 = vmatpush2.msra.mxu0 %v1704
      %v1706 = vand.u32 %v1001, 4294901760
      %1707 = vmatprep.subr.mxu0 %v1706
      %v1708 = vand.u32 %v1000, 4294901760
      %1709 = vmatpush2.msra.mxu0 %v1708
      %v1710 = vand.u32 %v1054, 4294901760
      %v1711 = vsub.f32 %v1054, %v1710
      %v1712 = vand.u32 %v1711, 4294901760
      %1713 = vmatprep.mubr.f32.mxu0 %v1712
      %v1714 = vand.u32 %v1036, 4294901760
      %v1715 = vsub.f32 %v1036, %v1714
      %v1716 = vand.u32 %v1715, 4294901760
      %1717 = vmatmul.mubr.f32.gmra.mxu0 %v1716
      %v1718 = vpop.f32.mrf.mxu0
      %v1719 = vadd.f32 %v1596, %v1718
      %v1720 = vpop.f32.mrf.mxu0
      %v1721 = vadd.f32 %v1598, %v1720
      %v1722 = vand.u32 %v1057, 4294901760
      %v1723 = vsub.f32 %v1057, %v1722
      %v1724 = vand.u32 %v1723, 4294901760
      %1725 = vmatprep.mubr.f32.mxu0 %v1724
      %v1726 = vand.u32 %v1038, 4294901760
      %v1727 = vsub.f32 %v1038, %v1726
      %v1728 = vand.u32 %v1727, 4294901760
      %1729 = vmatmul.mubr.f32.gmra.mxu0 %v1728
      %v1730 = vpop.f32.mrf.mxu0
      %v1731 = vadd.f32 %v1606, %v1730
      %v1732 = vpop.f32.mrf.mxu0
      %v1733 = vadd.f32 %v1608, %v1732
      %1734 = vdwg.mxu0
      %v1735 = vand.u32 %v933, 4294901760
      %v1736 = vsub.f32 %v933, %v1735
      %v1737 = vand.u32 %v1736, 4294901760
      %1738 = vmatprep.subr.mxu0 %v1737
      %v1739 = vand.u32 %v932, 4294901760
      %v1740 = vsub.f32 %v932, %v1739
      %v1741 = vand.u32 %v1740, 4294901760
      %1742 = vmatpush1.msra.mxu0 %v1741
      %v1743 = vand.u32 %v924, 4294901760
      %v1744 = vsub.f32 %v924, %v1743
      %v1745 = vand.u32 %v1744, 4294901760
      %1746 = vmatprep.subr.mxu0 %v1745
      %v1747 = vand.u32 %v923, 4294901760
      %v1748 = vsub.f32 %v923, %v1747
      %v1749 = vand.u32 %v1748, 4294901760
      %1750 = vmatpush1.msra.mxu0 %v1749
      %v1751 = vand.u32 %v856, 4294901760
      %v1752 = vsub.f32 %v856, %v1751
      %v1753 = vand.u32 %v1752, 4294901760
      %1754 = vmatprep.subr.mxu0 %v1753
      %v1755 = vand.u32 %v855, 4294901760
      %v1756 = vsub.f32 %v855, %v1755
      %v1757 = vand.u32 %v1756, 4294901760
      %1758 = vmatpush1.msra.mxu0 %v1757
      %v1759 = vand.u32 %v847, 4294901760
      %v1760 = vsub.f32 %v847, %v1759
      %v1761 = vand.u32 %v1760, 4294901760
      %1762 = vmatprep.subr.mxu0 %v1761
      %v1763 = vand.u32 %v846, 4294901760
      %v1764 = vsub.f32 %v846, %v1763
      %v1765 = vand.u32 %v1764, 4294901760
      %1766 = vmatpush1.msra.mxu0 %v1765
      %v1767 = vand.u32 %v778, 4294901760
      %v1768 = vsub.f32 %v778, %v1767
      %v1769 = vand.u32 %v1768, 4294901760
      %1770 = vmatprep.subr.mxu0 %v1769
      %v1771 = vand.u32 %v777, 4294901760
      %v1772 = vsub.f32 %v777, %v1771
      %v1773 = vand.u32 %v1772, 4294901760
      %1774 = vmatpush1.msra.mxu0 %v1773
      %v1775 = vand.u32 %v770, 4294901760
      %v1776 = vsub.f32 %v770, %v1775
      %v1777 = vand.u32 %v1776, 4294901760
      %1778 = vmatprep.subr.mxu0 %v1777
      %v1779 = vand.u32 %v769, 4294901760
      %v1780 = vsub.f32 %v769, %v1779
      %v1781 = vand.u32 %v1780, 4294901760
      %1782 = vmatpush1.msra.mxu0 %v1781
      %v1783 = vand.u32 %v707, 4294901760
      %v1784 = vsub.f32 %v707, %v1783
      %v1785 = vand.u32 %v1784, 4294901760
      %1786 = vmatprep.subr.mxu0 %v1785
      %v1787 = vand.u32 %v706, 4294901760
      %v1788 = vsub.f32 %v706, %v1787
      %v1789 = vand.u32 %v1788, 4294901760
      %1790 = vmatpush1.msra.mxu0 %v1789
      %v1791 = vand.u32 %v699, 4294901760
      %v1792 = vsub.f32 %v699, %v1791
      %v1793 = vand.u32 %v1792, 4294901760
      %1794 = vmatprep.subr.mxu0 %v1793
      %v1795 = vand.u32 %v698, 4294901760
      %v1796 = vsub.f32 %v698, %v1795
      %v1797 = vand.u32 %v1796, 4294901760
      %1798 = vmatpush1.msra.mxu0 %v1797
      %v1799 = vand.u32 %v636, 4294901760
      %v1800 = vsub.f32 %v636, %v1799
      %v1801 = vand.u32 %v1800, 4294901760
      %1802 = vmatprep.subr.mxu0 %v1801
      %v1803 = vand.u32 %v635, 4294901760
      %v1804 = vsub.f32 %v635, %v1803
      %v1805 = vand.u32 %v1804, 4294901760
      %1806 = vmatpush1.msra.mxu0 %v1805
      %v1807 = vand.u32 %v628, 4294901760
      %v1808 = vsub.f32 %v628, %v1807
      %v1809 = vand.u32 %v1808, 4294901760
      %1810 = vmatprep.subr.mxu0 %v1809
      %v1811 = vand.u32 %v627, 4294901760
      %v1812 = vsub.f32 %v627, %v1811
      %v1813 = vand.u32 %v1812, 4294901760
      %1814 = vmatpush1.msra.mxu0 %v1813
      %v1815 = vand.u32 %v565, 4294901760
      %v1816 = vsub.f32 %v565, %v1815
      %v1817 = vand.u32 %v1816, 4294901760
      %1818 = vmatprep.subr.mxu0 %v1817
      %v1819 = vand.u32 %v564, 4294901760
      %v1820 = vsub.f32 %v564, %v1819
      %v1821 = vand.u32 %v1820, 4294901760
      %1822 = vmatpush1.msra.mxu0 %v1821
      %v1823 = vand.u32 %v557, 4294901760
      %v1824 = vsub.f32 %v557, %v1823
      %v1825 = vand.u32 %v1824, 4294901760
      %1826 = vmatprep.subr.mxu0 %v1825
      %v1827 = vand.u32 %v556, 4294901760
      %v1828 = vsub.f32 %v556, %v1827
      %v1829 = vand.u32 %v1828, 4294901760
      %1830 = vmatpush1.msra.mxu0 %v1829
      %v1831 = vand.u32 %v494, 4294901760
      %v1832 = vsub.f32 %v494, %v1831
      %v1833 = vand.u32 %v1832, 4294901760
      %1834 = vmatprep.subr.mxu0 %v1833
      %v1835 = vand.u32 %v493, 4294901760
      %v1836 = vsub.f32 %v493, %v1835
      %v1837 = vand.u32 %v1836, 4294901760
      %1838 = vmatpush1.msra.mxu0 %v1837
      %v1839 = vand.u32 %v486, 4294901760
      %v1840 = vsub.f32 %v486, %v1839
      %v1841 = vand.u32 %v1840, 4294901760
      %1842 = vmatprep.subr.mxu0 %v1841
      %v1843 = vand.u32 %v485, 4294901760
      %v1844 = vsub.f32 %v485, %v1843
      %v1845 = vand.u32 %v1844, 4294901760
      %1846 = vmatpush1.msra.mxu0 %v1845
      %v1847 = vand.u32 %v421, 4294901760
      %v1848 = vsub.f32 %v421, %v1847
      %v1849 = vand.u32 %v1848, 4294901760
      %1850 = vmatprep.subr.mxu0 %v1849
      %v1851 = vand.u32 %v420, 4294901760
      %v1852 = vsub.f32 %v420, %v1851
      %v1853 = vand.u32 %v1852, 4294901760
      %1854 = vmatpush1.msra.mxu0 %v1853
      %v1855 = vand.u32 %v411, 4294901760
      %v1856 = vsub.f32 %v411, %v1855
      %v1857 = vand.u32 %v1856, 4294901760
      %1858 = vmatprep.subr.mxu0 %v1857
      %v1859 = vand.u32 %v410, 4294901760
      %v1860 = vsub.f32 %v410, %v1859
      %v1861 = vand.u32 %v1860, 4294901760
      %1862 = vmatpush1.msra.mxu0 %v1861
      %1863 = vmatprep.subr.mxu0 0.0
      %1864 = vmatpush2.msra.mxu0 0.0
      %1865 = vmatprep.subr.mxu0 0.0
      %1866 = vmatpush2.msra.mxu0 0.0
      %1867 = vmatprep.subr.mxu0 0.0
      %1868 = vmatpush2.msra.mxu0 0.0
      %1869 = vmatprep.subr.mxu0 0.0
      %1870 = vmatpush2.msra.mxu0 0.0
      %1871 = vmatprep.subr.mxu0 0.0
      %1872 = vmatpush2.msra.mxu0 0.0
      %1873 = vmatprep.subr.mxu0 0.0
      %1874 = vmatpush2.msra.mxu0 0.0
      %1875 = vmatprep.subr.mxu0 0.0
      %1876 = vmatpush2.msra.mxu0 0.0
      %1877 = vmatprep.subr.mxu0 0.0
      %1878 = vmatpush2.msra.mxu0 0.0
      %1879 = vmatprep.subr.mxu0 0.0
      %1880 = vmatpush2.msra.mxu0 0.0
      %1881 = vmatprep.subr.mxu0 0.0
      %1882 = vmatpush2.msra.mxu0 0.0
      %1883 = vmatprep.subr.mxu0 0.0
      %1884 = vmatpush2.msra.mxu0 0.0
      %1885 = vmatprep.subr.mxu0 0.0
      %1886 = vmatpush2.msra.mxu0 0.0
      %1887 = vmatprep.subr.mxu0 0.0
      %1888 = vmatpush2.msra.mxu0 0.0
      %1889 = vmatprep.subr.mxu0 0.0
      %1890 = vmatpush2.msra.mxu0 0.0
      %v1891 = vand.u32 %v1010, 4294901760
      %v1892 = vsub.f32 %v1010, %v1891
      %v1893 = vand.u32 %v1892, 4294901760
      %1894 = vmatprep.subr.mxu0 %v1893
      %v1895 = vand.u32 %v1009, 4294901760
      %v1896 = vsub.f32 %v1009, %v1895
      %v1897 = vand.u32 %v1896, 4294901760
      %1898 = vmatpush2.msra.mxu0 %v1897
      %v1899 = vand.u32 %v1001, 4294901760
      %v1900 = vsub.f32 %v1001, %v1899
      %v1901 = vand.u32 %v1900, 4294901760
      %1902 = vmatprep.subr.mxu0 %v1901
      %v1903 = vand.u32 %v1000, 4294901760
      %v1904 = vsub.f32 %v1000, %v1903
      %v1905 = vand.u32 %v1904, 4294901760
      %1906 = vmatpush2.msra.mxu0 %v1905
      %v1907 = vand.u32 %v1054, 4294901760
      %1908 = vmatprep.mubr.f32.mxu0 %v1907
      %v1909 = vand.u32 %v1036, 4294901760
      %1910 = vmatmul.mubr.f32.gmra.mxu0 %v1909
      %v1911 = vpop.f32.mrf.mxu0
      %v1912 = vadd.f32 %v1719, %v1911
      %v1913 = vpop.f32.mrf.mxu0
      %v1914 = vadd.f32 %v1721, %v1913
      %v1915 = vand.u32 %v1057, 4294901760
      %1916 = vmatprep.mubr.f32.mxu0 %v1915
      %v1917 = vand.u32 %v1038, 4294901760
      %1918 = vmatmul.mubr.f32.gmra.mxu0 %v1917
      %v1919 = vpop.f32.mrf.mxu0
      %v1920 = vadd.f32 %v1731, %v1919
      %v1921 = vpop.f32.mrf.mxu0
      %v1922 = vadd.f32 %v1733, %v1921
      %1923 = vdwg.mxu0
      %v1924 = vand.u32 %v933, 4294901760
      %1925 = vmatprep.subr.mxu0 %v1924
      %v1926 = vand.u32 %v932, 4294901760
      %1927 = vmatpush1.msra.mxu0 %v1926
      %v1928 = vand.u32 %v924, 4294901760
      %1929 = vmatprep.subr.mxu0 %v1928
      %v1930 = vand.u32 %v923, 4294901760
      %1931 = vmatpush1.msra.mxu0 %v1930
      %v1932 = vand.u32 %v856, 4294901760
      %1933 = vmatprep.subr.mxu0 %v1932
      %v1934 = vand.u32 %v855, 4294901760
      %1935 = vmatpush1.msra.mxu0 %v1934
      %v1936 = vand.u32 %v847, 4294901760
      %1937 = vmatprep.subr.mxu0 %v1936
      %v1938 = vand.u32 %v846, 4294901760
      %1939 = vmatpush1.msra.mxu0 %v1938
      %v1940 = vand.u32 %v778, 4294901760
      %1941 = vmatprep.subr.mxu0 %v1940
      %v1942 = vand.u32 %v777, 4294901760
      %1943 = vmatpush1.msra.mxu0 %v1942
      %v1944 = vand.u32 %v770, 4294901760
      %1945 = vmatprep.subr.mxu0 %v1944
      %v1946 = vand.u32 %v769, 4294901760
      %1947 = vmatpush1.msra.mxu0 %v1946
      %v1948 = vand.u32 %v707, 4294901760
      %1949 = vmatprep.subr.mxu0 %v1948
      %v1950 = vand.u32 %v706, 4294901760
      %1951 = vmatpush1.msra.mxu0 %v1950
      %v1952 = vand.u32 %v699, 4294901760
      %1953 = vmatprep.subr.mxu0 %v1952
      %v1954 = vand.u32 %v698, 4294901760
      %1955 = vmatpush1.msra.mxu0 %v1954
      %v1956 = vand.u32 %v636, 4294901760
      %1957 = vmatprep.subr.mxu0 %v1956
      %v1958 = vand.u32 %v635, 4294901760
      %1959 = vmatpush1.msra.mxu0 %v1958
      %v1960 = vand.u32 %v628, 4294901760
      %1961 = vmatprep.subr.mxu0 %v1960
      %v1962 = vand.u32 %v627, 4294901760
      %1963 = vmatpush1.msra.mxu0 %v1962
      %v1964 = vand.u32 %v565, 4294901760
      %1965 = vmatprep.subr.mxu0 %v1964
      %v1966 = vand.u32 %v564, 4294901760
      %1967 = vmatpush1.msra.mxu0 %v1966
      %v1968 = vand.u32 %v557, 4294901760
      %1969 = vmatprep.subr.mxu0 %v1968
      %v1970 = vand.u32 %v556, 4294901760
      %1971 = vmatpush1.msra.mxu0 %v1970
      %v1972 = vand.u32 %v494, 4294901760
      %1973 = vmatprep.subr.mxu0 %v1972
      %v1974 = vand.u32 %v493, 4294901760
      %1975 = vmatpush1.msra.mxu0 %v1974
      %v1976 = vand.u32 %v486, 4294901760
      %1977 = vmatprep.subr.mxu0 %v1976
      %v1978 = vand.u32 %v485, 4294901760
      %1979 = vmatpush1.msra.mxu0 %v1978
      %v1980 = vand.u32 %v421, 4294901760
      %1981 = vmatprep.subr.mxu0 %v1980
      %v1982 = vand.u32 %v420, 4294901760
      %1983 = vmatpush1.msra.mxu0 %v1982
      %v1984 = vand.u32 %v411, 4294901760
      %1985 = vmatprep.subr.mxu0 %v1984
      %v1986 = vand.u32 %v410, 4294901760
      %1987 = vmatpush1.msra.mxu0 %v1986
      %1988 = vmatprep.subr.mxu0 0.0
      %1989 = vmatpush2.msra.mxu0 0.0
      %1990 = vmatprep.subr.mxu0 0.0
      %1991 = vmatpush2.msra.mxu0 0.0
      %1992 = vmatprep.subr.mxu0 0.0
      %1993 = vmatpush2.msra.mxu0 0.0
      %1994 = vmatprep.subr.mxu0 0.0
      %1995 = vmatpush2.msra.mxu0 0.0
      %1996 = vmatprep.subr.mxu0 0.0
      %1997 = vmatpush2.msra.mxu0 0.0
      %1998 = vmatprep.subr.mxu0 0.0
      %1999 = vmatpush2.msra.mxu0 0.0
      %2000 = vmatprep.subr.mxu0 0.0
      %2001 = vmatpush2.msra.mxu0 0.0
      %2002 = vmatprep.subr.mxu0 0.0
      %2003 = vmatpush2.msra.mxu0 0.0
      %2004 = vmatprep.subr.mxu0 0.0
      %2005 = vmatpush2.msra.mxu0 0.0
      %2006 = vmatprep.subr.mxu0 0.0
      %2007 = vmatpush2.msra.mxu0 0.0
      %2008 = vmatprep.subr.mxu0 0.0
      %2009 = vmatpush2.msra.mxu0 0.0
      %2010 = vmatprep.subr.mxu0 0.0
      %2011 = vmatpush2.msra.mxu0 0.0
      %2012 = vmatprep.subr.mxu0 0.0
      %2013 = vmatpush2.msra.mxu0 0.0
      %2014 = vmatprep.subr.mxu0 0.0
      %2015 = vmatpush2.msra.mxu0 0.0
      %v2016 = vand.u32 %v1010, 4294901760
      %2017 = vmatprep.subr.mxu0 %v2016
      %v2018 = vand.u32 %v1009, 4294901760
      %2019 = vmatpush2.msra.mxu0 %v2018
      %v2020 = vand.u32 %v1001, 4294901760
      %2021 = vmatprep.subr.mxu0 %v2020
      %v2022 = vand.u32 %v1000, 4294901760
      %2023 = vmatpush2.msra.mxu0 %v2022
      %v2024 = vand.u32 %v1054, 4294901760
      %2025 = vmatprep.mubr.f32.mxu0 %v2024
      %v2026 = vand.u32 %v1036, 4294901760
      %2027 = vmatmul.mubr.f32.gmra.mxu0 %v2026
      %v2028 = vpop.f32.mrf.mxu0
      %v2029 = vadd.f32 %v1912, %v2028
      %v2030 = vpop.f32.mrf.mxu0
      %v2031 = vadd.f32 %v1914, %v2030
      %v2032 = vand.u32 %v1057, 4294901760
      %2033 = vmatprep.mubr.f32.mxu0 %v2032
      %v2034 = vand.u32 %v1038, 4294901760
      %2035 = vmatmul.mubr.f32.gmra.mxu0 %v2034
      %v2036 = vpop.f32.mrf.mxu0
      %v2037 = vadd.f32 %v1920, %v2036
      %v2038 = vpop.f32.mrf.mxu0
      %v2039 = vadd.f32 %v1922, %v2038
      %2040 = vdwg.mxu0
      %v2041 = vand.u32 %v935, 4294901760
      %2042 = vmatprep.subr.mxu0 %v2041
      %v2043 = vand.u32 %v934, 4294901760
      %2044 = vmatpush1.msra.mxu0 %v2043
      %v2045 = vand.u32 %v926, 4294901760
      %2046 = vmatprep.subr.mxu0 %v2045
      %v2047 = vand.u32 %v925, 4294901760
      %2048 = vmatpush1.msra.mxu0 %v2047
      %v2049 = vand.u32 %v858, 4294901760
      %2050 = vmatprep.subr.mxu0 %v2049
      %v2051 = vand.u32 %v857, 4294901760
      %2052 = vmatpush1.msra.mxu0 %v2051
      %v2053 = vand.u32 %v849, 4294901760
      %2054 = vmatprep.subr.mxu0 %v2053
      %v2055 = vand.u32 %v848, 4294901760
      %2056 = vmatpush1.msra.mxu0 %v2055
      %v2057 = vand.u32 %v780, 4294901760
      %2058 = vmatprep.subr.mxu0 %v2057
      %v2059 = vand.u32 %v779, 4294901760
      %2060 = vmatpush1.msra.mxu0 %v2059
      %v2061 = vand.u32 %v772, 4294901760
      %2062 = vmatprep.subr.mxu0 %v2061
      %v2063 = vand.u32 %v771, 4294901760
      %2064 = vmatpush1.msra.mxu0 %v2063
      %v2065 = vand.u32 %v709, 4294901760
      %2066 = vmatprep.subr.mxu0 %v2065
      %v2067 = vand.u32 %v708, 4294901760
      %2068 = vmatpush1.msra.mxu0 %v2067
      %v2069 = vand.u32 %v701, 4294901760
      %2070 = vmatprep.subr.mxu0 %v2069
      %v2071 = vand.u32 %v700, 4294901760
      %2072 = vmatpush1.msra.mxu0 %v2071
      %v2073 = vand.u32 %v638, 4294901760
      %2074 = vmatprep.subr.mxu0 %v2073
      %v2075 = vand.u32 %v637, 4294901760
      %2076 = vmatpush1.msra.mxu0 %v2075
      %v2077 = vand.u32 %v630, 4294901760
      %2078 = vmatprep.subr.mxu0 %v2077
      %v2079 = vand.u32 %v629, 4294901760
      %2080 = vmatpush1.msra.mxu0 %v2079
      %v2081 = vand.u32 %v567, 4294901760
      %2082 = vmatprep.subr.mxu0 %v2081
      %v2083 = vand.u32 %v566, 4294901760
      %2084 = vmatpush1.msra.mxu0 %v2083
      %v2085 = vand.u32 %v559, 4294901760
      %2086 = vmatprep.subr.mxu0 %v2085
      %v2087 = vand.u32 %v558, 4294901760
      %2088 = vmatpush1.msra.mxu0 %v2087
      %v2089 = vand.u32 %v496, 4294901760
      %2090 = vmatprep.subr.mxu0 %v2089
      %v2091 = vand.u32 %v495, 4294901760
      %2092 = vmatpush1.msra.mxu0 %v2091
      %v2093 = vand.u32 %v488, 4294901760
      %2094 = vmatprep.subr.mxu0 %v2093
      %v2095 = vand.u32 %v487, 4294901760
      %2096 = vmatpush1.msra.mxu0 %v2095
      %v2097 = vand.u32 %v423, 4294901760
      %2098 = vmatprep.subr.mxu0 %v2097
      %v2099 = vand.u32 %v422, 4294901760
      %2100 = vmatpush1.msra.mxu0 %v2099
      %v2101 = vand.u32 %v413, 4294901760
      %2102 = vmatprep.subr.mxu0 %v2101
      %v2103 = vand.u32 %v412, 4294901760
      %2104 = vmatpush1.msra.mxu0 %v2103
      %2105 = vmatprep.subr.mxu0 0.0
      %2106 = vmatpush2.msra.mxu0 0.0
      %2107 = vmatprep.subr.mxu0 0.0
      %2108 = vmatpush2.msra.mxu0 0.0
      %2109 = vmatprep.subr.mxu0 0.0
      %2110 = vmatpush2.msra.mxu0 0.0
      %2111 = vmatprep.subr.mxu0 0.0
      %2112 = vmatpush2.msra.mxu0 0.0
      %2113 = vmatprep.subr.mxu0 0.0
      %2114 = vmatpush2.msra.mxu0 0.0
      %2115 = vmatprep.subr.mxu0 0.0
      %2116 = vmatpush2.msra.mxu0 0.0
      %2117 = vmatprep.subr.mxu0 0.0
      %2118 = vmatpush2.msra.mxu0 0.0
      %2119 = vmatprep.subr.mxu0 0.0
      %2120 = vmatpush2.msra.mxu0 0.0
      %2121 = vmatprep.subr.mxu0 0.0
      %2122 = vmatpush2.msra.mxu0 0.0
      %2123 = vmatprep.subr.mxu0 0.0
      %2124 = vmatpush2.msra.mxu0 0.0
      %2125 = vmatprep.subr.mxu0 0.0
      %2126 = vmatpush2.msra.mxu0 0.0
      %2127 = vmatprep.subr.mxu0 0.0
      %2128 = vmatpush2.msra.mxu0 0.0
      %2129 = vmatprep.subr.mxu0 0.0
      %2130 = vmatpush2.msra.mxu0 0.0
      %2131 = vmatprep.subr.mxu0 0.0
      %2132 = vmatpush2.msra.mxu0 0.0
      %v2133 = vand.u32 %v1012, 4294901760
      %2134 = vmatprep.subr.mxu0 %v2133
      %v2135 = vand.u32 %v1011, 4294901760
      %2136 = vmatpush2.msra.mxu0 %v2135
      %v2137 = vand.u32 %v1003, 4294901760
      %2138 = vmatprep.subr.mxu0 %v2137
      %v2139 = vand.u32 %v1002, 4294901760
      %2140 = vmatpush2.msra.mxu0 %v2139
      %v2141 = vand.u32 %v1054, 4294901760
      %v2142 = vsub.f32 %v1054, %v2141
      %v2143 = vand.u32 %v2142, 4294901760
      %v2144 = vsub.f32 %v2142, %v2143
      %v2145 = vand.u32 %v2144, 4294901760
      %2146 = vmatprep.mubr.f32.mxu0 %v2145
      %v2147 = vand.u32 %v1036, 4294901760
      %v2148 = vsub.f32 %v1036, %v2147
      %v2149 = vand.u32 %v2148, 4294901760
      %v2150 = vsub.f32 %v2148, %v2149
      %v2151 = vand.u32 %v2150, 4294901760
      %2152 = vmatmul.mubr.f32.gmra.mxu0 %v2151
      %v2153 = vpop.f32.mrf.mxu0
      %v2154 = vadd.f32 %v1045, %v2153
      %v2155 = vpop.f32.mrf.mxu0
      %v2156 = vadd.f32 %v1045, %v2155
      %v2157 = vand.u32 %v1057, 4294901760
      %v2158 = vsub.f32 %v1057, %v2157
      %v2159 = vand.u32 %v2158, 4294901760
      %v2160 = vsub.f32 %v2158, %v2159
      %v2161 = vand.u32 %v2160, 4294901760
      %2162 = vmatprep.mubr.f32.mxu0 %v2161
      %v2163 = vand.u32 %v1038, 4294901760
      %v2164 = vsub.f32 %v1038, %v2163
      %v2165 = vand.u32 %v2164, 4294901760
      %v2166 = vsub.f32 %v2164, %v2165
      %v2167 = vand.u32 %v2166, 4294901760
      %2168 = vmatmul.mubr.f32.gmra.mxu0 %v2167
      %v2169 = vpop.f32.mrf.mxu0
      %v2170 = vadd.f32 %v1050, %v2169
      %v2171 = vpop.f32.mrf.mxu0
      %v2172 = vadd.f32 %v1050, %v2171
      %2173 = vdwg.mxu0
      %v2174 = vand.u32 %v935, 4294901760
      %v2175 = vsub.f32 %v935, %v2174
      %v2176 = vand.u32 %v2175, 4294901760
      %v2177 = vsub.f32 %v2175, %v2176
      %v2178 = vand.u32 %v2177, 4294901760
      %2179 = vmatprep.subr.mxu0 %v2178
      %v2180 = vand.u32 %v934, 4294901760
      %v2181 = vsub.f32 %v934, %v2180
      %v2182 = vand.u32 %v2181, 4294901760
      %v2183 = vsub.f32 %v2181, %v2182
      %v2184 = vand.u32 %v2183, 4294901760
      %2185 = vmatpush1.msra.mxu0 %v2184
      %v2186 = vand.u32 %v926, 4294901760
      %v2187 = vsub.f32 %v926, %v2186
      %v2188 = vand.u32 %v2187, 4294901760
      %v2189 = vsub.f32 %v2187, %v2188
      %v2190 = vand.u32 %v2189, 4294901760
      %2191 = vmatprep.subr.mxu0 %v2190
      %v2192 = vand.u32 %v925, 4294901760
      %v2193 = vsub.f32 %v925, %v2192
      %v2194 = vand.u32 %v2193, 4294901760
      %v2195 = vsub.f32 %v2193, %v2194
      %v2196 = vand.u32 %v2195, 4294901760
      %2197 = vmatpush1.msra.mxu0 %v2196
      %v2198 = vand.u32 %v858, 4294901760
      %v2199 = vsub.f32 %v858, %v2198
      %v2200 = vand.u32 %v2199, 4294901760
      %v2201 = vsub.f32 %v2199, %v2200
      %v2202 = vand.u32 %v2201, 4294901760
      %2203 = vmatprep.subr.mxu0 %v2202
      %v2204 = vand.u32 %v857, 4294901760
      %v2205 = vsub.f32 %v857, %v2204
      %v2206 = vand.u32 %v2205, 4294901760
      %v2207 = vsub.f32 %v2205, %v2206
      %v2208 = vand.u32 %v2207, 4294901760
      %2209 = vmatpush1.msra.mxu0 %v2208
      %v2210 = vand.u32 %v849, 4294901760
      %v2211 = vsub.f32 %v849, %v2210
      %v2212 = vand.u32 %v2211, 4294901760
      %v2213 = vsub.f32 %v2211, %v2212
      %v2214 = vand.u32 %v2213, 4294901760
      %2215 = vmatprep.subr.mxu0 %v2214
      %v2216 = vand.u32 %v848, 4294901760
      %v2217 = vsub.f32 %v848, %v2216
      %v2218 = vand.u32 %v2217, 4294901760
      %v2219 = vsub.f32 %v2217, %v2218
      %v2220 = vand.u32 %v2219, 4294901760
      %2221 = vmatpush1.msra.mxu0 %v2220
      %v2222 = vand.u32 %v780, 4294901760
      %v2223 = vsub.f32 %v780, %v2222
      %v2224 = vand.u32 %v2223, 4294901760
      %v2225 = vsub.f32 %v2223, %v2224
      %v2226 = vand.u32 %v2225, 4294901760
      %2227 = vmatprep.subr.mxu0 %v2226
      %v2228 = vand.u32 %v779, 4294901760
      %v2229 = vsub.f32 %v779, %v2228
      %v2230 = vand.u32 %v2229, 4294901760
      %v2231 = vsub.f32 %v2229, %v2230
      %v2232 = vand.u32 %v2231, 4294901760
      %2233 = vmatpush1.msra.mxu0 %v2232
      %v2234 = vand.u32 %v772, 4294901760
      %v2235 = vsub.f32 %v772, %v2234
      %v2236 = vand.u32 %v2235, 4294901760
      %v2237 = vsub.f32 %v2235, %v2236
      %v2238 = vand.u32 %v2237, 4294901760
      %2239 = vmatprep.subr.mxu0 %v2238
      %v2240 = vand.u32 %v771, 4294901760
      %v2241 = vsub.f32 %v771, %v2240
      %v2242 = vand.u32 %v2241, 4294901760
      %v2243 = vsub.f32 %v2241, %v2242
      %v2244 = vand.u32 %v2243, 4294901760
      %2245 = vmatpush1.msra.mxu0 %v2244
      %v2246 = vand.u32 %v709, 4294901760
      %v2247 = vsub.f32 %v709, %v2246
      %v2248 = vand.u32 %v2247, 4294901760
      %v2249 = vsub.f32 %v2247, %v2248
      %v2250 = vand.u32 %v2249, 4294901760
      %2251 = vmatprep.subr.mxu0 %v2250
      %v2252 = vand.u32 %v708, 4294901760
      %v2253 = vsub.f32 %v708, %v2252
      %v2254 = vand.u32 %v2253, 4294901760
      %v2255 = vsub.f32 %v2253, %v2254
      %v2256 = vand.u32 %v2255, 4294901760
      %2257 = vmatpush1.msra.mxu0 %v2256
      %v2258 = vand.u32 %v701, 4294901760
      %v2259 = vsub.f32 %v701, %v2258
      %v2260 = vand.u32 %v2259, 4294901760
      %v2261 = vsub.f32 %v2259, %v2260
      %v2262 = vand.u32 %v2261, 4294901760
      %2263 = vmatprep.subr.mxu0 %v2262
      %v2264 = vand.u32 %v700, 4294901760
      %v2265 = vsub.f32 %v700, %v2264
      %v2266 = vand.u32 %v2265, 4294901760
      %v2267 = vsub.f32 %v2265, %v2266
      %v2268 = vand.u32 %v2267, 4294901760
      %2269 = vmatpush1.msra.mxu0 %v2268
      %v2270 = vand.u32 %v638, 4294901760
      %v2271 = vsub.f32 %v638, %v2270
      %v2272 = vand.u32 %v2271, 4294901760
      %v2273 = vsub.f32 %v2271, %v2272
      %v2274 = vand.u32 %v2273, 4294901760
      %2275 = vmatprep.subr.mxu0 %v2274
      %v2276 = vand.u32 %v637, 4294901760
      %v2277 = vsub.f32 %v637, %v2276
      %v2278 = vand.u32 %v2277, 4294901760
      %v2279 = vsub.f32 %v2277, %v2278
      %v2280 = vand.u32 %v2279, 4294901760
      %2281 = vmatpush1.msra.mxu0 %v2280
      %v2282 = vand.u32 %v630, 4294901760
      %v2283 = vsub.f32 %v630, %v2282
      %v2284 = vand.u32 %v2283, 4294901760
      %v2285 = vsub.f32 %v2283, %v2284
      %v2286 = vand.u32 %v2285, 4294901760
      %2287 = vmatprep.subr.mxu0 %v2286
      %v2288 = vand.u32 %v629, 4294901760
      %v2289 = vsub.f32 %v629, %v2288
      %v2290 = vand.u32 %v2289, 4294901760
      %v2291 = vsub.f32 %v2289, %v2290
      %v2292 = vand.u32 %v2291, 4294901760
      %2293 = vmatpush1.msra.mxu0 %v2292
      %v2294 = vand.u32 %v567, 4294901760
      %v2295 = vsub.f32 %v567, %v2294
      %v2296 = vand.u32 %v2295, 4294901760
      %v2297 = vsub.f32 %v2295, %v2296
      %v2298 = vand.u32 %v2297, 4294901760
      %2299 = vmatprep.subr.mxu0 %v2298
      %v2300 = vand.u32 %v566, 4294901760
      %v2301 = vsub.f32 %v566, %v2300
      %v2302 = vand.u32 %v2301, 4294901760
      %v2303 = vsub.f32 %v2301, %v2302
      %v2304 = vand.u32 %v2303, 4294901760
      %2305 = vmatpush1.msra.mxu0 %v2304
      %v2306 = vand.u32 %v559, 4294901760
      %v2307 = vsub.f32 %v559, %v2306
      %v2308 = vand.u32 %v2307, 4294901760
      %v2309 = vsub.f32 %v2307, %v2308
      %v2310 = vand.u32 %v2309, 4294901760
      %2311 = vmatprep.subr.mxu0 %v2310
      %v2312 = vand.u32 %v558, 4294901760
      %v2313 = vsub.f32 %v558, %v2312
      %v2314 = vand.u32 %v2313, 4294901760
      %v2315 = vsub.f32 %v2313, %v2314
      %v2316 = vand.u32 %v2315, 4294901760
      %2317 = vmatpush1.msra.mxu0 %v2316
      %v2318 = vand.u32 %v496, 4294901760
      %v2319 = vsub.f32 %v496, %v2318
      %v2320 = vand.u32 %v2319, 4294901760
      %v2321 = vsub.f32 %v2319, %v2320
      %v2322 = vand.u32 %v2321, 4294901760
      %2323 = vmatprep.subr.mxu0 %v2322
      %v2324 = vand.u32 %v495, 4294901760
      %v2325 = vsub.f32 %v495, %v2324
      %v2326 = vand.u32 %v2325, 4294901760
      %v2327 = vsub.f32 %v2325, %v2326
      %v2328 = vand.u32 %v2327, 4294901760
      %2329 = vmatpush1.msra.mxu0 %v2328
      %v2330 = vand.u32 %v488, 4294901760
      %v2331 = vsub.f32 %v488, %v2330
      %v2332 = vand.u32 %v2331, 4294901760
      %v2333 = vsub.f32 %v2331, %v2332
      %v2334 = vand.u32 %v2333, 4294901760
      %2335 = vmatprep.subr.mxu0 %v2334
      %v2336 = vand.u32 %v487, 4294901760
      %v2337 = vsub.f32 %v487, %v2336
      %v2338 = vand.u32 %v2337, 4294901760
      %v2339 = vsub.f32 %v2337, %v2338
      %v2340 = vand.u32 %v2339, 4294901760
      %2341 = vmatpush1.msra.mxu0 %v2340
      %v2342 = vand.u32 %v423, 4294901760
      %v2343 = vsub.f32 %v423, %v2342
      %v2344 = vand.u32 %v2343, 4294901760
      %v2345 = vsub.f32 %v2343, %v2344
      %v2346 = vand.u32 %v2345, 4294901760
      %2347 = vmatprep.subr.mxu0 %v2346
      %v2348 = vand.u32 %v422, 4294901760
      %v2349 = vsub.f32 %v422, %v2348
      %v2350 = vand.u32 %v2349, 4294901760
      %v2351 = vsub.f32 %v2349, %v2350
      %v2352 = vand.u32 %v2351, 4294901760
      %2353 = vmatpush1.msra.mxu0 %v2352
      %v2354 = vand.u32 %v413, 4294901760
      %v2355 = vsub.f32 %v413, %v2354
      %v2356 = vand.u32 %v2355, 4294901760
      %v2357 = vsub.f32 %v2355, %v2356
      %v2358 = vand.u32 %v2357, 4294901760
      %2359 = vmatprep.subr.mxu0 %v2358
      %v2360 = vand.u32 %v412, 4294901760
      %v2361 = vsub.f32 %v412, %v2360
      %v2362 = vand.u32 %v2361, 4294901760
      %v2363 = vsub.f32 %v2361, %v2362
      %v2364 = vand.u32 %v2363, 4294901760
      %2365 = vmatpush1.msra.mxu0 %v2364
      %2366 = vmatprep.subr.mxu0 0.0
      %2367 = vmatpush2.msra.mxu0 0.0
      %2368 = vmatprep.subr.mxu0 0.0
      %2369 = vmatpush2.msra.mxu0 0.0
      %2370 = vmatprep.subr.mxu0 0.0
      %2371 = vmatpush2.msra.mxu0 0.0
      %2372 = vmatprep.subr.mxu0 0.0
      %2373 = vmatpush2.msra.mxu0 0.0
      %2374 = vmatprep.subr.mxu0 0.0
      %2375 = vmatpush2.msra.mxu0 0.0
      %2376 = vmatprep.subr.mxu0 0.0
      %2377 = vmatpush2.msra.mxu0 0.0
      %2378 = vmatprep.subr.mxu0 0.0
      %2379 = vmatpush2.msra.mxu0 0.0
      %2380 = vmatprep.subr.mxu0 0.0
      %2381 = vmatpush2.msra.mxu0 0.0
      %2382 = vmatprep.subr.mxu0 0.0
      %2383 = vmatpush2.msra.mxu0 0.0
      %2384 = vmatprep.subr.mxu0 0.0
      %2385 = vmatpush2.msra.mxu0 0.0
      %2386 = vmatprep.subr.mxu0 0.0
      %2387 = vmatpush2.msra.mxu0 0.0
      %2388 = vmatprep.subr.mxu0 0.0
      %2389 = vmatpush2.msra.mxu0 0.0
      %2390 = vmatprep.subr.mxu0 0.0
      %2391 = vmatpush2.msra.mxu0 0.0
      %2392 = vmatprep.subr.mxu0 0.0
      %2393 = vmatpush2.msra.mxu0 0.0
      %v2394 = vand.u32 %v1012, 4294901760
      %v2395 = vsub.f32 %v1012, %v2394
      %v2396 = vand.u32 %v2395, 4294901760
      %v2397 = vsub.f32 %v2395, %v2396
      %v2398 = vand.u32 %v2397, 4294901760
      %2399 = vmatprep.subr.mxu0 %v2398
      %v2400 = vand.u32 %v1011, 4294901760
      %v2401 = vsub.f32 %v1011, %v2400
      %v2402 = vand.u32 %v2401, 4294901760
      %v2403 = vsub.f32 %v2401, %v2402
      %v2404 = vand.u32 %v2403, 4294901760
      %2405 = vmatpush2.msra.mxu0 %v2404
      %v2406 = vand.u32 %v1003, 4294901760
      %v2407 = vsub.f32 %v1003, %v2406
      %v2408 = vand.u32 %v2407, 4294901760
      %v2409 = vsub.f32 %v2407, %v2408
      %v2410 = vand.u32 %v2409, 4294901760
      %2411 = vmatprep.subr.mxu0 %v2410
      %v2412 = vand.u32 %v1002, 4294901760
      %v2413 = vsub.f32 %v1002, %v2412
      %v2414 = vand.u32 %v2413, 4294901760
      %v2415 = vsub.f32 %v2413, %v2414
      %v2416 = vand.u32 %v2415, 4294901760
      %2417 = vmatpush2.msra.mxu0 %v2416
      %v2418 = vand.u32 %v1054, 4294901760
      %2419 = vmatprep.mubr.f32.mxu0 %v2418
      %v2420 = vand.u32 %v1036, 4294901760
      %2421 = vmatmul.mubr.f32.gmra.mxu0 %v2420
      %v2422 = vpop.f32.mrf.mxu0
      %v2423 = vadd.f32 %v2154, %v2422
      %v2424 = vpop.f32.mrf.mxu0
      %v2425 = vadd.f32 %v2156, %v2424
      %v2426 = vand.u32 %v1057, 4294901760
      %2427 = vmatprep.mubr.f32.mxu0 %v2426
      %v2428 = vand.u32 %v1038, 4294901760
      %2429 = vmatmul.mubr.f32.gmra.mxu0 %v2428
      %v2430 = vpop.f32.mrf.mxu0
      %v2431 = vadd.f32 %v2170, %v2430
      %v2432 = vpop.f32.mrf.mxu0
      %v2433 = vadd.f32 %v2172, %v2432
      %2434 = vdwg.mxu0
      %v2435 = vand.u32 %v935, 4294901760
      %v2436 = vsub.f32 %v935, %v2435
      %2437 = vmatprep.subr.mxu0 %v2436
      %v2438 = vand.u32 %v934, 4294901760
      %v2439 = vsub.f32 %v934, %v2438
      %2440 = vmatpush1.msra.mxu0 %v2439
      %v2441 = vand.u32 %v926, 4294901760
      %v2442 = vsub.f32 %v926, %v2441
      %2443 = vmatprep.subr.mxu0 %v2442
      %v2444 = vand.u32 %v925, 4294901760
      %v2445 = vsub.f32 %v925, %v2444
      %2446 = vmatpush1.msra.mxu0 %v2445
      %v2447 = vand.u32 %v858, 4294901760
      %v2448 = vsub.f32 %v858, %v2447
      %2449 = vmatprep.subr.mxu0 %v2448
      %v2450 = vand.u32 %v857, 4294901760
      %v2451 = vsub.f32 %v857, %v2450
      %2452 = vmatpush1.msra.mxu0 %v2451
      %v2453 = vand.u32 %v849, 4294901760
      %v2454 = vsub.f32 %v849, %v2453
      %2455 = vmatprep.subr.mxu0 %v2454
      %v2456 = vand.u32 %v848, 4294901760
      %v2457 = vsub.f32 %v848, %v2456
      %2458 = vmatpush1.msra.mxu0 %v2457
      %v2459 = vand.u32 %v780, 4294901760
      %v2460 = vsub.f32 %v780, %v2459
      %2461 = vmatprep.subr.mxu0 %v2460
      %v2462 = vand.u32 %v779, 4294901760
      %v2463 = vsub.f32 %v779, %v2462
      %2464 = vmatpush1.msra.mxu0 %v2463
      %v2465 = vand.u32 %v772, 4294901760
      %v2466 = vsub.f32 %v772, %v2465
      %2467 = vmatprep.subr.mxu0 %v2466
      %v2468 = vand.u32 %v771, 4294901760
      %v2469 = vsub.f32 %v771, %v2468
      %2470 = vmatpush1.msra.mxu0 %v2469
      %v2471 = vand.u32 %v709, 4294901760
      %v2472 = vsub.f32 %v709, %v2471
      %2473 = vmatprep.subr.mxu0 %v2472
      %v2474 = vand.u32 %v708, 4294901760
      %v2475 = vsub.f32 %v708, %v2474
      %2476 = vmatpush1.msra.mxu0 %v2475
      %v2477 = vand.u32 %v701, 4294901760
      %v2478 = vsub.f32 %v701, %v2477
      %2479 = vmatprep.subr.mxu0 %v2478
      %v2480 = vand.u32 %v700, 4294901760
      %v2481 = vsub.f32 %v700, %v2480
      %2482 = vmatpush1.msra.mxu0 %v2481
      %v2483 = vand.u32 %v638, 4294901760
      %v2484 = vsub.f32 %v638, %v2483
      %2485 = vmatprep.subr.mxu0 %v2484
      %v2486 = vand.u32 %v637, 4294901760
      %v2487 = vsub.f32 %v637, %v2486
      %2488 = vmatpush1.msra.mxu0 %v2487
      %v2489 = vand.u32 %v630, 4294901760
      %v2490 = vsub.f32 %v630, %v2489
      %2491 = vmatprep.subr.mxu0 %v2490
      %v2492 = vand.u32 %v629, 4294901760
      %v2493 = vsub.f32 %v629, %v2492
      %2494 = vmatpush1.msra.mxu0 %v2493
      %v2495 = vand.u32 %v567, 4294901760
      %v2496 = vsub.f32 %v567, %v2495
      %2497 = vmatprep.subr.mxu0 %v2496
      %v2498 = vand.u32 %v566, 4294901760
      %v2499 = vsub.f32 %v566, %v2498
      %2500 = vmatpush1.msra.mxu0 %v2499
      %v2501 = vand.u32 %v559, 4294901760
      %v2502 = vsub.f32 %v559, %v2501
      %2503 = vmatprep.subr.mxu0 %v2502
      %v2504 = vand.u32 %v558, 4294901760
      %v2505 = vsub.f32 %v558, %v2504
      %2506 = vmatpush1.msra.mxu0 %v2505
      %v2507 = vand.u32 %v496, 4294901760
      %v2508 = vsub.f32 %v496, %v2507
      %2509 = vmatprep.subr.mxu0 %v2508
      %v2510 = vand.u32 %v495, 4294901760
      %v2511 = vsub.f32 %v495, %v2510
      %2512 = vmatpush1.msra.mxu0 %v2511
      %v2513 = vand.u32 %v488, 4294901760
      %v2514 = vsub.f32 %v488, %v2513
      %2515 = vmatprep.subr.mxu0 %v2514
      %v2516 = vand.u32 %v487, 4294901760
      %v2517 = vsub.f32 %v487, %v2516
      %2518 = vmatpush1.msra.mxu0 %v2517
      %v2519 = vand.u32 %v423, 4294901760
      %v2520 = vsub.f32 %v423, %v2519
      %2521 = vmatprep.subr.mxu0 %v2520
      %v2522 = vand.u32 %v422, 4294901760
      %v2523 = vsub.f32 %v422, %v2522
      %2524 = vmatpush1.msra.mxu0 %v2523
      %v2525 = vand.u32 %v413, 4294901760
      %v2526 = vsub.f32 %v413, %v2525
      %2527 = vmatprep.subr.mxu0 %v2526
      %v2528 = vand.u32 %v412, 4294901760
      %v2529 = vsub.f32 %v412, %v2528
      %2530 = vmatpush1.msra.mxu0 %v2529
      %2531 = vmatprep.subr.mxu0 0.0
      %2532 = vmatpush2.msra.mxu0 0.0
      %2533 = vmatprep.subr.mxu0 0.0
      %2534 = vmatpush2.msra.mxu0 0.0
      %2535 = vmatprep.subr.mxu0 0.0
      %2536 = vmatpush2.msra.mxu0 0.0
      %2537 = vmatprep.subr.mxu0 0.0
      %2538 = vmatpush2.msra.mxu0 0.0
      %2539 = vmatprep.subr.mxu0 0.0
      %2540 = vmatpush2.msra.mxu0 0.0
      %2541 = vmatprep.subr.mxu0 0.0
      %2542 = vmatpush2.msra.mxu0 0.0
      %2543 = vmatprep.subr.mxu0 0.0
      %2544 = vmatpush2.msra.mxu0 0.0
      %2545 = vmatprep.subr.mxu0 0.0
      %2546 = vmatpush2.msra.mxu0 0.0
      %2547 = vmatprep.subr.mxu0 0.0
      %2548 = vmatpush2.msra.mxu0 0.0
      %2549 = vmatprep.subr.mxu0 0.0
      %2550 = vmatpush2.msra.mxu0 0.0
      %2551 = vmatprep.subr.mxu0 0.0
      %2552 = vmatpush2.msra.mxu0 0.0
      %2553 = vmatprep.subr.mxu0 0.0
      %2554 = vmatpush2.msra.mxu0 0.0
      %2555 = vmatprep.subr.mxu0 0.0
      %2556 = vmatpush2.msra.mxu0 0.0
      %2557 = vmatprep.subr.mxu0 0.0
      %2558 = vmatpush2.msra.mxu0 0.0
      %v2559 = vand.u32 %v1012, 4294901760
      %v2560 = vsub.f32 %v1012, %v2559
      %2561 = vmatprep.subr.mxu0 %v2560
      %v2562 = vand.u32 %v1011, 4294901760
      %v2563 = vsub.f32 %v1011, %v2562
      %2564 = vmatpush2.msra.mxu0 %v2563
      %v2565 = vand.u32 %v1003, 4294901760
      %v2566 = vsub.f32 %v1003, %v2565
      %2567 = vmatprep.subr.mxu0 %v2566
      %v2568 = vand.u32 %v1002, 4294901760
      %v2569 = vsub.f32 %v1002, %v2568
      %2570 = vmatpush2.msra.mxu0 %v2569
      %v2571 = vand.u32 %v1054, 4294901760
      %v2572 = vsub.f32 %v1054, %v2571
      %2573 = vmatprep.mubr.f32.mxu0 %v2572
      %v2574 = vand.u32 %v1036, 4294901760
      %v2575 = vsub.f32 %v1036, %v2574
      %2576 = vmatmul.mubr.f32.gmra.mxu0 %v2575
      %v2577 = vpop.f32.mrf.mxu0
      %v2578 = vadd.f32 %v2423, %v2577
      %v2579 = vpop.f32.mrf.mxu0
      %v2580 = vadd.f32 %v2425, %v2579
      %v2581 = vand.u32 %v1057, 4294901760
      %v2582 = vsub.f32 %v1057, %v2581
      %2583 = vmatprep.mubr.f32.mxu0 %v2582
      %v2584 = vand.u32 %v1038, 4294901760
      %v2585 = vsub.f32 %v1038, %v2584
      %2586 = vmatmul.mubr.f32.gmra.mxu0 %v2585
      %v2587 = vpop.f32.mrf.mxu0
      %v2588 = vadd.f32 %v2431, %v2587
      %v2589 = vpop.f32.mrf.mxu0
      %v2590 = vadd.f32 %v2433, %v2589
      %2591 = vdwg.mxu0
      %v2592 = vand.u32 %v935, 4294901760
      %2593 = vmatprep.subr.mxu0 %v2592
      %v2594 = vand.u32 %v934, 4294901760
      %2595 = vmatpush1.msra.mxu0 %v2594
      %v2596 = vand.u32 %v926, 4294901760
      %2597 = vmatprep.subr.mxu0 %v2596
      %v2598 = vand.u32 %v925, 4294901760
      %2599 = vmatpush1.msra.mxu0 %v2598
      %v2600 = vand.u32 %v858, 4294901760
      %2601 = vmatprep.subr.mxu0 %v2600
      %v2602 = vand.u32 %v857, 4294901760
      %2603 = vmatpush1.msra.mxu0 %v2602
      %v2604 = vand.u32 %v849, 4294901760
      %2605 = vmatprep.subr.mxu0 %v2604
      %v2606 = vand.u32 %v848, 4294901760
      %2607 = vmatpush1.msra.mxu0 %v2606
      %v2608 = vand.u32 %v780, 4294901760
      %2609 = vmatprep.subr.mxu0 %v2608
      %v2610 = vand.u32 %v779, 4294901760
      %2611 = vmatpush1.msra.mxu0 %v2610
      %v2612 = vand.u32 %v772, 4294901760
      %2613 = vmatprep.subr.mxu0 %v2612
      %v2614 = vand.u32 %v771, 4294901760
      %2615 = vmatpush1.msra.mxu0 %v2614
      %v2616 = vand.u32 %v709, 4294901760
      %2617 = vmatprep.subr.mxu0 %v2616
      %v2618 = vand.u32 %v708, 4294901760
      %2619 = vmatpush1.msra.mxu0 %v2618
      %v2620 = vand.u32 %v701, 4294901760
      %2621 = vmatprep.subr.mxu0 %v2620
      %v2622 = vand.u32 %v700, 4294901760
      %2623 = vmatpush1.msra.mxu0 %v2622
      %v2624 = vand.u32 %v638, 4294901760
      %2625 = vmatprep.subr.mxu0 %v2624
      %v2626 = vand.u32 %v637, 4294901760
      %2627 = vmatpush1.msra.mxu0 %v2626
      %v2628 = vand.u32 %v630, 4294901760
      %2629 = vmatprep.subr.mxu0 %v2628
      %v2630 = vand.u32 %v629, 4294901760
      %2631 = vmatpush1.msra.mxu0 %v2630
      %v2632 = vand.u32 %v567, 4294901760
      %2633 = vmatprep.subr.mxu0 %v2632
      %v2634 = vand.u32 %v566, 4294901760
      %2635 = vmatpush1.msra.mxu0 %v2634
      %v2636 = vand.u32 %v559, 4294901760
      %2637 = vmatprep.subr.mxu0 %v2636
      %v2638 = vand.u32 %v558, 4294901760
      %2639 = vmatpush1.msra.mxu0 %v2638
      %v2640 = vand.u32 %v496, 4294901760
      %2641 = vmatprep.subr.mxu0 %v2640
      %v2642 = vand.u32 %v495, 4294901760
      %2643 = vmatpush1.msra.mxu0 %v2642
      %v2644 = vand.u32 %v488, 4294901760
      %2645 = vmatprep.subr.mxu0 %v2644
      %v2646 = vand.u32 %v487, 4294901760
      %2647 = vmatpush1.msra.mxu0 %v2646
      %v2648 = vand.u32 %v423, 4294901760
      %2649 = vmatprep.subr.mxu0 %v2648
      %v2650 = vand.u32 %v422, 4294901760
      %2651 = vmatpush1.msra.mxu0 %v2650
      %v2652 = vand.u32 %v413, 4294901760
      %2653 = vmatprep.subr.mxu0 %v2652
      %v2654 = vand.u32 %v412, 4294901760
      %2655 = vmatpush1.msra.mxu0 %v2654
      %2656 = vmatprep.subr.mxu0 0.0
      %2657 = vmatpush2.msra.mxu0 0.0
      %2658 = vmatprep.subr.mxu0 0.0
      %2659 = vmatpush2.msra.mxu0 0.0
      %2660 = vmatprep.subr.mxu0 0.0
      %2661 = vmatpush2.msra.mxu0 0.0
      %2662 = vmatprep.subr.mxu0 0.0
      %2663 = vmatpush2.msra.mxu0 0.0
      %2664 = vmatprep.subr.mxu0 0.0
      %2665 = vmatpush2.msra.mxu0 0.0
      %2666 = vmatprep.subr.mxu0 0.0
      %2667 = vmatpush2.msra.mxu0 0.0
      %2668 = vmatprep.subr.mxu0 0.0
      %2669 = vmatpush2.msra.mxu0 0.0
      %2670 = vmatprep.subr.mxu0 0.0
      %2671 = vmatpush2.msra.mxu0 0.0
      %2672 = vmatprep.subr.mxu0 0.0
      %2673 = vmatpush2.msra.mxu0 0.0
      %2674 = vmatprep.subr.mxu0 0.0
      %2675 = vmatpush2.msra.mxu0 0.0
      %2676 = vmatprep.subr.mxu0 0.0
      %2677 = vmatpush2.msra.mxu0 0.0
      %2678 = vmatprep.subr.mxu0 0.0
      %2679 = vmatpush2.msra.mxu0 0.0
      %2680 = vmatprep.subr.mxu0 0.0
      %2681 = vmatpush2.msra.mxu0 0.0
      %2682 = vmatprep.subr.mxu0 0.0
      %2683 = vmatpush2.msra.mxu0 0.0
      %v2684 = vand.u32 %v1012, 4294901760
      %2685 = vmatprep.subr.mxu0 %v2684
      %v2686 = vand.u32 %v1011, 4294901760
      %2687 = vmatpush2.msra.mxu0 %v2686
      %v2688 = vand.u32 %v1003, 4294901760
      %2689 = vmatprep.subr.mxu0 %v2688
      %v2690 = vand.u32 %v1002, 4294901760
      %2691 = vmatpush2.msra.mxu0 %v2690
      %v2692 = vand.u32 %v1054, 4294901760
      %v2693 = vsub.f32 %v1054, %v2692
      %v2694 = vand.u32 %v2693, 4294901760
      %2695 = vmatprep.mubr.f32.mxu0 %v2694
      %v2696 = vand.u32 %v1036, 4294901760
      %v2697 = vsub.f32 %v1036, %v2696
      %v2698 = vand.u32 %v2697, 4294901760
      %2699 = vmatmul.mubr.f32.gmra.mxu0 %v2698
      %v2700 = vpop.f32.mrf.mxu0
      %v2701 = vadd.f32 %v2578, %v2700
      %v2702 = vpop.f32.mrf.mxu0
      %v2703 = vadd.f32 %v2580, %v2702
      %v2704 = vand.u32 %v1057, 4294901760
      %v2705 = vsub.f32 %v1057, %v2704
      %v2706 = vand.u32 %v2705, 4294901760
      %2707 = vmatprep.mubr.f32.mxu0 %v2706
      %v2708 = vand.u32 %v1038, 4294901760
      %v2709 = vsub.f32 %v1038, %v2708
      %v2710 = vand.u32 %v2709, 4294901760
      %2711 = vmatmul.mubr.f32.gmra.mxu0 %v2710
      %v2712 = vpop.f32.mrf.mxu0
      %v2713 = vadd.f32 %v2588, %v2712
      %v2714 = vpop.f32.mrf.mxu0
      %v2715 = vadd.f32 %v2590, %v2714
      %2716 = vdwg.mxu0
      %v2717 = vand.u32 %v935, 4294901760
      %v2718 = vsub.f32 %v935, %v2717
      %v2719 = vand.u32 %v2718, 4294901760
      %2720 = vmatprep.subr.mxu0 %v2719
      %v2721 = vand.u32 %v934, 4294901760
      %v2722 = vsub.f32 %v934, %v2721
      %v2723 = vand.u32 %v2722, 4294901760
      %2724 = vmatpush1.msra.mxu0 %v2723
      %v2725 = vand.u32 %v926, 4294901760
      %v2726 = vsub.f32 %v926, %v2725
      %v2727 = vand.u32 %v2726, 4294901760
      %2728 = vmatprep.subr.mxu0 %v2727
      %v2729 = vand.u32 %v925, 4294901760
      %v2730 = vsub.f32 %v925, %v2729
      %v2731 = vand.u32 %v2730, 4294901760
      %2732 = vmatpush1.msra.mxu0 %v2731
      %v2733 = vand.u32 %v858, 4294901760
      %v2734 = vsub.f32 %v858, %v2733
      %v2735 = vand.u32 %v2734, 4294901760
      %2736 = vmatprep.subr.mxu0 %v2735
      %v2737 = vand.u32 %v857, 4294901760
      %v2738 = vsub.f32 %v857, %v2737
      %v2739 = vand.u32 %v2738, 4294901760
      %2740 = vmatpush1.msra.mxu0 %v2739
      %v2741 = vand.u32 %v849, 4294901760
      %v2742 = vsub.f32 %v849, %v2741
      %v2743 = vand.u32 %v2742, 4294901760
      %2744 = vmatprep.subr.mxu0 %v2743
      %v2745 = vand.u32 %v848, 4294901760
      %v2746 = vsub.f32 %v848, %v2745
      %v2747 = vand.u32 %v2746, 4294901760
      %2748 = vmatpush1.msra.mxu0 %v2747
      %v2749 = vand.u32 %v780, 4294901760
      %v2750 = vsub.f32 %v780, %v2749
      %v2751 = vand.u32 %v2750, 4294901760
      %2752 = vmatprep.subr.mxu0 %v2751
      %v2753 = vand.u32 %v779, 4294901760
      %v2754 = vsub.f32 %v779, %v2753
      %v2755 = vand.u32 %v2754, 4294901760
      %2756 = vmatpush1.msra.mxu0 %v2755
      %v2757 = vand.u32 %v772, 4294901760
      %v2758 = vsub.f32 %v772, %v2757
      %v2759 = vand.u32 %v2758, 4294901760
      %2760 = vmatprep.subr.mxu0 %v2759
      %v2761 = vand.u32 %v771, 4294901760
      %v2762 = vsub.f32 %v771, %v2761
      %v2763 = vand.u32 %v2762, 4294901760
      %2764 = vmatpush1.msra.mxu0 %v2763
      %v2765 = vand.u32 %v709, 4294901760
      %v2766 = vsub.f32 %v709, %v2765
      %v2767 = vand.u32 %v2766, 4294901760
      %2768 = vmatprep.subr.mxu0 %v2767
      %v2769 = vand.u32 %v708, 4294901760
      %v2770 = vsub.f32 %v708, %v2769
      %v2771 = vand.u32 %v2770, 4294901760
      %2772 = vmatpush1.msra.mxu0 %v2771
      %v2773 = vand.u32 %v701, 4294901760
      %v2774 = vsub.f32 %v701, %v2773
      %v2775 = vand.u32 %v2774, 4294901760
      %2776 = vmatprep.subr.mxu0 %v2775
      %v2777 = vand.u32 %v700, 4294901760
      %v2778 = vsub.f32 %v700, %v2777
      %v2779 = vand.u32 %v2778, 4294901760
      %2780 = vmatpush1.msra.mxu0 %v2779
      %v2781 = vand.u32 %v638, 4294901760
      %v2782 = vsub.f32 %v638, %v2781
      %v2783 = vand.u32 %v2782, 4294901760
      %2784 = vmatprep.subr.mxu0 %v2783
      %v2785 = vand.u32 %v637, 4294901760
      %v2786 = vsub.f32 %v637, %v2785
      %v2787 = vand.u32 %v2786, 4294901760
      %2788 = vmatpush1.msra.mxu0 %v2787
      %v2789 = vand.u32 %v630, 4294901760
      %v2790 = vsub.f32 %v630, %v2789
      %v2791 = vand.u32 %v2790, 4294901760
      %2792 = vmatprep.subr.mxu0 %v2791
      %v2793 = vand.u32 %v629, 4294901760
      %v2794 = vsub.f32 %v629, %v2793
      %v2795 = vand.u32 %v2794, 4294901760
      %2796 = vmatpush1.msra.mxu0 %v2795
      %v2797 = vand.u32 %v567, 4294901760
      %v2798 = vsub.f32 %v567, %v2797
      %v2799 = vand.u32 %v2798, 4294901760
      %2800 = vmatprep.subr.mxu0 %v2799
      %v2801 = vand.u32 %v566, 4294901760
      %v2802 = vsub.f32 %v566, %v2801
      %v2803 = vand.u32 %v2802, 4294901760
      %2804 = vmatpush1.msra.mxu0 %v2803
      %v2805 = vand.u32 %v559, 4294901760
      %v2806 = vsub.f32 %v559, %v2805
      %v2807 = vand.u32 %v2806, 4294901760
      %2808 = vmatprep.subr.mxu0 %v2807
      %v2809 = vand.u32 %v558, 4294901760
      %v2810 = vsub.f32 %v558, %v2809
      %v2811 = vand.u32 %v2810, 4294901760
      %2812 = vmatpush1.msra.mxu0 %v2811
      %v2813 = vand.u32 %v496, 4294901760
      %v2814 = vsub.f32 %v496, %v2813
      %v2815 = vand.u32 %v2814, 4294901760
      %2816 = vmatprep.subr.mxu0 %v2815
      %v2817 = vand.u32 %v495, 4294901760
      %v2818 = vsub.f32 %v495, %v2817
      %v2819 = vand.u32 %v2818, 4294901760
      %2820 = vmatpush1.msra.mxu0 %v2819
      %v2821 = vand.u32 %v488, 4294901760
      %v2822 = vsub.f32 %v488, %v2821
      %v2823 = vand.u32 %v2822, 4294901760
      %2824 = vmatprep.subr.mxu0 %v2823
      %v2825 = vand.u32 %v487, 4294901760
      %v2826 = vsub.f32 %v487, %v2825
      %v2827 = vand.u32 %v2826, 4294901760
      %2828 = vmatpush1.msra.mxu0 %v2827
      %v2829 = vand.u32 %v423, 4294901760
      %v2830 = vsub.f32 %v423, %v2829
      %v2831 = vand.u32 %v2830, 4294901760
      %2832 = vmatprep.subr.mxu0 %v2831
      %v2833 = vand.u32 %v422, 4294901760
      %v2834 = vsub.f32 %v422, %v2833
      %v2835 = vand.u32 %v2834, 4294901760
      %2836 = vmatpush1.msra.mxu0 %v2835
      %v2837 = vand.u32 %v413, 4294901760
      %v2838 = vsub.f32 %v413, %v2837
      %v2839 = vand.u32 %v2838, 4294901760
      %2840 = vmatprep.subr.mxu0 %v2839
      %v2841 = vand.u32 %v412, 4294901760
      %v2842 = vsub.f32 %v412, %v2841
      %v2843 = vand.u32 %v2842, 4294901760
      %2844 = vmatpush1.msra.mxu0 %v2843
      %2845 = vmatprep.subr.mxu0 0.0
      %2846 = vmatpush2.msra.mxu0 0.0
      %2847 = vmatprep.subr.mxu0 0.0
      %2848 = vmatpush2.msra.mxu0 0.0
      %2849 = vmatprep.subr.mxu0 0.0
      %2850 = vmatpush2.msra.mxu0 0.0
      %2851 = vmatprep.subr.mxu0 0.0
      %2852 = vmatpush2.msra.mxu0 0.0
      %2853 = vmatprep.subr.mxu0 0.0
      %2854 = vmatpush2.msra.mxu0 0.0
      %2855 = vmatprep.subr.mxu0 0.0
      %2856 = vmatpush2.msra.mxu0 0.0
      %2857 = vmatprep.subr.mxu0 0.0
      %2858 = vmatpush2.msra.mxu0 0.0
      %2859 = vmatprep.subr.mxu0 0.0
      %2860 = vmatpush2.msra.mxu0 0.0
      %2861 = vmatprep.subr.mxu0 0.0
      %2862 = vmatpush2.msra.mxu0 0.0
      %2863 = vmatprep.subr.mxu0 0.0
      %2864 = vmatpush2.msra.mxu0 0.0
      %2865 = vmatprep.subr.mxu0 0.0
      %2866 = vmatpush2.msra.mxu0 0.0
      %2867 = vmatprep.subr.mxu0 0.0
      %2868 = vmatpush2.msra.mxu0 0.0
      %2869 = vmatprep.subr.mxu0 0.0
      %2870 = vmatpush2.msra.mxu0 0.0
      %2871 = vmatprep.subr.mxu0 0.0
      %2872 = vmatpush2.msra.mxu0 0.0
      %v2873 = vand.u32 %v1012, 4294901760
      %v2874 = vsub.f32 %v1012, %v2873
      %v2875 = vand.u32 %v2874, 4294901760
      %2876 = vmatprep.subr.mxu0 %v2875
      %v2877 = vand.u32 %v1011, 4294901760
      %v2878 = vsub.f32 %v1011, %v2877
      %v2879 = vand.u32 %v2878, 4294901760
      %2880 = vmatpush2.msra.mxu0 %v2879
      %v2881 = vand.u32 %v1003, 4294901760
      %v2882 = vsub.f32 %v1003, %v2881
      %v2883 = vand.u32 %v2882, 4294901760
      %2884 = vmatprep.subr.mxu0 %v2883
      %v2885 = vand.u32 %v1002, 4294901760
      %v2886 = vsub.f32 %v1002, %v2885
      %v2887 = vand.u32 %v2886, 4294901760
      %2888 = vmatpush2.msra.mxu0 %v2887
      %v2889 = vand.u32 %v1054, 4294901760
      %2890 = vmatprep.mubr.f32.mxu0 %v2889
      %v2891 = vand.u32 %v1036, 4294901760
      %2892 = vmatmul.mubr.f32.gmra.mxu0 %v2891
      %v2893 = vpop.f32.mrf.mxu0
      %v2894 = vadd.f32 %v2701, %v2893
      %v2895 = vpop.f32.mrf.mxu0
      %v2896 = vadd.f32 %v2703, %v2895
      %v2897 = vand.u32 %v1057, 4294901760
      %2898 = vmatprep.mubr.f32.mxu0 %v2897
      %v2899 = vand.u32 %v1038, 4294901760
      %2900 = vmatmul.mubr.f32.gmra.mxu0 %v2899
      %v2901 = vpop.f32.mrf.mxu0
      %v2902 = vadd.f32 %v2713, %v2901
      %v2903 = vpop.f32.mrf.mxu0
      %v2904 = vadd.f32 %v2715, %v2903
      %2905 = vdwg.mxu0
      %v2906 = vand.u32 %v935, 4294901760
      %2907 = vmatprep.subr.mxu0 %v2906
      %v2908 = vand.u32 %v934, 4294901760
      %2909 = vmatpush1.msra.mxu0 %v2908
      %v2910 = vand.u32 %v926, 4294901760
      %2911 = vmatprep.subr.mxu0 %v2910
      %v2912 = vand.u32 %v925, 4294901760
      %2913 = vmatpush1.msra.mxu0 %v2912
      %v2914 = vand.u32 %v858, 4294901760
      %2915 = vmatprep.subr.mxu0 %v2914
      %v2916 = vand.u32 %v857, 4294901760
      %2917 = vmatpush1.msra.mxu0 %v2916
      %v2918 = vand.u32 %v849, 4294901760
      %2919 = vmatprep.subr.mxu0 %v2918
      %v2920 = vand.u32 %v848, 4294901760
      %2921 = vmatpush1.msra.mxu0 %v2920
      %v2922 = vand.u32 %v780, 4294901760
      %2923 = vmatprep.subr.mxu0 %v2922
      %v2924 = vand.u32 %v779, 4294901760
      %2925 = vmatpush1.msra.mxu0 %v2924
      %v2926 = vand.u32 %v772, 4294901760
      %2927 = vmatprep.subr.mxu0 %v2926
      %v2928 = vand.u32 %v771, 4294901760
      %2929 = vmatpush1.msra.mxu0 %v2928
      %v2930 = vand.u32 %v709, 4294901760
      %2931 = vmatprep.subr.mxu0 %v2930
      %v2932 = vand.u32 %v708, 4294901760
      %2933 = vmatpush1.msra.mxu0 %v2932
      %v2934 = vand.u32 %v701, 4294901760
      %2935 = vmatprep.subr.mxu0 %v2934
      %v2936 = vand.u32 %v700, 4294901760
      %2937 = vmatpush1.msra.mxu0 %v2936
      %v2938 = vand.u32 %v638, 4294901760
      %2939 = vmatprep.subr.mxu0 %v2938
      %v2940 = vand.u32 %v637, 4294901760
      %2941 = vmatpush1.msra.mxu0 %v2940
      %v2942 = vand.u32 %v630, 4294901760
      %2943 = vmatprep.subr.mxu0 %v2942
      %v2944 = vand.u32 %v629, 4294901760
      %2945 = vmatpush1.msra.mxu0 %v2944
      %v2946 = vand.u32 %v567, 4294901760
      %2947 = vmatprep.subr.mxu0 %v2946
      %v2948 = vand.u32 %v566, 4294901760
      %2949 = vmatpush1.msra.mxu0 %v2948
      %v2950 = vand.u32 %v559, 4294901760
      %2951 = vmatprep.subr.mxu0 %v2950
      %v2952 = vand.u32 %v558, 4294901760
      %2953 = vmatpush1.msra.mxu0 %v2952
      %v2954 = vand.u32 %v496, 4294901760
      %2955 = vmatprep.subr.mxu0 %v2954
      %v2956 = vand.u32 %v495, 4294901760
      %2957 = vmatpush1.msra.mxu0 %v2956
      %v2958 = vand.u32 %v488, 4294901760
      %2959 = vmatprep.subr.mxu0 %v2958
      %v2960 = vand.u32 %v487, 4294901760
      %2961 = vmatpush1.msra.mxu0 %v2960
      %v2962 = vand.u32 %v423, 4294901760
      %2963 = vmatprep.subr.mxu0 %v2962
      %v2964 = vand.u32 %v422, 4294901760
      %2965 = vmatpush1.msra.mxu0 %v2964
      %v2966 = vand.u32 %v413, 4294901760
      %2967 = vmatprep.subr.mxu0 %v2966
      %v2968 = vand.u32 %v412, 4294901760
      %2969 = vmatpush1.msra.mxu0 %v2968
      %2970 = vmatprep.subr.mxu0 0.0
      %2971 = vmatpush2.msra.mxu0 0.0
      %2972 = vmatprep.subr.mxu0 0.0
      %2973 = vmatpush2.msra.mxu0 0.0
      %2974 = vmatprep.subr.mxu0 0.0
      %2975 = vmatpush2.msra.mxu0 0.0
      %2976 = vmatprep.subr.mxu0 0.0
      %2977 = vmatpush2.msra.mxu0 0.0
      %2978 = vmatprep.subr.mxu0 0.0
      %2979 = vmatpush2.msra.mxu0 0.0
      %2980 = vmatprep.subr.mxu0 0.0
      %2981 = vmatpush2.msra.mxu0 0.0
      %2982 = vmatprep.subr.mxu0 0.0
      %2983 = vmatpush2.msra.mxu0 0.0
      %2984 = vmatprep.subr.mxu0 0.0
      %2985 = vmatpush2.msra.mxu0 0.0
      %2986 = vmatprep.subr.mxu0 0.0
      %2987 = vmatpush2.msra.mxu0 0.0
      %2988 = vmatprep.subr.mxu0 0.0
      %2989 = vmatpush2.msra.mxu0 0.0
      %2990 = vmatprep.subr.mxu0 0.0
      %2991 = vmatpush2.msra.mxu0 0.0
      %2992 = vmatprep.subr.mxu0 0.0
      %2993 = vmatpush2.msra.mxu0 0.0
      %2994 = vmatprep.subr.mxu0 0.0
      %2995 = vmatpush2.msra.mxu0 0.0
      %2996 = vmatprep.subr.mxu0 0.0
      %2997 = vmatpush2.msra.mxu0 0.0
      %v2998 = vand.u32 %v1012, 4294901760
      %2999 = vmatprep.subr.mxu0 %v2998
      %v3000 = vand.u32 %v1011, 4294901760
      %3001 = vmatpush2.msra.mxu0 %v3000
      %v3002 = vand.u32 %v1003, 4294901760
      %3003 = vmatprep.subr.mxu0 %v3002
      %v3004 = vand.u32 %v1002, 4294901760
      %3005 = vmatpush2.msra.mxu0 %v3004
      %v3006 = vand.u32 %v1054, 4294901760
      %3007 = vmatprep.mubr.f32.mxu0 %v3006
      %v3008 = vand.u32 %v1036, 4294901760
      %3009 = vmatmul.mubr.f32.gmra.mxu0 %v3008
      %v3010 = vpop.f32.mrf.mxu0
      %v3011 = vadd.f32 %v2894, %v3010
      %v3012 = vpop.f32.mrf.mxu0
      %v3013 = vadd.f32 %v2896, %v3012
      %v3014 = vand.u32 %v1057, 4294901760
      %3015 = vmatprep.mubr.f32.mxu0 %v3014
      %v3016 = vand.u32 %v1038, 4294901760
      %3017 = vmatmul.mubr.f32.gmra.mxu0 %v3016
      %v3018 = vpop.f32.mrf.mxu0
      %v3019 = vadd.f32 %v2902, %v3018
      %v3020 = vpop.f32.mrf.mxu0
      %v3021 = vadd.f32 %v2904, %v3020
      %3022 = vdwg.mxu0
      %v3023 = vand.u32 %v937, 4294901760
      %3024 = vmatprep.subr.mxu0 %v3023
      %v3025 = vand.u32 %v936, 4294901760
      %3026 = vmatpush1.msra.mxu0 %v3025
      %v3027 = vand.u32 %v928, 4294901760
      %3028 = vmatprep.subr.mxu0 %v3027
      %v3029 = vand.u32 %v927, 4294901760
      %3030 = vmatpush1.msra.mxu0 %v3029
      %v3031 = vand.u32 %v860, 4294901760
      %3032 = vmatprep.subr.mxu0 %v3031
      %v3033 = vand.u32 %v859, 4294901760
      %3034 = vmatpush1.msra.mxu0 %v3033
      %v3035 = vand.u32 %v851, 4294901760
      %3036 = vmatprep.subr.mxu0 %v3035
      %v3037 = vand.u32 %v850, 4294901760
      %3038 = vmatpush1.msra.mxu0 %v3037
      %v3039 = vand.u32 %v782, 4294901760
      %3040 = vmatprep.subr.mxu0 %v3039
      %v3041 = vand.u32 %v781, 4294901760
      %3042 = vmatpush1.msra.mxu0 %v3041
      %v3043 = vand.u32 %v774, 4294901760
      %3044 = vmatprep.subr.mxu0 %v3043
      %v3045 = vand.u32 %v773, 4294901760
      %3046 = vmatpush1.msra.mxu0 %v3045
      %v3047 = vand.u32 %v711, 4294901760
      %3048 = vmatprep.subr.mxu0 %v3047
      %v3049 = vand.u32 %v710, 4294901760
      %3050 = vmatpush1.msra.mxu0 %v3049
      %v3051 = vand.u32 %v703, 4294901760
      %3052 = vmatprep.subr.mxu0 %v3051
      %v3053 = vand.u32 %v702, 4294901760
      %3054 = vmatpush1.msra.mxu0 %v3053
      %v3055 = vand.u32 %v640, 4294901760
      %3056 = vmatprep.subr.mxu0 %v3055
      %v3057 = vand.u32 %v639, 4294901760
      %3058 = vmatpush1.msra.mxu0 %v3057
      %v3059 = vand.u32 %v632, 4294901760
      %3060 = vmatprep.subr.mxu0 %v3059
      %v3061 = vand.u32 %v631, 4294901760
      %3062 = vmatpush1.msra.mxu0 %v3061
      %v3063 = vand.u32 %v569, 4294901760
      %3064 = vmatprep.subr.mxu0 %v3063
      %v3065 = vand.u32 %v568, 4294901760
      %3066 = vmatpush1.msra.mxu0 %v3065
      %v3067 = vand.u32 %v561, 4294901760
      %3068 = vmatprep.subr.mxu0 %v3067
      %v3069 = vand.u32 %v560, 4294901760
      %3070 = vmatpush1.msra.mxu0 %v3069
      %v3071 = vand.u32 %v498, 4294901760
      %3072 = vmatprep.subr.mxu0 %v3071
      %v3073 = vand.u32 %v497, 4294901760
      %3074 = vmatpush1.msra.mxu0 %v3073
      %v3075 = vand.u32 %v490, 4294901760
      %3076 = vmatprep.subr.mxu0 %v3075
      %v3077 = vand.u32 %v489, 4294901760
      %3078 = vmatpush1.msra.mxu0 %v3077
      %v3079 = vand.u32 %v425, 4294901760
      %3080 = vmatprep.subr.mxu0 %v3079
      %v3081 = vand.u32 %v424, 4294901760
      %3082 = vmatpush1.msra.mxu0 %v3081
      %v3083 = vand.u32 %v415, 4294901760
      %3084 = vmatprep.subr.mxu0 %v3083
      %v3085 = vand.u32 %v414, 4294901760
      %3086 = vmatpush1.msra.mxu0 %v3085
      %3087 = vmatprep.subr.mxu0 0.0
      %3088 = vmatpush2.msra.mxu0 0.0
      %3089 = vmatprep.subr.mxu0 0.0
      %3090 = vmatpush2.msra.mxu0 0.0
      %3091 = vmatprep.subr.mxu0 0.0
      %3092 = vmatpush2.msra.mxu0 0.0
      %3093 = vmatprep.subr.mxu0 0.0
      %3094 = vmatpush2.msra.mxu0 0.0
      %3095 = vmatprep.subr.mxu0 0.0
      %3096 = vmatpush2.msra.mxu0 0.0
      %3097 = vmatprep.subr.mxu0 0.0
      %3098 = vmatpush2.msra.mxu0 0.0
      %3099 = vmatprep.subr.mxu0 0.0
      %3100 = vmatpush2.msra.mxu0 0.0
      %3101 = vmatprep.subr.mxu0 0.0
      %3102 = vmatpush2.msra.mxu0 0.0
      %3103 = vmatprep.subr.mxu0 0.0
      %3104 = vmatpush2.msra.mxu0 0.0
      %3105 = vmatprep.subr.mxu0 0.0
      %3106 = vmatpush2.msra.mxu0 0.0
      %3107 = vmatprep.subr.mxu0 0.0
      %3108 = vmatpush2.msra.mxu0 0.0
      %3109 = vmatprep.subr.mxu0 0.0
      %3110 = vmatpush2.msra.mxu0 0.0
      %3111 = vmatprep.subr.mxu0 0.0
      %3112 = vmatpush2.msra.mxu0 0.0
      %3113 = vmatprep.subr.mxu0 0.0
      %3114 = vmatpush2.msra.mxu0 0.0
      %v3115 = vand.u32 %v1014, 4294901760
      %3116 = vmatprep.subr.mxu0 %v3115
      %v3117 = vand.u32 %v1013, 4294901760
      %3118 = vmatpush2.msra.mxu0 %v3117
      %v3119 = vand.u32 %v1005, 4294901760
      %3120 = vmatprep.subr.mxu0 %v3119
      %v3121 = vand.u32 %v1004, 4294901760
      %3122 = vmatpush2.msra.mxu0 %v3121
      %v3123 = vand.u32 %v1054, 4294901760
      %v3124 = vsub.f32 %v1054, %v3123
      %v3125 = vand.u32 %v3124, 4294901760
      %v3126 = vsub.f32 %v3124, %v3125
      %v3127 = vand.u32 %v3126, 4294901760
      %3128 = vmatprep.mubr.f32.mxu0 %v3127
      %v3129 = vand.u32 %v1036, 4294901760
      %v3130 = vsub.f32 %v1036, %v3129
      %v3131 = vand.u32 %v3130, 4294901760
      %v3132 = vsub.f32 %v3130, %v3131
      %v3133 = vand.u32 %v3132, 4294901760
      %3134 = vmatmul.mubr.f32.gmra.mxu0 %v3133
      %v3135 = vpop.f32.mrf.mxu0
      %v3136 = vadd.f32 %v1045, %v3135
      %v3137 = vpop.f32.mrf.mxu0
      %v3138 = vadd.f32 %v1045, %v3137
      %v3139 = vand.u32 %v1057, 4294901760
      %v3140 = vsub.f32 %v1057, %v3139
      %v3141 = vand.u32 %v3140, 4294901760
      %v3142 = vsub.f32 %v3140, %v3141
      %v3143 = vand.u32 %v3142, 4294901760
      %3144 = vmatprep.mubr.f32.mxu0 %v3143
      %v3145 = vand.u32 %v1038, 4294901760
      %v3146 = vsub.f32 %v1038, %v3145
      %v3147 = vand.u32 %v3146, 4294901760
      %v3148 = vsub.f32 %v3146, %v3147
      %v3149 = vand.u32 %v3148, 4294901760
      %3150 = vmatmul.mubr.f32.gmra.mxu0 %v3149
      %v3151 = vpop.f32.mrf.mxu0
      %v3152 = vadd.f32 %v1050, %v3151
      %v3153 = vpop.f32.mrf.mxu0
      %v3154 = vadd.f32 %v1050, %v3153
      %3155 = vdwg.mxu0
      %v3156 = vand.u32 %v937, 4294901760
      %v3157 = vsub.f32 %v937, %v3156
      %v3158 = vand.u32 %v3157, 4294901760
      %v3159 = vsub.f32 %v3157, %v3158
      %v3160 = vand.u32 %v3159, 4294901760
      %3161 = vmatprep.subr.mxu0 %v3160
      %v3162 = vand.u32 %v936, 4294901760
      %v3163 = vsub.f32 %v936, %v3162
      %v3164 = vand.u32 %v3163, 4294901760
      %v3165 = vsub.f32 %v3163, %v3164
      %v3166 = vand.u32 %v3165, 4294901760
      %3167 = vmatpush1.msra.mxu0 %v3166
      %v3168 = vand.u32 %v928, 4294901760
      %v3169 = vsub.f32 %v928, %v3168
      %v3170 = vand.u32 %v3169, 4294901760
      %v3171 = vsub.f32 %v3169, %v3170
      %v3172 = vand.u32 %v3171, 4294901760
      %3173 = vmatprep.subr.mxu0 %v3172
      %v3174 = vand.u32 %v927, 4294901760
      %v3175 = vsub.f32 %v927, %v3174
      %v3176 = vand.u32 %v3175, 4294901760
      %v3177 = vsub.f32 %v3175, %v3176
      %v3178 = vand.u32 %v3177, 4294901760
      %3179 = vmatpush1.msra.mxu0 %v3178
      %v3180 = vand.u32 %v860, 4294901760
      %v3181 = vsub.f32 %v860, %v3180
      %v3182 = vand.u32 %v3181, 4294901760
      %v3183 = vsub.f32 %v3181, %v3182
      %v3184 = vand.u32 %v3183, 4294901760
      %3185 = vmatprep.subr.mxu0 %v3184
      %v3186 = vand.u32 %v859, 4294901760
      %v3187 = vsub.f32 %v859, %v3186
      %v3188 = vand.u32 %v3187, 4294901760
      %v3189 = vsub.f32 %v3187, %v3188
      %v3190 = vand.u32 %v3189, 4294901760
      %3191 = vmatpush1.msra.mxu0 %v3190
      %v3192 = vand.u32 %v851, 4294901760
      %v3193 = vsub.f32 %v851, %v3192
      %v3194 = vand.u32 %v3193, 4294901760
      %v3195 = vsub.f32 %v3193, %v3194
      %v3196 = vand.u32 %v3195, 4294901760
      %3197 = vmatprep.subr.mxu0 %v3196
      %v3198 = vand.u32 %v850, 4294901760
      %v3199 = vsub.f32 %v850, %v3198
      %v3200 = vand.u32 %v3199, 4294901760
      %v3201 = vsub.f32 %v3199, %v3200
      %v3202 = vand.u32 %v3201, 4294901760
      %3203 = vmatpush1.msra.mxu0 %v3202
      %v3204 = vand.u32 %v782, 4294901760
      %v3205 = vsub.f32 %v782, %v3204
      %v3206 = vand.u32 %v3205, 4294901760
      %v3207 = vsub.f32 %v3205, %v3206
      %v3208 = vand.u32 %v3207, 4294901760
      %3209 = vmatprep.subr.mxu0 %v3208
      %v3210 = vand.u32 %v781, 4294901760
      %v3211 = vsub.f32 %v781, %v3210
      %v3212 = vand.u32 %v3211, 4294901760
      %v3213 = vsub.f32 %v3211, %v3212
      %v3214 = vand.u32 %v3213, 4294901760
      %3215 = vmatpush1.msra.mxu0 %v3214
      %v3216 = vand.u32 %v774, 4294901760
      %v3217 = vsub.f32 %v774, %v3216
      %v3218 = vand.u32 %v3217, 4294901760
      %v3219 = vsub.f32 %v3217, %v3218
      %v3220 = vand.u32 %v3219, 4294901760
      %3221 = vmatprep.subr.mxu0 %v3220
      %v3222 = vand.u32 %v773, 4294901760
      %v3223 = vsub.f32 %v773, %v3222
      %v3224 = vand.u32 %v3223, 4294901760
      %v3225 = vsub.f32 %v3223, %v3224
      %v3226 = vand.u32 %v3225, 4294901760
      %3227 = vmatpush1.msra.mxu0 %v3226
      %v3228 = vand.u32 %v711, 4294901760
      %v3229 = vsub.f32 %v711, %v3228
      %v3230 = vand.u32 %v3229, 4294901760
      %v3231 = vsub.f32 %v3229, %v3230
      %v3232 = vand.u32 %v3231, 4294901760
      %3233 = vmatprep.subr.mxu0 %v3232
      %v3234 = vand.u32 %v710, 4294901760
      %v3235 = vsub.f32 %v710, %v3234
      %v3236 = vand.u32 %v3235, 4294901760
      %v3237 = vsub.f32 %v3235, %v3236
      %v3238 = vand.u32 %v3237, 4294901760
      %3239 = vmatpush1.msra.mxu0 %v3238
      %v3240 = vand.u32 %v703, 4294901760
      %v3241 = vsub.f32 %v703, %v3240
      %v3242 = vand.u32 %v3241, 4294901760
      %v3243 = vsub.f32 %v3241, %v3242
      %v3244 = vand.u32 %v3243, 4294901760
      %3245 = vmatprep.subr.mxu0 %v3244
      %v3246 = vand.u32 %v702, 4294901760
      %v3247 = vsub.f32 %v702, %v3246
      %v3248 = vand.u32 %v3247, 4294901760
      %v3249 = vsub.f32 %v3247, %v3248
      %v3250 = vand.u32 %v3249, 4294901760
      %3251 = vmatpush1.msra.mxu0 %v3250
      %v3252 = vand.u32 %v640, 4294901760
      %v3253 = vsub.f32 %v640, %v3252
      %v3254 = vand.u32 %v3253, 4294901760
      %v3255 = vsub.f32 %v3253, %v3254
      %v3256 = vand.u32 %v3255, 4294901760
      %3257 = vmatprep.subr.mxu0 %v3256
      %v3258 = vand.u32 %v639, 4294901760
      %v3259 = vsub.f32 %v639, %v3258
      %v3260 = vand.u32 %v3259, 4294901760
      %v3261 = vsub.f32 %v3259, %v3260
      %v3262 = vand.u32 %v3261, 4294901760
      %3263 = vmatpush1.msra.mxu0 %v3262
      %v3264 = vand.u32 %v632, 4294901760
      %v3265 = vsub.f32 %v632, %v3264
      %v3266 = vand.u32 %v3265, 4294901760
      %v3267 = vsub.f32 %v3265, %v3266
      %v3268 = vand.u32 %v3267, 4294901760
      %3269 = vmatprep.subr.mxu0 %v3268
      %v3270 = vand.u32 %v631, 4294901760
      %v3271 = vsub.f32 %v631, %v3270
      %v3272 = vand.u32 %v3271, 4294901760
      %v3273 = vsub.f32 %v3271, %v3272
      %v3274 = vand.u32 %v3273, 4294901760
      %3275 = vmatpush1.msra.mxu0 %v3274
      %v3276 = vand.u32 %v569, 4294901760
      %v3277 = vsub.f32 %v569, %v3276
      %v3278 = vand.u32 %v3277, 4294901760
      %v3279 = vsub.f32 %v3277, %v3278
      %v3280 = vand.u32 %v3279, 4294901760
      %3281 = vmatprep.subr.mxu0 %v3280
      %v3282 = vand.u32 %v568, 4294901760
      %v3283 = vsub.f32 %v568, %v3282
      %v3284 = vand.u32 %v3283, 4294901760
      %v3285 = vsub.f32 %v3283, %v3284
      %v3286 = vand.u32 %v3285, 4294901760
      %3287 = vmatpush1.msra.mxu0 %v3286
      %v3288 = vand.u32 %v561, 4294901760
      %v3289 = vsub.f32 %v561, %v3288
      %v3290 = vand.u32 %v3289, 4294901760
      %v3291 = vsub.f32 %v3289, %v3290
      %v3292 = vand.u32 %v3291, 4294901760
      %3293 = vmatprep.subr.mxu0 %v3292
      %v3294 = vand.u32 %v560, 4294901760
      %v3295 = vsub.f32 %v560, %v3294
      %v3296 = vand.u32 %v3295, 4294901760
      %v3297 = vsub.f32 %v3295, %v3296
      %v3298 = vand.u32 %v3297, 4294901760
      %3299 = vmatpush1.msra.mxu0 %v3298
      %v3300 = vand.u32 %v498, 4294901760
      %v3301 = vsub.f32 %v498, %v3300
      %v3302 = vand.u32 %v3301, 4294901760
      %v3303 = vsub.f32 %v3301, %v3302
      %v3304 = vand.u32 %v3303, 4294901760
      %3305 = vmatprep.subr.mxu0 %v3304
      %v3306 = vand.u32 %v497, 4294901760
      %v3307 = vsub.f32 %v497, %v3306
      %v3308 = vand.u32 %v3307, 4294901760
      %v3309 = vsub.f32 %v3307, %v3308
      %v3310 = vand.u32 %v3309, 4294901760
      %3311 = vmatpush1.msra.mxu0 %v3310
      %v3312 = vand.u32 %v490, 4294901760
      %v3313 = vsub.f32 %v490, %v3312
      %v3314 = vand.u32 %v3313, 4294901760
      %v3315 = vsub.f32 %v3313, %v3314
      %v3316 = vand.u32 %v3315, 4294901760
      %3317 = vmatprep.subr.mxu0 %v3316
      %v3318 = vand.u32 %v489, 4294901760
      %v3319 = vsub.f32 %v489, %v3318
      %v3320 = vand.u32 %v3319, 4294901760
      %v3321 = vsub.f32 %v3319, %v3320
      %v3322 = vand.u32 %v3321, 4294901760
      %3323 = vmatpush1.msra.mxu0 %v3322
      %v3324 = vand.u32 %v425, 4294901760
      %v3325 = vsub.f32 %v425, %v3324
      %v3326 = vand.u32 %v3325, 4294901760
      %v3327 = vsub.f32 %v3325, %v3326
      %v3328 = vand.u32 %v3327, 4294901760
      %3329 = vmatprep.subr.mxu0 %v3328
      %v3330 = vand.u32 %v424, 4294901760
      %v3331 = vsub.f32 %v424, %v3330
      %v3332 = vand.u32 %v3331, 4294901760
      %v3333 = vsub.f32 %v3331, %v3332
      %v3334 = vand.u32 %v3333, 4294901760
      %3335 = vmatpush1.msra.mxu0 %v3334
      %v3336 = vand.u32 %v415, 4294901760
      %v3337 = vsub.f32 %v415, %v3336
      %v3338 = vand.u32 %v3337, 4294901760
      %v3339 = vsub.f32 %v3337, %v3338
      %v3340 = vand.u32 %v3339, 4294901760
      %3341 = vmatprep.subr.mxu0 %v3340
      %v3342 = vand.u32 %v414, 4294901760
      %v3343 = vsub.f32 %v414, %v3342
      %v3344 = vand.u32 %v3343, 4294901760
      %v3345 = vsub.f32 %v3343, %v3344
      %v3346 = vand.u32 %v3345, 4294901760
      %3347 = vmatpush1.msra.mxu0 %v3346
      %3348 = vmatprep.subr.mxu0 0.0
      %3349 = vmatpush2.msra.mxu0 0.0
      %3350 = vmatprep.subr.mxu0 0.0
      %3351 = vmatpush2.msra.mxu0 0.0
      %3352 = vmatprep.subr.mxu0 0.0
      %3353 = vmatpush2.msra.mxu0 0.0
      %3354 = vmatprep.subr.mxu0 0.0
      %3355 = vmatpush2.msra.mxu0 0.0
      %3356 = vmatprep.subr.mxu0 0.0
      %3357 = vmatpush2.msra.mxu0 0.0
      %3358 = vmatprep.subr.mxu0 0.0
      %3359 = vmatpush2.msra.mxu0 0.0
      %3360 = vmatprep.subr.mxu0 0.0
      %3361 = vmatpush2.msra.mxu0 0.0
      %3362 = vmatprep.subr.mxu0 0.0
      %3363 = vmatpush2.msra.mxu0 0.0
      %3364 = vmatprep.subr.mxu0 0.0
      %3365 = vmatpush2.msra.mxu0 0.0
      %3366 = vmatprep.subr.mxu0 0.0
      %3367 = vmatpush2.msra.mxu0 0.0
      %3368 = vmatprep.subr.mxu0 0.0
      %3369 = vmatpush2.msra.mxu0 0.0
      %3370 = vmatprep.subr.mxu0 0.0
      %3371 = vmatpush2.msra.mxu0 0.0
      %3372 = vmatprep.subr.mxu0 0.0
      %3373 = vmatpush2.msra.mxu0 0.0
      %3374 = vmatprep.subr.mxu0 0.0
      %3375 = vmatpush2.msra.mxu0 0.0
      %v3376 = vand.u32 %v1014, 4294901760
      %v3377 = vsub.f32 %v1014, %v3376
      %v3378 = vand.u32 %v3377, 4294901760
      %v3379 = vsub.f32 %v3377, %v3378
      %v3380 = vand.u32 %v3379, 4294901760
      %3381 = vmatprep.subr.mxu0 %v3380
      %v3382 = vand.u32 %v1013, 4294901760
      %v3383 = vsub.f32 %v1013, %v3382
      %v3384 = vand.u32 %v3383, 4294901760
      %v3385 = vsub.f32 %v3383, %v3384
      %v3386 = vand.u32 %v3385, 4294901760
      %3387 = vmatpush2.msra.mxu0 %v3386
      %v3388 = vand.u32 %v1005, 4294901760
      %v3389 = vsub.f32 %v1005, %v3388
      %v3390 = vand.u32 %v3389, 4294901760
      %v3391 = vsub.f32 %v3389, %v3390
      %v3392 = vand.u32 %v3391, 4294901760
      %3393 = vmatprep.subr.mxu0 %v3392
      %v3394 = vand.u32 %v1004, 4294901760
      %v3395 = vsub.f32 %v1004, %v3394
      %v3396 = vand.u32 %v3395, 4294901760
      %v3397 = vsub.f32 %v3395, %v3396
      %v3398 = vand.u32 %v3397, 4294901760
      %3399 = vmatpush2.msra.mxu0 %v3398
      %v3400 = vand.u32 %v1054, 4294901760
      %3401 = vmatprep.mubr.f32.mxu0 %v3400
      %v3402 = vand.u32 %v1036, 4294901760
      %3403 = vmatmul.mubr.f32.gmra.mxu0 %v3402
      %v3404 = vpop.f32.mrf.mxu0
      %v3405 = vadd.f32 %v3136, %v3404
      %v3406 = vpop.f32.mrf.mxu0
      %v3407 = vadd.f32 %v3138, %v3406
      %v3408 = vand.u32 %v1057, 4294901760
      %3409 = vmatprep.mubr.f32.mxu0 %v3408
      %v3410 = vand.u32 %v1038, 4294901760
      %3411 = vmatmul.mubr.f32.gmra.mxu0 %v3410
      %v3412 = vpop.f32.mrf.mxu0
      %v3413 = vadd.f32 %v3152, %v3412
      %v3414 = vpop.f32.mrf.mxu0
      %v3415 = vadd.f32 %v3154, %v3414
      %3416 = vdwg.mxu0
      %v3417 = vand.u32 %v937, 4294901760
      %v3418 = vsub.f32 %v937, %v3417
      %3419 = vmatprep.subr.mxu0 %v3418
      %v3420 = vand.u32 %v936, 4294901760
      %v3421 = vsub.f32 %v936, %v3420
      %3422 = vmatpush1.msra.mxu0 %v3421
      %v3423 = vand.u32 %v928, 4294901760
      %v3424 = vsub.f32 %v928, %v3423
      %3425 = vmatprep.subr.mxu0 %v3424
      %v3426 = vand.u32 %v927, 4294901760
      %v3427 = vsub.f32 %v927, %v3426
      %3428 = vmatpush1.msra.mxu0 %v3427
      %v3429 = vand.u32 %v860, 4294901760
      %v3430 = vsub.f32 %v860, %v3429
      %3431 = vmatprep.subr.mxu0 %v3430
      %v3432 = vand.u32 %v859, 4294901760
      %v3433 = vsub.f32 %v859, %v3432
      %3434 = vmatpush1.msra.mxu0 %v3433
      %v3435 = vand.u32 %v851, 4294901760
      %v3436 = vsub.f32 %v851, %v3435
      %3437 = vmatprep.subr.mxu0 %v3436
      %v3438 = vand.u32 %v850, 4294901760
      %v3439 = vsub.f32 %v850, %v3438
      %3440 = vmatpush1.msra.mxu0 %v3439
      %v3441 = vand.u32 %v782, 4294901760
      %v3442 = vsub.f32 %v782, %v3441
      %3443 = vmatprep.subr.mxu0 %v3442
      %v3444 = vand.u32 %v781, 4294901760
      %v3445 = vsub.f32 %v781, %v3444
      %3446 = vmatpush1.msra.mxu0 %v3445
      %v3447 = vand.u32 %v774, 4294901760
      %v3448 = vsub.f32 %v774, %v3447
      %3449 = vmatprep.subr.mxu0 %v3448
      %v3450 = vand.u32 %v773, 4294901760
      %v3451 = vsub.f32 %v773, %v3450
      %3452 = vmatpush1.msra.mxu0 %v3451
      %v3453 = vand.u32 %v711, 4294901760
      %v3454 = vsub.f32 %v711, %v3453
      %3455 = vmatprep.subr.mxu0 %v3454
      %v3456 = vand.u32 %v710, 4294901760
      %v3457 = vsub.f32 %v710, %v3456
      %3458 = vmatpush1.msra.mxu0 %v3457
      %v3459 = vand.u32 %v703, 4294901760
      %v3460 = vsub.f32 %v703, %v3459
      %3461 = vmatprep.subr.mxu0 %v3460
      %v3462 = vand.u32 %v702, 4294901760
      %v3463 = vsub.f32 %v702, %v3462
      %3464 = vmatpush1.msra.mxu0 %v3463
      %v3465 = vand.u32 %v640, 4294901760
      %v3466 = vsub.f32 %v640, %v3465
      %3467 = vmatprep.subr.mxu0 %v3466
      %v3468 = vand.u32 %v639, 4294901760
      %v3469 = vsub.f32 %v639, %v3468
      %3470 = vmatpush1.msra.mxu0 %v3469
      %v3471 = vand.u32 %v632, 4294901760
      %v3472 = vsub.f32 %v632, %v3471
      %3473 = vmatprep.subr.mxu0 %v3472
      %v3474 = vand.u32 %v631, 4294901760
      %v3475 = vsub.f32 %v631, %v3474
      %3476 = vmatpush1.msra.mxu0 %v3475
      %v3477 = vand.u32 %v569, 4294901760
      %v3478 = vsub.f32 %v569, %v3477
      %3479 = vmatprep.subr.mxu0 %v3478
      %v3480 = vand.u32 %v568, 4294901760
      %v3481 = vsub.f32 %v568, %v3480
      %3482 = vmatpush1.msra.mxu0 %v3481
      %v3483 = vand.u32 %v561, 4294901760
      %v3484 = vsub.f32 %v561, %v3483
      %3485 = vmatprep.subr.mxu0 %v3484
      %v3486 = vand.u32 %v560, 4294901760
      %v3487 = vsub.f32 %v560, %v3486
      %3488 = vmatpush1.msra.mxu0 %v3487
      %v3489 = vand.u32 %v498, 4294901760
      %v3490 = vsub.f32 %v498, %v3489
      %3491 = vmatprep.subr.mxu0 %v3490
      %v3492 = vand.u32 %v497, 4294901760
      %v3493 = vsub.f32 %v497, %v3492
      %3494 = vmatpush1.msra.mxu0 %v3493
      %v3495 = vand.u32 %v490, 4294901760
      %v3496 = vsub.f32 %v490, %v3495
      %3497 = vmatprep.subr.mxu0 %v3496
      %v3498 = vand.u32 %v489, 4294901760
      %v3499 = vsub.f32 %v489, %v3498
      %3500 = vmatpush1.msra.mxu0 %v3499
      %v3501 = vand.u32 %v425, 4294901760
      %v3502 = vsub.f32 %v425, %v3501
      %3503 = vmatprep.subr.mxu0 %v3502
      %v3504 = vand.u32 %v424, 4294901760
      %v3505 = vsub.f32 %v424, %v3504
      %3506 = vmatpush1.msra.mxu0 %v3505
      %v3507 = vand.u32 %v415, 4294901760
      %v3508 = vsub.f32 %v415, %v3507
      %3509 = vmatprep.subr.mxu0 %v3508
      %v3510 = vand.u32 %v414, 4294901760
      %v3511 = vsub.f32 %v414, %v3510
      %3512 = vmatpush1.msra.mxu0 %v3511
      %3513 = vmatprep.subr.mxu0 0.0
      %3514 = vmatpush2.msra.mxu0 0.0
      %3515 = vmatprep.subr.mxu0 0.0
      %3516 = vmatpush2.msra.mxu0 0.0
      %3517 = vmatprep.subr.mxu0 0.0
      %3518 = vmatpush2.msra.mxu0 0.0
      %3519 = vmatprep.subr.mxu0 0.0
      %3520 = vmatpush2.msra.mxu0 0.0
      %3521 = vmatprep.subr.mxu0 0.0
      %3522 = vmatpush2.msra.mxu0 0.0
      %3523 = vmatprep.subr.mxu0 0.0
      %3524 = vmatpush2.msra.mxu0 0.0
      %3525 = vmatprep.subr.mxu0 0.0
      %3526 = vmatpush2.msra.mxu0 0.0
      %3527 = vmatprep.subr.mxu0 0.0
      %3528 = vmatpush2.msra.mxu0 0.0
      %3529 = vmatprep.subr.mxu0 0.0
      %3530 = vmatpush2.msra.mxu0 0.0
      %3531 = vmatprep.subr.mxu0 0.0
      %3532 = vmatpush2.msra.mxu0 0.0
      %3533 = vmatprep.subr.mxu0 0.0
      %3534 = vmatpush2.msra.mxu0 0.0
      %3535 = vmatprep.subr.mxu0 0.0
      %3536 = vmatpush2.msra.mxu0 0.0
      %3537 = vmatprep.subr.mxu0 0.0
      %3538 = vmatpush2.msra.mxu0 0.0
      %3539 = vmatprep.subr.mxu0 0.0
      %3540 = vmatpush2.msra.mxu0 0.0
      %v3541 = vand.u32 %v1014, 4294901760
      %v3542 = vsub.f32 %v1014, %v3541
      %3543 = vmatprep.subr.mxu0 %v3542
      %v3544 = vand.u32 %v1013, 4294901760
      %v3545 = vsub.f32 %v1013, %v3544
      %3546 = vmatpush2.msra.mxu0 %v3545
      %v3547 = vand.u32 %v1005, 4294901760
      %v3548 = vsub.f32 %v1005, %v3547
      %3549 = vmatprep.subr.mxu0 %v3548
      %v3550 = vand.u32 %v1004, 4294901760
      %v3551 = vsub.f32 %v1004, %v3550
      %3552 = vmatpush2.msra.mxu0 %v3551
      %v3553 = vand.u32 %v1054, 4294901760
      %v3554 = vsub.f32 %v1054, %v3553
      %3555 = vmatprep.mubr.f32.mxu0 %v3554
      %v3556 = vand.u32 %v1036, 4294901760
      %v3557 = vsub.f32 %v1036, %v3556
      %3558 = vmatmul.mubr.f32.gmra.mxu0 %v3557
      %v3559 = vpop.f32.mrf.mxu0
      %v3560 = vadd.f32 %v3405, %v3559
      %v3561 = vpop.f32.mrf.mxu0
      %v3562 = vadd.f32 %v3407, %v3561
      %v3563 = vand.u32 %v1057, 4294901760
      %v3564 = vsub.f32 %v1057, %v3563
      %3565 = vmatprep.mubr.f32.mxu0 %v3564
      %v3566 = vand.u32 %v1038, 4294901760
      %v3567 = vsub.f32 %v1038, %v3566
      %3568 = vmatmul.mubr.f32.gmra.mxu0 %v3567
      %v3569 = vpop.f32.mrf.mxu0
      %v3570 = vadd.f32 %v3413, %v3569
      %v3571 = vpop.f32.mrf.mxu0
      %v3572 = vadd.f32 %v3415, %v3571
      %3573 = vdwg.mxu0
      %v3574 = vand.u32 %v937, 4294901760
      %3575 = vmatprep.subr.mxu0 %v3574
      %v3576 = vand.u32 %v936, 4294901760
      %3577 = vmatpush1.msra.mxu0 %v3576
      %v3578 = vand.u32 %v928, 4294901760
      %3579 = vmatprep.subr.mxu0 %v3578
      %v3580 = vand.u32 %v927, 4294901760
      %3581 = vmatpush1.msra.mxu0 %v3580
      %v3582 = vand.u32 %v860, 4294901760
      %3583 = vmatprep.subr.mxu0 %v3582
      %v3584 = vand.u32 %v859, 4294901760
      %3585 = vmatpush1.msra.mxu0 %v3584
      %v3586 = vand.u32 %v851, 4294901760
      %3587 = vmatprep.subr.mxu0 %v3586
      %v3588 = vand.u32 %v850, 4294901760
      %3589 = vmatpush1.msra.mxu0 %v3588
      %v3590 = vand.u32 %v782, 4294901760
      %3591 = vmatprep.subr.mxu0 %v3590
      %v3592 = vand.u32 %v781, 4294901760
      %3593 = vmatpush1.msra.mxu0 %v3592
      %v3594 = vand.u32 %v774, 4294901760
      %3595 = vmatprep.subr.mxu0 %v3594
      %v3596 = vand.u32 %v773, 4294901760
      %3597 = vmatpush1.msra.mxu0 %v3596
      %v3598 = vand.u32 %v711, 4294901760
      %3599 = vmatprep.subr.mxu0 %v3598
      %v3600 = vand.u32 %v710, 4294901760
      %3601 = vmatpush1.msra.mxu0 %v3600
      %v3602 = vand.u32 %v703, 4294901760
      %3603 = vmatprep.subr.mxu0 %v3602
      %v3604 = vand.u32 %v702, 4294901760
      %3605 = vmatpush1.msra.mxu0 %v3604
      %v3606 = vand.u32 %v640, 4294901760
      %3607 = vmatprep.subr.mxu0 %v3606
      %v3608 = vand.u32 %v639, 4294901760
      %3609 = vmatpush1.msra.mxu0 %v3608
      %v3610 = vand.u32 %v632, 4294901760
      %3611 = vmatprep.subr.mxu0 %v3610
      %v3612 = vand.u32 %v631, 4294901760
      %3613 = vmatpush1.msra.mxu0 %v3612
      %v3614 = vand.u32 %v569, 4294901760
      %3615 = vmatprep.subr.mxu0 %v3614
      %v3616 = vand.u32 %v568, 4294901760
      %3617 = vmatpush1.msra.mxu0 %v3616
      %v3618 = vand.u32 %v561, 4294901760
      %3619 = vmatprep.subr.mxu0 %v3618
      %v3620 = vand.u32 %v560, 4294901760
      %3621 = vmatpush1.msra.mxu0 %v3620
      %v3622 = vand.u32 %v498, 4294901760
      %3623 = vmatprep.subr.mxu0 %v3622
      %v3624 = vand.u32 %v497, 4294901760
      %3625 = vmatpush1.msra.mxu0 %v3624
      %v3626 = vand.u32 %v490, 4294901760
      %3627 = vmatprep.subr.mxu0 %v3626
      %v3628 = vand.u32 %v489, 4294901760
      %3629 = vmatpush1.msra.mxu0 %v3628
      %v3630 = vand.u32 %v425, 4294901760
      %3631 = vmatprep.subr.mxu0 %v3630
      %v3632 = vand.u32 %v424, 4294901760
      %3633 = vmatpush1.msra.mxu0 %v3632
      %v3634 = vand.u32 %v415, 4294901760
      %3635 = vmatprep.subr.mxu0 %v3634
      %v3636 = vand.u32 %v414, 4294901760
      %3637 = vmatpush1.msra.mxu0 %v3636
      %3638 = vmatprep.subr.mxu0 0.0
      %3639 = vmatpush2.msra.mxu0 0.0
      %3640 = vmatprep.subr.mxu0 0.0
      %3641 = vmatpush2.msra.mxu0 0.0
      %3642 = vmatprep.subr.mxu0 0.0
      %3643 = vmatpush2.msra.mxu0 0.0
      %3644 = vmatprep.subr.mxu0 0.0
      %3645 = vmatpush2.msra.mxu0 0.0
      %3646 = vmatprep.subr.mxu0 0.0
      %3647 = vmatpush2.msra.mxu0 0.0
      %3648 = vmatprep.subr.mxu0 0.0
      %3649 = vmatpush2.msra.mxu0 0.0
      %3650 = vmatprep.subr.mxu0 0.0
      %3651 = vmatpush2.msra.mxu0 0.0
      %3652 = vmatprep.subr.mxu0 0.0
      %3653 = vmatpush2.msra.mxu0 0.0
      %3654 = vmatprep.subr.mxu0 0.0
      %3655 = vmatpush2.msra.mxu0 0.0
      %3656 = vmatprep.subr.mxu0 0.0
      %3657 = vmatpush2.msra.mxu0 0.0
      %3658 = vmatprep.subr.mxu0 0.0
      %3659 = vmatpush2.msra.mxu0 0.0
      %3660 = vmatprep.subr.mxu0 0.0
      %3661 = vmatpush2.msra.mxu0 0.0
      %3662 = vmatprep.subr.mxu0 0.0
      %3663 = vmatpush2.msra.mxu0 0.0
      %3664 = vmatprep.subr.mxu0 0.0
      %3665 = vmatpush2.msra.mxu0 0.0
      %v3666 = vand.u32 %v1014, 4294901760
      %3667 = vmatprep.subr.mxu0 %v3666
      %v3668 = vand.u32 %v1013, 4294901760
      %3669 = vmatpush2.msra.mxu0 %v3668
      %v3670 = vand.u32 %v1005, 4294901760
      %3671 = vmatprep.subr.mxu0 %v3670
      %v3672 = vand.u32 %v1004, 4294901760
      %3673 = vmatpush2.msra.mxu0 %v3672
      %v3674 = vand.u32 %v1054, 4294901760
      %v3675 = vsub.f32 %v1054, %v3674
      %v3676 = vand.u32 %v3675, 4294901760
      %3677 = vmatprep.mubr.f32.mxu0 %v3676
      %v3678 = vand.u32 %v1036, 4294901760
      %v3679 = vsub.f32 %v1036, %v3678
      %v3680 = vand.u32 %v3679, 4294901760
      %3681 = vmatmul.mubr.f32.gmra.mxu0 %v3680
      %v3682 = vpop.f32.mrf.mxu0
      %v3683 = vadd.f32 %v3560, %v3682
      %v3684 = vpop.f32.mrf.mxu0
      %v3685 = vadd.f32 %v3562, %v3684
      %v3686 = vand.u32 %v1057, 4294901760
      %v3687 = vsub.f32 %v1057, %v3686
      %v3688 = vand.u32 %v3687, 4294901760
      %3689 = vmatprep.mubr.f32.mxu0 %v3688
      %v3690 = vand.u32 %v1038, 4294901760
      %v3691 = vsub.f32 %v1038, %v3690
      %v3692 = vand.u32 %v3691, 4294901760
      %3693 = vmatmul.mubr.f32.gmra.mxu0 %v3692
      %v3694 = vpop.f32.mrf.mxu0
      %v3695 = vadd.f32 %v3570, %v3694
      %v3696 = vpop.f32.mrf.mxu0
      %v3697 = vadd.f32 %v3572, %v3696
      %3698 = vdwg.mxu0
      %v3699 = vand.u32 %v937, 4294901760
      %v3700 = vsub.f32 %v937, %v3699
      %v3701 = vand.u32 %v3700, 4294901760
      %3702 = vmatprep.subr.mxu0 %v3701
      %v3703 = vand.u32 %v936, 4294901760
      %v3704 = vsub.f32 %v936, %v3703
      %v3705 = vand.u32 %v3704, 4294901760
      %3706 = vmatpush1.msra.mxu0 %v3705
      %v3707 = vand.u32 %v928, 4294901760
      %v3708 = vsub.f32 %v928, %v3707
      %v3709 = vand.u32 %v3708, 4294901760
      %3710 = vmatprep.subr.mxu0 %v3709
      %v3711 = vand.u32 %v927, 4294901760
      %v3712 = vsub.f32 %v927, %v3711
      %v3713 = vand.u32 %v3712, 4294901760
      %3714 = vmatpush1.msra.mxu0 %v3713
      %v3715 = vand.u32 %v860, 4294901760
      %v3716 = vsub.f32 %v860, %v3715
      %v3717 = vand.u32 %v3716, 4294901760
      %3718 = vmatprep.subr.mxu0 %v3717
      %v3719 = vand.u32 %v859, 4294901760
      %v3720 = vsub.f32 %v859, %v3719
      %v3721 = vand.u32 %v3720, 4294901760
      %3722 = vmatpush1.msra.mxu0 %v3721
      %v3723 = vand.u32 %v851, 4294901760
      %v3724 = vsub.f32 %v851, %v3723
      %v3725 = vand.u32 %v3724, 4294901760
      %3726 = vmatprep.subr.mxu0 %v3725
      %v3727 = vand.u32 %v850, 4294901760
      %v3728 = vsub.f32 %v850, %v3727
      %v3729 = vand.u32 %v3728, 4294901760
      %3730 = vmatpush1.msra.mxu0 %v3729
      %v3731 = vand.u32 %v782, 4294901760
      %v3732 = vsub.f32 %v782, %v3731
      %v3733 = vand.u32 %v3732, 4294901760
      %3734 = vmatprep.subr.mxu0 %v3733
      %v3735 = vand.u32 %v781, 4294901760
      %v3736 = vsub.f32 %v781, %v3735
      %v3737 = vand.u32 %v3736, 4294901760
      %3738 = vmatpush1.msra.mxu0 %v3737
      %v3739 = vand.u32 %v774, 4294901760
      %v3740 = vsub.f32 %v774, %v3739
      %v3741 = vand.u32 %v3740, 4294901760
      %3742 = vmatprep.subr.mxu0 %v3741
      %v3743 = vand.u32 %v773, 4294901760
      %v3744 = vsub.f32 %v773, %v3743
      %v3745 = vand.u32 %v3744, 4294901760
      %3746 = vmatpush1.msra.mxu0 %v3745
      %v3747 = vand.u32 %v711, 4294901760
      %v3748 = vsub.f32 %v711, %v3747
      %v3749 = vand.u32 %v3748, 4294901760
      %3750 = vmatprep.subr.mxu0 %v3749
      %v3751 = vand.u32 %v710, 4294901760
      %v3752 = vsub.f32 %v710, %v3751
      %v3753 = vand.u32 %v3752, 4294901760
      %3754 = vmatpush1.msra.mxu0 %v3753
      %v3755 = vand.u32 %v703, 4294901760
      %v3756 = vsub.f32 %v703, %v3755
      %v3757 = vand.u32 %v3756, 4294901760
      %3758 = vmatprep.subr.mxu0 %v3757
      %v3759 = vand.u32 %v702, 4294901760
      %v3760 = vsub.f32 %v702, %v3759
      %v3761 = vand.u32 %v3760, 4294901760
      %3762 = vmatpush1.msra.mxu0 %v3761
      %v3763 = vand.u32 %v640, 4294901760
      %v3764 = vsub.f32 %v640, %v3763
      %v3765 = vand.u32 %v3764, 4294901760
      %3766 = vmatprep.subr.mxu0 %v3765
      %v3767 = vand.u32 %v639, 4294901760
      %v3768 = vsub.f32 %v639, %v3767
      %v3769 = vand.u32 %v3768, 4294901760
      %3770 = vmatpush1.msra.mxu0 %v3769
      %v3771 = vand.u32 %v632, 4294901760
      %v3772 = vsub.f32 %v632, %v3771
      %v3773 = vand.u32 %v3772, 4294901760
      %3774 = vmatprep.subr.mxu0 %v3773
      %v3775 = vand.u32 %v631, 4294901760
      %v3776 = vsub.f32 %v631, %v3775
      %v3777 = vand.u32 %v3776, 4294901760
      %3778 = vmatpush1.msra.mxu0 %v3777
      %v3779 = vand.u32 %v569, 4294901760
      %v3780 = vsub.f32 %v569, %v3779
      %v3781 = vand.u32 %v3780, 4294901760
      %3782 = vmatprep.subr.mxu0 %v3781
      %v3783 = vand.u32 %v568, 4294901760
      %v3784 = vsub.f32 %v568, %v3783
      %v3785 = vand.u32 %v3784, 4294901760
      %3786 = vmatpush1.msra.mxu0 %v3785
      %v3787 = vand.u32 %v561, 4294901760
      %v3788 = vsub.f32 %v561, %v3787
      %v3789 = vand.u32 %v3788, 4294901760
      %3790 = vmatprep.subr.mxu0 %v3789
      %v3791 = vand.u32 %v560, 4294901760
      %v3792 = vsub.f32 %v560, %v3791
      %v3793 = vand.u32 %v3792, 4294901760
      %3794 = vmatpush1.msra.mxu0 %v3793
      %v3795 = vand.u32 %v498, 4294901760
      %v3796 = vsub.f32 %v498, %v3795
      %v3797 = vand.u32 %v3796, 4294901760
      %3798 = vmatprep.subr.mxu0 %v3797
      %v3799 = vand.u32 %v497, 4294901760
      %v3800 = vsub.f32 %v497, %v3799
      %v3801 = vand.u32 %v3800, 4294901760
      %3802 = vmatpush1.msra.mxu0 %v3801
      %v3803 = vand.u32 %v490, 4294901760
      %v3804 = vsub.f32 %v490, %v3803
      %v3805 = vand.u32 %v3804, 4294901760
      %3806 = vmatprep.subr.mxu0 %v3805
      %v3807 = vand.u32 %v489, 4294901760
      %v3808 = vsub.f32 %v489, %v3807
      %v3809 = vand.u32 %v3808, 4294901760
      %3810 = vmatpush1.msra.mxu0 %v3809
      %v3811 = vand.u32 %v425, 4294901760
      %v3812 = vsub.f32 %v425, %v3811
      %v3813 = vand.u32 %v3812, 4294901760
      %3814 = vmatprep.subr.mxu0 %v3813
      %v3815 = vand.u32 %v424, 4294901760
      %v3816 = vsub.f32 %v424, %v3815
      %v3817 = vand.u32 %v3816, 4294901760
      %3818 = vmatpush1.msra.mxu0 %v3817
      %v3819 = vand.u32 %v415, 4294901760
      %v3820 = vsub.f32 %v415, %v3819
      %v3821 = vand.u32 %v3820, 4294901760
      %3822 = vmatprep.subr.mxu0 %v3821
      %v3823 = vand.u32 %v414, 4294901760
      %v3824 = vsub.f32 %v414, %v3823
      %v3825 = vand.u32 %v3824, 4294901760
      %3826 = vmatpush1.msra.mxu0 %v3825
      %3827 = vmatprep.subr.mxu0 0.0
      %3828 = vmatpush2.msra.mxu0 0.0
      %3829 = vmatprep.subr.mxu0 0.0
      %3830 = vmatpush2.msra.mxu0 0.0
      %3831 = vmatprep.subr.mxu0 0.0
      %3832 = vmatpush2.msra.mxu0 0.0
      %3833 = vmatprep.subr.mxu0 0.0
      %3834 = vmatpush2.msra.mxu0 0.0
      %3835 = vmatprep.subr.mxu0 0.0
      %3836 = vmatpush2.msra.mxu0 0.0
      %3837 = vmatprep.subr.mxu0 0.0
      %3838 = vmatpush2.msra.mxu0 0.0
      %3839 = vmatprep.subr.mxu0 0.0
      %3840 = vmatpush2.msra.mxu0 0.0
      %3841 = vmatprep.subr.mxu0 0.0
      %3842 = vmatpush2.msra.mxu0 0.0
      %3843 = vmatprep.subr.mxu0 0.0
      %3844 = vmatpush2.msra.mxu0 0.0
      %3845 = vmatprep.subr.mxu0 0.0
      %3846 = vmatpush2.msra.mxu0 0.0
      %3847 = vmatprep.subr.mxu0 0.0
      %3848 = vmatpush2.msra.mxu0 0.0
      %3849 = vmatprep.subr.mxu0 0.0
      %3850 = vmatpush2.msra.mxu0 0.0
      %3851 = vmatprep.subr.mxu0 0.0
      %3852 = vmatpush2.msra.mxu0 0.0
      %3853 = vmatprep.subr.mxu0 0.0
      %3854 = vmatpush2.msra.mxu0 0.0
      %v3855 = vand.u32 %v1014, 4294901760
      %v3856 = vsub.f32 %v1014, %v3855
      %v3857 = vand.u32 %v3856, 4294901760
      %3858 = vmatprep.subr.mxu0 %v3857
      %v3859 = vand.u32 %v1013, 4294901760
      %v3860 = vsub.f32 %v1013, %v3859
      %v3861 = vand.u32 %v3860, 4294901760
      %3862 = vmatpush2.msra.mxu0 %v3861
      %v3863 = vand.u32 %v1005, 4294901760
      %v3864 = vsub.f32 %v1005, %v3863
      %v3865 = vand.u32 %v3864, 4294901760
      %3866 = vmatprep.subr.mxu0 %v3865
      %v3867 = vand.u32 %v1004, 4294901760
      %v3868 = vsub.f32 %v1004, %v3867
      %v3869 = vand.u32 %v3868, 4294901760
      %3870 = vmatpush2.msra.mxu0 %v3869
      %v3871 = vand.u32 %v1054, 4294901760
      %3872 = vmatprep.mubr.f32.mxu0 %v3871
      %v3873 = vand.u32 %v1036, 4294901760
      %3874 = vmatmul.mubr.f32.gmra.mxu0 %v3873
      %v3875 = vpop.f32.mrf.mxu0
      %v3876 = vadd.f32 %v3683, %v3875
      %v3877 = vpop.f32.mrf.mxu0
      %v3878 = vadd.f32 %v3685, %v3877
      %v3879 = vand.u32 %v1057, 4294901760
      %3880 = vmatprep.mubr.f32.mxu0 %v3879
      %v3881 = vand.u32 %v1038, 4294901760
      %3882 = vmatmul.mubr.f32.gmra.mxu0 %v3881
      %v3883 = vpop.f32.mrf.mxu0
      %v3884 = vadd.f32 %v3695, %v3883
      %v3885 = vpop.f32.mrf.mxu0
      %v3886 = vadd.f32 %v3697, %v3885
      %3887 = vdwg.mxu0
      %v3888 = vand.u32 %v937, 4294901760
      %3889 = vmatprep.subr.mxu0 %v3888
      %v3890 = vand.u32 %v936, 4294901760
      %3891 = vmatpush1.msra.mxu0 %v3890
      %v3892 = vand.u32 %v928, 4294901760
      %3893 = vmatprep.subr.mxu0 %v3892
      %v3894 = vand.u32 %v927, 4294901760
      %3895 = vmatpush1.msra.mxu0 %v3894
      %v3896 = vand.u32 %v860, 4294901760
      %3897 = vmatprep.subr.mxu0 %v3896
      %v3898 = vand.u32 %v859, 4294901760
      %3899 = vmatpush1.msra.mxu0 %v3898
      %v3900 = vand.u32 %v851, 4294901760
      %3901 = vmatprep.subr.mxu0 %v3900
      %v3902 = vand.u32 %v850, 4294901760
      %3903 = vmatpush1.msra.mxu0 %v3902
      %v3904 = vand.u32 %v782, 4294901760
      %3905 = vmatprep.subr.mxu0 %v3904
      %v3906 = vand.u32 %v781, 4294901760
      %3907 = vmatpush1.msra.mxu0 %v3906
      %v3908 = vand.u32 %v774, 4294901760
      %3909 = vmatprep.subr.mxu0 %v3908
      %v3910 = vand.u32 %v773, 4294901760
      %3911 = vmatpush1.msra.mxu0 %v3910
      %v3912 = vand.u32 %v711, 4294901760
      %3913 = vmatprep.subr.mxu0 %v3912
      %v3914 = vand.u32 %v710, 4294901760
      %3915 = vmatpush1.msra.mxu0 %v3914
      %v3916 = vand.u32 %v703, 4294901760
      %3917 = vmatprep.subr.mxu0 %v3916
      %v3918 = vand.u32 %v702, 4294901760
      %3919 = vmatpush1.msra.mxu0 %v3918
      %v3920 = vand.u32 %v640, 4294901760
      %3921 = vmatprep.subr.mxu0 %v3920
      %v3922 = vand.u32 %v639, 4294901760
      %3923 = vmatpush1.msra.mxu0 %v3922
      %v3924 = vand.u32 %v632, 4294901760
      %3925 = vmatprep.subr.mxu0 %v3924
      %v3926 = vand.u32 %v631, 4294901760
      %3927 = vmatpush1.msra.mxu0 %v3926
      %v3928 = vand.u32 %v569, 4294901760
      %3929 = vmatprep.subr.mxu0 %v3928
      %v3930 = vand.u32 %v568, 4294901760
      %3931 = vmatpush1.msra.mxu0 %v3930
      %v3932 = vand.u32 %v561, 4294901760
      %3933 = vmatprep.subr.mxu0 %v3932
      %v3934 = vand.u32 %v560, 4294901760
      %3935 = vmatpush1.msra.mxu0 %v3934
      %v3936 = vand.u32 %v498, 4294901760
      %3937 = vmatprep.subr.mxu0 %v3936
      %v3938 = vand.u32 %v497, 4294901760
      %3939 = vmatpush1.msra.mxu0 %v3938
      %v3940 = vand.u32 %v490, 4294901760
      %3941 = vmatprep.subr.mxu0 %v3940
      %v3942 = vand.u32 %v489, 4294901760
      %3943 = vmatpush1.msra.mxu0 %v3942
      %v3944 = vand.u32 %v425, 4294901760
      %3945 = vmatprep.subr.mxu0 %v3944
      %v3946 = vand.u32 %v424, 4294901760
      %3947 = vmatpush1.msra.mxu0 %v3946
      %v3948 = vand.u32 %v415, 4294901760
      %3949 = vmatprep.subr.mxu0 %v3948
      %v3950 = vand.u32 %v414, 4294901760
      %3951 = vmatpush1.msra.mxu0 %v3950
      %3952 = vmatprep.subr.mxu0 0.0
      %3953 = vmatpush2.msra.mxu0 0.0
      %3954 = vmatprep.subr.mxu0 0.0
      %3955 = vmatpush2.msra.mxu0 0.0
      %3956 = vmatprep.subr.mxu0 0.0
      %3957 = vmatpush2.msra.mxu0 0.0
      %3958 = vmatprep.subr.mxu0 0.0
      %3959 = vmatpush2.msra.mxu0 0.0
      %3960 = vmatprep.subr.mxu0 0.0
      %3961 = vmatpush2.msra.mxu0 0.0
      %3962 = vmatprep.subr.mxu0 0.0
      %3963 = vmatpush2.msra.mxu0 0.0
      %3964 = vmatprep.subr.mxu0 0.0
      %3965 = vmatpush2.msra.mxu0 0.0
      %3966 = vmatprep.subr.mxu0 0.0
      %3967 = vmatpush2.msra.mxu0 0.0
      %3968 = vmatprep.subr.mxu0 0.0
      %3969 = vmatpush2.msra.mxu0 0.0
      %3970 = vmatprep.subr.mxu0 0.0
      %3971 = vmatpush2.msra.mxu0 0.0
      %3972 = vmatprep.subr.mxu0 0.0
      %3973 = vmatpush2.msra.mxu0 0.0
      %3974 = vmatprep.subr.mxu0 0.0
      %3975 = vmatpush2.msra.mxu0 0.0
      %3976 = vmatprep.subr.mxu0 0.0
      %3977 = vmatpush2.msra.mxu0 0.0
      %3978 = vmatprep.subr.mxu0 0.0
      %3979 = vmatpush2.msra.mxu0 0.0
      %v3980 = vand.u32 %v1014, 4294901760
      %3981 = vmatprep.subr.mxu0 %v3980
      %v3982 = vand.u32 %v1013, 4294901760
      %3983 = vmatpush2.msra.mxu0 %v3982
      %v3984 = vand.u32 %v1005, 4294901760
      %3985 = vmatprep.subr.mxu0 %v3984
      %v3986 = vand.u32 %v1004, 4294901760
      %3987 = vmatpush2.msra.mxu0 %v3986
      %v3988 = vand.u32 %v1054, 4294901760
      %3989 = vmatprep.mubr.f32.mxu0 %v3988
      %v3990 = vand.u32 %v1036, 4294901760
      %3991 = vmatmul.mubr.f32.gmra.mxu0 %v3990
      %v3992 = vpop.f32.mrf.mxu0
      %v3993 = vadd.f32 %v3876, %v3992
      %v3994 = vpop.f32.mrf.mxu0
      %v3995 = vadd.f32 %v3878, %v3994
      %v3996 = vand.u32 %v1057, 4294901760
      %3997 = vmatprep.mubr.f32.mxu0 %v3996
      %v3998 = vand.u32 %v1038, 4294901760
      %3999 = vmatmul.mubr.f32.gmra.mxu0 %v3998
      %v4000 = vpop.f32.mrf.mxu0
      %v4001 = vadd.f32 %v3884, %v4000
      %v4002 = vpop.f32.mrf.mxu0
      %v4003 = vadd.f32 %v3886, %v4002
      %4004 = vdwg.mxu0
      %v4005 = vand.u32 %v939, 4294901760
      %4006 = vmatprep.subr.mxu0 %v4005
      %v4007 = vand.u32 %v938, 4294901760
      %4008 = vmatpush1.msra.mxu0 %v4007
      %v4009 = vand.u32 %v930, 4294901760
      %4010 = vmatprep.subr.mxu0 %v4009
      %v4011 = vand.u32 %v929, 4294901760
      %4012 = vmatpush1.msra.mxu0 %v4011
      %v4013 = vand.u32 %v862, 4294901760
      %4014 = vmatprep.subr.mxu0 %v4013
      %v4015 = vand.u32 %v861, 4294901760
      %4016 = vmatpush1.msra.mxu0 %v4015
      %v4017 = vand.u32 %v853, 4294901760
      %4018 = vmatprep.subr.mxu0 %v4017
      %v4019 = vand.u32 %v852, 4294901760
      %4020 = vmatpush1.msra.mxu0 %v4019
      %v4021 = vand.u32 %v784, 4294901760
      %4022 = vmatprep.subr.mxu0 %v4021
      %v4023 = vand.u32 %v783, 4294901760
      %4024 = vmatpush1.msra.mxu0 %v4023
      %v4025 = vand.u32 %v776, 4294901760
      %4026 = vmatprep.subr.mxu0 %v4025
      %v4027 = vand.u32 %v775, 4294901760
      %4028 = vmatpush1.msra.mxu0 %v4027
      %v4029 = vand.u32 %v713, 4294901760
      %4030 = vmatprep.subr.mxu0 %v4029
      %v4031 = vand.u32 %v712, 4294901760
      %4032 = vmatpush1.msra.mxu0 %v4031
      %v4033 = vand.u32 %v705, 4294901760
      %4034 = vmatprep.subr.mxu0 %v4033
      %v4035 = vand.u32 %v704, 4294901760
      %4036 = vmatpush1.msra.mxu0 %v4035
      %v4037 = vand.u32 %v642, 4294901760
      %4038 = vmatprep.subr.mxu0 %v4037
      %v4039 = vand.u32 %v641, 4294901760
      %4040 = vmatpush1.msra.mxu0 %v4039
      %v4041 = vand.u32 %v634, 4294901760
      %4042 = vmatprep.subr.mxu0 %v4041
      %v4043 = vand.u32 %v633, 4294901760
      %4044 = vmatpush1.msra.mxu0 %v4043
      %v4045 = vand.u32 %v571, 4294901760
      %4046 = vmatprep.subr.mxu0 %v4045
      %v4047 = vand.u32 %v570, 4294901760
      %4048 = vmatpush1.msra.mxu0 %v4047
      %v4049 = vand.u32 %v563, 4294901760
      %4050 = vmatprep.subr.mxu0 %v4049
      %v4051 = vand.u32 %v562, 4294901760
      %4052 = vmatpush1.msra.mxu0 %v4051
      %v4053 = vand.u32 %v500, 4294901760
      %4054 = vmatprep.subr.mxu0 %v4053
      %v4055 = vand.u32 %v499, 4294901760
      %4056 = vmatpush1.msra.mxu0 %v4055
      %v4057 = vand.u32 %v492, 4294901760
      %4058 = vmatprep.subr.mxu0 %v4057
      %v4059 = vand.u32 %v491, 4294901760
      %4060 = vmatpush1.msra.mxu0 %v4059
      %v4061 = vand.u32 %v427, 4294901760
      %4062 = vmatprep.subr.mxu0 %v4061
      %v4063 = vand.u32 %v426, 4294901760
      %4064 = vmatpush1.msra.mxu0 %v4063
      %v4065 = vand.u32 %v417, 4294901760
      %4066 = vmatprep.subr.mxu0 %v4065
      %v4067 = vand.u32 %v416, 4294901760
      %4068 = vmatpush1.msra.mxu0 %v4067
      %4069 = vmatprep.subr.mxu0 0.0
      %4070 = vmatpush2.msra.mxu0 0.0
      %4071 = vmatprep.subr.mxu0 0.0
      %4072 = vmatpush2.msra.mxu0 0.0
      %4073 = vmatprep.subr.mxu0 0.0
      %4074 = vmatpush2.msra.mxu0 0.0
      %4075 = vmatprep.subr.mxu0 0.0
      %4076 = vmatpush2.msra.mxu0 0.0
      %4077 = vmatprep.subr.mxu0 0.0
      %4078 = vmatpush2.msra.mxu0 0.0
      %4079 = vmatprep.subr.mxu0 0.0
      %4080 = vmatpush2.msra.mxu0 0.0
      %4081 = vmatprep.subr.mxu0 0.0
      %4082 = vmatpush2.msra.mxu0 0.0
      %4083 = vmatprep.subr.mxu0 0.0
      %4084 = vmatpush2.msra.mxu0 0.0
      %4085 = vmatprep.subr.mxu0 0.0
      %4086 = vmatpush2.msra.mxu0 0.0
      %4087 = vmatprep.subr.mxu0 0.0
      %4088 = vmatpush2.msra.mxu0 0.0
      %4089 = vmatprep.subr.mxu0 0.0
      %4090 = vmatpush2.msra.mxu0 0.0
      %4091 = vmatprep.subr.mxu0 0.0
      %4092 = vmatpush2.msra.mxu0 0.0
      %4093 = vmatprep.subr.mxu0 0.0
      %4094 = vmatpush2.msra.mxu0 0.0
      %4095 = vmatprep.subr.mxu0 0.0
      %4096 = vmatpush2.msra.mxu0 0.0
      %v4097 = vand.u32 %v1016, 4294901760
      %4098 = vmatprep.subr.mxu0 %v4097
      %v4099 = vand.u32 %v1015, 4294901760
      %4100 = vmatpush2.msra.mxu0 %v4099
      %v4101 = vand.u32 %v1007, 4294901760
      %4102 = vmatprep.subr.mxu0 %v4101
      %v4103 = vand.u32 %v1006, 4294901760
      %4104 = vmatpush2.msra.mxu0 %v4103
      %v4105 = vand.u32 %v1054, 4294901760
      %v4106 = vsub.f32 %v1054, %v4105
      %v4107 = vand.u32 %v4106, 4294901760
      %v4108 = vsub.f32 %v4106, %v4107
      %v4109 = vand.u32 %v4108, 4294901760
      %4110 = vmatprep.mubr.f32.mxu0 %v4109
      %v4111 = vand.u32 %v1036, 4294901760
      %v4112 = vsub.f32 %v1036, %v4111
      %v4113 = vand.u32 %v4112, 4294901760
      %v4114 = vsub.f32 %v4112, %v4113
      %v4115 = vand.u32 %v4114, 4294901760
      %4116 = vmatmul.mubr.f32.gmra.mxu0 %v4115
      %v4117 = vpop.f32.mrf.mxu0
      %v4118 = vadd.f32 %v1045, %v4117
      %v4119 = vpop.f32.mrf.mxu0
      %v4120 = vadd.f32 %v1045, %v4119
      %v4121 = vand.u32 %v1057, 4294901760
      %v4122 = vsub.f32 %v1057, %v4121
      %v4123 = vand.u32 %v4122, 4294901760
      %v4124 = vsub.f32 %v4122, %v4123
      %v4125 = vand.u32 %v4124, 4294901760
      %4126 = vmatprep.mubr.f32.mxu0 %v4125
      %v4127 = vand.u32 %v1038, 4294901760
      %v4128 = vsub.f32 %v1038, %v4127
      %v4129 = vand.u32 %v4128, 4294901760
      %v4130 = vsub.f32 %v4128, %v4129
      %v4131 = vand.u32 %v4130, 4294901760
      %4132 = vmatmul.mubr.f32.gmra.mxu0 %v4131
      %v4133 = vpop.f32.mrf.mxu0
      %v4134 = vadd.f32 %v1050, %v4133
      %v4135 = vpop.f32.mrf.mxu0
      %v4136 = vadd.f32 %v1050, %v4135
      %4137 = vdwg.mxu0
      %v4138 = vand.u32 %v939, 4294901760
      %v4139 = vsub.f32 %v939, %v4138
      %v4140 = vand.u32 %v4139, 4294901760
      %v4141 = vsub.f32 %v4139, %v4140
      %v4142 = vand.u32 %v4141, 4294901760
      %4143 = vmatprep.subr.mxu0 %v4142
      %v4144 = vand.u32 %v938, 4294901760
      %v4145 = vsub.f32 %v938, %v4144
      %v4146 = vand.u32 %v4145, 4294901760
      %v4147 = vsub.f32 %v4145, %v4146
      %v4148 = vand.u32 %v4147, 4294901760
      %4149 = vmatpush1.msra.mxu0 %v4148
      %v4150 = vand.u32 %v930, 4294901760
      %v4151 = vsub.f32 %v930, %v4150
      %v4152 = vand.u32 %v4151, 4294901760
      %v4153 = vsub.f32 %v4151, %v4152
      %v4154 = vand.u32 %v4153, 4294901760
      %4155 = vmatprep.subr.mxu0 %v4154
      %v4156 = vand.u32 %v929, 4294901760
      %v4157 = vsub.f32 %v929, %v4156
      %v4158 = vand.u32 %v4157, 4294901760
      %v4159 = vsub.f32 %v4157, %v4158
      %v4160 = vand.u32 %v4159, 4294901760
      %4161 = vmatpush1.msra.mxu0 %v4160
      %v4162 = vand.u32 %v862, 4294901760
      %v4163 = vsub.f32 %v862, %v4162
      %v4164 = vand.u32 %v4163, 4294901760
      %v4165 = vsub.f32 %v4163, %v4164
      %v4166 = vand.u32 %v4165, 4294901760
      %4167 = vmatprep.subr.mxu0 %v4166
      %v4168 = vand.u32 %v861, 4294901760
      %v4169 = vsub.f32 %v861, %v4168
      %v4170 = vand.u32 %v4169, 4294901760
      %v4171 = vsub.f32 %v4169, %v4170
      %v4172 = vand.u32 %v4171, 4294901760
      %4173 = vmatpush1.msra.mxu0 %v4172
      %v4174 = vand.u32 %v853, 4294901760
      %v4175 = vsub.f32 %v853, %v4174
      %v4176 = vand.u32 %v4175, 4294901760
      %v4177 = vsub.f32 %v4175, %v4176
      %v4178 = vand.u32 %v4177, 4294901760
      %4179 = vmatprep.subr.mxu0 %v4178
      %v4180 = vand.u32 %v852, 4294901760
      %v4181 = vsub.f32 %v852, %v4180
      %v4182 = vand.u32 %v4181, 4294901760
      %v4183 = vsub.f32 %v4181, %v4182
      %v4184 = vand.u32 %v4183, 4294901760
      %4185 = vmatpush1.msra.mxu0 %v4184
      %v4186 = vand.u32 %v784, 4294901760
      %v4187 = vsub.f32 %v784, %v4186
      %v4188 = vand.u32 %v4187, 4294901760
      %v4189 = vsub.f32 %v4187, %v4188
      %v4190 = vand.u32 %v4189, 4294901760
      %4191 = vmatprep.subr.mxu0 %v4190
      %v4192 = vand.u32 %v783, 4294901760
      %v4193 = vsub.f32 %v783, %v4192
      %v4194 = vand.u32 %v4193, 4294901760
      %v4195 = vsub.f32 %v4193, %v4194
      %v4196 = vand.u32 %v4195, 4294901760
      %4197 = vmatpush1.msra.mxu0 %v4196
      %v4198 = vand.u32 %v776, 4294901760
      %v4199 = vsub.f32 %v776, %v4198
      %v4200 = vand.u32 %v4199, 4294901760
      %v4201 = vsub.f32 %v4199, %v4200
      %v4202 = vand.u32 %v4201, 4294901760
      %4203 = vmatprep.subr.mxu0 %v4202
      %v4204 = vand.u32 %v775, 4294901760
      %v4205 = vsub.f32 %v775, %v4204
      %v4206 = vand.u32 %v4205, 4294901760
      %v4207 = vsub.f32 %v4205, %v4206
      %v4208 = vand.u32 %v4207, 4294901760
      %4209 = vmatpush1.msra.mxu0 %v4208
      %v4210 = vand.u32 %v713, 4294901760
      %v4211 = vsub.f32 %v713, %v4210
      %v4212 = vand.u32 %v4211, 4294901760
      %v4213 = vsub.f32 %v4211, %v4212
      %v4214 = vand.u32 %v4213, 4294901760
      %4215 = vmatprep.subr.mxu0 %v4214
      %v4216 = vand.u32 %v712, 4294901760
      %v4217 = vsub.f32 %v712, %v4216
      %v4218 = vand.u32 %v4217, 4294901760
      %v4219 = vsub.f32 %v4217, %v4218
      %v4220 = vand.u32 %v4219, 4294901760
      %4221 = vmatpush1.msra.mxu0 %v4220
      %v4222 = vand.u32 %v705, 4294901760
      %v4223 = vsub.f32 %v705, %v4222
      %v4224 = vand.u32 %v4223, 4294901760
      %v4225 = vsub.f32 %v4223, %v4224
      %v4226 = vand.u32 %v4225, 4294901760
      %4227 = vmatprep.subr.mxu0 %v4226
      %v4228 = vand.u32 %v704, 4294901760
      %v4229 = vsub.f32 %v704, %v4228
      %v4230 = vand.u32 %v4229, 4294901760
      %v4231 = vsub.f32 %v4229, %v4230
      %v4232 = vand.u32 %v4231, 4294901760
      %4233 = vmatpush1.msra.mxu0 %v4232
      %v4234 = vand.u32 %v642, 4294901760
      %v4235 = vsub.f32 %v642, %v4234
      %v4236 = vand.u32 %v4235, 4294901760
      %v4237 = vsub.f32 %v4235, %v4236
      %v4238 = vand.u32 %v4237, 4294901760
      %4239 = vmatprep.subr.mxu0 %v4238
      %v4240 = vand.u32 %v641, 4294901760
      %v4241 = vsub.f32 %v641, %v4240
      %v4242 = vand.u32 %v4241, 4294901760
      %v4243 = vsub.f32 %v4241, %v4242
      %v4244 = vand.u32 %v4243, 4294901760
      %4245 = vmatpush1.msra.mxu0 %v4244
      %v4246 = vand.u32 %v634, 4294901760
      %v4247 = vsub.f32 %v634, %v4246
      %v4248 = vand.u32 %v4247, 4294901760
      %v4249 = vsub.f32 %v4247, %v4248
      %v4250 = vand.u32 %v4249, 4294901760
      %4251 = vmatprep.subr.mxu0 %v4250
      %v4252 = vand.u32 %v633, 4294901760
      %v4253 = vsub.f32 %v633, %v4252
      %v4254 = vand.u32 %v4253, 4294901760
      %v4255 = vsub.f32 %v4253, %v4254
      %v4256 = vand.u32 %v4255, 4294901760
      %4257 = vmatpush1.msra.mxu0 %v4256
      %v4258 = vand.u32 %v571, 4294901760
      %v4259 = vsub.f32 %v571, %v4258
      %v4260 = vand.u32 %v4259, 4294901760
      %v4261 = vsub.f32 %v4259, %v4260
      %v4262 = vand.u32 %v4261, 4294901760
      %4263 = vmatprep.subr.mxu0 %v4262
      %v4264 = vand.u32 %v570, 4294901760
      %v4265 = vsub.f32 %v570, %v4264
      %v4266 = vand.u32 %v4265, 4294901760
      %v4267 = vsub.f32 %v4265, %v4266
      %v4268 = vand.u32 %v4267, 4294901760
      %4269 = vmatpush1.msra.mxu0 %v4268
      %v4270 = vand.u32 %v563, 4294901760
      %v4271 = vsub.f32 %v563, %v4270
      %v4272 = vand.u32 %v4271, 4294901760
      %v4273 = vsub.f32 %v4271, %v4272
      %v4274 = vand.u32 %v4273, 4294901760
      %4275 = vmatprep.subr.mxu0 %v4274
      %v4276 = vand.u32 %v562, 4294901760
      %v4277 = vsub.f32 %v562, %v4276
      %v4278 = vand.u32 %v4277, 4294901760
      %v4279 = vsub.f32 %v4277, %v4278
      %v4280 = vand.u32 %v4279, 4294901760
      %4281 = vmatpush1.msra.mxu0 %v4280
      %v4282 = vand.u32 %v500, 4294901760
      %v4283 = vsub.f32 %v500, %v4282
      %v4284 = vand.u32 %v4283, 4294901760
      %v4285 = vsub.f32 %v4283, %v4284
      %v4286 = vand.u32 %v4285, 4294901760
      %4287 = vmatprep.subr.mxu0 %v4286
      %v4288 = vand.u32 %v499, 4294901760
      %v4289 = vsub.f32 %v499, %v4288
      %v4290 = vand.u32 %v4289, 4294901760
      %v4291 = vsub.f32 %v4289, %v4290
      %v4292 = vand.u32 %v4291, 4294901760
      %4293 = vmatpush1.msra.mxu0 %v4292
      %v4294 = vand.u32 %v492, 4294901760
      %v4295 = vsub.f32 %v492, %v4294
      %v4296 = vand.u32 %v4295, 4294901760
      %v4297 = vsub.f32 %v4295, %v4296
      %v4298 = vand.u32 %v4297, 4294901760
      %4299 = vmatprep.subr.mxu0 %v4298
      %v4300 = vand.u32 %v491, 4294901760
      %v4301 = vsub.f32 %v491, %v4300
      %v4302 = vand.u32 %v4301, 4294901760
      %v4303 = vsub.f32 %v4301, %v4302
      %v4304 = vand.u32 %v4303, 4294901760
      %4305 = vmatpush1.msra.mxu0 %v4304
      %v4306 = vand.u32 %v427, 4294901760
      %v4307 = vsub.f32 %v427, %v4306
      %v4308 = vand.u32 %v4307, 4294901760
      %v4309 = vsub.f32 %v4307, %v4308
      %v4310 = vand.u32 %v4309, 4294901760
      %4311 = vmatprep.subr.mxu0 %v4310
      %v4312 = vand.u32 %v426, 4294901760
      %v4313 = vsub.f32 %v426, %v4312
      %v4314 = vand.u32 %v4313, 4294901760
      %v4315 = vsub.f32 %v4313, %v4314
      %v4316 = vand.u32 %v4315, 4294901760
      %4317 = vmatpush1.msra.mxu0 %v4316
      %v4318 = vand.u32 %v417, 4294901760
      %v4319 = vsub.f32 %v417, %v4318
      %v4320 = vand.u32 %v4319, 4294901760
      %v4321 = vsub.f32 %v4319, %v4320
      %v4322 = vand.u32 %v4321, 4294901760
      %4323 = vmatprep.subr.mxu0 %v4322
      %v4324 = vand.u32 %v416, 4294901760
      %v4325 = vsub.f32 %v416, %v4324
      %v4326 = vand.u32 %v4325, 4294901760
      %v4327 = vsub.f32 %v4325, %v4326
      %v4328 = vand.u32 %v4327, 4294901760
      %4329 = vmatpush1.msra.mxu0 %v4328
      %4330 = vmatprep.subr.mxu0 0.0
      %4331 = vmatpush2.msra.mxu0 0.0
      %4332 = vmatprep.subr.mxu0 0.0
      %4333 = vmatpush2.msra.mxu0 0.0
      %4334 = vmatprep.subr.mxu0 0.0
      %4335 = vmatpush2.msra.mxu0 0.0
      %4336 = vmatprep.subr.mxu0 0.0
      %4337 = vmatpush2.msra.mxu0 0.0
      %4338 = vmatprep.subr.mxu0 0.0
      %4339 = vmatpush2.msra.mxu0 0.0
      %4340 = vmatprep.subr.mxu0 0.0
      %4341 = vmatpush2.msra.mxu0 0.0
      %4342 = vmatprep.subr.mxu0 0.0
      %4343 = vmatpush2.msra.mxu0 0.0
      %4344 = vmatprep.subr.mxu0 0.0
      %4345 = vmatpush2.msra.mxu0 0.0
      %4346 = vmatprep.subr.mxu0 0.0
      %4347 = vmatpush2.msra.mxu0 0.0
      %4348 = vmatprep.subr.mxu0 0.0
      %4349 = vmatpush2.msra.mxu0 0.0
      %4350 = vmatprep.subr.mxu0 0.0
      %4351 = vmatpush2.msra.mxu0 0.0
      %4352 = vmatprep.subr.mxu0 0.0
      %4353 = vmatpush2.msra.mxu0 0.0
      %4354 = vmatprep.subr.mxu0 0.0
      %4355 = vmatpush2.msra.mxu0 0.0
      %4356 = vmatprep.subr.mxu0 0.0
      %4357 = vmatpush2.msra.mxu0 0.0
      %v4358 = vand.u32 %v1016, 4294901760
      %v4359 = vsub.f32 %v1016, %v4358
      %v4360 = vand.u32 %v4359, 4294901760
      %v4361 = vsub.f32 %v4359, %v4360
      %v4362 = vand.u32 %v4361, 4294901760
      %4363 = vmatprep.subr.mxu0 %v4362
      %v4364 = vand.u32 %v1015, 4294901760
      %v4365 = vsub.f32 %v1015, %v4364
      %v4366 = vand.u32 %v4365, 4294901760
      %v4367 = vsub.f32 %v4365, %v4366
      %v4368 = vand.u32 %v4367, 4294901760
      %4369 = vmatpush2.msra.mxu0 %v4368
      %v4370 = vand.u32 %v1007, 4294901760
      %v4371 = vsub.f32 %v1007, %v4370
      %v4372 = vand.u32 %v4371, 4294901760
      %v4373 = vsub.f32 %v4371, %v4372
      %v4374 = vand.u32 %v4373, 4294901760
      %4375 = vmatprep.subr.mxu0 %v4374
      %v4376 = vand.u32 %v1006, 4294901760
      %v4377 = vsub.f32 %v1006, %v4376
      %v4378 = vand.u32 %v4377, 4294901760
      %v4379 = vsub.f32 %v4377, %v4378
      %v4380 = vand.u32 %v4379, 4294901760
      %4381 = vmatpush2.msra.mxu0 %v4380
      %v4382 = vand.u32 %v1054, 4294901760
      %4383 = vmatprep.mubr.f32.mxu0 %v4382
      %v4384 = vand.u32 %v1036, 4294901760
      %4385 = vmatmul.mubr.f32.gmra.mxu0 %v4384
      %v4386 = vpop.f32.mrf.mxu0
      %v4387 = vadd.f32 %v4118, %v4386
      %v4388 = vpop.f32.mrf.mxu0
      %v4389 = vadd.f32 %v4120, %v4388
      %v4390 = vand.u32 %v1057, 4294901760
      %4391 = vmatprep.mubr.f32.mxu0 %v4390
      %v4392 = vand.u32 %v1038, 4294901760
      %4393 = vmatmul.mubr.f32.gmra.mxu0 %v4392
      %v4394 = vpop.f32.mrf.mxu0
      %v4395 = vadd.f32 %v4134, %v4394
      %v4396 = vpop.f32.mrf.mxu0
      %v4397 = vadd.f32 %v4136, %v4396
      %4398 = vdwg.mxu0
      %v4399 = vand.u32 %v939, 4294901760
      %v4400 = vsub.f32 %v939, %v4399
      %4401 = vmatprep.subr.mxu0 %v4400
      %v4402 = vand.u32 %v938, 4294901760
      %v4403 = vsub.f32 %v938, %v4402
      %4404 = vmatpush1.msra.mxu0 %v4403
      %v4405 = vand.u32 %v930, 4294901760
      %v4406 = vsub.f32 %v930, %v4405
      %4407 = vmatprep.subr.mxu0 %v4406
      %v4408 = vand.u32 %v929, 4294901760
      %v4409 = vsub.f32 %v929, %v4408
      %4410 = vmatpush1.msra.mxu0 %v4409
      %v4411 = vand.u32 %v862, 4294901760
      %v4412 = vsub.f32 %v862, %v4411
      %4413 = vmatprep.subr.mxu0 %v4412
      %v4414 = vand.u32 %v861, 4294901760
      %v4415 = vsub.f32 %v861, %v4414
      %4416 = vmatpush1.msra.mxu0 %v4415
      %v4417 = vand.u32 %v853, 4294901760
      %v4418 = vsub.f32 %v853, %v4417
      %4419 = vmatprep.subr.mxu0 %v4418
      %v4420 = vand.u32 %v852, 4294901760
      %v4421 = vsub.f32 %v852, %v4420
      %4422 = vmatpush1.msra.mxu0 %v4421
      %v4423 = vand.u32 %v784, 4294901760
      %v4424 = vsub.f32 %v784, %v4423
      %4425 = vmatprep.subr.mxu0 %v4424
      %v4426 = vand.u32 %v783, 4294901760
      %v4427 = vsub.f32 %v783, %v4426
      %4428 = vmatpush1.msra.mxu0 %v4427
      %v4429 = vand.u32 %v776, 4294901760
      %v4430 = vsub.f32 %v776, %v4429
      %4431 = vmatprep.subr.mxu0 %v4430
      %v4432 = vand.u32 %v775, 4294901760
      %v4433 = vsub.f32 %v775, %v4432
      %4434 = vmatpush1.msra.mxu0 %v4433
      %v4435 = vand.u32 %v713, 4294901760
      %v4436 = vsub.f32 %v713, %v4435
      %4437 = vmatprep.subr.mxu0 %v4436
      %v4438 = vand.u32 %v712, 4294901760
      %v4439 = vsub.f32 %v712, %v4438
      %4440 = vmatpush1.msra.mxu0 %v4439
      %v4441 = vand.u32 %v705, 4294901760
      %v4442 = vsub.f32 %v705, %v4441
      %4443 = vmatprep.subr.mxu0 %v4442
      %v4444 = vand.u32 %v704, 4294901760
      %v4445 = vsub.f32 %v704, %v4444
      %4446 = vmatpush1.msra.mxu0 %v4445
      %v4447 = vand.u32 %v642, 4294901760
      %v4448 = vsub.f32 %v642, %v4447
      %4449 = vmatprep.subr.mxu0 %v4448
      %v4450 = vand.u32 %v641, 4294901760
      %v4451 = vsub.f32 %v641, %v4450
      %4452 = vmatpush1.msra.mxu0 %v4451
      %v4453 = vand.u32 %v634, 4294901760
      %v4454 = vsub.f32 %v634, %v4453
      %4455 = vmatprep.subr.mxu0 %v4454
      %v4456 = vand.u32 %v633, 4294901760
      %v4457 = vsub.f32 %v633, %v4456
      %4458 = vmatpush1.msra.mxu0 %v4457
      %v4459 = vand.u32 %v571, 4294901760
      %v4460 = vsub.f32 %v571, %v4459
      %4461 = vmatprep.subr.mxu0 %v4460
      %v4462 = vand.u32 %v570, 4294901760
      %v4463 = vsub.f32 %v570, %v4462
      %4464 = vmatpush1.msra.mxu0 %v4463
      %v4465 = vand.u32 %v563, 4294901760
      %v4466 = vsub.f32 %v563, %v4465
      %4467 = vmatprep.subr.mxu0 %v4466
      %v4468 = vand.u32 %v562, 4294901760
      %v4469 = vsub.f32 %v562, %v4468
      %4470 = vmatpush1.msra.mxu0 %v4469
      %v4471 = vand.u32 %v500, 4294901760
      %v4472 = vsub.f32 %v500, %v4471
      %4473 = vmatprep.subr.mxu0 %v4472
      %v4474 = vand.u32 %v499, 4294901760
      %v4475 = vsub.f32 %v499, %v4474
      %4476 = vmatpush1.msra.mxu0 %v4475
      %v4477 = vand.u32 %v492, 4294901760
      %v4478 = vsub.f32 %v492, %v4477
      %4479 = vmatprep.subr.mxu0 %v4478
      %v4480 = vand.u32 %v491, 4294901760
      %v4481 = vsub.f32 %v491, %v4480
      %4482 = vmatpush1.msra.mxu0 %v4481
      %v4483 = vand.u32 %v427, 4294901760
      %v4484 = vsub.f32 %v427, %v4483
      %4485 = vmatprep.subr.mxu0 %v4484
      %v4486 = vand.u32 %v426, 4294901760
      %v4487 = vsub.f32 %v426, %v4486
      %4488 = vmatpush1.msra.mxu0 %v4487
      %v4489 = vand.u32 %v417, 4294901760
      %v4490 = vsub.f32 %v417, %v4489
      %4491 = vmatprep.subr.mxu0 %v4490
      %v4492 = vand.u32 %v416, 4294901760
      %v4493 = vsub.f32 %v416, %v4492
      %4494 = vmatpush1.msra.mxu0 %v4493
      %4495 = vmatprep.subr.mxu0 0.0
      %4496 = vmatpush2.msra.mxu0 0.0
      %4497 = vmatprep.subr.mxu0 0.0
      %4498 = vmatpush2.msra.mxu0 0.0
      %4499 = vmatprep.subr.mxu0 0.0
      %4500 = vmatpush2.msra.mxu0 0.0
      %4501 = vmatprep.subr.mxu0 0.0
      %4502 = vmatpush2.msra.mxu0 0.0
      %4503 = vmatprep.subr.mxu0 0.0
      %4504 = vmatpush2.msra.mxu0 0.0
      %4505 = vmatprep.subr.mxu0 0.0
      %4506 = vmatpush2.msra.mxu0 0.0
      %4507 = vmatprep.subr.mxu0 0.0
      %4508 = vmatpush2.msra.mxu0 0.0
      %4509 = vmatprep.subr.mxu0 0.0
      %4510 = vmatpush2.msra.mxu0 0.0
      %4511 = vmatprep.subr.mxu0 0.0
      %4512 = vmatpush2.msra.mxu0 0.0
      %4513 = vmatprep.subr.mxu0 0.0
      %4514 = vmatpush2.msra.mxu0 0.0
      %4515 = vmatprep.subr.mxu0 0.0
      %4516 = vmatpush2.msra.mxu0 0.0
      %4517 = vmatprep.subr.mxu0 0.0
      %4518 = vmatpush2.msra.mxu0 0.0
      %4519 = vmatprep.subr.mxu0 0.0
      %4520 = vmatpush2.msra.mxu0 0.0
      %4521 = vmatprep.subr.mxu0 0.0
      %4522 = vmatpush2.msra.mxu0 0.0
      %v4523 = vand.u32 %v1016, 4294901760
      %v4524 = vsub.f32 %v1016, %v4523
      %4525 = vmatprep.subr.mxu0 %v4524
      %v4526 = vand.u32 %v1015, 4294901760
      %v4527 = vsub.f32 %v1015, %v4526
      %4528 = vmatpush2.msra.mxu0 %v4527
      %v4529 = vand.u32 %v1007, 4294901760
      %v4530 = vsub.f32 %v1007, %v4529
      %4531 = vmatprep.subr.mxu0 %v4530
      %v4532 = vand.u32 %v1006, 4294901760
      %v4533 = vsub.f32 %v1006, %v4532
      %4534 = vmatpush2.msra.mxu0 %v4533
      %v4535 = vand.u32 %v1054, 4294901760
      %v4536 = vsub.f32 %v1054, %v4535
      %4537 = vmatprep.mubr.f32.mxu0 %v4536
      %v4538 = vand.u32 %v1036, 4294901760
      %v4539 = vsub.f32 %v1036, %v4538
      %4540 = vmatmul.mubr.f32.gmra.mxu0 %v4539
      %v4541 = vpop.f32.mrf.mxu0
      %v4542 = vadd.f32 %v4387, %v4541
      %v4543 = vpop.f32.mrf.mxu0
      %v4544 = vadd.f32 %v4389, %v4543
      %v4545 = vand.u32 %v1057, 4294901760
      %v4546 = vsub.f32 %v1057, %v4545
      %4547 = vmatprep.mubr.f32.mxu0 %v4546
      %v4548 = vand.u32 %v1038, 4294901760
      %v4549 = vsub.f32 %v1038, %v4548
      %4550 = vmatmul.mubr.f32.gmra.mxu0 %v4549
      %v4551 = vpop.f32.mrf.mxu0
      %v4552 = vadd.f32 %v4395, %v4551
      %v4553 = vpop.f32.mrf.mxu0
      %v4554 = vadd.f32 %v4397, %v4553
      %4555 = vdwg.mxu0
      %v4556 = vand.u32 %v939, 4294901760
      %4557 = vmatprep.subr.mxu0 %v4556
      %v4558 = vand.u32 %v938, 4294901760
      %4559 = vmatpush1.msra.mxu0 %v4558
      %v4560 = vand.u32 %v930, 4294901760
      %4561 = vmatprep.subr.mxu0 %v4560
      %v4562 = vand.u32 %v929, 4294901760
      %4563 = vmatpush1.msra.mxu0 %v4562
      %v4564 = vand.u32 %v862, 4294901760
      %4565 = vmatprep.subr.mxu0 %v4564
      %v4566 = vand.u32 %v861, 4294901760
      %4567 = vmatpush1.msra.mxu0 %v4566
      %v4568 = vand.u32 %v853, 4294901760
      %4569 = vmatprep.subr.mxu0 %v4568
      %v4570 = vand.u32 %v852, 4294901760
      %4571 = vmatpush1.msra.mxu0 %v4570
      %v4572 = vand.u32 %v784, 4294901760
      %4573 = vmatprep.subr.mxu0 %v4572
      %v4574 = vand.u32 %v783, 4294901760
      %4575 = vmatpush1.msra.mxu0 %v4574
      %v4576 = vand.u32 %v776, 4294901760
      %4577 = vmatprep.subr.mxu0 %v4576
      %v4578 = vand.u32 %v775, 4294901760
      %4579 = vmatpush1.msra.mxu0 %v4578
      %v4580 = vand.u32 %v713, 4294901760
      %4581 = vmatprep.subr.mxu0 %v4580
      %v4582 = vand.u32 %v712, 4294901760
      %4583 = vmatpush1.msra.mxu0 %v4582
      %v4584 = vand.u32 %v705, 4294901760
      %4585 = vmatprep.subr.mxu0 %v4584
      %v4586 = vand.u32 %v704, 4294901760
      %4587 = vmatpush1.msra.mxu0 %v4586
      %v4588 = vand.u32 %v642, 4294901760
      %4589 = vmatprep.subr.mxu0 %v4588
      %v4590 = vand.u32 %v641, 4294901760
      %4591 = vmatpush1.msra.mxu0 %v4590
      %v4592 = vand.u32 %v634, 4294901760
      %4593 = vmatprep.subr.mxu0 %v4592
      %v4594 = vand.u32 %v633, 4294901760
      %4595 = vmatpush1.msra.mxu0 %v4594
      %v4596 = vand.u32 %v571, 4294901760
      %4597 = vmatprep.subr.mxu0 %v4596
      %v4598 = vand.u32 %v570, 4294901760
      %4599 = vmatpush1.msra.mxu0 %v4598
      %v4600 = vand.u32 %v563, 4294901760
      %4601 = vmatprep.subr.mxu0 %v4600
      %v4602 = vand.u32 %v562, 4294901760
      %4603 = vmatpush1.msra.mxu0 %v4602
      %v4604 = vand.u32 %v500, 4294901760
      %4605 = vmatprep.subr.mxu0 %v4604
      %v4606 = vand.u32 %v499, 4294901760
      %4607 = vmatpush1.msra.mxu0 %v4606
      %v4608 = vand.u32 %v492, 4294901760
      %4609 = vmatprep.subr.mxu0 %v4608
      %v4610 = vand.u32 %v491, 4294901760
      %4611 = vmatpush1.msra.mxu0 %v4610
      %v4612 = vand.u32 %v427, 4294901760
      %4613 = vmatprep.subr.mxu0 %v4612
      %v4614 = vand.u32 %v426, 4294901760
      %4615 = vmatpush1.msra.mxu0 %v4614
      %v4616 = vand.u32 %v417, 4294901760
      %4617 = vmatprep.subr.mxu0 %v4616
      %v4618 = vand.u32 %v416, 4294901760
      %4619 = vmatpush1.msra.mxu0 %v4618
      %4620 = vmatprep.subr.mxu0 0.0
      %4621 = vmatpush2.msra.mxu0 0.0
      %4622 = vmatprep.subr.mxu0 0.0
      %4623 = vmatpush2.msra.mxu0 0.0
      %4624 = vmatprep.subr.mxu0 0.0
      %4625 = vmatpush2.msra.mxu0 0.0
      %4626 = vmatprep.subr.mxu0 0.0
      %4627 = vmatpush2.msra.mxu0 0.0
      %4628 = vmatprep.subr.mxu0 0.0
      %4629 = vmatpush2.msra.mxu0 0.0
      %4630 = vmatprep.subr.mxu0 0.0
      %4631 = vmatpush2.msra.mxu0 0.0
      %4632 = vmatprep.subr.mxu0 0.0
      %4633 = vmatpush2.msra.mxu0 0.0
      %4634 = vmatprep.subr.mxu0 0.0
      %4635 = vmatpush2.msra.mxu0 0.0
      %4636 = vmatprep.subr.mxu0 0.0
      %4637 = vmatpush2.msra.mxu0 0.0
      %4638 = vmatprep.subr.mxu0 0.0
      %4639 = vmatpush2.msra.mxu0 0.0
      %4640 = vmatprep.subr.mxu0 0.0
      %4641 = vmatpush2.msra.mxu0 0.0
      %4642 = vmatprep.subr.mxu0 0.0
      %4643 = vmatpush2.msra.mxu0 0.0
      %4644 = vmatprep.subr.mxu0 0.0
      %4645 = vmatpush2.msra.mxu0 0.0
      %4646 = vmatprep.subr.mxu0 0.0
      %4647 = vmatpush2.msra.mxu0 0.0
      %v4648 = vand.u32 %v1016, 4294901760
      %4649 = vmatprep.subr.mxu0 %v4648
      %v4650 = vand.u32 %v1015, 4294901760
      %4651 = vmatpush2.msra.mxu0 %v4650
      %v4652 = vand.u32 %v1007, 4294901760
      %4653 = vmatprep.subr.mxu0 %v4652
      %v4654 = vand.u32 %v1006, 4294901760
      %4655 = vmatpush2.msra.mxu0 %v4654
      %v4656 = vand.u32 %v1054, 4294901760
      %v4657 = vsub.f32 %v1054, %v4656
      %v4658 = vand.u32 %v4657, 4294901760
      %4659 = vmatprep.mubr.f32.mxu0 %v4658
      %v4660 = vand.u32 %v1036, 4294901760
      %v4661 = vsub.f32 %v1036, %v4660
      %v4662 = vand.u32 %v4661, 4294901760
      %4663 = vmatmul.mubr.f32.gmra.mxu0 %v4662
      %v4664 = vpop.f32.mrf.mxu0
      %v4665 = vadd.f32 %v4542, %v4664
      %v4666 = vpop.f32.mrf.mxu0
      %v4667 = vadd.f32 %v4544, %v4666
      %v4668 = vand.u32 %v1057, 4294901760
      %v4669 = vsub.f32 %v1057, %v4668
      %v4670 = vand.u32 %v4669, 4294901760
      %4671 = vmatprep.mubr.f32.mxu0 %v4670
      %v4672 = vand.u32 %v1038, 4294901760
      %v4673 = vsub.f32 %v1038, %v4672
      %v4674 = vand.u32 %v4673, 4294901760
      %4675 = vmatmul.mubr.f32.gmra.mxu0 %v4674
      %v4676 = vpop.f32.mrf.mxu0
      %v4677 = vadd.f32 %v4552, %v4676
      %v4678 = vpop.f32.mrf.mxu0
      %v4679 = vadd.f32 %v4554, %v4678
      %4680 = vdwg.mxu0
      %v4681 = vand.u32 %v939, 4294901760
      %v4682 = vsub.f32 %v939, %v4681
      %v4683 = vand.u32 %v4682, 4294901760
      %4684 = vmatprep.subr.mxu0 %v4683
      %v4685 = vand.u32 %v938, 4294901760
      %v4686 = vsub.f32 %v938, %v4685
      %v4687 = vand.u32 %v4686, 4294901760
      %4688 = vmatpush1.msra.mxu0 %v4687
      %v4689 = vand.u32 %v930, 4294901760
      %v4690 = vsub.f32 %v930, %v4689
      %v4691 = vand.u32 %v4690, 4294901760
      %4692 = vmatprep.subr.mxu0 %v4691
      %v4693 = vand.u32 %v929, 4294901760
      %v4694 = vsub.f32 %v929, %v4693
      %v4695 = vand.u32 %v4694, 4294901760
      %4696 = vmatpush1.msra.mxu0 %v4695
      %v4697 = vand.u32 %v862, 4294901760
      %v4698 = vsub.f32 %v862, %v4697
      %v4699 = vand.u32 %v4698, 4294901760
      %4700 = vmatprep.subr.mxu0 %v4699
      %v4701 = vand.u32 %v861, 4294901760
      %v4702 = vsub.f32 %v861, %v4701
      %v4703 = vand.u32 %v4702, 4294901760
      %4704 = vmatpush1.msra.mxu0 %v4703
      %v4705 = vand.u32 %v853, 4294901760
      %v4706 = vsub.f32 %v853, %v4705
      %v4707 = vand.u32 %v4706, 4294901760
      %4708 = vmatprep.subr.mxu0 %v4707
      %v4709 = vand.u32 %v852, 4294901760
      %v4710 = vsub.f32 %v852, %v4709
      %v4711 = vand.u32 %v4710, 4294901760
      %4712 = vmatpush1.msra.mxu0 %v4711
      %v4713 = vand.u32 %v784, 4294901760
      %v4714 = vsub.f32 %v784, %v4713
      %v4715 = vand.u32 %v4714, 4294901760
      %4716 = vmatprep.subr.mxu0 %v4715
      %v4717 = vand.u32 %v783, 4294901760
      %v4718 = vsub.f32 %v783, %v4717
      %v4719 = vand.u32 %v4718, 4294901760
      %4720 = vmatpush1.msra.mxu0 %v4719
      %v4721 = vand.u32 %v776, 4294901760
      %v4722 = vsub.f32 %v776, %v4721
      %v4723 = vand.u32 %v4722, 4294901760
      %4724 = vmatprep.subr.mxu0 %v4723
      %v4725 = vand.u32 %v775, 4294901760
      %v4726 = vsub.f32 %v775, %v4725
      %v4727 = vand.u32 %v4726, 4294901760
      %4728 = vmatpush1.msra.mxu0 %v4727
      %v4729 = vand.u32 %v713, 4294901760
      %v4730 = vsub.f32 %v713, %v4729
      %v4731 = vand.u32 %v4730, 4294901760
      %4732 = vmatprep.subr.mxu0 %v4731
      %v4733 = vand.u32 %v712, 4294901760
      %v4734 = vsub.f32 %v712, %v4733
      %v4735 = vand.u32 %v4734, 4294901760
      %4736 = vmatpush1.msra.mxu0 %v4735
      %v4737 = vand.u32 %v705, 4294901760
      %v4738 = vsub.f32 %v705, %v4737
      %v4739 = vand.u32 %v4738, 4294901760
      %4740 = vmatprep.subr.mxu0 %v4739
      %v4741 = vand.u32 %v704, 4294901760
      %v4742 = vsub.f32 %v704, %v4741
      %v4743 = vand.u32 %v4742, 4294901760
      %4744 = vmatpush1.msra.mxu0 %v4743
      %v4745 = vand.u32 %v642, 4294901760
      %v4746 = vsub.f32 %v642, %v4745
      %v4747 = vand.u32 %v4746, 4294901760
      %4748 = vmatprep.subr.mxu0 %v4747
      %v4749 = vand.u32 %v641, 4294901760
      %v4750 = vsub.f32 %v641, %v4749
      %v4751 = vand.u32 %v4750, 4294901760
      %4752 = vmatpush1.msra.mxu0 %v4751
      %v4753 = vand.u32 %v634, 4294901760
      %v4754 = vsub.f32 %v634, %v4753
      %v4755 = vand.u32 %v4754, 4294901760
      %4756 = vmatprep.subr.mxu0 %v4755
      %v4757 = vand.u32 %v633, 4294901760
      %v4758 = vsub.f32 %v633, %v4757
      %v4759 = vand.u32 %v4758, 4294901760
      %4760 = vmatpush1.msra.mxu0 %v4759
      %v4761 = vand.u32 %v571, 4294901760
      %v4762 = vsub.f32 %v571, %v4761
      %v4763 = vand.u32 %v4762, 4294901760
      %4764 = vmatprep.subr.mxu0 %v4763
      %v4765 = vand.u32 %v570, 4294901760
      %v4766 = vsub.f32 %v570, %v4765
      %v4767 = vand.u32 %v4766, 4294901760
      %4768 = vmatpush1.msra.mxu0 %v4767
      %v4769 = vand.u32 %v563, 4294901760
      %v4770 = vsub.f32 %v563, %v4769
      %v4771 = vand.u32 %v4770, 4294901760
      %4772 = vmatprep.subr.mxu0 %v4771
      %v4773 = vand.u32 %v562, 4294901760
      %v4774 = vsub.f32 %v562, %v4773
      %v4775 = vand.u32 %v4774, 4294901760
      %4776 = vmatpush1.msra.mxu0 %v4775
      %v4777 = vand.u32 %v500, 4294901760
      %v4778 = vsub.f32 %v500, %v4777
      %v4779 = vand.u32 %v4778, 4294901760
      %4780 = vmatprep.subr.mxu0 %v4779
      %v4781 = vand.u32 %v499, 4294901760
      %v4782 = vsub.f32 %v499, %v4781
      %v4783 = vand.u32 %v4782, 4294901760
      %4784 = vmatpush1.msra.mxu0 %v4783
      %v4785 = vand.u32 %v492, 4294901760
      %v4786 = vsub.f32 %v492, %v4785
      %v4787 = vand.u32 %v4786, 4294901760
      %4788 = vmatprep.subr.mxu0 %v4787
      %v4789 = vand.u32 %v491, 4294901760
      %v4790 = vsub.f32 %v491, %v4789
      %v4791 = vand.u32 %v4790, 4294901760
      %4792 = vmatpush1.msra.mxu0 %v4791
      %v4793 = vand.u32 %v427, 4294901760
      %v4794 = vsub.f32 %v427, %v4793
      %v4795 = vand.u32 %v4794, 4294901760
      %4796 = vmatprep.subr.mxu0 %v4795
      %v4797 = vand.u32 %v426, 4294901760
      %v4798 = vsub.f32 %v426, %v4797
      %v4799 = vand.u32 %v4798, 4294901760
      %4800 = vmatpush1.msra.mxu0 %v4799
      %v4801 = vand.u32 %v417, 4294901760
      %v4802 = vsub.f32 %v417, %v4801
      %v4803 = vand.u32 %v4802, 4294901760
      %4804 = vmatprep.subr.mxu0 %v4803
      %v4805 = vand.u32 %v416, 4294901760
      %v4806 = vsub.f32 %v416, %v4805
      %v4807 = vand.u32 %v4806, 4294901760
      %4808 = vmatpush1.msra.mxu0 %v4807
      %4809 = vmatprep.subr.mxu0 0.0
      %4810 = vmatpush2.msra.mxu0 0.0
      %4811 = vmatprep.subr.mxu0 0.0
      %4812 = vmatpush2.msra.mxu0 0.0
      %4813 = vmatprep.subr.mxu0 0.0
      %4814 = vmatpush2.msra.mxu0 0.0
      %4815 = vmatprep.subr.mxu0 0.0
      %4816 = vmatpush2.msra.mxu0 0.0
      %4817 = vmatprep.subr.mxu0 0.0
      %4818 = vmatpush2.msra.mxu0 0.0
      %4819 = vmatprep.subr.mxu0 0.0
      %4820 = vmatpush2.msra.mxu0 0.0
      %4821 = vmatprep.subr.mxu0 0.0
      %4822 = vmatpush2.msra.mxu0 0.0
      %4823 = vmatprep.subr.mxu0 0.0
      %4824 = vmatpush2.msra.mxu0 0.0
      %4825 = vmatprep.subr.mxu0 0.0
      %4826 = vmatpush2.msra.mxu0 0.0
      %4827 = vmatprep.subr.mxu0 0.0
      %4828 = vmatpush2.msra.mxu0 0.0
      %4829 = vmatprep.subr.mxu0 0.0
      %4830 = vmatpush2.msra.mxu0 0.0
      %4831 = vmatprep.subr.mxu0 0.0
      %4832 = vmatpush2.msra.mxu0 0.0
      %4833 = vmatprep.subr.mxu0 0.0
      %4834 = vmatpush2.msra.mxu0 0.0
      %4835 = vmatprep.subr.mxu0 0.0
      %4836 = vmatpush2.msra.mxu0 0.0
      %v4837 = vand.u32 %v1016, 4294901760
      %v4838 = vsub.f32 %v1016, %v4837
      %v4839 = vand.u32 %v4838, 4294901760
      %4840 = vmatprep.subr.mxu0 %v4839
      %v4841 = vand.u32 %v1015, 4294901760
      %v4842 = vsub.f32 %v1015, %v4841
      %v4843 = vand.u32 %v4842, 4294901760
      %4844 = vmatpush2.msra.mxu0 %v4843
      %v4845 = vand.u32 %v1007, 4294901760
      %v4846 = vsub.f32 %v1007, %v4845
      %v4847 = vand.u32 %v4846, 4294901760
      %4848 = vmatprep.subr.mxu0 %v4847
      %v4849 = vand.u32 %v1006, 4294901760
      %v4850 = vsub.f32 %v1006, %v4849
      %v4851 = vand.u32 %v4850, 4294901760
      %4852 = vmatpush2.msra.mxu0 %v4851
      %v4853 = vand.u32 %v1054, 4294901760
      %4854 = vmatprep.mubr.f32.mxu0 %v4853
      %v4855 = vand.u32 %v1036, 4294901760
      %4856 = vmatmul.mubr.f32.gmra.mxu0 %v4855
      %v4857 = vpop.f32.mrf.mxu0
      %v4858 = vadd.f32 %v4665, %v4857
      %v4859 = vpop.f32.mrf.mxu0
      %v4860 = vadd.f32 %v4667, %v4859
      %v4861 = vand.u32 %v1057, 4294901760
      %4862 = vmatprep.mubr.f32.mxu0 %v4861
      %v4863 = vand.u32 %v1038, 4294901760
      %4864 = vmatmul.mubr.f32.gmra.mxu0 %v4863
      %v4865 = vpop.f32.mrf.mxu0
      %v4866 = vadd.f32 %v4677, %v4865
      %v4867 = vpop.f32.mrf.mxu0
      %v4868 = vadd.f32 %v4679, %v4867
      %4869 = vdwg.mxu0
      %v4870 = vand.u32 %v939, 4294901760
      %4871 = vmatprep.subr.mxu0 %v4870
      %v4872 = vand.u32 %v938, 4294901760
      %4873 = vmatpush1.msra.mxu0 %v4872
      %v4874 = vand.u32 %v930, 4294901760
      %4875 = vmatprep.subr.mxu0 %v4874
      %v4876 = vand.u32 %v929, 4294901760
      %4877 = vmatpush1.msra.mxu0 %v4876
      %v4878 = vand.u32 %v862, 4294901760
      %4879 = vmatprep.subr.mxu0 %v4878
      %v4880 = vand.u32 %v861, 4294901760
      %4881 = vmatpush1.msra.mxu0 %v4880
      %v4882 = vand.u32 %v853, 4294901760
      %4883 = vmatprep.subr.mxu0 %v4882
      %v4884 = vand.u32 %v852, 4294901760
      %4885 = vmatpush1.msra.mxu0 %v4884
      %v4886 = vand.u32 %v784, 4294901760
      %4887 = vmatprep.subr.mxu0 %v4886
      %v4888 = vand.u32 %v783, 4294901760
      %4889 = vmatpush1.msra.mxu0 %v4888
      %v4890 = vand.u32 %v776, 4294901760
      %4891 = vmatprep.subr.mxu0 %v4890
      %v4892 = vand.u32 %v775, 4294901760
      %4893 = vmatpush1.msra.mxu0 %v4892
      %v4894 = vand.u32 %v713, 4294901760
      %4895 = vmatprep.subr.mxu0 %v4894
      %v4896 = vand.u32 %v712, 4294901760
      %4897 = vmatpush1.msra.mxu0 %v4896
      %v4898 = vand.u32 %v705, 4294901760
      %4899 = vmatprep.subr.mxu0 %v4898
      %v4900 = vand.u32 %v704, 4294901760
      %4901 = vmatpush1.msra.mxu0 %v4900
      %v4902 = vand.u32 %v642, 4294901760
      %4903 = vmatprep.subr.mxu0 %v4902
      %v4904 = vand.u32 %v641, 4294901760
      %4905 = vmatpush1.msra.mxu0 %v4904
      %v4906 = vand.u32 %v634, 4294901760
      %4907 = vmatprep.subr.mxu0 %v4906
      %v4908 = vand.u32 %v633, 4294901760
      %4909 = vmatpush1.msra.mxu0 %v4908
      %v4910 = vand.u32 %v571, 4294901760
      %4911 = vmatprep.subr.mxu0 %v4910
      %v4912 = vand.u32 %v570, 4294901760
      %4913 = vmatpush1.msra.mxu0 %v4912
      %v4914 = vand.u32 %v563, 4294901760
      %4915 = vmatprep.subr.mxu0 %v4914
      %v4916 = vand.u32 %v562, 4294901760
      %4917 = vmatpush1.msra.mxu0 %v4916
      %v4918 = vand.u32 %v500, 4294901760
      %4919 = vmatprep.subr.mxu0 %v4918
      %v4920 = vand.u32 %v499, 4294901760
      %4921 = vmatpush1.msra.mxu0 %v4920
      %v4922 = vand.u32 %v492, 4294901760
      %4923 = vmatprep.subr.mxu0 %v4922
      %v4924 = vand.u32 %v491, 4294901760
      %4925 = vmatpush1.msra.mxu0 %v4924
      %v4926 = vand.u32 %v427, 4294901760
      %4927 = vmatprep.subr.mxu0 %v4926
      %v4928 = vand.u32 %v426, 4294901760
      %4929 = vmatpush1.msra.mxu0 %v4928
      %v4930 = vand.u32 %v417, 4294901760
      %4931 = vmatprep.subr.mxu0 %v4930
      %v4932 = vand.u32 %v416, 4294901760
      %4933 = vmatpush1.msra.mxu0 %v4932
      %4934 = vmatprep.subr.mxu0 0.0
      %4935 = vmatpush2.msra.mxu0 0.0
      %4936 = vmatprep.subr.mxu0 0.0
      %4937 = vmatpush2.msra.mxu0 0.0
      %4938 = vmatprep.subr.mxu0 0.0
      %4939 = vmatpush2.msra.mxu0 0.0
      %4940 = vmatprep.subr.mxu0 0.0
      %4941 = vmatpush2.msra.mxu0 0.0
      %4942 = vmatprep.subr.mxu0 0.0
      %4943 = vmatpush2.msra.mxu0 0.0
      %4944 = vmatprep.subr.mxu0 0.0
      %4945 = vmatpush2.msra.mxu0 0.0
      %4946 = vmatprep.subr.mxu0 0.0
      %4947 = vmatpush2.msra.mxu0 0.0
      %4948 = vmatprep.subr.mxu0 0.0
      %4949 = vmatpush2.msra.mxu0 0.0
      %4950 = vmatprep.subr.mxu0 0.0
      %4951 = vmatpush2.msra.mxu0 0.0
      %4952 = vmatprep.subr.mxu0 0.0
      %4953 = vmatpush2.msra.mxu0 0.0
      %4954 = vmatprep.subr.mxu0 0.0
      %4955 = vmatpush2.msra.mxu0 0.0
      %4956 = vmatprep.subr.mxu0 0.0
      %4957 = vmatpush2.msra.mxu0 0.0
      %4958 = vmatprep.subr.mxu0 0.0
      %4959 = vmatpush2.msra.mxu0 0.0
      %4960 = vmatprep.subr.mxu0 0.0
      %4961 = vmatpush2.msra.mxu0 0.0
      %v4962 = vand.u32 %v1016, 4294901760
      %4963 = vmatprep.subr.mxu0 %v4962
      %v4964 = vand.u32 %v1015, 4294901760
      %4965 = vmatpush2.msra.mxu0 %v4964
      %v4966 = vand.u32 %v1007, 4294901760
      %4967 = vmatprep.subr.mxu0 %v4966
      %v4968 = vand.u32 %v1006, 4294901760
      %4969 = vmatpush2.msra.mxu0 %v4968
      %v4970 = vand.u32 %v1054, 4294901760
      %4971 = vmatprep.mubr.f32.mxu0 %v4970
      %v4972 = vand.u32 %v1036, 4294901760
      %4973 = vmatmul.mubr.f32.gmra.mxu0 %v4972
      %v4974 = vpop.f32.mrf.mxu0
      %v4975 = vadd.f32 %v4858, %v4974
      %v4976 = vpop.f32.mrf.mxu0
      %v4977 = vadd.f32 %v4860, %v4976
      %v4978 = vand.u32 %v1057, 4294901760
      %4979 = vmatprep.mubr.f32.mxu0 %v4978
      %v4980 = vand.u32 %v1038, 4294901760
      %4981 = vmatmul.mubr.f32.gmra.mxu0 %v4980
      %v4982 = vpop.f32.mrf.mxu0
      %v4983 = vadd.f32 %v4866, %v4982
      %v4984 = vpop.f32.mrf.mxu0
      %v4985 = vadd.f32 %v4868, %v4984
      %4986 = vdwg.mxu0
      %4987 = vmatprep.subr.mxu0 0.0
      %v4988 = vand.u32 %v940, 4294901760
      %4989 = vmatpush1.msra.mxu0 %v4988
      %4990 = vmatprep.subr.mxu0 0.0
      %v4991 = vand.u32 %v931, 4294901760
      %4992 = vmatpush1.msra.mxu0 %v4991
      %4993 = vmatprep.subr.mxu0 0.0
      %v4994 = vand.u32 %v863, 4294901760
      %4995 = vmatpush1.msra.mxu0 %v4994
      %4996 = vmatprep.subr.mxu0 0.0
      %v4997 = vand.u32 %v854, 4294901760
      %4998 = vmatpush1.msra.mxu0 %v4997
      %4999 = vmatprep.subr.mxu0 0.0
      %v5000 = vand.u32 %v767, 4294901760
      %5001 = vmatpush1.msra.mxu0 %v5000
      %5002 = vmatprep.subr.mxu0 0.0
      %v5003 = vand.u32 %v749, 4294901760
      %5004 = vmatpush1.msra.mxu0 %v5003
      %5005 = vmatprep.subr.mxu0 0.0
      %v5006 = vand.u32 %v696, 4294901760
      %5007 = vmatpush1.msra.mxu0 %v5006
      %5008 = vmatprep.subr.mxu0 0.0
      %v5009 = vand.u32 %v678, 4294901760
      %5010 = vmatpush1.msra.mxu0 %v5009
      %5011 = vmatprep.subr.mxu0 0.0
      %v5012 = vand.u32 %v625, 4294901760
      %5013 = vmatpush1.msra.mxu0 %v5012
      %5014 = vmatprep.subr.mxu0 0.0
      %v5015 = vand.u32 %v607, 4294901760
      %5016 = vmatpush1.msra.mxu0 %v5015
      %5017 = vmatprep.subr.mxu0 0.0
      %v5018 = vand.u32 %v554, 4294901760
      %5019 = vmatpush1.msra.mxu0 %v5018
      %5020 = vmatprep.subr.mxu0 0.0
      %v5021 = vand.u32 %v536, 4294901760
      %5022 = vmatpush1.msra.mxu0 %v5021
      %5023 = vmatprep.subr.mxu0 0.0
      %v5024 = vand.u32 %v483, 4294901760
      %5025 = vmatpush1.msra.mxu0 %v5024
      %5026 = vmatprep.subr.mxu0 0.0
      %v5027 = vand.u32 %v465, 4294901760
      %5028 = vmatpush1.msra.mxu0 %v5027
      %5029 = vmatprep.subr.mxu0 0.0
      %v5030 = vand.u32 %v428, 4294901760
      %5031 = vmatpush1.msra.mxu0 %v5030
      %5032 = vmatprep.subr.mxu0 0.0
      %v5033 = vand.u32 %v418, 4294901760
      %5034 = vmatpush1.msra.mxu0 %v5033
      %5035 = vmatprep.subr.mxu0 0.0
      %5036 = vmatpush2.msra.mxu0 0.0
      %5037 = vmatprep.subr.mxu0 0.0
      %5038 = vmatpush2.msra.mxu0 0.0
      %5039 = vmatprep.subr.mxu0 0.0
      %5040 = vmatpush2.msra.mxu0 0.0
      %5041 = vmatprep.subr.mxu0 0.0
      %5042 = vmatpush2.msra.mxu0 0.0
      %5043 = vmatprep.subr.mxu0 0.0
      %5044 = vmatpush2.msra.mxu0 0.0
      %5045 = vmatprep.subr.mxu0 0.0
      %5046 = vmatpush2.msra.mxu0 0.0
      %5047 = vmatprep.subr.mxu0 0.0
      %5048 = vmatpush2.msra.mxu0 0.0
      %5049 = vmatprep.subr.mxu0 0.0
      %5050 = vmatpush2.msra.mxu0 0.0
      %5051 = vmatprep.subr.mxu0 0.0
      %5052 = vmatpush2.msra.mxu0 0.0
      %5053 = vmatprep.subr.mxu0 0.0
      %5054 = vmatpush2.msra.mxu0 0.0
      %5055 = vmatprep.subr.mxu0 0.0
      %5056 = vmatpush2.msra.mxu0 0.0
      %5057 = vmatprep.subr.mxu0 0.0
      %5058 = vmatpush2.msra.mxu0 0.0
      %5059 = vmatprep.subr.mxu0 0.0
      %5060 = vmatpush2.msra.mxu0 0.0
      %5061 = vmatprep.subr.mxu0 0.0
      %5062 = vmatpush2.msra.mxu0 0.0
      %5063 = vmatprep.subr.mxu0 0.0
      %v5064 = vand.u32 %v1017, 4294901760
      %5065 = vmatpush2.msra.mxu0 %v5064
      %5066 = vmatprep.subr.mxu0 0.0
      %v5067 = vand.u32 %v1008, 4294901760
      %5068 = vmatpush2.msra.mxu0 %v5067
      %v5069 = vand.u32 %v1054, 4294901760
      %v5070 = vsub.f32 %v1054, %v5069
      %v5071 = vand.u32 %v5070, 4294901760
      %v5072 = vsub.f32 %v5070, %v5071
      %v5073 = vand.u32 %v5072, 4294901760
      %5074 = vmatprep.mubr.f32.mxu0 %v5073
      %v5075 = vand.u32 %v1036, 4294901760
      %v5076 = vsub.f32 %v1036, %v5075
      %v5077 = vand.u32 %v5076, 4294901760
      %v5078 = vsub.f32 %v5076, %v5077
      %v5079 = vand.u32 %v5078, 4294901760
      %5080 = vmatmul.mubr.f32.gmra.mxu0 %v5079
      %v5081 = vpop.f32.mrf.mxu0
      %v5082 = vadd.f32 %v1045, %v5081
      %v5083 = vpop.f32.mrf.mxu0
      %v5084 = vand.u32 %v1057, 4294901760
      %v5085 = vsub.f32 %v1057, %v5084
      %v5086 = vand.u32 %v5085, 4294901760
      %v5087 = vsub.f32 %v5085, %v5086
      %v5088 = vand.u32 %v5087, 4294901760
      %5089 = vmatprep.mubr.f32.mxu0 %v5088
      %v5090 = vand.u32 %v1038, 4294901760
      %v5091 = vsub.f32 %v1038, %v5090
      %v5092 = vand.u32 %v5091, 4294901760
      %v5093 = vsub.f32 %v5091, %v5092
      %v5094 = vand.u32 %v5093, 4294901760
      %5095 = vmatmul.mubr.f32.gmra.mxu0 %v5094
      %v5096 = vpop.f32.mrf.mxu0
      %v5097 = vadd.f32 %v1050, %v5096
      %v5098 = vpop.f32.mrf.mxu0
      %5099 = vdwg.mxu0
      %5100 = vmatprep.subr.mxu0 0.0
      %v5101 = vand.u32 %v940, 4294901760
      %v5102 = vsub.f32 %v940, %v5101
      %v5103 = vand.u32 %v5102, 4294901760
      %v5104 = vsub.f32 %v5102, %v5103
      %v5105 = vand.u32 %v5104, 4294901760
      %5106 = vmatpush1.msra.mxu0 %v5105
      %5107 = vmatprep.subr.mxu0 0.0
      %v5108 = vand.u32 %v931, 4294901760
      %v5109 = vsub.f32 %v931, %v5108
      %v5110 = vand.u32 %v5109, 4294901760
      %v5111 = vsub.f32 %v5109, %v5110
      %v5112 = vand.u32 %v5111, 4294901760
      %5113 = vmatpush1.msra.mxu0 %v5112
      %5114 = vmatprep.subr.mxu0 0.0
      %v5115 = vand.u32 %v863, 4294901760
      %v5116 = vsub.f32 %v863, %v5115
      %v5117 = vand.u32 %v5116, 4294901760
      %v5118 = vsub.f32 %v5116, %v5117
      %v5119 = vand.u32 %v5118, 4294901760
      %5120 = vmatpush1.msra.mxu0 %v5119
      %5121 = vmatprep.subr.mxu0 0.0
      %v5122 = vand.u32 %v854, 4294901760
      %v5123 = vsub.f32 %v854, %v5122
      %v5124 = vand.u32 %v5123, 4294901760
      %v5125 = vsub.f32 %v5123, %v5124
      %v5126 = vand.u32 %v5125, 4294901760
      %5127 = vmatpush1.msra.mxu0 %v5126
      %5128 = vmatprep.subr.mxu0 0.0
      %v5129 = vand.u32 %v767, 4294901760
      %v5130 = vsub.f32 %v767, %v5129
      %v5131 = vand.u32 %v5130, 4294901760
      %v5132 = vsub.f32 %v5130, %v5131
      %v5133 = vand.u32 %v5132, 4294901760
      %5134 = vmatpush1.msra.mxu0 %v5133
      %5135 = vmatprep.subr.mxu0 0.0
      %v5136 = vand.u32 %v749, 4294901760
      %v5137 = vsub.f32 %v749, %v5136
      %v5138 = vand.u32 %v5137, 4294901760
      %v5139 = vsub.f32 %v5137, %v5138
      %v5140 = vand.u32 %v5139, 4294901760
      %5141 = vmatpush1.msra.mxu0 %v5140
      %5142 = vmatprep.subr.mxu0 0.0
      %v5143 = vand.u32 %v696, 4294901760
      %v5144 = vsub.f32 %v696, %v5143
      %v5145 = vand.u32 %v5144, 4294901760
      %v5146 = vsub.f32 %v5144, %v5145
      %v5147 = vand.u32 %v5146, 4294901760
      %5148 = vmatpush1.msra.mxu0 %v5147
      %5149 = vmatprep.subr.mxu0 0.0
      %v5150 = vand.u32 %v678, 4294901760
      %v5151 = vsub.f32 %v678, %v5150
      %v5152 = vand.u32 %v5151, 4294901760
      %v5153 = vsub.f32 %v5151, %v5152
      %v5154 = vand.u32 %v5153, 4294901760
      %5155 = vmatpush1.msra.mxu0 %v5154
      %5156 = vmatprep.subr.mxu0 0.0
      %v5157 = vand.u32 %v625, 4294901760
      %v5158 = vsub.f32 %v625, %v5157
      %v5159 = vand.u32 %v5158, 4294901760
      %v5160 = vsub.f32 %v5158, %v5159
      %v5161 = vand.u32 %v5160, 4294901760
      %5162 = vmatpush1.msra.mxu0 %v5161
      %5163 = vmatprep.subr.mxu0 0.0
      %v5164 = vand.u32 %v607, 4294901760
      %v5165 = vsub.f32 %v607, %v5164
      %v5166 = vand.u32 %v5165, 4294901760
      %v5167 = vsub.f32 %v5165, %v5166
      %v5168 = vand.u32 %v5167, 4294901760
      %5169 = vmatpush1.msra.mxu0 %v5168
      %5170 = vmatprep.subr.mxu0 0.0
      %v5171 = vand.u32 %v554, 4294901760
      %v5172 = vsub.f32 %v554, %v5171
      %v5173 = vand.u32 %v5172, 4294901760
      %v5174 = vsub.f32 %v5172, %v5173
      %v5175 = vand.u32 %v5174, 4294901760
      %5176 = vmatpush1.msra.mxu0 %v5175
      %5177 = vmatprep.subr.mxu0 0.0
      %v5178 = vand.u32 %v536, 4294901760
      %v5179 = vsub.f32 %v536, %v5178
      %v5180 = vand.u32 %v5179, 4294901760
      %v5181 = vsub.f32 %v5179, %v5180
      %v5182 = vand.u32 %v5181, 4294901760
      %5183 = vmatpush1.msra.mxu0 %v5182
      %5184 = vmatprep.subr.mxu0 0.0
      %v5185 = vand.u32 %v483, 4294901760
      %v5186 = vsub.f32 %v483, %v5185
      %v5187 = vand.u32 %v5186, 4294901760
      %v5188 = vsub.f32 %v5186, %v5187
      %v5189 = vand.u32 %v5188, 4294901760
      %5190 = vmatpush1.msra.mxu0 %v5189
      %5191 = vmatprep.subr.mxu0 0.0
      %v5192 = vand.u32 %v465, 4294901760
      %v5193 = vsub.f32 %v465, %v5192
      %v5194 = vand.u32 %v5193, 4294901760
      %v5195 = vsub.f32 %v5193, %v5194
      %v5196 = vand.u32 %v5195, 4294901760
      %5197 = vmatpush1.msra.mxu0 %v5196
      %5198 = vmatprep.subr.mxu0 0.0
      %v5199 = vand.u32 %v428, 4294901760
      %v5200 = vsub.f32 %v428, %v5199
      %v5201 = vand.u32 %v5200, 4294901760
      %v5202 = vsub.f32 %v5200, %v5201
      %v5203 = vand.u32 %v5202, 4294901760
      %5204 = vmatpush1.msra.mxu0 %v5203
      %5205 = vmatprep.subr.mxu0 0.0
      %v5206 = vand.u32 %v418, 4294901760
      %v5207 = vsub.f32 %v418, %v5206
      %v5208 = vand.u32 %v5207, 4294901760
      %v5209 = vsub.f32 %v5207, %v5208
      %v5210 = vand.u32 %v5209, 4294901760
      %5211 = vmatpush1.msra.mxu0 %v5210
      %5212 = vmatprep.subr.mxu0 0.0
      %5213 = vmatpush2.msra.mxu0 0.0
      %5214 = vmatprep.subr.mxu0 0.0
      %5215 = vmatpush2.msra.mxu0 0.0
      %5216 = vmatprep.subr.mxu0 0.0
      %5217 = vmatpush2.msra.mxu0 0.0
      %5218 = vmatprep.subr.mxu0 0.0
      %5219 = vmatpush2.msra.mxu0 0.0
      %5220 = vmatprep.subr.mxu0 0.0
      %5221 = vmatpush2.msra.mxu0 0.0
      %5222 = vmatprep.subr.mxu0 0.0
      %5223 = vmatpush2.msra.mxu0 0.0
      %5224 = vmatprep.subr.mxu0 0.0
      %5225 = vmatpush2.msra.mxu0 0.0
      %5226 = vmatprep.subr.mxu0 0.0
      %5227 = vmatpush2.msra.mxu0 0.0
      %5228 = vmatprep.subr.mxu0 0.0
      %5229 = vmatpush2.msra.mxu0 0.0
      %5230 = vmatprep.subr.mxu0 0.0
      %5231 = vmatpush2.msra.mxu0 0.0
      %5232 = vmatprep.subr.mxu0 0.0
      %5233 = vmatpush2.msra.mxu0 0.0
      %5234 = vmatprep.subr.mxu0 0.0
      %5235 = vmatpush2.msra.mxu0 0.0
      %5236 = vmatprep.subr.mxu0 0.0
      %5237 = vmatpush2.msra.mxu0 0.0
      %5238 = vmatprep.subr.mxu0 0.0
      %5239 = vmatpush2.msra.mxu0 0.0
      %5240 = vmatprep.subr.mxu0 0.0
      %v5241 = vand.u32 %v1017, 4294901760
      %v5242 = vsub.f32 %v1017, %v5241
      %v5243 = vand.u32 %v5242, 4294901760
      %v5244 = vsub.f32 %v5242, %v5243
      %v5245 = vand.u32 %v5244, 4294901760
      %5246 = vmatpush2.msra.mxu0 %v5245
      %5247 = vmatprep.subr.mxu0 0.0
      %v5248 = vand.u32 %v1008, 4294901760
      %v5249 = vsub.f32 %v1008, %v5248
      %v5250 = vand.u32 %v5249, 4294901760
      %v5251 = vsub.f32 %v5249, %v5250
      %v5252 = vand.u32 %v5251, 4294901760
      %5253 = vmatpush2.msra.mxu0 %v5252
      %v5254 = vand.u32 %v1054, 4294901760
      %5255 = vmatprep.mubr.f32.mxu0 %v5254
      %v5256 = vand.u32 %v1036, 4294901760
      %5257 = vmatmul.mubr.f32.gmra.mxu0 %v5256
      %v5258 = vpop.f32.mrf.mxu0
      %v5259 = vadd.f32 %v5082, %v5258
      %v5260 = vpop.f32.mrf.mxu0
      %v5261 = vand.u32 %v1057, 4294901760
      %5262 = vmatprep.mubr.f32.mxu0 %v5261
      %v5263 = vand.u32 %v1038, 4294901760
      %5264 = vmatmul.mubr.f32.gmra.mxu0 %v5263
      %v5265 = vpop.f32.mrf.mxu0
      %v5266 = vadd.f32 %v5097, %v5265
      %v5267 = vpop.f32.mrf.mxu0
      %5268 = vdwg.mxu0
      %5269 = vmatprep.subr.mxu0 0.0
      %v5270 = vand.u32 %v940, 4294901760
      %v5271 = vsub.f32 %v940, %v5270
      %5272 = vmatpush1.msra.mxu0 %v5271
      %5273 = vmatprep.subr.mxu0 0.0
      %v5274 = vand.u32 %v931, 4294901760
      %v5275 = vsub.f32 %v931, %v5274
      %5276 = vmatpush1.msra.mxu0 %v5275
      %5277 = vmatprep.subr.mxu0 0.0
      %v5278 = vand.u32 %v863, 4294901760
      %v5279 = vsub.f32 %v863, %v5278
      %5280 = vmatpush1.msra.mxu0 %v5279
      %5281 = vmatprep.subr.mxu0 0.0
      %v5282 = vand.u32 %v854, 4294901760
      %v5283 = vsub.f32 %v854, %v5282
      %5284 = vmatpush1.msra.mxu0 %v5283
      %5285 = vmatprep.subr.mxu0 0.0
      %v5286 = vand.u32 %v767, 4294901760
      %v5287 = vsub.f32 %v767, %v5286
      %5288 = vmatpush1.msra.mxu0 %v5287
      %5289 = vmatprep.subr.mxu0 0.0
      %v5290 = vand.u32 %v749, 4294901760
      %v5291 = vsub.f32 %v749, %v5290
      %5292 = vmatpush1.msra.mxu0 %v5291
      %5293 = vmatprep.subr.mxu0 0.0
      %v5294 = vand.u32 %v696, 4294901760
      %v5295 = vsub.f32 %v696, %v5294
      %5296 = vmatpush1.msra.mxu0 %v5295
      %5297 = vmatprep.subr.mxu0 0.0
      %v5298 = vand.u32 %v678, 4294901760
      %v5299 = vsub.f32 %v678, %v5298
      %5300 = vmatpush1.msra.mxu0 %v5299
      %5301 = vmatprep.subr.mxu0 0.0
      %v5302 = vand.u32 %v625, 4294901760
      %v5303 = vsub.f32 %v625, %v5302
      %5304 = vmatpush1.msra.mxu0 %v5303
      %5305 = vmatprep.subr.mxu0 0.0
      %v5306 = vand.u32 %v607, 4294901760
      %v5307 = vsub.f32 %v607, %v5306
      %5308 = vmatpush1.msra.mxu0 %v5307
      %5309 = vmatprep.subr.mxu0 0.0
      %v5310 = vand.u32 %v554, 4294901760
      %v5311 = vsub.f32 %v554, %v5310
      %5312 = vmatpush1.msra.mxu0 %v5311
      %5313 = vmatprep.subr.mxu0 0.0
      %v5314 = vand.u32 %v536, 4294901760
      %v5315 = vsub.f32 %v536, %v5314
      %5316 = vmatpush1.msra.mxu0 %v5315
      %5317 = vmatprep.subr.mxu0 0.0
      %v5318 = vand.u32 %v483, 4294901760
      %v5319 = vsub.f32 %v483, %v5318
      %5320 = vmatpush1.msra.mxu0 %v5319
      %5321 = vmatprep.subr.mxu0 0.0
      %v5322 = vand.u32 %v465, 4294901760
      %v5323 = vsub.f32 %v465, %v5322
      %5324 = vmatpush1.msra.mxu0 %v5323
      %5325 = vmatprep.subr.mxu0 0.0
      %v5326 = vand.u32 %v428, 4294901760
      %v5327 = vsub.f32 %v428, %v5326
      %5328 = vmatpush1.msra.mxu0 %v5327
      %5329 = vmatprep.subr.mxu0 0.0
      %v5330 = vand.u32 %v418, 4294901760
      %v5331 = vsub.f32 %v418, %v5330
      %5332 = vmatpush1.msra.mxu0 %v5331
      %5333 = vmatprep.subr.mxu0 0.0
      %5334 = vmatpush2.msra.mxu0 0.0
      %5335 = vmatprep.subr.mxu0 0.0
      %5336 = vmatpush2.msra.mxu0 0.0
      %5337 = vmatprep.subr.mxu0 0.0
      %5338 = vmatpush2.msra.mxu0 0.0
      %5339 = vmatprep.subr.mxu0 0.0
      %5340 = vmatpush2.msra.mxu0 0.0
      %5341 = vmatprep.subr.mxu0 0.0
      %5342 = vmatpush2.msra.mxu0 0.0
      %5343 = vmatprep.subr.mxu0 0.0
      %5344 = vmatpush2.msra.mxu0 0.0
      %5345 = vmatprep.subr.mxu0 0.0
      %5346 = vmatpush2.msra.mxu0 0.0
      %5347 = vmatprep.subr.mxu0 0.0
      %5348 = vmatpush2.msra.mxu0 0.0
      %5349 = vmatprep.subr.mxu0 0.0
      %5350 = vmatpush2.msra.mxu0 0.0
      %5351 = vmatprep.subr.mxu0 0.0
      %5352 = vmatpush2.msra.mxu0 0.0
      %5353 = vmatprep.subr.mxu0 0.0
      %5354 = vmatpush2.msra.mxu0 0.0
      %5355 = vmatprep.subr.mxu0 0.0
      %5356 = vmatpush2.msra.mxu0 0.0
      %5357 = vmatprep.subr.mxu0 0.0
      %5358 = vmatpush2.msra.mxu0 0.0
      %5359 = vmatprep.subr.mxu0 0.0
      %5360 = vmatpush2.msra.mxu0 0.0
      %5361 = vmatprep.subr.mxu0 0.0
      %v5362 = vand.u32 %v1017, 4294901760
      %v5363 = vsub.f32 %v1017, %v5362
      %5364 = vmatpush2.msra.mxu0 %v5363
      %5365 = vmatprep.subr.mxu0 0.0
      %v5366 = vand.u32 %v1008, 4294901760
      %v5367 = vsub.f32 %v1008, %v5366
      %5368 = vmatpush2.msra.mxu0 %v5367
      %v5369 = vand.u32 %v1054, 4294901760
      %v5370 = vsub.f32 %v1054, %v5369
      %5371 = vmatprep.mubr.f32.mxu0 %v5370
      %v5372 = vand.u32 %v1036, 4294901760
      %v5373 = vsub.f32 %v1036, %v5372
      %5374 = vmatmul.mubr.f32.gmra.mxu0 %v5373
      %v5375 = vpop.f32.mrf.mxu0
      %v5376 = vadd.f32 %v5259, %v5375
      %v5377 = vpop.f32.mrf.mxu0
      %v5378 = vand.u32 %v1057, 4294901760
      %v5379 = vsub.f32 %v1057, %v5378
      %5380 = vmatprep.mubr.f32.mxu0 %v5379
      %v5381 = vand.u32 %v1038, 4294901760
      %v5382 = vsub.f32 %v1038, %v5381
      %5383 = vmatmul.mubr.f32.gmra.mxu0 %v5382
      %v5384 = vpop.f32.mrf.mxu0
      %v5385 = vadd.f32 %v5266, %v5384
      %v5386 = vpop.f32.mrf.mxu0
      %5387 = vdwg.mxu0
      %5388 = vmatprep.subr.mxu0 0.0
      %v5389 = vand.u32 %v940, 4294901760
      %5390 = vmatpush1.msra.mxu0 %v5389
      %5391 = vmatprep.subr.mxu0 0.0
      %v5392 = vand.u32 %v931, 4294901760
      %5393 = vmatpush1.msra.mxu0 %v5392
      %5394 = vmatprep.subr.mxu0 0.0
      %v5395 = vand.u32 %v863, 4294901760
      %5396 = vmatpush1.msra.mxu0 %v5395
      %5397 = vmatprep.subr.mxu0 0.0
      %v5398 = vand.u32 %v854, 4294901760
      %5399 = vmatpush1.msra.mxu0 %v5398
      %5400 = vmatprep.subr.mxu0 0.0
      %v5401 = vand.u32 %v767, 4294901760
      %5402 = vmatpush1.msra.mxu0 %v5401
      %5403 = vmatprep.subr.mxu0 0.0
      %v5404 = vand.u32 %v749, 4294901760
      %5405 = vmatpush1.msra.mxu0 %v5404
      %5406 = vmatprep.subr.mxu0 0.0
      %v5407 = vand.u32 %v696, 4294901760
      %5408 = vmatpush1.msra.mxu0 %v5407
      %5409 = vmatprep.subr.mxu0 0.0
      %v5410 = vand.u32 %v678, 4294901760
      %5411 = vmatpush1.msra.mxu0 %v5410
      %5412 = vmatprep.subr.mxu0 0.0
      %v5413 = vand.u32 %v625, 4294901760
      %5414 = vmatpush1.msra.mxu0 %v5413
      %5415 = vmatprep.subr.mxu0 0.0
      %v5416 = vand.u32 %v607, 4294901760
      %5417 = vmatpush1.msra.mxu0 %v5416
      %5418 = vmatprep.subr.mxu0 0.0
      %v5419 = vand.u32 %v554, 4294901760
      %5420 = vmatpush1.msra.mxu0 %v5419
      %5421 = vmatprep.subr.mxu0 0.0
      %v5422 = vand.u32 %v536, 4294901760
      %5423 = vmatpush1.msra.mxu0 %v5422
      %5424 = vmatprep.subr.mxu0 0.0
      %v5425 = vand.u32 %v483, 4294901760
      %5426 = vmatpush1.msra.mxu0 %v5425
      %5427 = vmatprep.subr.mxu0 0.0
      %v5428 = vand.u32 %v465, 4294901760
      %5429 = vmatpush1.msra.mxu0 %v5428
      %5430 = vmatprep.subr.mxu0 0.0
      %v5431 = vand.u32 %v428, 4294901760
      %5432 = vmatpush1.msra.mxu0 %v5431
      %5433 = vmatprep.subr.mxu0 0.0
      %v5434 = vand.u32 %v418, 4294901760
      %5435 = vmatpush1.msra.mxu0 %v5434
      %5436 = vmatprep.subr.mxu0 0.0
      %5437 = vmatpush2.msra.mxu0 0.0
      %5438 = vmatprep.subr.mxu0 0.0
      %5439 = vmatpush2.msra.mxu0 0.0
      %5440 = vmatprep.subr.mxu0 0.0
      %5441 = vmatpush2.msra.mxu0 0.0
      %5442 = vmatprep.subr.mxu0 0.0
      %5443 = vmatpush2.msra.mxu0 0.0
      %5444 = vmatprep.subr.mxu0 0.0
      %5445 = vmatpush2.msra.mxu0 0.0
      %5446 = vmatprep.subr.mxu0 0.0
      %5447 = vmatpush2.msra.mxu0 0.0
      %5448 = vmatprep.subr.mxu0 0.0
      %5449 = vmatpush2.msra.mxu0 0.0
      %5450 = vmatprep.subr.mxu0 0.0
      %5451 = vmatpush2.msra.mxu0 0.0
      %5452 = vmatprep.subr.mxu0 0.0
      %5453 = vmatpush2.msra.mxu0 0.0
      %5454 = vmatprep.subr.mxu0 0.0
      %5455 = vmatpush2.msra.mxu0 0.0
      %5456 = vmatprep.subr.mxu0 0.0
      %5457 = vmatpush2.msra.mxu0 0.0
      %5458 = vmatprep.subr.mxu0 0.0
      %5459 = vmatpush2.msra.mxu0 0.0
      %5460 = vmatprep.subr.mxu0 0.0
      %5461 = vmatpush2.msra.mxu0 0.0
      %5462 = vmatprep.subr.mxu0 0.0
      %5463 = vmatpush2.msra.mxu0 0.0
      %5464 = vmatprep.subr.mxu0 0.0
      %v5465 = vand.u32 %v1017, 4294901760
      %5466 = vmatpush2.msra.mxu0 %v5465
      %5467 = vmatprep.subr.mxu0 0.0
      %v5468 = vand.u32 %v1008, 4294901760
      %5469 = vmatpush2.msra.mxu0 %v5468
      %v5470 = vand.u32 %v1054, 4294901760
      %v5471 = vsub.f32 %v1054, %v5470
      %v5472 = vand.u32 %v5471, 4294901760
      %5473 = vmatprep.mubr.f32.mxu0 %v5472
      %v5474 = vand.u32 %v1036, 4294901760
      %v5475 = vsub.f32 %v1036, %v5474
      %v5476 = vand.u32 %v5475, 4294901760
      %5477 = vmatmul.mubr.f32.gmra.mxu0 %v5476
      %v5478 = vpop.f32.mrf.mxu0
      %v5479 = vadd.f32 %v5376, %v5478
      %v5480 = vpop.f32.mrf.mxu0
      %v5481 = vand.u32 %v1057, 4294901760
      %v5482 = vsub.f32 %v1057, %v5481
      %v5483 = vand.u32 %v5482, 4294901760
      %5484 = vmatprep.mubr.f32.mxu0 %v5483
      %v5485 = vand.u32 %v1038, 4294901760
      %v5486 = vsub.f32 %v1038, %v5485
      %v5487 = vand.u32 %v5486, 4294901760
      %5488 = vmatmul.mubr.f32.gmra.mxu0 %v5487
      %v5489 = vpop.f32.mrf.mxu0
      %v5490 = vadd.f32 %v5385, %v5489
      %v5491 = vpop.f32.mrf.mxu0
      %5492 = vdwg.mxu0
      %5493 = vmatprep.subr.mxu0 0.0
      %v5494 = vand.u32 %v940, 4294901760
      %v5495 = vsub.f32 %v940, %v5494
      %v5496 = vand.u32 %v5495, 4294901760
      %5497 = vmatpush1.msra.mxu0 %v5496
      %5498 = vmatprep.subr.mxu0 0.0
      %v5499 = vand.u32 %v931, 4294901760
      %v5500 = vsub.f32 %v931, %v5499
      %v5501 = vand.u32 %v5500, 4294901760
      %5502 = vmatpush1.msra.mxu0 %v5501
      %5503 = vmatprep.subr.mxu0 0.0
      %v5504 = vand.u32 %v863, 4294901760
      %v5505 = vsub.f32 %v863, %v5504
      %v5506 = vand.u32 %v5505, 4294901760
      %5507 = vmatpush1.msra.mxu0 %v5506
      %5508 = vmatprep.subr.mxu0 0.0
      %v5509 = vand.u32 %v854, 4294901760
      %v5510 = vsub.f32 %v854, %v5509
      %v5511 = vand.u32 %v5510, 4294901760
      %5512 = vmatpush1.msra.mxu0 %v5511
      %5513 = vmatprep.subr.mxu0 0.0
      %v5514 = vand.u32 %v767, 4294901760
      %v5515 = vsub.f32 %v767, %v5514
      %v5516 = vand.u32 %v5515, 4294901760
      %5517 = vmatpush1.msra.mxu0 %v5516
      %5518 = vmatprep.subr.mxu0 0.0
      %v5519 = vand.u32 %v749, 4294901760
      %v5520 = vsub.f32 %v749, %v5519
      %v5521 = vand.u32 %v5520, 4294901760
      %5522 = vmatpush1.msra.mxu0 %v5521
      %5523 = vmatprep.subr.mxu0 0.0
      %v5524 = vand.u32 %v696, 4294901760
      %v5525 = vsub.f32 %v696, %v5524
      %v5526 = vand.u32 %v5525, 4294901760
      %5527 = vmatpush1.msra.mxu0 %v5526
      %5528 = vmatprep.subr.mxu0 0.0
      %v5529 = vand.u32 %v678, 4294901760
      %v5530 = vsub.f32 %v678, %v5529
      %v5531 = vand.u32 %v5530, 4294901760
      %5532 = vmatpush1.msra.mxu0 %v5531
      %5533 = vmatprep.subr.mxu0 0.0
      %v5534 = vand.u32 %v625, 4294901760
      %v5535 = vsub.f32 %v625, %v5534
      %v5536 = vand.u32 %v5535, 4294901760
      %5537 = vmatpush1.msra.mxu0 %v5536
      %5538 = vmatprep.subr.mxu0 0.0
      %v5539 = vand.u32 %v607, 4294901760
      %v5540 = vsub.f32 %v607, %v5539
      %v5541 = vand.u32 %v5540, 4294901760
      %5542 = vmatpush1.msra.mxu0 %v5541
      %5543 = vmatprep.subr.mxu0 0.0
      %v5544 = vand.u32 %v554, 4294901760
      %v5545 = vsub.f32 %v554, %v5544
      %v5546 = vand.u32 %v5545, 4294901760
      %5547 = vmatpush1.msra.mxu0 %v5546
      %5548 = vmatprep.subr.mxu0 0.0
      %v5549 = vand.u32 %v536, 4294901760
      %v5550 = vsub.f32 %v536, %v5549
      %v5551 = vand.u32 %v5550, 4294901760
      %5552 = vmatpush1.msra.mxu0 %v5551
      %5553 = vmatprep.subr.mxu0 0.0
      %v5554 = vand.u32 %v483, 4294901760
      %v5555 = vsub.f32 %v483, %v5554
      %v5556 = vand.u32 %v5555, 4294901760
      %5557 = vmatpush1.msra.mxu0 %v5556
      %5558 = vmatprep.subr.mxu0 0.0
      %v5559 = vand.u32 %v465, 4294901760
      %v5560 = vsub.f32 %v465, %v5559
      %v5561 = vand.u32 %v5560, 4294901760
      %5562 = vmatpush1.msra.mxu0 %v5561
      %5563 = vmatprep.subr.mxu0 0.0
      %v5564 = vand.u32 %v428, 4294901760
      %v5565 = vsub.f32 %v428, %v5564
      %v5566 = vand.u32 %v5565, 4294901760
      %5567 = vmatpush1.msra.mxu0 %v5566
      %5568 = vmatprep.subr.mxu0 0.0
      %v5569 = vand.u32 %v418, 4294901760
      %v5570 = vsub.f32 %v418, %v5569
      %v5571 = vand.u32 %v5570, 4294901760
      %5572 = vmatpush1.msra.mxu0 %v5571
      %5573 = vmatprep.subr.mxu0 0.0
      %5574 = vmatpush2.msra.mxu0 0.0
      %5575 = vmatprep.subr.mxu0 0.0
      %5576 = vmatpush2.msra.mxu0 0.0
      %5577 = vmatprep.subr.mxu0 0.0
      %5578 = vmatpush2.msra.mxu0 0.0
      %5579 = vmatprep.subr.mxu0 0.0
      %5580 = vmatpush2.msra.mxu0 0.0
      %5581 = vmatprep.subr.mxu0 0.0
      %5582 = vmatpush2.msra.mxu0 0.0
      %5583 = vmatprep.subr.mxu0 0.0
      %5584 = vmatpush2.msra.mxu0 0.0
      %5585 = vmatprep.subr.mxu0 0.0
      %5586 = vmatpush2.msra.mxu0 0.0
      %5587 = vmatprep.subr.mxu0 0.0
      %5588 = vmatpush2.msra.mxu0 0.0
      %5589 = vmatprep.subr.mxu0 0.0
      %5590 = vmatpush2.msra.mxu0 0.0
      %5591 = vmatprep.subr.mxu0 0.0
      %5592 = vmatpush2.msra.mxu0 0.0
      %5593 = vmatprep.subr.mxu0 0.0
      %5594 = vmatpush2.msra.mxu0 0.0
      %5595 = vmatprep.subr.mxu0 0.0
      %5596 = vmatpush2.msra.mxu0 0.0
      %5597 = vmatprep.subr.mxu0 0.0
      %5598 = vmatpush2.msra.mxu0 0.0
      %5599 = vmatprep.subr.mxu0 0.0
      %5600 = vmatpush2.msra.mxu0 0.0
      %5601 = vmatprep.subr.mxu0 0.0
      %v5602 = vand.u32 %v1017, 4294901760
      %v5603 = vsub.f32 %v1017, %v5602
      %v5604 = vand.u32 %v5603, 4294901760
      %5605 = vmatpush2.msra.mxu0 %v5604
      %5606 = vmatprep.subr.mxu0 0.0
      %v5607 = vand.u32 %v1008, 4294901760
      %v5608 = vsub.f32 %v1008, %v5607
      %v5609 = vand.u32 %v5608, 4294901760
      %5610 = vmatpush2.msra.mxu0 %v5609
      %v5611 = vand.u32 %v1054, 4294901760
      %5612 = vmatprep.mubr.f32.mxu0 %v5611
      %v5613 = vand.u32 %v1036, 4294901760
      %5614 = vmatmul.mubr.f32.gmra.mxu0 %v5613
      %v5615 = vpop.f32.mrf.mxu0
      %v5616 = vadd.f32 %v5479, %v5615
      %v5617 = vpop.f32.mrf.mxu0
      %v5618 = vand.u32 %v1057, 4294901760
      %5619 = vmatprep.mubr.f32.mxu0 %v5618
      %v5620 = vand.u32 %v1038, 4294901760
      %5621 = vmatmul.mubr.f32.gmra.mxu0 %v5620
      %v5622 = vpop.f32.mrf.mxu0
      %v5623 = vadd.f32 %v5490, %v5622
      %v5624 = vpop.f32.mrf.mxu0
      %5625 = vdwg.mxu0
      %5626 = vmatprep.subr.mxu0 0.0
      %v5627 = vand.u32 %v940, 4294901760
      %5628 = vmatpush1.msra.mxu0 %v5627
      %5629 = vmatprep.subr.mxu0 0.0
      %v5630 = vand.u32 %v931, 4294901760
      %5631 = vmatpush1.msra.mxu0 %v5630
      %5632 = vmatprep.subr.mxu0 0.0
      %v5633 = vand.u32 %v863, 4294901760
      %5634 = vmatpush1.msra.mxu0 %v5633
      %5635 = vmatprep.subr.mxu0 0.0
      %v5636 = vand.u32 %v854, 4294901760
      %5637 = vmatpush1.msra.mxu0 %v5636
      %5638 = vmatprep.subr.mxu0 0.0
      %v5639 = vand.u32 %v767, 4294901760
      %5640 = vmatpush1.msra.mxu0 %v5639
      %5641 = vmatprep.subr.mxu0 0.0
      %v5642 = vand.u32 %v749, 4294901760
      %5643 = vmatpush1.msra.mxu0 %v5642
      %5644 = vmatprep.subr.mxu0 0.0
      %v5645 = vand.u32 %v696, 4294901760
      %5646 = vmatpush1.msra.mxu0 %v5645
      %5647 = vmatprep.subr.mxu0 0.0
      %v5648 = vand.u32 %v678, 4294901760
      %5649 = vmatpush1.msra.mxu0 %v5648
      %5650 = vmatprep.subr.mxu0 0.0
      %v5651 = vand.u32 %v625, 4294901760
      %5652 = vmatpush1.msra.mxu0 %v5651
      %5653 = vmatprep.subr.mxu0 0.0
      %v5654 = vand.u32 %v607, 4294901760
      %5655 = vmatpush1.msra.mxu0 %v5654
      %5656 = vmatprep.subr.mxu0 0.0
      %v5657 = vand.u32 %v554, 4294901760
      %5658 = vmatpush1.msra.mxu0 %v5657
      %5659 = vmatprep.subr.mxu0 0.0
      %v5660 = vand.u32 %v536, 4294901760
      %5661 = vmatpush1.msra.mxu0 %v5660
      %5662 = vmatprep.subr.mxu0 0.0
      %v5663 = vand.u32 %v483, 4294901760
      %5664 = vmatpush1.msra.mxu0 %v5663
      %5665 = vmatprep.subr.mxu0 0.0
      %v5666 = vand.u32 %v465, 4294901760
      %5667 = vmatpush1.msra.mxu0 %v5666
      %5668 = vmatprep.subr.mxu0 0.0
      %v5669 = vand.u32 %v428, 4294901760
      %5670 = vmatpush1.msra.mxu0 %v5669
      %5671 = vmatprep.subr.mxu0 0.0
      %v5672 = vand.u32 %v418, 4294901760
      %5673 = vmatpush1.msra.mxu0 %v5672
      %5674 = vmatprep.subr.mxu0 0.0
      %5675 = vmatpush2.msra.mxu0 0.0
      %5676 = vmatprep.subr.mxu0 0.0
      %5677 = vmatpush2.msra.mxu0 0.0
      %5678 = vmatprep.subr.mxu0 0.0
      %5679 = vmatpush2.msra.mxu0 0.0
      %5680 = vmatprep.subr.mxu0 0.0
      %5681 = vmatpush2.msra.mxu0 0.0
      %5682 = vmatprep.subr.mxu0 0.0
      %5683 = vmatpush2.msra.mxu0 0.0
      %5684 = vmatprep.subr.mxu0 0.0
      %5685 = vmatpush2.msra.mxu0 0.0
      %5686 = vmatprep.subr.mxu0 0.0
      %5687 = vmatpush2.msra.mxu0 0.0
      %5688 = vmatprep.subr.mxu0 0.0
      %5689 = vmatpush2.msra.mxu0 0.0
      %5690 = vmatprep.subr.mxu0 0.0
      %5691 = vmatpush2.msra.mxu0 0.0
      %5692 = vmatprep.subr.mxu0 0.0
      %5693 = vmatpush2.msra.mxu0 0.0
      %5694 = vmatprep.subr.mxu0 0.0
      %5695 = vmatpush2.msra.mxu0 0.0
      %5696 = vmatprep.subr.mxu0 0.0
      %5697 = vmatpush2.msra.mxu0 0.0
      %5698 = vmatprep.subr.mxu0 0.0
      %5699 = vmatpush2.msra.mxu0 0.0
      %5700 = vmatprep.subr.mxu0 0.0
      %5701 = vmatpush2.msra.mxu0 0.0
      %5702 = vmatprep.subr.mxu0 0.0
      %v5703 = vand.u32 %v1017, 4294901760
      %5704 = vmatpush2.msra.mxu0 %v5703
      %5705 = vmatprep.subr.mxu0 0.0
      %v5706 = vand.u32 %v1008, 4294901760
      %5707 = vmatpush2.msra.mxu0 %v5706
      %v5708 = vand.u32 %v1054, 4294901760
      %5709 = vmatprep.mubr.f32.mxu0 %v5708
      %v5710 = vand.u32 %v1036, 4294901760
      %5711 = vmatmul.mubr.f32.gmra.mxu0 %v5710
      %v5712 = vpop.f32.mrf.mxu0
      %v5713 = vadd.f32 %v5616, %v5712
      %v5714 = vpop.f32.mrf.mxu0
      %v5715 = vand.u32 %v1057, 4294901760
      %5716 = vmatprep.mubr.f32.mxu0 %v5715
      %v5717 = vand.u32 %v1038, 4294901760
      %5718 = vmatmul.mubr.f32.gmra.mxu0 %v5717
      %v5719 = vpop.f32.mrf.mxu0
      %v5720 = vadd.f32 %v5623, %v5719
      %v5721 = vpop.f32.mrf.mxu0
      %5722 = vdwg.mxu0
      %v5723 = vtanh.pop %v2029
      %v5724 = vtanh.pop %v2031
      %v5725 = vtanh.pop %v3011
      %v5726 = vtanh.pop %v3013
      %v5727 = vtanh.pop %v3993
      %v5728 = vtanh.pop %v3995
      %v5729 = vtanh.pop %v4975
      %v5730 = vtanh.pop %v4977
      %v5731 = vtanh.pop %v5713
      %v5732 = vtanh.pop %v2037
      %v5733 = vtanh.pop %v2039
      %v5734 = vtanh.pop %v3019
      %v5735 = vtanh.pop %v3021
      %v5736 = vtanh.pop %v4001
      %v5737 = vtanh.pop %v4003
      %v5738 = vtanh.pop %v4983
      %v5739 = vtanh.pop %v4985
      %v5740 = vtanh.pop %v5720
      %5741 = vst [vmem:[%s251] sm:$0xff] %v5723
      %5742 = vst [vmem:[%s251 + $0x8] sm:$0xff] %v5724
      %5743 = vst [vmem:[%s251 + $0x10] sm:$0xff] %v5725
      %5744 = vst [vmem:[%s251 + $0x18] sm:$0xff] %v5726
      %5745 = vst [vmem:[%s251 + $0x20] sm:$0xff] %v5727
      %5746 = vst [vmem:[%s251 + $0x28] sm:$0xff] %v5728
      %5747 = vst [vmem:[%s251 + $0x30] sm:$0xff] %v5729
      %5748 = vst [vmem:[%s251 + $0x38] sm:$0xff] %v5730
      %vm5749 = vcmask 506880
      %5750 = vst.msk [vmem:[%s251 + $0x40] sm:$0xff] %vm5749, %v5731
      %5751 = vst [vmem:[%s251 + $0x48] sm:$0xf] %v5732
      %5752 = vst [vmem:[%s251 + $0x50] sm:$0xf] %v5733
      %5753 = vst [vmem:[%s251 + $0x58] sm:$0xf] %v5734
      %5754 = vst [vmem:[%s251 + $0x60] sm:$0xf] %v5735
      %5755 = vst [vmem:[%s251 + $0x68] sm:$0xf] %v5736
      %5756 = vst [vmem:[%s251 + $0x70] sm:$0xf] %v5737
      %5757 = vst [vmem:[%s251 + $0x78] sm:$0xf] %v5738
      %5758 = vst [vmem:[%s251 + $0x80] sm:$0xf] %v5739
      %vm5759 = vcmask 502784
      %5760 = vst.msk [vmem:[%s251 + $0x88] sm:$0xf] %vm5759, %v5740
      %p5761 = scmp.lt.s32.totalorder %s17, 1
      %s5762 = scalar_select %p5761, %s17, 1
      %s5763 = smul.addr %s5762, 18
      %s5764 = smul.addr %s5763, 8
      %s5765 = scalar_lea.vmem %s6, %s5764
      // Predicated region
      $region45: #{decoder_forward.3} parent=43 // pred_check
        %p5766 = pneg %p166
      $region46: #{decoder_forward.3} parent=43 // pred_check_branch
        %5768 = sbr.rel (%p5766) target = $region48
      $region47: #{decoder_forward.3} parent=43 // pred_region
        _
      $region48: #{decoder_forward.3} parent=43 // pred_fallthru
        _
    $region44: #{decoder_forward.3} parent=5 // pred_fallthru
      _
    %p5769 = scmp.le.s32.totalorder 2, %s12
    // Predicated region
    $region49: #{decoder_forward.3} parent=5 // pred_check
      %p5770 = pneg %p5769
    $region50: #{decoder_forward.3} parent=5 // pred_check_branch
      %5772 = sbr.rel (%p5770) target = $region52
    $region51: #{decoder_forward.3} parent=5 // pred_region
      %s5773 = ssub.s32 %s12, 2
      // Predicated region
      $region53: #{decoder_forward.3} parent=51 // pred_check
        %p5774 = pneg %p172
      $region54: #{decoder_forward.3} parent=51 // pred_check_branch
        %5776 = sbr.rel (%p5774) target = $region56
      $region55: #{decoder_forward.3} parent=51 // pred_region
        %p5777 = scmp.lt.s32.totalorder %s18, 1
        %s5778 = scalar_select %p5777, %s18, 1
        %s5779 = smul.addr %s5778, 18
        %s5780 = smul.addr %s5779, 8
        %s5781 = scalar_lea.vmem %s6, %s5780
      $region56: #{decoder_forward.3} parent=51 // pred_fallthru
        _
    $region52: #{decoder_forward.3} parent=5 // pred_fallthru
      _
  $region6: #{decoder_forward.3} parent=0 // loop_footer
    %s16 = sadd.s32 1, %s12
  $region7: #{decoder_forward.3} parent=0 // loop_footer_branch
    %11 = sbr.rel target = $region3
  $region8: #{decoder_forward.3} parent=0 // loop_exit
    _

</llo_original>
